<compile_context>
chip_gen: v5e
topology: v5e:2x2
jax: 0.10.0
libtpu: 0.0.40
codegen_flags: <defaults>
</compile_context>

<pallas_src>
import functools

import jax
import jax.numpy as jnp
from jax.experimental import pallas as pl
from jax.experimental.pallas import tpu as pltpu

HIDDEN = 256          # config['hidden_size']
NUM_EXPERTS = 4       # config['num_experts']
NUM_CLASSES = 10
FC_IN = 64 * 7 * 7    # 3136
GATE_PAD = 128        # gate columns zero-padded to one full 128-lane block


def _cdiv(a, b):
    return (a + b - 1) // b


def _round_up(x, m):
    return ((x + m - 1) // m) * m


def _pick_tile(rows, target, align=16):
    """Row tile: multiple of 16 (bf16-native sublane tile), capped at `target`
    and at ~half the row count so there are >=2 grid steps whenever possible
    (v7x has 2 TensorCores to feed via dimension_semantics='parallel')."""
    half = _round_up(_cdiv(rows, 2), align)
    return max(align, min(target, half))


def _vmem_limit_bytes():
    try:
        cap = pltpu.get_tpu_info().vmem_capacity_bytes
    except Exception:
        cap = 128 * 1024 * 1024
    # ~45% of physical VMEM: ~57 MiB on v5e/v6e (128 MiB), 32 MiB on v7x (64 MiB).
    return int(min(64 * 1024 * 1024, max(32 * 1024 * 1024, 0.45 * cap)))


_VMEM_LIMIT = _vmem_limit_bytes()


# ----------------------------------------------------------------------------
# Pallas kernels
# ----------------------------------------------------------------------------
def _conv_relu_pool_kernel(lhs_ref, w_ref, b_ref, o_ref, *, n_lane):
    # lhs: (tm, pack*16*Cin) bf16 ; w: (pack*16*Cin, 4*n_lane) bf16
    # b:   (1, n_lane) f32        ; o: (tm, n_lane) bf16  (n_lane = pack*Cout = 128)
    acc = jnp.dot(lhs_ref[...], w_ref[...],
                  preferred_element_type=jnp.float32)          # (tm, 4*n_lane) f32
    # 2x2 maxpool == max over the four 128-lane-aligned tap blocks
    # (bias-add and ReLU commute with the max).
    p = jnp.maximum(jnp.maximum(acc[:, 0 * n_lane:1 * n_lane],
                                acc[:, 1 * n_lane:2 * n_lane]),
                    jnp.maximum(acc[:, 2 * n_lane:3 * n_lane],
                                acc[:, 3 * n_lane:4 * n_lane]))
    o_ref[...] = jnp.maximum(p + b_ref[...], 0.0).astype(o_ref.dtype)


def _moe_head_kernel(x_ref, fc_w_ref, fc_b_ref, ge_w_ref, ge_b_ref,
                     out_w_ref, out_b_ref, o_ref):
    x = x_ref[...]                                             # (tb, FC_IN) bf16
    # fc + relu (f32 accumulate / f32 epilogue)
    h = jnp.dot(x, fc_w_ref[...], preferred_element_type=jnp.float32)
    h = jnp.maximum(h + fc_b_ref[...], 0.0)                    # (tb, H) f32
    hb = h.astype(jnp.bfloat16)
    # Gate (zero-padded to 128 lanes) + all 4 experts in ONE lane-dense matmul.
    r = jnp.dot(hb, ge_w_ref[...], preferred_element_type=jnp.float32)
    r = r + ge_b_ref[...]                                      # (tb, 128 + 4*H) f32
    g = r[:, :NUM_EXPERTS]
    g = g - jnp.max(g, axis=-1, keepdims=True)
    ge = jnp.exp(g)
    probs = ge / jnp.sum(ge, axis=-1, keepdims=True)           # (tb, 4) f32
    # Probability-weighted expert sum, one 256-lane slab at a time (f32; v5e VPU
    # has no bf16).  Slab offsets are 128-lane aligned.
    acc = probs[:, 0:1] * r[:, GATE_PAD:GATE_PAD + HIDDEN]
    for i in range(1, NUM_EXPERTS):
        lo = GATE_PAD + i * HIDDEN
        acc = acc + probs[:, i:i + 1] * r[:, lo:lo + HIDDEN]
    out = jnp.dot(acc.astype(jnp.bfloat16), out_w_ref[...],
                  preferred_element_type=jnp.float32) + out_b_ref[...]
    o_ref[...] = out.astype(o_ref.dtype)


# ----------------------------------------------------------------------------
# Wrapper-side data preparation
# ----------------------------------------------------------------------------
def _pooled_patches(x_bhwc):
    """(B, H, W, C) -> (B*(H//2)*(W//2), 16*C).

    One row per pooled output position: its 4x4 padded-input window (covers all
    four 3x3 conv taps of that 2x2 pool window).  Row order (b, h', w');
    column order (u, v, c)."""
    B, H, W, C = x_bhwc.shape
    xp = jnp.pad(x_bhwc, ((0, 0), (1, 1), (1, 1), (0, 0)))
    pats = jnp.stack([xp[:, u:u + H:2, v:v + W:2, :]
                      for u in range(4) for v in range(4)], axis=3)
    return pats.reshape(B * (H // 2) * (W // 2), 16 * C)


def _packed_pooled_conv_rhs(w, pack):
    """(3,3,Cin,Cout) conv weight -> (pack*16*Cin, 4*pack*Cout) packed weight.

    Input column = (pos j, u, v, cin); output column = (tap k, pos j, cout), so
    the 2x2 pool in the kernel is a max over four (pack*Cout)=128-lane-aligned
    column blocks and the pooled result is already lane-dense."""
    _, _, cin, cout = w.shape
    wpp = jnp.zeros((4, 4, cin, 2, 2, cout), w.dtype)
    for ph in range(2):
        for pw in range(2):
            wpp = wpp.at[ph:ph + 3, pw:pw + 3, :, ph, pw, :].set(w)
    wpp = wpp.reshape(16 * cin, 4, cout)                       # (uvc, tap, cout)
    rhs = jnp.zeros((pack, 16 * cin, 4, pack, cout), w.dtype)
    for j in range(pack):
        rhs = rhs.at[j, :, :, j, :].set(wpp)
    return rhs.reshape(pack * 16 * cin, 4 * pack * cout)


# ----------------------------------------------------------------------------
# pallas_call wrappers
# ----------------------------------------------------------------------------
def conv_relu_pool(x_bhwc, rhs, bias, c_out, *, pack, tm_target):
    """Fused conv3x3(pad=1)+bias+ReLU+maxpool2x2, `pack` pooled positions per
    lane-dense output row: (B,H,W,Cin) -> (B,H/2,W/2,Cout)."""
    B, H, W, _ = x_bhwc.shape
    n_pos = B * (H // 2) * (W // 2)
    lhs = _pooled_patches(x_bhwc)                              # (n_pos, 16*Cin) bf16
    mr = _round_up(n_pos, pack)
    if mr != n_pos:
        lhs = jnp.pad(lhs, ((0, mr - n_pos), (0, 0)))
    lhs = lhs.reshape(mr // pack, pack * lhs.shape[1])         # pack positions / row
    Mr, K = lhs.shape
    n_lane = pack * c_out                                      # 128
    tm = _pick_tile(Mr, tm_target)
    m_pad = _round_up(Mr, tm)
    if m_pad != Mr:
        lhs = jnp.pad(lhs, ((0, m_pad - Mr), (0, 0)))
    cost = pl.CostEstimate(
        flops=2 * m_pad * K * 4 * n_lane,
        transcendentals=0,
        bytes_accessed=(m_pad * K * 2 + K * 4 * n_lane * 2
                        + m_pad * n_lane * 2 + n_lane * 4))
    out = pl.pallas_call(
        functools.partial(_conv_relu_pool_kernel, n_lane=n_lane),
        out_shape=jax.ShapeDtypeStruct((m_pad, n_lane), jnp.bfloat16),
        grid=(m_pad // tm,),
        in_specs=[pl.BlockSpec((tm, K), lambda i: (i, 0)),
                  pl.BlockSpec((K, 4 * n_lane), lambda i: (0, 0)),   # weight resident
                  pl.BlockSpec((1, n_lane), lambda i: (0, 0))],      # bias resident
        out_specs=pl.BlockSpec((tm, n_lane), lambda i: (i, 0)),
        compiler_params=pltpu.CompilerParams(
            dimension_semantics=("parallel",),
            vmem_limit_bytes=_VMEM_LIMIT),
        cost_estimate=cost,
    )(lhs, rhs, bias)
    out = out.reshape(m_pad * pack, c_out)[:n_pos]             # contiguous unpack
    return out.reshape(B, H // 2, W // 2, c_out)


def moe_head(flat, prep, *, tb_target=256):
    """Fused fc -> ReLU -> (gate||experts) matmul -> softmax-weighted sum ->
    output layer, gridded over batch rows."""
    B = flat.shape[0]
    tb = _pick_tile(B, tb_target)
    b_pad = _round_up(B, tb)
    if b_pad != B:
        flat = jnp.pad(flat, ((0, b_pad - B), (0, 0)))
    ge_n = GATE_PAD + NUM_EXPERTS * HIDDEN                     # 1152
    flops = 2 * b_pad * HIDDEN * (FC_IN + ge_n + NUM_CLASSES)
    wbytes = 2 * HIDDEN * (FC_IN + ge_n + NUM_CLASSES)
    cost = pl.CostEstimate(
        flops=flops,
        transcendentals=b_pad * NUM_EXPERTS,
        bytes_accessed=b_pad * FC_IN * 2 + wbytes + b_pad * NUM_CLASSES * 4)
    out = pl.pallas_call(
        _moe_head_kernel,
        out_shape=jax.ShapeDtypeStruct((b_pad, NUM_CLASSES), jnp.float32),
        grid=(b_pad // tb,),
        in_specs=[
            pl.BlockSpec((tb, FC_IN), lambda i: (i, 0)),
            pl.BlockSpec((FC_IN, HIDDEN), lambda i: (0, 0)),
            pl.BlockSpec((1, HIDDEN), lambda i: (0, 0)),
            pl.BlockSpec((HIDDEN, ge_n), lambda i: (0, 0)),
            pl.BlockSpec((1, ge_n), lambda i: (0, 0)),
            pl.BlockSpec((HIDDEN, NUM_CLASSES), lambda i: (0, 0)),
            pl.BlockSpec((1, NUM_CLASSES), lambda i: (0, 0)),
        ],
        out_specs=pl.BlockSpec((tb, NUM_CLASSES), lambda i: (i, 0)),
        compiler_params=pltpu.CompilerParams(
            dimension_semantics=("parallel",),
            vmem_limit_bytes=_VMEM_LIMIT),
        cost_estimate=cost,
    )(flat, prep['fc_w'], prep['fc_b'], prep['ge_w'], prep['ge_b'],
      prep['out_w'], prep['out_b'])
    return out[:B]


# ----------------------------------------------------------------------------
# Parameters
# ----------------------------------------------------------------------------
def init_params(key):
    """PyTorch-equivalent layouts: conv (3,3,Cin,Cout) == weight.permute(2,3,1,0);
    linear (in,out) == weight.T; fc_w rows in NCHW (c*49+h*7+w) order."""
    ks = jax.random.split(key, 12)
    s = 0.05
    return {
        'conv1_w': s * jax.random.normal(ks[0], (3, 3, 1, 32), jnp.float32),
        'conv1_b': s * jax.random.normal(ks[1], (32,), jnp.float32),
        'conv2_w': s * jax.random.normal(ks[2], (3, 3, 32, 64), jnp.float32),
        'conv2_b': s * jax.random.normal(ks[3], (64,), jnp.float32),
        'fc_w':    s * jax.random.normal(ks[4], (FC_IN, HIDDEN), jnp.float32),
        'fc_b':    s * jax.random.normal(ks[5], (HIDDEN,), jnp.float32),
        'gate_w':  s * jax.random.normal(ks[6], (HIDDEN, NUM_EXPERTS), jnp.float32),
        'gate_b':  s * jax.random.normal(ks[7], (NUM_EXPERTS,), jnp.float32),
        'exp_w':   s * jax.random.normal(ks[8], (NUM_EXPERTS, HIDDEN, HIDDEN), jnp.float32),
        'exp_b':   s * jax.random.normal(ks[9], (NUM_EXPERTS, HIDDEN), jnp.float32),
        'out_w':   s * jax.random.normal(ks[10], (HIDDEN, NUM_CLASSES), jnp.float32),
        'out_b':   s * jax.random.normal(ks[11], (NUM_CLASSES,), jnp.float32),
    }


def prepare_params(p):
    """One-time layout/dtype transforms folded into the weights (off hot path)."""
    # Fold PyTorch's NCHW flatten (row = c*49 + h*7 + w) into a row permutation
    # of fc_w so the NHWC-flattened activation is used directly.
    pos = jnp.arange(FC_IN)
    perm = (pos % 64) * 49 + pos // 64
    bf16, f32 = jnp.bfloat16, jnp.float32
    # Gate folded into the expert matmul: zero-pad gate to one 128-lane block
    # and concatenate with the (HIDDEN, 4*HIDDEN) packed expert weights.
    gate_w_pad = jnp.zeros((HIDDEN, GATE_PAD), f32).at[:, :NUM_EXPERTS].set(p['gate_w'])
    gate_b_pad = jnp.zeros((GATE_PAD,), f32).at[:NUM_EXPERTS].set(p['gate_b'])
    exp_w = jnp.transpose(p['exp_w'], (1, 0, 2)).reshape(HIDDEN, NUM_EXPERTS * HIDDEN)
    exp_b = p['exp_b'].reshape(NUM_EXPERTS * HIDDEN)
    ge_n = GATE_PAD + NUM_EXPERTS * HIDDEN
    return {
        'c1_rhs': _packed_pooled_conv_rhs(p['conv1_w'], 4).astype(bf16),   # (64, 512)
        'c1_b':   jnp.tile(p['conv1_b'], 4).reshape(1, 128).astype(f32),
        'c2_rhs': _packed_pooled_conv_rhs(p['conv2_w'], 2).astype(bf16),   # (1024, 512)
        'c2_b':   jnp.tile(p['conv2_b'], 2).reshape(1, 128).astype(f32),
        'fc_w':   p['fc_w'][perm, :].astype(bf16),                         # (3136, 256)
        'fc_b':   p['fc_b'].reshape(1, HIDDEN).astype(f32),
        'ge_w':   jnp.concatenate([gate_w_pad, exp_w], axis=1).astype(bf16),  # (256, 1152)
        'ge_b':   jnp.concatenate([gate_b_pad, exp_b]).reshape(1, ge_n).astype(f32),
        'out_w':  p['out_w'].astype(bf16),                                 # (256, 10)
        'out_b':  p['out_b'].reshape(1, NUM_CLASSES).astype(f32),
    }


# ----------------------------------------------------------------------------
# Forward
# ----------------------------------------------------------------------------
@jax.jit
def pikv_moe_forward(prep, x_nchw):
    B, _, H, W = x_nchw.shape
    x = x_nchw.astype(jnp.bfloat16).reshape(B, H, W, 1)        # NCHW(C=1) -> NHWC
    y = conv_relu_pool(x, prep['c1_rhs'], prep['c1_b'], 32,
                       pack=4, tm_target=1024)                 # (B,14,14,32)
    y = conv_relu_pool(y, prep['c2_rhs'], prep['c2_b'], 64,
                       pack=2, tm_target=1024)                 # (B,7,7,64)
    flat = y.reshape(B, FC_IN)      # NHWC flatten; fc_w rows are pre-permuted
    # TODO(synk): cache_manager.update_cache(x, x) is a stateful LRU KV-cache
    # bookkeeping side effect with no influence on the returned logits; it is
    # not reproduced here.
    return moe_head(flat, prep, tb_target=256)


if __name__ == "__main__":
    key = jax.random.PRNGKey(0)
    pkey, xkey = jax.random.split(key)
    params = init_params(pkey)
    prep = prepare_params(params)
    # MNIST-style input; 28x28 is required by fc_in_features = 64*7*7.
    x = jax.random.normal(xkey, (2, 1, 28, 28), jnp.float32)
    out = pikv_moe_forward(prep, x)
    out = jax.block_until_ready(out)
    assert out.shape == (2, NUM_CLASSES) and out.dtype == jnp.float32
    assert bool(jnp.all(jnp.isfinite(out)))
    print("KERNEL_OK")
</pallas_src>

<mosaic_0001>
module attributes {stable_mosaic.version = 11 : i64} {
  func.func @_conv_relu_pool_kernel(%arg0: i32, %arg1: memref<64x64xbf16, #tpu.memory_space<vmem>>, %arg2: memref<64x512xbf16, #tpu.memory_space<vmem>>, %arg3: memref<1x128xf32, #tpu.memory_space<vmem>>, %arg4: memref<64x128xbf16, #tpu.memory_space<vmem>>) attributes {dimension_semantics = [#tpu.dimension_semantics<parallel>], iteration_bounds = array<i64: 2>, scalar_prefetch = 0 : i64, scratch_operands = 0 : i64, tpu.core_type = #tpu.core_type<tc>, window_params = [{transform_indices = @transform_0, window_bounds = array<i64: 64, 64>}, {pipeline_mode = #tpu.pipeline_mode<synchronous>, transform_indices = @transform_1, window_bounds = array<i64: 64, 512>}, {pipeline_mode = #tpu.pipeline_mode<synchronous>, transform_indices = @transform_2, window_bounds = array<i64: 1, 128>}, {transform_indices = @transform_3, window_bounds = array<i64: 64, 128>}]} {
    %c0 = arith.constant 0 : index
    %c0_0 = arith.constant 0 : index
    %0 = vector.load %arg1[%c0, %c0_0] : memref<64x64xbf16, #tpu.memory_space<vmem>>, vector<64x64xbf16>
    %c0_1 = arith.constant 0 : index
    %c0_2 = arith.constant 0 : index
    %1 = vector.load %arg2[%c0_1, %c0_2] : memref<64x512xbf16, #tpu.memory_space<vmem>>, vector<64x512xbf16>
    %cst = arith.constant dense<0.000000e+00> : vector<64x512xf32>
    %2 = tpu.matmul %0, %1, %cst {dimension_numbers = #tpu.dot_dimension_numbers<[1], [0], [0], [1], [0, 0, 1, 1], [], []>} : vector<64x64xbf16>, vector<64x512xbf16>, vector<64x512xf32> -> vector<64x512xf32>
    %3 = vector.extract_strided_slice %2 {offsets = [0, 0], sizes = [64, 128], strides = [1, 1]} : vector<64x512xf32> to vector<64x128xf32>
    %4 = vector.extract_strided_slice %2 {offsets = [0, 128], sizes = [64, 128], strides = [1, 1]} : vector<64x512xf32> to vector<64x128xf32>
    %5 = arith.maximumf %3, %4 : vector<64x128xf32>
    %6 = vector.extract_strided_slice %2 {offsets = [0, 256], sizes = [64, 128], strides = [1, 1]} : vector<64x512xf32> to vector<64x128xf32>
    %7 = vector.extract_strided_slice %2 {offsets = [0, 384], sizes = [64, 128], strides = [1, 1]} : vector<64x512xf32> to vector<64x128xf32>
    %8 = arith.maximumf %6, %7 : vector<64x128xf32>
    %9 = arith.maximumf %5, %8 : vector<64x128xf32>
    %c0_3 = arith.constant 0 : index
    %c0_4 = arith.constant 0 : index
    %10 = vector.load %arg3[%c0_3, %c0_4] : memref<1x128xf32, #tpu.memory_space<vmem>>, vector<1x128xf32>
    %11 = vector.broadcast %10 : vector<1x128xf32> to vector<64x128xf32>
    %12 = arith.addf %9, %11 : vector<64x128xf32>
    %cst_5 = arith.constant 0.000000e+00 : f32
    %13 = vector.broadcast %cst_5 : f32 to vector<64x128xf32>
    %14 = arith.maximumf %12, %13 : vector<64x128xf32>
    %15 = arith.truncf %14 : vector<64x128xf32> to vector<64x128xbf16>
    %c0_6 = arith.constant 0 : index
    %c0_7 = arith.constant 0 : index
    %16 = vector.load %arg4[%c0_6, %c0_7] : memref<64x128xbf16, #tpu.memory_space<vmem>>, vector<64x128xbf16>
    tpu.vector_store %arg4[%c0_6, %c0_7], %15 {strides = array<i32>} : memref<64x128xbf16, #tpu.memory_space<vmem>>, vector<64x128xbf16>,
    return
  }
  func.func @transform_0(%arg0: i32) -> (i32, i32) {
    %c0_i32 = arith.constant 0 : i32
    %c0_i32_0 = arith.constant 0 : i32
    return %arg0, %c0_i32 : i32, i32
  }
  func.func @transform_1(%arg0: i32) -> (i32, i32) {
    %c0_i32 = arith.constant 0 : i32
    %c0_i32_0 = arith.constant 0 : i32
    %c0_i32_1 = arith.constant 0 : i32
    return %c0_i32, %c0_i32_0 : i32, i32
  }
  func.func @transform_2(%arg0: i32) -> (i32, i32) {
    %c0_i32 = arith.constant 0 : i32
    %c0_i32_0 = arith.constant 0 : i32
    %c0_i32_1 = arith.constant 0 : i32
    return %c0_i32, %c0_i32_0 : i32, i32
  }
  func.func @transform_3(%arg0: i32) -> (i32, i32) {
    %c0_i32 = arith.constant 0 : i32
    %c0_i32_0 = arith.constant 0 : i32
    return %arg0, %c0_i32 : i32, i32
  }
}

module attributes {stable_mosaic.version = 11 : i64} {
  func.func @_conv_relu_pool_kernel(%arg0: i32, %arg1: memref<32x1024xbf16, #tpu.memory_space<vmem>>, %arg2: memref<1024x512xbf16, #tpu.memory_space<vmem>>, %arg3: memref<1x128xf32, #tpu.memory_space<vmem>>, %arg4: memref<32x128xbf16, #tpu.memory_space<vmem>>) attributes {dimension_semantics = [#tpu.dimension_semantics<parallel>], iteration_bounds = array<i64: 2>, scalar_prefetch = 0 : i64, scratch_operands = 0 : i64, tpu.core_type = #tpu.core_type<tc>, window_params = [{transform_indices = @transform_0, window_bounds = array<i64: 32, 1024>}, {pipeline_mode = #tpu.pipeline_mode<synchronous>, transform_indices = @transform_1, window_bounds = array<i64: 1024, 512>}, {pipeline_mode = #tpu.pipeline_mode<synchronous>, transform_indices = @transform_2, window_bounds = array<i64: 1, 128>}, {transform_indices = @transform_3, window_bounds = array<i64: 32, 128>}]} {
    %c0 = arith.constant 0 : index
    %c0_0 = arith.constant 0 : index
    %0 = vector.load %arg1[%c0, %c0_0] : memref<32x1024xbf16, #tpu.memory_space<vmem>>, vector<32x1024xbf16>
    %c0_1 = arith.constant 0 : index
    %c0_2 = arith.constant 0 : index
    %1 = vector.load %arg2[%c0_1, %c0_2] : memref<1024x512xbf16, #tpu.memory_space<vmem>>, vector<1024x512xbf16>
    %cst = arith.constant dense<0.000000e+00> : vector<32x512xf32>
    %2 = tpu.matmul %0, %1, %cst {dimension_numbers = #tpu.dot_dimension_numbers<[1], [0], [0], [1], [0, 0, 1, 1], [], []>} : vector<32x1024xbf16>, vector<1024x512xbf16>, vector<32x512xf32> -> vector<32x512xf32>
    %3 = vector.extract_strided_slice %2 {offsets = [0, 0], sizes = [32, 128], strides = [1, 1]} : vector<32x512xf32> to vector<32x128xf32>
    %4 = vector.extract_strided_slice %2 {offsets = [0, 128], sizes = [32, 128], strides = [1, 1]} : vector<32x512xf32> to vector<32x128xf32>
    %5 = arith.maximumf %3, %4 : vector<32x128xf32>
    %6 = vector.extract_strided_slice %2 {offsets = [0, 256], sizes = [32, 128], strides = [1, 1]} : vector<32x512xf32> to vector<32x128xf32>
    %7 = vector.extract_strided_slice %2 {offsets = [0, 384], sizes = [32, 128], strides = [1, 1]} : vector<32x512xf32> to vector<32x128xf32>
    %8 = arith.maximumf %6, %7 : vector<32x128xf32>
    %9 = arith.maximumf %5, %8 : vector<32x128xf32>
    %c0_3 = arith.constant 0 : index
    %c0_4 = arith.constant 0 : index
    %10 = vector.load %arg3[%c0_3, %c0_4] : memref<1x128xf32, #tpu.memory_space<vmem>>, vector<1x128xf32>
    %11 = vector.broadcast %10 : vector<1x128xf32> to vector<32x128xf32>
    %12 = arith.addf %9, %11 : vector<32x128xf32>
    %cst_5 = arith.constant 0.000000e+00 : f32
    %13 = vector.broadcast %cst_5 : f32 to vector<32x128xf32>
    %14 = arith.maximumf %12, %13 : vector<32x128xf32>
    %15 = arith.truncf %14 : vector<32x128xf32> to vector<32x128xbf16>
    %c0_6 = arith.constant 0 : index
    %c0_7 = arith.constant 0 : index
    %16 = vector.load %arg4[%c0_6, %c0_7] : memref<32x128xbf16, #tpu.memory_space<vmem>>, vector<32x128xbf16>
    tpu.vector_store %arg4[%c0_6, %c0_7], %15 {strides = array<i32>} : memref<32x128xbf16, #tpu.memory_space<vmem>>, vector<32x128xbf16>,
    return
  }
  func.func @transform_0(%arg0: i32) -> (i32, i32) {
    %c0_i32 = arith.constant 0 : i32
    %c0_i32_0 = arith.constant 0 : i32
    return %arg0, %c0_i32 : i32, i32
  }
  func.func @transform_1(%arg0: i32) -> (i32, i32) {
    %c0_i32 = arith.constant 0 : i32
    %c0_i32_0 = arith.constant 0 : i32
    %c0_i32_1 = arith.constant 0 : i32
    return %c0_i32, %c0_i32_0 : i32, i32
  }
  func.func @transform_2(%arg0: i32) -> (i32, i32) {
    %c0_i32 = arith.constant 0 : i32
    %c0_i32_0 = arith.constant 0 : i32
    %c0_i32_1 = arith.constant 0 : i32
    return %c0_i32, %c0_i32_0 : i32, i32
  }
  func.func @transform_3(%arg0: i32) -> (i32, i32) {
    %c0_i32 = arith.constant 0 : i32
    %c0_i32_0 = arith.constant 0 : i32
    return %arg0, %c0_i32 : i32, i32
  }
}

module attributes {stable_mosaic.version = 11 : i64} {
  func.func @_moe_head_kernel(%arg0: i32, %arg1: memref<16x3136xbf16, #tpu.memory_space<vmem>>, %arg2: memref<3136x256xbf16, #tpu.memory_space<vmem>>, %arg3: memref<1x256xf32, #tpu.memory_space<vmem>>, %arg4: memref<256x1152xbf16, #tpu.memory_space<vmem>>, %arg5: memref<1x1152xf32, #tpu.memory_space<vmem>>, %arg6: memref<256x10xbf16, #tpu.memory_space<vmem>>, %arg7: memref<1x10xf32, #tpu.memory_space<vmem>>, %arg8: memref<16x10xf32, #tpu.memory_space<vmem>>) attributes {dimension_semantics = [#tpu.dimension_semantics<parallel>], iteration_bounds = array<i64: 1>, scalar_prefetch = 0 : i64, scratch_operands = 0 : i64, tpu.core_type = #tpu.core_type<tc>, window_params = [{transform_indices = @transform_0, window_bounds = array<i64: 16, 3136>}, {pipeline_mode = #tpu.pipeline_mode<synchronous>, transform_indices = @transform_1, window_bounds = array<i64: 3136, 256>}, {pipeline_mode = #tpu.pipeline_mode<synchronous>, transform_indices = @transform_2, window_bounds = array<i64: 1, 256>}, {pipeline_mode = #tpu.pipeline_mode<synchronous>, transform_indices = @transform_3, window_bounds = array<i64: 256, 1152>}, {pipeline_mode = #tpu.pipeline_mode<synchronous>, transform_indices = @transform_4, window_bounds = array<i64: 1, 1152>}, {pipeline_mode = #tpu.pipeline_mode<synchronous>, transform_indices = @transform_5, window_bounds = array<i64: 256, 10>}, {pipeline_mode = #tpu.pipeline_mode<synchronous>, transform_indices = @transform_6, window_bounds = array<i64: 1, 10>}, {transform_indices = @transform_7, window_bounds = array<i64: 16, 10>}]} {
    %c0 = arith.constant 0 : index
    %c0_0 = arith.constant 0 : index
    %0 = vector.load %arg1[%c0, %c0_0] : memref<16x3136xbf16, #tpu.memory_space<vmem>>, vector<16x3136xbf16>
    %c0_1 = arith.constant 0 : index
    %c0_2 = arith.constant 0 : index
    %1 = vector.load %arg2[%c0_1, %c0_2] : memref<3136x256xbf16, #tpu.memory_space<vmem>>, vector<3136x256xbf16>
    %cst = arith.constant dense<0.000000e+00> : vector<16x256xf32>
    %2 = tpu.matmul %0, %1, %cst {dimension_numbers = #tpu.dot_dimension_numbers<[1], [0], [0], [1], [0, 0, 1, 1], [], []>} : vector<16x3136xbf16>, vector<3136x256xbf16>, vector<16x256xf32> -> vector<16x256xf32>
    %c0_3 = arith.constant 0 : index
    %c0_4 = arith.constant 0 : index
    %3 = vector.load %arg3[%c0_3, %c0_4] : memref<1x256xf32, #tpu.memory_space<vmem>>, vector<1x256xf32>
    %4 = vector.broadcast %3 : vector<1x256xf32> to vector<16x256xf32>
    %5 = arith.addf %2, %4 : vector<16x256xf32>
    %cst_5 = arith.constant 0.000000e+00 : f32
    %6 = vector.broadcast %cst_5 : f32 to vector<16x256xf32>
    %7 = arith.maximumf %5, %6 : vector<16x256xf32>
    %8 = arith.truncf %7 : vector<16x256xf32> to vector<16x256xbf16>
    %c0_6 = arith.constant 0 : index
    %c0_7 = arith.constant 0 : index
    %9 = vector.load %arg4[%c0_6, %c0_7] : memref<256x1152xbf16, #tpu.memory_space<vmem>>, vector<256x1152xbf16>
    %cst_8 = arith.constant dense<0.000000e+00> : vector<16x1152xf32>
    %10 = tpu.matmul %8, %9, %cst_8 {dimension_numbers = #tpu.dot_dimension_numbers<[1], [0], [0], [1], [0, 0, 1, 1], [], []>} : vector<16x256xbf16>, vector<256x1152xbf16>, vector<16x1152xf32> -> vector<16x1152xf32>
    %c0_9 = arith.constant 0 : index
    %c0_10 = arith.constant 0 : index
    %11 = vector.load %arg5[%c0_9, %c0_10] : memref<1x1152xf32, #tpu.memory_space<vmem>>, vector<1x1152xf32>
    %12 = vector.broadcast %11 : vector<1x1152xf32> to vector<16x1152xf32>
    %13 = arith.addf %10, %12 : vector<16x1152xf32>
    %14 = vector.extract_strided_slice %13 {offsets = [0, 0], sizes = [16, 4], strides = [1, 1]} : vector<16x1152xf32> to vector<16x4xf32>
    %cst_11 = arith.constant dense<0xFF800000> : vector<16xf32>
    %15 = vector.multi_reduction <maximumf>, %14, %cst_11 [1] : vector<16x4xf32> to vector<16xf32>
    %16 = vector.shape_cast %15 : vector<16xf32> to vector<16x1xf32>
    %17 = vector.broadcast %16 : vector<16x1xf32> to vector<16x4xf32>
    %18 = arith.subf %14, %17 : vector<16x4xf32>
    %19 = math.exp %18 : vector<16x4xf32>
    %cst_12 = arith.constant dense<0.000000e+00> : vector<16xf32>
    %20 = vector.multi_reduction <add>, %19, %cst_12 [1] : vector<16x4xf32> to vector<16xf32>
    %21 = vector.shape_cast %20 : vector<16xf32> to vector<16x1xf32>
    %22 = vector.broadcast %21 : vector<16x1xf32> to vector<16x4xf32>
    %23 = arith.divf %19, %22 : vector<16x4xf32>
    %24 = vector.extract_strided_slice %23 {offsets = [0, 0], sizes = [16, 1], strides = [1, 1]} : vector<16x4xf32> to vector<16x1xf32>
    %25 = vector.extract_strided_slice %13 {offsets = [0, 128], sizes = [16, 256], strides = [1, 1]} : vector<16x1152xf32> to vector<16x256xf32>
    %26 = vector.broadcast %24 : vector<16x1xf32> to vector<16x256xf32>
    %27 = arith.mulf %26, %25 : vector<16x256xf32>
    %28 = vector.extract_strided_slice %23 {offsets = [0, 1], sizes = [16, 1], strides = [1, 1]} : vector<16x4xf32> to vector<16x1xf32>
    %29 = vector.extract_strided_slice %13 {offsets = [0, 384], sizes = [16, 256], strides = [1, 1]} : vector<16x1152xf32> to vector<16x256xf32>
    %30 = vector.broadcast %28 : vector<16x1xf32> to vector<16x256xf32>
    %31 = arith.mulf %30, %29 : vector<16x256xf32>
    %32 = arith.addf %27, %31 : vector<16x256xf32>
    %33 = vector.extract_strided_slice %23 {offsets = [0, 2], sizes = [16, 1], strides = [1, 1]} : vector<16x4xf32> to vector<16x1xf32>
    %34 = vector.extract_strided_slice %13 {offsets = [0, 640], sizes = [16, 256], strides = [1, 1]} : vector<16x1152xf32> to vector<16x256xf32>
    %35 = vector.broadcast %33 : vector<16x1xf32> to vector<16x256xf32>
    %36 = arith.mulf %35, %34 : vector<16x256xf32>
    %37 = arith.addf %32, %36 : vector<16x256xf32>
    %38 = vector.extract_strided_slice %23 {offsets = [0, 3], sizes = [16, 1], strides = [1, 1]} : vector<16x4xf32> to vector<16x1xf32>
    %39 = vector.extract_strided_slice %13 {offsets = [0, 896], sizes = [16, 256], strides = [1, 1]} : vector<16x1152xf32> to vector<16x256xf32>
    %40 = vector.broadcast %38 : vector<16x1xf32> to vector<16x256xf32>
    %41 = arith.mulf %40, %39 : vector<16x256xf32>
    %42 = arith.addf %37, %41 : vector<16x256xf32>
    %43 = arith.truncf %42 : vector<16x256xf32> to vector<16x256xbf16>
    %c0_13 = arith.constant 0 : index
    %c0_14 = arith.constant 0 : index
    %44 = vector.load %arg6[%c0_13, %c0_14] : memref<256x10xbf16, #tpu.memory_space<vmem>>, vector<256x10xbf16>
    %cst_15 = arith.constant dense<0.000000e+00> : vector<16x10xf32>
    %45 = tpu.matmul %43, %44, %cst_15 {dimension_numbers = #tpu.dot_dimension_numbers<[1], [0], [0], [1], [0, 0, 1, 1], [], []>} : vector<16x256xbf16>, vector<256x10xbf16>, vector<16x10xf32> -> vector<16x10xf32>
    %c0_16 = arith.constant 0 : index
    %c0_17 = arith.constant 0 : index
    %46 = vector.load %arg7[%c0_16, %c0_17] : memref<1x10xf32, #tpu.memory_space<vmem>>, vector<1x10xf32>
    %47 = vector.broadcast %46 : vector<1x10xf32> to vector<16x10xf32>
    %48 = arith.addf %45, %47 : vector<16x10xf32>
    %c0_18 = arith.constant 0 : index
    %c0_19 = arith.constant 0 : index
    %49 = vector.load %arg8[%c0_18, %c0_19] : memref<16x10xf32, #tpu.memory_space<vmem>>, vector<16x10xf32>
    tpu.vector_store %arg8[%c0_18, %c0_19], %48 {strides = array<i32>} : memref<16x10xf32, #tpu.memory_space<vmem>>, vector<16x10xf32>,
    return
  }
  func.func @transform_0(%arg0: i32) -> (i32, i32) {
    %c0_i32 = arith.constant 0 : i32
    %c0_i32_0 = arith.constant 0 : i32
    return %arg0, %c0_i32 : i32, i32
  }
  func.func @transform_1(%arg0: i32) -> (i32, i32) {
    %c0_i32 = arith.constant 0 : i32
    %c0_i32_0 = arith.constant 0 : i32
    %c0_i32_1 = arith.constant 0 : i32
    return %c0_i32, %c0_i32_0 : i32, i32
  }
  func.func @transform_2(%arg0: i32) -> (i32, i32) {
    %c0_i32 = arith.constant 0 : i32
    %c0_i32_0 = arith.constant 0 : i32
    %c0_i32_1 = arith.constant 0 : i32
    return %c0_i32, %c0_i32_0 : i32, i32
  }
  func.func @transform_3(%arg0: i32) -> (i32, i32) {
    %c0_i32 = arith.constant 0 : i32
    %c0_i32_0 = arith.constant 0 : i32
    %c0_i32_1 = arith.constant 0 : i32
    return %c0_i32, %c0_i32_0 : i32, i32
  }
  func.func @transform_4(%arg0: i32) -> (i32, i32) {
    %c0_i32 = arith.constant 0 : i32
    %c0_i32_0 = arith.constant 0 : i32
    %c0_i32_1 = arith.constant 0 : i32
    return %c0_i32, %c0_i32_0 : i32, i32
  }
  func.func @transform_5(%arg0: i32) -> (i32, i32) {
    %c0_i32 = arith.constant 0 : i32
    %c0_i32_0 = arith.constant 0 : i32
    %c0_i32_1 = arith.constant 0 : i32
    return %c0_i32, %c0_i32_0 : i32, i32
  }
  func.func @transform_6(%arg0: i32) -> (i32, i32) {
    %c0_i32 = arith.constant 0 : i32
    %c0_i32_0 = arith.constant 0 : i32
    %c0_i32_1 = arith.constant 0 : i32
    return %c0_i32, %c0_i32_0 : i32, i32
  }
  func.func @transform_7(%arg0: i32) -> (i32, i32) {
    %c0_i32 = arith.constant 0 : i32
    %c0_i32_0 = arith.constant 0 : i32
    return %arg0, %c0_i32 : i32, i32
  }
}

</mosaic_0001>

<llo_original>
// kernel: pikv_moe_forward.3
$region0: #{pikv_moe_forward.3}
  #allocation0 [shape = 'u32[]', space=smem, size = 0x4, offset = 0x4, fixed_abs, tag = 'smem constant byte address 0x4 - core index']
  #allocation1 [shape = 'u32[72,128]{1,0:T(1,128)}', space=vmem, size = 0x9000, scoped, tag = 'internal scratch']
  %s0 = inlined_call_operand.vmem [shape: bf16[128,64], index: 0, kind: input, shape index: {}]
  %s1 = inlined_call_operand.hbm [shape: bf16[64,512], index: 1, kind: input, shape index: {}]
  %s2 = inlined_call_operand.hbm [shape: f32[1,128], index: 2, kind: input, shape index: {}]
  %s3 = inlined_call_operand.vmem [shape: bf16[128,128], index: 3, kind: output, shape index: {}]
  %s4 = sld [smem:[#allocation0]]
  $region53: #{pikv_moe_forward.3} parent=0
    _
  %s6 = ssub.s32 1, %s4
  %s7 = scalar_select 0, %s6, %s4
  $region1: #{pikv_moe_forward.3} parent=0
    #allocation2 [shape = 'u8[65536]{0}', space=vmem, size = 0x10000, scoped, tag = 'input window, operand 1, single buffered']
    #allocation3 [shape = 's32[2]{0}', space=sflag, size = 0x8, scoped, tag = 'scoped memory for pikv_moe_forward.3']
    #allocation4 [shape = 'u8[512]{0}', space=vmem, size = 0x400, scoped, tag = 'input window, operand 2, single buffered']
    #allocation5 [shape = 's32[1]{0}', space=sflag, size = 0x4, scoped, tag = 'scoped memory for pikv_moe_forward.3']
    %8 = vsyncpa [#allocation3], 0
    %9 = vsyncpa [#allocation5], 0
    loop: start=0, step=1, limit=4
    $region2: #{pikv_moe_forward.3} parent=1 // loop_pre_header
      _
    $region3: #{pikv_moe_forward.3} parent=1 // loop_header
      %s11 = sphi 0, %s15
      %p12 = scmp.ge.s32.totalorder %s11, 4
      %s21 = sphi 0, %s23
      %s24 = sphi 0, %s21
      %s25 = sphi 0, %s24
      %s41 = sphi 0, %s25
      %s45 = sphi 0, %s45
      %s47 = sphi 0, %s45
      %s48 = sphi 0, %s47
      %s62 = sphi 0, %s48
      %s66 = sphi 0, %s66
      %s68 = sphi 0, %s66
      %s69 = sphi 0, %s68
      %s83 = sphi 0, %s69
      %s89 = sphi 0, %s91
      %s92 = sphi 0, %s89
      %s93 = sphi 0, %s92
      %s109 = sphi 0, %s93
    $region4: #{pikv_moe_forward.3} parent=1 // loop_header_branch
      %14 = sbr.rel (%p12) target = $region8
    $region5: #{pikv_moe_forward.3} parent=1 // loop_body
      %s16 = ssub.s32 %s11, 1
      %s17 = ssub.s32 %s11, 2
      %s18 = sadd.s32 %s11, 1
      %s19 = ssub.s32 %s11, %s18
      %p20 = scmp.eq.s32.totalorder %s19, 0
      %s22 = sadd.s32 %s21, 1
      %s23 = scalar_select %p20, %s21, %s22
      %p26 = pneg %p20
      %p27 = scmp.eq.s32.totalorder %s11, 1
      %p28 = por %p26, %p27
      %p29 = scmp.ne.s32.totalorder %s21, %s24
      %p30 = scmp.eq.s32.totalorder %s11, 0
      %p31 = por %p29, %p30
      %p32 = scmp.ne.s32.totalorder %s21, %s24
      %p33 = scmp.eq.s32.totalorder %s16, 1
      %p34 = por %p32, %p33
      %p35 = scmp.ne.s32.totalorder %s24, %s25
      %p36 = scmp.eq.s32.totalorder %s16, 0
      %p37 = por %p35, %p36
      %p38 = scmp.ne.s32.totalorder %s24, %s25
      %p39 = scmp.eq.s32.totalorder %s17, 1
      %p40 = por %p38, %p39
      %p42 = scmp.ne.s32.totalorder %s25, %s41
      %p43 = scmp.eq.s32.totalorder %s17, 0
      %p44 = por %p42, %p43
      %s46 = sadd.s32 %s45, 1
      %p49 = scmp.eq.s32.totalorder %s11, 1
      %p50 = scmp.ne.s32.totalorder %s45, %s47
      %p51 = scmp.eq.s32.totalorder %s11, 0
      %p52 = por %p50, %p51
      %p53 = scmp.ne.s32.totalorder %s45, %s47
      %p54 = scmp.eq.s32.totalorder %s16, 1
      %p55 = por %p53, %p54
      %p56 = scmp.ne.s32.totalorder %s47, %s48
      %p57 = scmp.eq.s32.totalorder %s16, 0
      %p58 = por %p56, %p57
      %p59 = scmp.ne.s32.totalorder %s47, %s48
      %p60 = scmp.eq.s32.totalorder %s17, 1
      %p61 = por %p59, %p60
      %p63 = scmp.ne.s32.totalorder %s48, %s62
      %p64 = scmp.eq.s32.totalorder %s17, 0
      %p65 = por %p63, %p64
      %s67 = sadd.s32 %s66, 1
      %p70 = scmp.eq.s32.totalorder %s11, 1
      %p71 = scmp.ne.s32.totalorder %s66, %s68
      %p72 = scmp.eq.s32.totalorder %s11, 0
      %p73 = por %p71, %p72
      %p74 = scmp.ne.s32.totalorder %s66, %s68
      %p75 = scmp.eq.s32.totalorder %s16, 1
      %p76 = por %p74, %p75
      %p77 = scmp.ne.s32.totalorder %s68, %s69
      %p78 = scmp.eq.s32.totalorder %s16, 0
      %p79 = por %p77, %p78
      %p80 = scmp.ne.s32.totalorder %s68, %s69
      %p81 = scmp.eq.s32.totalorder %s17, 1
      %p82 = por %p80, %p81
      %p84 = scmp.ne.s32.totalorder %s69, %s83
      %p85 = scmp.eq.s32.totalorder %s17, 0
      %p86 = por %p84, %p85
      %s87 = ssub.s32 %s11, %s18
      %p88 = scmp.eq.s32.totalorder %s87, 0
      %s90 = sadd.s32 %s89, 1
      %s91 = scalar_select %p88, %s89, %s90
      %p94 = pneg %p88
      %p95 = scmp.eq.s32.totalorder %s11, 1
      %p96 = por %p94, %p95
      %p97 = scmp.ne.s32.totalorder %s89, %s92
      %p98 = scmp.eq.s32.totalorder %s11, 0
      %p99 = por %p97, %p98
      %p100 = scmp.ne.s32.totalorder %s89, %s92
      %p101 = scmp.eq.s32.totalorder %s16, 1
      %p102 = por %p100, %p101
      %p103 = scmp.ne.s32.totalorder %s92, %s93
      %p104 = scmp.eq.s32.totalorder %s16, 0
      %p105 = por %p103, %p104
      %p106 = scmp.ne.s32.totalorder %s92, %s93
      %p107 = scmp.eq.s32.totalorder %s17, 1
      %p108 = por %p106, %p107
      %p110 = scmp.ne.s32.totalorder %s93, %s109
      %p111 = scmp.eq.s32.totalorder %s17, 0
      %p112 = por %p110, %p111
      %p113 = scmp.le.s32.totalorder 1, %s11
      %p114 = scmp.lt.s32.totalorder %s11, 3
      %p115 = pnand %p113, %p114
      %p116 = pneg %p115
      // Predicated region
      $region9: #{pikv_moe_forward.3} parent=5 // pred_check
        _
      $region10: #{pikv_moe_forward.3} parent=5 // pred_check_branch
        %118 = sbr.rel (%p115) target = $region12
      $region11: #{pikv_moe_forward.3} parent=5 // pred_region
        %s119 = ssub.s32 %s11, 1
        // Predicated region
        $region13: #{pikv_moe_forward.3} parent=11 // pred_check
          %p120 = pneg %p58
        $region14: #{pikv_moe_forward.3} parent=11 // pred_check_branch
          %122 = sbr.rel (%p120) target = $region16
        $region15: #{pikv_moe_forward.3} parent=11 // pred_region
          %124 = vsyncadd [#allocation3], 0
          %s125 = sshll.u32 %s1, 4
          %s126 = int_to_ptr.hbm [resolvable:$true] %s125
          %s127 = sshll.u32 [#allocation2], 4
          %s128 = int_to_ptr.vmem [resolvable:$true] %s127
          %133 = dma.hbm_to_vmem [thread:$0]  %s126, 2048, %s128, [#allocation3], 256, 256, 16
        $region16: #{pikv_moe_forward.3} parent=11 // pred_fallthru
          _
        // Predicated region
        $region17: #{pikv_moe_forward.3} parent=11 // pred_check
          %p134 = pneg %p79
        $region18: #{pikv_moe_forward.3} parent=11 // pred_check_branch
          %136 = sbr.rel (%p134) target = $region20
        $region19: #{pikv_moe_forward.3} parent=11 // pred_region
          %138 = vsyncadd [#allocation5], 0
          %s140 = sshll.u32 %s2, 4
          %s141 = int_to_ptr.hbm [resolvable:$true] %s140
          %s142 = sshll.u32 [#allocation4], 4
          %s143 = int_to_ptr.vmem [resolvable:$true] %s142
          %145 = dma.hbm_to_vmem [thread:$0]  %s141, 16, %s143, [#allocation5]
        $region20: #{pikv_moe_forward.3} parent=11 // pred_fallthru
          _
      $region12: #{pikv_moe_forward.3} parent=5 // pred_fallthru
        _
      %p146 = scmp.lt.s32.totalorder %s11, 2
      // Predicated region
      $region21: #{pikv_moe_forward.3} parent=5 // pred_check
        %p147 = pneg %p146
      $region22: #{pikv_moe_forward.3} parent=5 // pred_check_branch
        %149 = sbr.rel (%p147) target = $region24
      $region23: #{pikv_moe_forward.3} parent=5 // pred_region
        // Predicated region
        $region25: #{pikv_moe_forward.3} parent=23 // pred_check
          %p150 = pneg %p31
        $region26: #{pikv_moe_forward.3} parent=23 // pred_check_branch
          %152 = sbr.rel (%p150) target = $region28
        $region27: #{pikv_moe_forward.3} parent=23 // pred_region
          %s153 = smul.u32 8, %s11
          %p154 = scmp.lt.s32.totalorder %s153, 15
          %s155 = scalar_select %p154, %s153, 15
          %s156 = smul.addr %s155, 4
          %s157 = scalar_lea.vmem %s0, %s156
          %s158 = smul.u32 8, %s11
        $region28: #{pikv_moe_forward.3} parent=23 // pred_fallthru
          _
      $region24: #{pikv_moe_forward.3} parent=5 // pred_fallthru
        _
      %p159 = scmp.le.s32.totalorder 1, %s11
      %p160 = scmp.lt.s32.totalorder %s11, 3
      %p161 = pnand %p159, %p160
      %p162 = pneg %p161
      // Predicated region
      $region29: #{pikv_moe_forward.3} parent=5 // pred_check
        _
      $region30: #{pikv_moe_forward.3} parent=5 // pred_check_branch
        %164 = sbr.rel (%p161) target = $region32
      $region31: #{pikv_moe_forward.3} parent=5 // pred_region
        %s165 = ssub.s32 %s11, 1
        // Predicated region
        $region33: #{pikv_moe_forward.3} parent=31 // pred_check
          %p166 = pneg %p58
        $region34: #{pikv_moe_forward.3} parent=31 // pred_check_branch
          %168 = sbr.rel (%p166) target = $region36
        $region35: #{pikv_moe_forward.3} parent=31 // pred_region
          %170 = dma.done [#allocation3], 2048
        $region36: #{pikv_moe_forward.3} parent=31 // pred_fallthru
          _
        // Predicated region
        $region37: #{pikv_moe_forward.3} parent=31 // pred_check
          %p171 = pneg %p79
        $region38: #{pikv_moe_forward.3} parent=31 // pred_check_branch
          %173 = sbr.rel (%p171) target = $region40
        $region39: #{pikv_moe_forward.3} parent=31 // pred_region
          %175 = dma.done [#allocation5], 16
        $region40: #{pikv_moe_forward.3} parent=31 // pred_fallthru
          _
        %s176 = smul.u32 8, %s16
        %p177 = scmp.lt.s32.totalorder %s176, 15
        %s178 = scalar_select %p177, %s176, 15
        %s179 = smul.addr %s178, 4
        %s180 = scalar_lea.vmem %s0, %s179
        %p181 = pneg %p37
        %p182 = pneg %p34
        %p183 = pneg %p58
        %p184 = pneg %p55
        %p185 = pneg %p79
        %p186 = pneg %p76
        %p187 = pneg %p105
        %p188 = pneg %p102
        %s189 = smul.u32 8, %s16
        %p190 = scmp.lt.s32.totalorder %s189, 15
        %s191 = scalar_select %p190, %s189, 15
        %s192 = smul.addr %s191, 4
        %s193 = scalar_lea.vmem %s3, %s192
        %s194 = smul.u32 8, %s16
        %p195 = scmp.lt.s32.totalorder %s194, 15
        %s196 = scalar_select %p195, %s194, 15
        %s197 = smul.addr %s196, 4
        %s198 = scalar_lea.vmem %s0, %s197
        %s199 = smul.u32 8, %s16
        %s200 = smul.u32 8, %s16
        %p201 = scmp.lt.s32.totalorder %s200, 15
        %s202 = scalar_select %p201, %s200, 15
        %s203 = smul.addr %s202, 4
        %s204 = scalar_lea.vmem %s3, %s203
        %s205 = smul.u32 8, %s16
        %v207 = vld [vmem:[%s198] sm:$0xf]
        %v208 = vld [vmem:[%s198 + $0x4] sm:$0xf]
        %v209 = vld [vmem:[%s198 + $0x8] sm:$0xf]
        %v210 = vld [vmem:[%s198 + $0xc] sm:$0xf]
        %v211 = vld [vmem:[%s198 + $0x10] sm:$0xf]
        %v212 = vld [vmem:[%s198 + $0x14] sm:$0xf]
        %v213 = vld [vmem:[%s198 + $0x18] sm:$0xf]
        %v214 = vld [vmem:[%s198 + $0x1c] sm:$0xf]
        %v215 = vld [vmem:[#allocation2] sm:$0xff]
        %v216 = vld [vmem:[#allocation2 + $0x8] sm:$0xff]
        %v217 = vld [vmem:[#allocation2 + $0x10] sm:$0xff]
        %v218 = vld [vmem:[#allocation2 + $0x18] sm:$0xff]
        %v219 = vld [vmem:[#allocation2 + $0x20] sm:$0xff]
        %v220 = vld [vmem:[#allocation2 + $0x28] sm:$0xff]
        %v221 = vld [vmem:[#allocation2 + $0x30] sm:$0xff]
        %v222 = vld [vmem:[#allocation2 + $0x38] sm:$0xff]
        %v223 = vld [vmem:[#allocation2 + $0x40] sm:$0xff]
        %v224 = vld [vmem:[#allocation2 + $0x48] sm:$0xff]
        %v225 = vld [vmem:[#allocation2 + $0x50] sm:$0xff]
        %v226 = vld [vmem:[#allocation2 + $0x58] sm:$0xff]
        %v227 = vld [vmem:[#allocation2 + $0x60] sm:$0xff]
        %v228 = vld [vmem:[#allocation2 + $0x68] sm:$0xff]
        %v229 = vld [vmem:[#allocation2 + $0x70] sm:$0xff]
        %v230 = vld [vmem:[#allocation2 + $0x78] sm:$0xff]
        %v239 = vunpack.c.l.b16 %v207
        %v240 = vunpack.c.l.b16 %v208
        %v241 = vunpack.c.l.b16 %v209
        %v242 = vunpack.c.l.b16 %v210
        %v243 = vunpack.c.l.b16 %v211
        %v244 = vunpack.c.l.b16 %v212
        %v245 = vunpack.c.l.b16 %v213
        %v246 = vunpack.c.l.b16 %v214
        %v247 = vpack.c.b16 %v240, %v239
        %v248 = vpack.c.b16 %v242, %v241
        %v249 = vpack.c.b16 %v244, %v243
        %v250 = vpack.c.b16 %v246, %v245
        %v267 = vunpack.c.l.b16 %v215
        %v268 = vunpack.c.h.b16 %v215
        %v269 = vunpack.c.l.b16 %v216
        %v270 = vunpack.c.h.b16 %v216
        %v271 = vunpack.c.l.b16 %v217
        %v272 = vunpack.c.h.b16 %v217
        %v273 = vunpack.c.l.b16 %v218
        %v274 = vunpack.c.h.b16 %v218
        %v275 = vunpack.c.l.b16 %v219
        %v276 = vunpack.c.h.b16 %v219
        %v277 = vunpack.c.l.b16 %v220
        %v278 = vunpack.c.h.b16 %v220
        %v279 = vunpack.c.l.b16 %v221
        %v280 = vunpack.c.h.b16 %v221
        %v281 = vunpack.c.l.b16 %v222
        %v282 = vunpack.c.h.b16 %v222
        %v283 = vunpack.c.l.b16 %v223
        %v284 = vunpack.c.h.b16 %v223
        %v285 = vunpack.c.l.b16 %v224
        %v286 = vunpack.c.h.b16 %v224
        %v287 = vunpack.c.l.b16 %v225
        %v288 = vunpack.c.h.b16 %v225
        %v289 = vunpack.c.l.b16 %v226
        %v290 = vunpack.c.h.b16 %v226
        %v291 = vunpack.c.l.b16 %v227
        %v292 = vunpack.c.h.b16 %v227
        %v293 = vunpack.c.l.b16 %v228
        %v294 = vunpack.c.h.b16 %v228
        %v295 = vunpack.c.l.b16 %v229
        %v296 = vunpack.c.h.b16 %v229
        %v297 = vunpack.c.l.b16 %v230
        %v298 = vunpack.c.h.b16 %v230
        %v299 = vpack.c.b16 %v271, %v267
        %v300 = vpack.c.b16 %v272, %v268
        %v301 = vpack.c.b16 %v273, %v269
        %v302 = vpack.c.b16 %v274, %v270
        %v303 = vpack.c.b16 %v279, %v275
        %v304 = vpack.c.b16 %v280, %v276
        %v305 = vpack.c.b16 %v281, %v277
        %v306 = vpack.c.b16 %v282, %v278
        %v307 = vpack.c.b16 %v287, %v283
        %v308 = vpack.c.b16 %v288, %v284
        %v309 = vpack.c.b16 %v289, %v285
        %v310 = vpack.c.b16 %v290, %v286
        %v311 = vpack.c.b16 %v295, %v291
        %v312 = vpack.c.b16 %v296, %v292
        %v313 = vpack.c.b16 %v297, %v293
        %v314 = vpack.c.b16 %v298, %v294
        %vm331 = vcmask 523264
        %v333 = vsel %vm331, %v247, 0
        %v336 = vsel %vm331, %v248, 0
        %v339 = vsel %vm331, %v249, 0
        %v342 = vsel %vm331, %v250, 0
        %344 = vmatpush.bf16.msra.mxu0 0
        %345 = vmatpush.bf16.msra.mxu0 0
        %346 = vmatpush.bf16.msra.mxu0 0
        %347 = vmatpush.bf16.msra.mxu0 0
        %348 = vmatpush.bf16.msra.mxu0 %v311
        %349 = vmatpush.bf16.msra.mxu0 %v307
        %350 = vmatpush.bf16.msra.mxu0 %v303
        %351 = vmatpush.bf16.msra.mxu0 %v299
        %352 = vmatmul.bf16.gmra.mxu0 %v333
        %v353 = vpop.f32.mrf.mxu0
        %v354 = vadd.f32 0.0, %v353
        %v355 = vpop.f32.mrf.mxu0
        %v356 = vadd.f32 0.0, %v355
        %357 = vmatmul.bf16.gmra.mxu0 %v336
        %v358 = vpop.f32.mrf.mxu0
        %v359 = vadd.f32 0.0, %v358
        %v360 = vpop.f32.mrf.mxu0
        %v361 = vadd.f32 0.0, %v360
        %362 = vmatmul.bf16.gmra.mxu0 %v339
        %v363 = vpop.f32.mrf.mxu0
        %v364 = vadd.f32 0.0, %v363
        %v365 = vpop.f32.mrf.mxu0
        %v366 = vadd.f32 0.0, %v365
        %367 = vmatmul.bf16.gmra.mxu0 %v342
        %v368 = vpop.f32.mrf.mxu0
        %v369 = vadd.f32 0.0, %v368
        %v370 = vpop.f32.mrf.mxu0
        %v371 = vadd.f32 0.0, %v370
        %372 = vdwg.mxu0
        %373 = vmatpush.bf16.msra.mxu0 0
        %374 = vmatpush.bf16.msra.mxu0 0
        %375 = vmatpush.bf16.msra.mxu0 0
        %376 = vmatpush.bf16.msra.mxu0 0
        %377 = vmatpush.bf16.msra.mxu0 %v312
        %378 = vmatpush.bf16.msra.mxu0 %v308
        %379 = vmatpush.bf16.msra.mxu0 %v304
        %380 = vmatpush.bf16.msra.mxu0 %v300
        %381 = vmatmul.bf16.gmra.mxu0 %v333
        %v382 = vpop.f32.mrf.mxu0
        %v383 = vadd.f32 0.0, %v382
        %v384 = vpop.f32.mrf.mxu0
        %v385 = vadd.f32 0.0, %v384
        %386 = vmatmul.bf16.gmra.mxu0 %v336
        %v387 = vpop.f32.mrf.mxu0
        %v388 = vadd.f32 0.0, %v387
        %v389 = vpop.f32.mrf.mxu0
        %v390 = vadd.f32 0.0, %v389
        %391 = vmatmul.bf16.gmra.mxu0 %v339
        %v392 = vpop.f32.mrf.mxu0
        %v393 = vadd.f32 0.0, %v392
        %v394 = vpop.f32.mrf.mxu0
        %v395 = vadd.f32 0.0, %v394
        %396 = vmatmul.bf16.gmra.mxu0 %v342
        %v397 = vpop.f32.mrf.mxu0
        %v398 = vadd.f32 0.0, %v397
        %v399 = vpop.f32.mrf.mxu0
        %v400 = vadd.f32 0.0, %v399
        %401 = vdwg.mxu0
        %402 = vmatpush.bf16.msra.mxu0 0
        %403 = vmatpush.bf16.msra.mxu0 0
        %404 = vmatpush.bf16.msra.mxu0 0
        %405 = vmatpush.bf16.msra.mxu0 0
        %406 = vmatpush.bf16.msra.mxu0 %v313
        %407 = vmatpush.bf16.msra.mxu0 %v309
        %408 = vmatpush.bf16.msra.mxu0 %v305
        %409 = vmatpush.bf16.msra.mxu0 %v301
        %410 = vmatmul.bf16.gmra.mxu0 %v333
        %v411 = vpop.f32.mrf.mxu0
        %v412 = vadd.f32 0.0, %v411
        %v413 = vpop.f32.mrf.mxu0
        %v414 = vadd.f32 0.0, %v413
        %415 = vmatmul.bf16.gmra.mxu0 %v336
        %v416 = vpop.f32.mrf.mxu0
        %v417 = vadd.f32 0.0, %v416
        %v418 = vpop.f32.mrf.mxu0
        %v419 = vadd.f32 0.0, %v418
        %420 = vmatmul.bf16.gmra.mxu0 %v339
        %v421 = vpop.f32.mrf.mxu0
        %v422 = vadd.f32 0.0, %v421
        %v423 = vpop.f32.mrf.mxu0
        %v424 = vadd.f32 0.0, %v423
        %425 = vmatmul.bf16.gmra.mxu0 %v342
        %v426 = vpop.f32.mrf.mxu0
        %v427 = vadd.f32 0.0, %v426
        %v428 = vpop.f32.mrf.mxu0
        %v429 = vadd.f32 0.0, %v428
        %430 = vdwg.mxu0
        %431 = vmatpush.bf16.msra.mxu0 0
        %432 = vmatpush.bf16.msra.mxu0 0
        %433 = vmatpush.bf16.msra.mxu0 0
        %434 = vmatpush.bf16.msra.mxu0 0
        %435 = vmatpush.bf16.msra.mxu0 %v314
        %436 = vmatpush.bf16.msra.mxu0 %v310
        %437 = vmatpush.bf16.msra.mxu0 %v306
        %438 = vmatpush.bf16.msra.mxu0 %v302
        %439 = vmatmul.bf16.gmra.mxu0 %v333
        %v440 = vpop.f32.mrf.mxu0
        %v441 = vadd.f32 0.0, %v440
        %v442 = vpop.f32.mrf.mxu0
        %v443 = vadd.f32 0.0, %v442
        %444 = vmatmul.bf16.gmra.mxu0 %v336
        %v445 = vpop.f32.mrf.mxu0
        %v446 = vadd.f32 0.0, %v445
        %v447 = vpop.f32.mrf.mxu0
        %v448 = vadd.f32 0.0, %v447
        %449 = vmatmul.bf16.gmra.mxu0 %v339
        %v450 = vpop.f32.mrf.mxu0
        %v451 = vadd.f32 0.0, %v450
        %v452 = vpop.f32.mrf.mxu0
        %v453 = vadd.f32 0.0, %v452
        %454 = vmatmul.bf16.gmra.mxu0 %v342
        %v455 = vpop.f32.mrf.mxu0
        %v456 = vadd.f32 0.0, %v455
        %v457 = vpop.f32.mrf.mxu0
        %v458 = vadd.f32 0.0, %v457
        %459 = vdwg.mxu0
        %v460 = vmax.f32 %v354, %v383
        %v461 = vmax.f32 %v356, %v385
        %v462 = vmax.f32 %v359, %v388
        %v463 = vmax.f32 %v361, %v390
        %v464 = vmax.f32 %v364, %v393
        %v465 = vmax.f32 %v366, %v395
        %v466 = vmax.f32 %v369, %v398
        %v467 = vmax.f32 %v371, %v400
        %v468 = vmax.f32 %v412, %v441
        %v469 = vmax.f32 %v414, %v443
        %v470 = vmax.f32 %v417, %v446
        %v471 = vmax.f32 %v419, %v448
        %v472 = vmax.f32 %v422, %v451
        %v473 = vmax.f32 %v424, %v453
        %v474 = vmax.f32 %v427, %v456
        %v475 = vmax.f32 %v429, %v458
        %v476 = vmax.f32 %v460, %v468
        %v477 = vmax.f32 %v461, %v469
        %v478 = vmax.f32 %v462, %v470
        %v479 = vmax.f32 %v463, %v471
        %v480 = vmax.f32 %v464, %v472
        %v481 = vmax.f32 %v465, %v473
        %v482 = vmax.f32 %v466, %v474
        %v483 = vmax.f32 %v467, %v475
        %v484 = vld [vmem:[#allocation4] sm:$0x1]
        %v486 = vperm.slane %v484, 0
        %v488 = vadd.f32 %v476, %v486
        %v489 = vadd.f32 %v477, %v486
        %v490 = vadd.f32 %v478, %v486
        %v491 = vadd.f32 %v479, %v486
        %v492 = vadd.f32 %v480, %v486
        %v493 = vadd.f32 %v481, %v486
        %v494 = vadd.f32 %v482, %v486
        %v495 = vadd.f32 %v483, %v486
        %v496 = vmax.f32 %v488, 0.0
        %v497 = vmax.f32 %v489, 0.0
        %v498 = vmax.f32 %v490, 0.0
        %v499 = vmax.f32 %v491, 0.0
        %v500 = vmax.f32 %v492, 0.0
        %v501 = vmax.f32 %v493, 0.0
        %v502 = vmax.f32 %v494, 0.0
        %v503 = vmax.f32 %v495, 0.0
        %v504 = vpack.c.bf16 %v496, %v496
        %v505 = vpack.c.bf16 %v497, %v497
        %v506 = vpack.c.bf16 %v498, %v498
        %v507 = vpack.c.bf16 %v499, %v499
        %v508 = vpack.c.bf16 %v500, %v500
        %v509 = vpack.c.bf16 %v501, %v501
        %v510 = vpack.c.bf16 %v502, %v502
        %v511 = vpack.c.bf16 %v503, %v503
        %512 = vst [vmem:[%s204] sm:$0xf] %v504
        %513 = vst [vmem:[%s204 + $0x4] sm:$0xf] %v505
        %514 = vst [vmem:[%s204 + $0x8] sm:$0xf] %v506
        %515 = vst [vmem:[%s204 + $0xc] sm:$0xf] %v507
        %516 = vst [vmem:[%s204 + $0x10] sm:$0xf] %v508
        %517 = vst [vmem:[%s204 + $0x14] sm:$0xf] %v509
        %518 = vst [vmem:[%s204 + $0x18] sm:$0xf] %v510
        %519 = vst [vmem:[%s204 + $0x1c] sm:$0xf] %v511
        %s520 = smul.u32 8, %s16
        %p521 = scmp.lt.s32.totalorder %s520, 15
        %s522 = scalar_select %p521, %s520, 15
        %s523 = smul.addr %s522, 4
        %s524 = scalar_lea.vmem %s3, %s523
        // Predicated region
        $region41: #{pikv_moe_forward.3} parent=31 // pred_check
          %p525 = pneg %p102
        $region42: #{pikv_moe_forward.3} parent=31 // pred_check_branch
          %527 = sbr.rel (%p525) target = $region44
        $region43: #{pikv_moe_forward.3} parent=31 // pred_region
          %s528 = smul.u32 8, %s16
        $region44: #{pikv_moe_forward.3} parent=31 // pred_fallthru
          _
      $region32: #{pikv_moe_forward.3} parent=5 // pred_fallthru
        _
      %p529 = scmp.le.s32.totalorder 2, %s11
      // Predicated region
      $region45: #{pikv_moe_forward.3} parent=5 // pred_check
        %p530 = pneg %p529
      $region46: #{pikv_moe_forward.3} parent=5 // pred_check_branch
        %532 = sbr.rel (%p530) target = $region48
      $region47: #{pikv_moe_forward.3} parent=5 // pred_region
        %s533 = ssub.s32 %s11, 2
        // Predicated region
        $region49: #{pikv_moe_forward.3} parent=47 // pred_check
          %p534 = pneg %p108
        $region50: #{pikv_moe_forward.3} parent=47 // pred_check_branch
          %536 = sbr.rel (%p534) target = $region52
        $region51: #{pikv_moe_forward.3} parent=47 // pred_region
          %s537 = smul.u32 8, %s17
          %p538 = scmp.lt.s32.totalorder %s537, 15
          %s539 = scalar_select %p538, %s537, 15
          %s540 = smul.addr %s539, 4
          %s541 = scalar_lea.vmem %s3, %s540
        $region52: #{pikv_moe_forward.3} parent=47 // pred_fallthru
          _
      $region48: #{pikv_moe_forward.3} parent=5 // pred_fallthru
        _
    $region6: #{pikv_moe_forward.3} parent=1 // loop_footer
      %s15 = sadd.s32 1, %s11
    $region7: #{pikv_moe_forward.3} parent=1 // loop_footer_branch
      %10 = sbr.rel target = $region3
    $region8: #{pikv_moe_forward.3} parent=1 // loop_exit
      _
    %542 = vsyncpa [#allocation3], 1
    %s543 = scalar_lea.sflag [#allocation3], 1
    %544 = vsyncpa %s543, 1
    %545 = vsyncpa [#allocation5], 1

// kernel: pikv_moe_forward.4
$region0: #{pikv_moe_forward.4}
  #allocation0 [shape = 'u32[]', space=smem, size = 0x4, offset = 0x4, fixed_abs, tag = 'smem constant byte address 0x4 - core index']
  #allocation1 [shape = 'u32[72,128]{1,0:T(1,128)}', space=vmem, size = 0x9000, scoped, tag = 'internal scratch']
  %s0 = inlined_call_operand.vmem [shape: bf16[64,1024], index: 0, kind: input, shape index: {}]
  %s1 = inlined_call_operand.vmem [shape: bf16[1024,512], index: 1, kind: input, shape index: {}]
  %s2 = inlined_call_operand.vmem [shape: f32[1,128], index: 2, kind: input, shape index: {}]
  %s3 = inlined_call_operand.vmem [shape: bf16[64,128], index: 3, kind: output, shape index: {}]
  %s4 = sld [smem:[#allocation0]]
  $region45: #{pikv_moe_forward.4} parent=0
    _
  %s6 = ssub.s32 1, %s4
  %s7 = scalar_select 0, %s6, %s4
  loop: start=0, step=1, limit=4
  $region2: #{pikv_moe_forward.4} parent=0 // loop_pre_header
    _
  $region3: #{pikv_moe_forward.4} parent=0 // loop_header
    %s9 = sphi 0, %s13
    %p10 = scmp.ge.s32.totalorder %s9, 4
    %s19 = sphi 0, %s21
    %s22 = sphi 0, %s19
    %s23 = sphi 0, %s22
    %s39 = sphi 0, %s23
    %s43 = sphi 0, %s43
    %s45 = sphi 0, %s43
    %s46 = sphi 0, %s45
    %s60 = sphi 0, %s46
    %s64 = sphi 0, %s64
    %s66 = sphi 0, %s64
    %s67 = sphi 0, %s66
    %s81 = sphi 0, %s67
    %s87 = sphi 0, %s89
    %s90 = sphi 0, %s87
    %s91 = sphi 0, %s90
    %s107 = sphi 0, %s91
  $region4: #{pikv_moe_forward.4} parent=0 // loop_header_branch
    %12 = sbr.rel (%p10) target = $region8
  $region5: #{pikv_moe_forward.4} parent=0 // loop_body
    %s14 = ssub.s32 %s9, 1
    %s15 = ssub.s32 %s9, 2
    %s16 = sadd.s32 %s9, 1
    %s17 = ssub.s32 %s9, %s16
    %p18 = scmp.eq.s32.totalorder %s17, 0
    %s20 = sadd.s32 %s19, 1
    %s21 = scalar_select %p18, %s19, %s20
    %p24 = pneg %p18
    %p25 = scmp.eq.s32.totalorder %s9, 1
    %p26 = por %p24, %p25
    %p27 = scmp.ne.s32.totalorder %s19, %s22
    %p28 = scmp.eq.s32.totalorder %s9, 0
    %p29 = por %p27, %p28
    %p30 = scmp.ne.s32.totalorder %s19, %s22
    %p31 = scmp.eq.s32.totalorder %s14, 1
    %p32 = por %p30, %p31
    %p33 = scmp.ne.s32.totalorder %s22, %s23
    %p34 = scmp.eq.s32.totalorder %s14, 0
    %p35 = por %p33, %p34
    %p36 = scmp.ne.s32.totalorder %s22, %s23
    %p37 = scmp.eq.s32.totalorder %s15, 1
    %p38 = por %p36, %p37
    %p40 = scmp.ne.s32.totalorder %s23, %s39
    %p41 = scmp.eq.s32.totalorder %s15, 0
    %p42 = por %p40, %p41
    %s44 = sadd.s32 %s43, 1
    %p47 = scmp.eq.s32.totalorder %s9, 1
    %p48 = scmp.ne.s32.totalorder %s43, %s45
    %p49 = scmp.eq.s32.totalorder %s9, 0
    %p50 = por %p48, %p49
    %p51 = scmp.ne.s32.totalorder %s43, %s45
    %p52 = scmp.eq.s32.totalorder %s14, 1
    %p53 = por %p51, %p52
    %p54 = scmp.ne.s32.totalorder %s45, %s46
    %p55 = scmp.eq.s32.totalorder %s14, 0
    %p56 = por %p54, %p55
    %p57 = scmp.ne.s32.totalorder %s45, %s46
    %p58 = scmp.eq.s32.totalorder %s15, 1
    %p59 = por %p57, %p58
    %p61 = scmp.ne.s32.totalorder %s46, %s60
    %p62 = scmp.eq.s32.totalorder %s15, 0
    %p63 = por %p61, %p62
    %s65 = sadd.s32 %s64, 1
    %p68 = scmp.eq.s32.totalorder %s9, 1
    %p69 = scmp.ne.s32.totalorder %s64, %s66
    %p70 = scmp.eq.s32.totalorder %s9, 0
    %p71 = por %p69, %p70
    %p72 = scmp.ne.s32.totalorder %s64, %s66
    %p73 = scmp.eq.s32.totalorder %s14, 1
    %p74 = por %p72, %p73
    %p75 = scmp.ne.s32.totalorder %s66, %s67
    %p76 = scmp.eq.s32.totalorder %s14, 0
    %p77 = por %p75, %p76
    %p78 = scmp.ne.s32.totalorder %s66, %s67
    %p79 = scmp.eq.s32.totalorder %s15, 1
    %p80 = por %p78, %p79
    %p82 = scmp.ne.s32.totalorder %s67, %s81
    %p83 = scmp.eq.s32.totalorder %s15, 0
    %p84 = por %p82, %p83
    %s85 = ssub.s32 %s9, %s16
    %p86 = scmp.eq.s32.totalorder %s85, 0
    %s88 = sadd.s32 %s87, 1
    %s89 = scalar_select %p86, %s87, %s88
    %p92 = pneg %p86
    %p93 = scmp.eq.s32.totalorder %s9, 1
    %p94 = por %p92, %p93
    %p95 = scmp.ne.s32.totalorder %s87, %s90
    %p96 = scmp.eq.s32.totalorder %s9, 0
    %p97 = por %p95, %p96
    %p98 = scmp.ne.s32.totalorder %s87, %s90
    %p99 = scmp.eq.s32.totalorder %s14, 1
    %p100 = por %p98, %p99
    %p101 = scmp.ne.s32.totalorder %s90, %s91
    %p102 = scmp.eq.s32.totalorder %s14, 0
    %p103 = por %p101, %p102
    %p104 = scmp.ne.s32.totalorder %s90, %s91
    %p105 = scmp.eq.s32.totalorder %s15, 1
    %p106 = por %p104, %p105
    %p108 = scmp.ne.s32.totalorder %s91, %s107
    %p109 = scmp.eq.s32.totalorder %s15, 0
    %p110 = por %p108, %p109
    %p111 = scmp.le.s32.totalorder 1, %s9
    %p112 = scmp.lt.s32.totalorder %s9, 3
    %p113 = pnand %p111, %p112
    %p114 = pneg %p113
    // Predicated region
    $region9: #{pikv_moe_forward.4} parent=5 // pred_check
      _
    $region10: #{pikv_moe_forward.4} parent=5 // pred_check_branch
      %116 = sbr.rel (%p113) target = $region12
    $region11: #{pikv_moe_forward.4} parent=5 // pred_region
      %s117 = ssub.s32 %s9, 1
      // Predicated region
      $region13: #{pikv_moe_forward.4} parent=11 // pred_check
        %p118 = pneg %p56
      $region14: #{pikv_moe_forward.4} parent=11 // pred_check_branch
        %120 = sbr.rel (%p118) target = $region16
      $region15: #{pikv_moe_forward.4} parent=11 // pred_region
        _
      $region16: #{pikv_moe_forward.4} parent=11 // pred_fallthru
        _
      // Predicated region
      $region17: #{pikv_moe_forward.4} parent=11 // pred_check
        %p121 = pneg %p77
      $region18: #{pikv_moe_forward.4} parent=11 // pred_check_branch
        %123 = sbr.rel (%p121) target = $region20
      $region19: #{pikv_moe_forward.4} parent=11 // pred_region
        _
      $region20: #{pikv_moe_forward.4} parent=11 // pred_fallthru
        _
    $region12: #{pikv_moe_forward.4} parent=5 // pred_fallthru
      _
    %p124 = scmp.lt.s32.totalorder %s9, 2
    // Predicated region
    $region21: #{pikv_moe_forward.4} parent=5 // pred_check
      %p125 = pneg %p124
    $region22: #{pikv_moe_forward.4} parent=5 // pred_check_branch
      %127 = sbr.rel (%p125) target = $region24
    $region23: #{pikv_moe_forward.4} parent=5 // pred_region
      // Predicated region
      $region25: #{pikv_moe_forward.4} parent=23 // pred_check
        %p128 = pneg %p29
      $region26: #{pikv_moe_forward.4} parent=23 // pred_check_branch
        %130 = sbr.rel (%p128) target = $region28
      $region27: #{pikv_moe_forward.4} parent=23 // pred_region
        %s131 = smul.u32 4, %s9
        %p132 = scmp.lt.s32.totalorder %s131, 7
        %s133 = scalar_select %p132, %s131, 7
        %s134 = smul.addr %s133, 8
        %s135 = smul.addr %s134, 4
        %s136 = scalar_lea.vmem %s0, %s135
        %s137 = smul.u32 4, %s9
      $region28: #{pikv_moe_forward.4} parent=23 // pred_fallthru
        _
    $region24: #{pikv_moe_forward.4} parent=5 // pred_fallthru
      _
    %p138 = scmp.le.s32.totalorder 1, %s9
    %p139 = scmp.lt.s32.totalorder %s9, 3
    %p140 = pnand %p138, %p139
    %p141 = pneg %p140
    // Predicated region
    $region29: #{pikv_moe_forward.4} parent=5 // pred_check
      _
    $region30: #{pikv_moe_forward.4} parent=5 // pred_check_branch
      %143 = sbr.rel (%p140) target = $region32
    $region31: #{pikv_moe_forward.4} parent=5 // pred_region
      %s144 = ssub.s32 %s9, 1
      %s145 = smul.u32 4, %s14
      %p146 = scmp.lt.s32.totalorder %s145, 7
      %s147 = scalar_select %p146, %s145, 7
      %s148 = smul.addr %s147, 8
      %s149 = smul.addr %s148, 4
      %s150 = scalar_lea.vmem %s0, %s149
      %p151 = pneg %p35
      %p152 = pneg %p32
      %p153 = pneg %p56
      %p154 = pneg %p53
      %p155 = pneg %p77
      %p156 = pneg %p74
      %p157 = pneg %p103
      %p158 = pneg %p100
      %s159 = smul.u32 4, %s14
      %p160 = scmp.lt.s32.totalorder %s159, 7
      %s161 = scalar_select %p160, %s159, 7
      %s162 = smul.addr %s161, 4
      %s163 = scalar_lea.vmem %s3, %s162
      %s164 = smul.u32 4, %s14
      %p165 = scmp.lt.s32.totalorder %s164, 7
      %s166 = scalar_select %p165, %s164, 7
      %s167 = smul.addr %s166, 8
      %s168 = smul.addr %s167, 4
      %s169 = scalar_lea.vmem %s0, %s168
      %s170 = smul.u32 4, %s14
      %s171 = smul.u32 4, %s14
      %p172 = scmp.lt.s32.totalorder %s171, 7
      %s173 = scalar_select %p172, %s171, 7
      %s174 = smul.addr %s173, 4
      %s175 = scalar_lea.vmem %s3, %s174
      %s176 = smul.u32 4, %s14
      %v177 = vld [vmem:[%s169] sm:$0xff]
      %v178 = vld [vmem:[%s169 + $0x8] sm:$0xff]
      %v179 = vld [vmem:[%s169 + $0x10] sm:$0xff]
      %v180 = vld [vmem:[%s169 + $0x18] sm:$0xff]
      %v181 = vld [vmem:[%s169 + $0x20] sm:$0xff]
      %v182 = vld [vmem:[%s169 + $0x28] sm:$0xff]
      %v183 = vld [vmem:[%s169 + $0x30] sm:$0xff]
      %v184 = vld [vmem:[%s169 + $0x38] sm:$0xff]
      %v185 = vld [vmem:[%s169 + $0x40] sm:$0xff]
      %v186 = vld [vmem:[%s169 + $0x48] sm:$0xff]
      %v187 = vld [vmem:[%s169 + $0x50] sm:$0xff]
      %v188 = vld [vmem:[%s169 + $0x58] sm:$0xff]
      %v189 = vld [vmem:[%s169 + $0x60] sm:$0xff]
      %v190 = vld [vmem:[%s169 + $0x68] sm:$0xff]
      %v191 = vld [vmem:[%s169 + $0x70] sm:$0xff]
      %v192 = vld [vmem:[%s169 + $0x78] sm:$0xff]
      %v193 = vld [vmem:[%s1] sm:$0xff]
      %v194 = vld [vmem:[%s1 + $0x8] sm:$0xff]
      %v195 = vld [vmem:[%s1 + $0x10] sm:$0xff]
      %v196 = vld [vmem:[%s1 + $0x18] sm:$0xff]
      %v197 = vld [vmem:[%s1 + $0x20] sm:$0xff]
      %v198 = vld [vmem:[%s1 + $0x28] sm:$0xff]
      %v199 = vld [vmem:[%s1 + $0x30] sm:$0xff]
      %v200 = vld [vmem:[%s1 + $0x38] sm:$0xff]
      %v201 = vld [vmem:[%s1 + $0x40] sm:$0xff]
      %v202 = vld [vmem:[%s1 + $0x48] sm:$0xff]
      %v203 = vld [vmem:[%s1 + $0x50] sm:$0xff]
      %v204 = vld [vmem:[%s1 + $0x58] sm:$0xff]
      %v205 = vld [vmem:[%s1 + $0x60] sm:$0xff]
      %v206 = vld [vmem:[%s1 + $0x68] sm:$0xff]
      %v207 = vld [vmem:[%s1 + $0x70] sm:$0xff]
      %v208 = vld [vmem:[%s1 + $0x78] sm:$0xff]
      %v209 = vld [vmem:[%s1 + $0x80] sm:$0xff]
      %v210 = vld [vmem:[%s1 + $0x88] sm:$0xff]
      %v211 = vld [vmem:[%s1 + $0x90] sm:$0xff]
      %v212 = vld [vmem:[%s1 + $0x98] sm:$0xff]
      %v213 = vld [vmem:[%s1 + $0xa0] sm:$0xff]
      %v214 = vld [vmem:[%s1 + $0xa8] sm:$0xff]
      %v215 = vld [vmem:[%s1 + $0xb0] sm:$0xff]
      %v216 = vld [vmem:[%s1 + $0xb8] sm:$0xff]
      %v217 = vld [vmem:[%s1 + $0xc0] sm:$0xff]
      %v218 = vld [vmem:[%s1 + $0xc8] sm:$0xff]
      %v219 = vld [vmem:[%s1 + $0xd0] sm:$0xff]
      %v220 = vld [vmem:[%s1 + $0xd8] sm:$0xff]
      %v221 = vld [vmem:[%s1 + $0xe0] sm:$0xff]
      %v222 = vld [vmem:[%s1 + $0xe8] sm:$0xff]
      %v223 = vld [vmem:[%s1 + $0xf0] sm:$0xff]
      %v224 = vld [vmem:[%s1 + $0xf8] sm:$0xff]
      %v225 = vld [vmem:[%s1 + $0x100] sm:$0xff]
      %v226 = vld [vmem:[%s1 + $0x108] sm:$0xff]
      %v227 = vld [vmem:[%s1 + $0x110] sm:$0xff]
      %v228 = vld [vmem:[%s1 + $0x118] sm:$0xff]
      %v229 = vld [vmem:[%s1 + $0x120] sm:$0xff]
      %v230 = vld [vmem:[%s1 + $0x128] sm:$0xff]
      %v231 = vld [vmem:[%s1 + $0x130] sm:$0xff]
      %v232 = vld [vmem:[%s1 + $0x138] sm:$0xff]
      %v233 = vld [vmem:[%s1 + $0x140] sm:$0xff]
      %v234 = vld [vmem:[%s1 + $0x148] sm:$0xff]
      %v235 = vld [vmem:[%s1 + $0x150] sm:$0xff]
      %v236 = vld [vmem:[%s1 + $0x158] sm:$0xff]
      %v237 = vld [vmem:[%s1 + $0x160] sm:$0xff]
      %v238 = vld [vmem:[%s1 + $0x168] sm:$0xff]
      %v239 = vld [vmem:[%s1 + $0x170] sm:$0xff]
      %v240 = vld [vmem:[%s1 + $0x178] sm:$0xff]
      %v241 = vld [vmem:[%s1 + $0x180] sm:$0xff]
      %v242 = vld [vmem:[%s1 + $0x188] sm:$0xff]
      %v243 = vld [vmem:[%s1 + $0x190] sm:$0xff]
      %v244 = vld [vmem:[%s1 + $0x198] sm:$0xff]
      %v245 = vld [vmem:[%s1 + $0x1a0] sm:$0xff]
      %v246 = vld [vmem:[%s1 + $0x1a8] sm:$0xff]
      %v247 = vld [vmem:[%s1 + $0x1b0] sm:$0xff]
      %v248 = vld [vmem:[%s1 + $0x1b8] sm:$0xff]
      %v249 = vld [vmem:[%s1 + $0x1c0] sm:$0xff]
      %v250 = vld [vmem:[%s1 + $0x1c8] sm:$0xff]
      %v251 = vld [vmem:[%s1 + $0x1d0] sm:$0xff]
      %v252 = vld [vmem:[%s1 + $0x1d8] sm:$0xff]
      %v253 = vld [vmem:[%s1 + $0x1e0] sm:$0xff]
      %v254 = vld [vmem:[%s1 + $0x1e8] sm:$0xff]
      %v255 = vld [vmem:[%s1 + $0x1f0] sm:$0xff]
      %v256 = vld [vmem:[%s1 + $0x1f8] sm:$0xff]
      %v257 = vld [vmem:[%s1 + $0x200] sm:$0xff]
      %v258 = vld [vmem:[%s1 + $0x208] sm:$0xff]
      %v259 = vld [vmem:[%s1 + $0x210] sm:$0xff]
      %v260 = vld [vmem:[%s1 + $0x218] sm:$0xff]
      %v261 = vld [vmem:[%s1 + $0x220] sm:$0xff]
      %v262 = vld [vmem:[%s1 + $0x228] sm:$0xff]
      %v263 = vld [vmem:[%s1 + $0x230] sm:$0xff]
      %v264 = vld [vmem:[%s1 + $0x238] sm:$0xff]
      %v265 = vld [vmem:[%s1 + $0x240] sm:$0xff]
      %v266 = vld [vmem:[%s1 + $0x248] sm:$0xff]
      %v267 = vld [vmem:[%s1 + $0x250] sm:$0xff]
      %v268 = vld [vmem:[%s1 + $0x258] sm:$0xff]
      %v269 = vld [vmem:[%s1 + $0x260] sm:$0xff]
      %v270 = vld [vmem:[%s1 + $0x268] sm:$0xff]
      %v271 = vld [vmem:[%s1 + $0x270] sm:$0xff]
      %v272 = vld [vmem:[%s1 + $0x278] sm:$0xff]
      %v273 = vld [vmem:[%s1 + $0x280] sm:$0xff]
      %v274 = vld [vmem:[%s1 + $0x288] sm:$0xff]
      %v275 = vld [vmem:[%s1 + $0x290] sm:$0xff]
      %v276 = vld [vmem:[%s1 + $0x298] sm:$0xff]
      %v277 = vld [vmem:[%s1 + $0x2a0] sm:$0xff]
      %v278 = vld [vmem:[%s1 + $0x2a8] sm:$0xff]
      %v279 = vld [vmem:[%s1 + $0x2b0] sm:$0xff]
      %v280 = vld [vmem:[%s1 + $0x2b8] sm:$0xff]
      %v281 = vld [vmem:[%s1 + $0x2c0] sm:$0xff]
      %v282 = vld [vmem:[%s1 + $0x2c8] sm:$0xff]
      %v283 = vld [vmem:[%s1 + $0x2d0] sm:$0xff]
      %v284 = vld [vmem:[%s1 + $0x2d8] sm:$0xff]
      %v285 = vld [vmem:[%s1 + $0x2e0] sm:$0xff]
      %v286 = vld [vmem:[%s1 + $0x2e8] sm:$0xff]
      %v287 = vld [vmem:[%s1 + $0x2f0] sm:$0xff]
      %v288 = vld [vmem:[%s1 + $0x2f8] sm:$0xff]
      %v289 = vld [vmem:[%s1 + $0x300] sm:$0xff]
      %v290 = vld [vmem:[%s1 + $0x308] sm:$0xff]
      %v291 = vld [vmem:[%s1 + $0x310] sm:$0xff]
      %v292 = vld [vmem:[%s1 + $0x318] sm:$0xff]
      %v293 = vld [vmem:[%s1 + $0x320] sm:$0xff]
      %v294 = vld [vmem:[%s1 + $0x328] sm:$0xff]
      %v295 = vld [vmem:[%s1 + $0x330] sm:$0xff]
      %v296 = vld [vmem:[%s1 + $0x338] sm:$0xff]
      %v297 = vld [vmem:[%s1 + $0x340] sm:$0xff]
      %v298 = vld [vmem:[%s1 + $0x348] sm:$0xff]
      %v299 = vld [vmem:[%s1 + $0x350] sm:$0xff]
      %v300 = vld [vmem:[%s1 + $0x358] sm:$0xff]
      %v301 = vld [vmem:[%s1 + $0x360] sm:$0xff]
      %v302 = vld [vmem:[%s1 + $0x368] sm:$0xff]
      %v303 = vld [vmem:[%s1 + $0x370] sm:$0xff]
      %v304 = vld [vmem:[%s1 + $0x378] sm:$0xff]
      %v305 = vld [vmem:[%s1 + $0x380] sm:$0xff]
      %v306 = vld [vmem:[%s1 + $0x388] sm:$0xff]
      %v307 = vld [vmem:[%s1 + $0x390] sm:$0xff]
      %v308 = vld [vmem:[%s1 + $0x398] sm:$0xff]
      %v309 = vld [vmem:[%s1 + $0x3a0] sm:$0xff]
      %v310 = vld [vmem:[%s1 + $0x3a8] sm:$0xff]
      %v311 = vld [vmem:[%s1 + $0x3b0] sm:$0xff]
      %v312 = vld [vmem:[%s1 + $0x3b8] sm:$0xff]
      %v313 = vld [vmem:[%s1 + $0x3c0] sm:$0xff]
      %v314 = vld [vmem:[%s1 + $0x3c8] sm:$0xff]
      %v315 = vld [vmem:[%s1 + $0x3d0] sm:$0xff]
      %v316 = vld [vmem:[%s1 + $0x3d8] sm:$0xff]
      %v317 = vld [vmem:[%s1 + $0x3e0] sm:$0xff]
      %v318 = vld [vmem:[%s1 + $0x3e8] sm:$0xff]
      %v319 = vld [vmem:[%s1 + $0x3f0] sm:$0xff]
      %v320 = vld [vmem:[%s1 + $0x3f8] sm:$0xff]
      %v321 = vld [vmem:[%s1 + $0x400] sm:$0xff]
      %v322 = vld [vmem:[%s1 + $0x408] sm:$0xff]
      %v323 = vld [vmem:[%s1 + $0x410] sm:$0xff]
      %v324 = vld [vmem:[%s1 + $0x418] sm:$0xff]
      %v325 = vld [vmem:[%s1 + $0x420] sm:$0xff]
      %v326 = vld [vmem:[%s1 + $0x428] sm:$0xff]
      %v327 = vld [vmem:[%s1 + $0x430] sm:$0xff]
      %v328 = vld [vmem:[%s1 + $0x438] sm:$0xff]
      %v329 = vld [vmem:[%s1 + $0x440] sm:$0xff]
      %v330 = vld [vmem:[%s1 + $0x448] sm:$0xff]
      %v331 = vld [vmem:[%s1 + $0x450] sm:$0xff]
      %v332 = vld [vmem:[%s1 + $0x458] sm:$0xff]
      %v333 = vld [vmem:[%s1 + $0x460] sm:$0xff]
      %v334 = vld [vmem:[%s1 + $0x468] sm:$0xff]
      %v335 = vld [vmem:[%s1 + $0x470] sm:$0xff]
      %v336 = vld [vmem:[%s1 + $0x478] sm:$0xff]
      %v337 = vld [vmem:[%s1 + $0x480] sm:$0xff]
      %v338 = vld [vmem:[%s1 + $0x488] sm:$0xff]
      %v339 = vld [vmem:[%s1 + $0x490] sm:$0xff]
      %v340 = vld [vmem:[%s1 + $0x498] sm:$0xff]
      %v341 = vld [vmem:[%s1 + $0x4a0] sm:$0xff]
      %v342 = vld [vmem:[%s1 + $0x4a8] sm:$0xff]
      %v343 = vld [vmem:[%s1 + $0x4b0] sm:$0xff]
      %v344 = vld [vmem:[%s1 + $0x4b8] sm:$0xff]
      %v345 = vld [vmem:[%s1 + $0x4c0] sm:$0xff]
      %v346 = vld [vmem:[%s1 + $0x4c8] sm:$0xff]
      %v347 = vld [vmem:[%s1 + $0x4d0] sm:$0xff]
      %v348 = vld [vmem:[%s1 + $0x4d8] sm:$0xff]
      %v349 = vld [vmem:[%s1 + $0x4e0] sm:$0xff]
      %v350 = vld [vmem:[%s1 + $0x4e8] sm:$0xff]
      %v351 = vld [vmem:[%s1 + $0x4f0] sm:$0xff]
      %v352 = vld [vmem:[%s1 + $0x4f8] sm:$0xff]
      %v353 = vld [vmem:[%s1 + $0x500] sm:$0xff]
      %v354 = vld [vmem:[%s1 + $0x508] sm:$0xff]
      %v355 = vld [vmem:[%s1 + $0x510] sm:$0xff]
      %v356 = vld [vmem:[%s1 + $0x518] sm:$0xff]
      %v357 = vld [vmem:[%s1 + $0x520] sm:$0xff]
      %v358 = vld [vmem:[%s1 + $0x528] sm:$0xff]
      %v359 = vld [vmem:[%s1 + $0x530] sm:$0xff]
      %v360 = vld [vmem:[%s1 + $0x538] sm:$0xff]
      %v361 = vld [vmem:[%s1 + $0x540] sm:$0xff]
      %v362 = vld [vmem:[%s1 + $0x548] sm:$0xff]
      %v363 = vld [vmem:[%s1 + $0x550] sm:$0xff]
      %v364 = vld [vmem:[%s1 + $0x558] sm:$0xff]
      %v365 = vld [vmem:[%s1 + $0x560] sm:$0xff]
      %v366 = vld [vmem:[%s1 + $0x568] sm:$0xff]
      %v367 = vld [vmem:[%s1 + $0x570] sm:$0xff]
      %v368 = vld [vmem:[%s1 + $0x578] sm:$0xff]
      %v369 = vld [vmem:[%s1 + $0x580] sm:$0xff]
      %v370 = vld [vmem:[%s1 + $0x588] sm:$0xff]
      %v371 = vld [vmem:[%s1 + $0x590] sm:$0xff]
      %v372 = vld [vmem:[%s1 + $0x598] sm:$0xff]
      %v373 = vld [vmem:[%s1 + $0x5a0] sm:$0xff]
      %v374 = vld [vmem:[%s1 + $0x5a8] sm:$0xff]
      %v375 = vld [vmem:[%s1 + $0x5b0] sm:$0xff]
      %v376 = vld [vmem:[%s1 + $0x5b8] sm:$0xff]
      %v377 = vld [vmem:[%s1 + $0x5c0] sm:$0xff]
      %v378 = vld [vmem:[%s1 + $0x5c8] sm:$0xff]
      %v379 = vld [vmem:[%s1 + $0x5d0] sm:$0xff]
      %v380 = vld [vmem:[%s1 + $0x5d8] sm:$0xff]
      %v381 = vld [vmem:[%s1 + $0x5e0] sm:$0xff]
      %v382 = vld [vmem:[%s1 + $0x5e8] sm:$0xff]
      %v383 = vld [vmem:[%s1 + $0x5f0] sm:$0xff]
      %v384 = vld [vmem:[%s1 + $0x5f8] sm:$0xff]
      %v385 = vld [vmem:[%s1 + $0x600] sm:$0xff]
      %v386 = vld [vmem:[%s1 + $0x608] sm:$0xff]
      %v387 = vld [vmem:[%s1 + $0x610] sm:$0xff]
      %v388 = vld [vmem:[%s1 + $0x618] sm:$0xff]
      %v389 = vld [vmem:[%s1 + $0x620] sm:$0xff]
      %v390 = vld [vmem:[%s1 + $0x628] sm:$0xff]
      %v391 = vld [vmem:[%s1 + $0x630] sm:$0xff]
      %v392 = vld [vmem:[%s1 + $0x638] sm:$0xff]
      %v393 = vld [vmem:[%s1 + $0x640] sm:$0xff]
      %v394 = vld [vmem:[%s1 + $0x648] sm:$0xff]
      %v395 = vld [vmem:[%s1 + $0x650] sm:$0xff]
      %v396 = vld [vmem:[%s1 + $0x658] sm:$0xff]
      %v397 = vld [vmem:[%s1 + $0x660] sm:$0xff]
      %v398 = vld [vmem:[%s1 + $0x668] sm:$0xff]
      %v399 = vld [vmem:[%s1 + $0x670] sm:$0xff]
      %v400 = vld [vmem:[%s1 + $0x678] sm:$0xff]
      %v401 = vld [vmem:[%s1 + $0x680] sm:$0xff]
      %v402 = vld [vmem:[%s1 + $0x688] sm:$0xff]
      %v403 = vld [vmem:[%s1 + $0x690] sm:$0xff]
      %v404 = vld [vmem:[%s1 + $0x698] sm:$0xff]
      %v405 = vld [vmem:[%s1 + $0x6a0] sm:$0xff]
      %v406 = vld [vmem:[%s1 + $0x6a8] sm:$0xff]
      %v407 = vld [vmem:[%s1 + $0x6b0] sm:$0xff]
      %v408 = vld [vmem:[%s1 + $0x6b8] sm:$0xff]
      %v409 = vld [vmem:[%s1 + $0x6c0] sm:$0xff]
      %v410 = vld [vmem:[%s1 + $0x6c8] sm:$0xff]
      %v411 = vld [vmem:[%s1 + $0x6d0] sm:$0xff]
      %v412 = vld [vmem:[%s1 + $0x6d8] sm:$0xff]
      %v413 = vld [vmem:[%s1 + $0x6e0] sm:$0xff]
      %v414 = vld [vmem:[%s1 + $0x6e8] sm:$0xff]
      %v415 = vld [vmem:[%s1 + $0x6f0] sm:$0xff]
      %v416 = vld [vmem:[%s1 + $0x6f8] sm:$0xff]
      %v417 = vld [vmem:[%s1 + $0x700] sm:$0xff]
      %v418 = vld [vmem:[%s1 + $0x708] sm:$0xff]
      %v419 = vld [vmem:[%s1 + $0x710] sm:$0xff]
      %v420 = vld [vmem:[%s1 + $0x718] sm:$0xff]
      %v421 = vld [vmem:[%s1 + $0x720] sm:$0xff]
      %v422 = vld [vmem:[%s1 + $0x728] sm:$0xff]
      %v423 = vld [vmem:[%s1 + $0x730] sm:$0xff]
      %v424 = vld [vmem:[%s1 + $0x738] sm:$0xff]
      %v425 = vld [vmem:[%s1 + $0x740] sm:$0xff]
      %v426 = vld [vmem:[%s1 + $0x748] sm:$0xff]
      %v427 = vld [vmem:[%s1 + $0x750] sm:$0xff]
      %v428 = vld [vmem:[%s1 + $0x758] sm:$0xff]
      %v429 = vld [vmem:[%s1 + $0x760] sm:$0xff]
      %v430 = vld [vmem:[%s1 + $0x768] sm:$0xff]
      %v431 = vld [vmem:[%s1 + $0x770] sm:$0xff]
      %v432 = vld [vmem:[%s1 + $0x778] sm:$0xff]
      %v433 = vld [vmem:[%s1 + $0x780] sm:$0xff]
      %v434 = vld [vmem:[%s1 + $0x788] sm:$0xff]
      %v435 = vld [vmem:[%s1 + $0x790] sm:$0xff]
      %v436 = vld [vmem:[%s1 + $0x798] sm:$0xff]
      %v437 = vld [vmem:[%s1 + $0x7a0] sm:$0xff]
      %v438 = vld [vmem:[%s1 + $0x7a8] sm:$0xff]
      %v439 = vld [vmem:[%s1 + $0x7b0] sm:$0xff]
      %v440 = vld [vmem:[%s1 + $0x7b8] sm:$0xff]
      %v441 = vld [vmem:[%s1 + $0x7c0] sm:$0xff]
      %v442 = vld [vmem:[%s1 + $0x7c8] sm:$0xff]
      %v443 = vld [vmem:[%s1 + $0x7d0] sm:$0xff]
      %v444 = vld [vmem:[%s1 + $0x7d8] sm:$0xff]
      %v445 = vld [vmem:[%s1 + $0x7e0] sm:$0xff]
      %v446 = vld [vmem:[%s1 + $0x7e8] sm:$0xff]
      %v447 = vld [vmem:[%s1 + $0x7f0] sm:$0xff]
      %v448 = vld [vmem:[%s1 + $0x7f8] sm:$0xff]
      %v465 = vunpack.c.l.b16 %v177
      %v466 = vunpack.c.h.b16 %v177
      %v467 = vunpack.c.l.b16 %v178
      %v468 = vunpack.c.h.b16 %v178
      %v469 = vunpack.c.l.b16 %v179
      %v470 = vunpack.c.h.b16 %v179
      %v471 = vunpack.c.l.b16 %v180
      %v472 = vunpack.c.h.b16 %v180
      %v473 = vunpack.c.l.b16 %v181
      %v474 = vunpack.c.h.b16 %v181
      %v475 = vunpack.c.l.b16 %v182
      %v476 = vunpack.c.h.b16 %v182
      %v477 = vunpack.c.l.b16 %v183
      %v478 = vunpack.c.h.b16 %v183
      %v479 = vunpack.c.l.b16 %v184
      %v480 = vunpack.c.h.b16 %v184
      %v481 = vunpack.c.l.b16 %v185
      %v482 = vunpack.c.h.b16 %v185
      %v483 = vunpack.c.l.b16 %v186
      %v484 = vunpack.c.h.b16 %v186
      %v485 = vunpack.c.l.b16 %v187
      %v486 = vunpack.c.h.b16 %v187
      %v487 = vunpack.c.l.b16 %v188
      %v488 = vunpack.c.h.b16 %v188
      %v489 = vunpack.c.l.b16 %v189
      %v490 = vunpack.c.h.b16 %v189
      %v491 = vunpack.c.l.b16 %v190
      %v492 = vunpack.c.h.b16 %v190
      %v493 = vunpack.c.l.b16 %v191
      %v494 = vunpack.c.h.b16 %v191
      %v495 = vunpack.c.l.b16 %v192
      %v496 = vunpack.c.h.b16 %v192
      %v497 = vpack.c.b16 %v473, %v465
      %v498 = vpack.c.b16 %v474, %v466
      %v499 = vpack.c.b16 %v475, %v467
      %v500 = vpack.c.b16 %v476, %v468
      %v501 = vpack.c.b16 %v477, %v469
      %v502 = vpack.c.b16 %v478, %v470
      %v503 = vpack.c.b16 %v479, %v471
      %v504 = vpack.c.b16 %v480, %v472
      %v505 = vpack.c.b16 %v489, %v481
      %v506 = vpack.c.b16 %v490, %v482
      %v507 = vpack.c.b16 %v491, %v483
      %v508 = vpack.c.b16 %v492, %v484
      %v509 = vpack.c.b16 %v493, %v485
      %v510 = vpack.c.b16 %v494, %v486
      %v511 = vpack.c.b16 %v495, %v487
      %v512 = vpack.c.b16 %v496, %v488
      %v785 = vunpack.c.l.b16 %v193
      %v786 = vunpack.c.h.b16 %v193
      %v787 = vunpack.c.l.b16 %v194
      %v788 = vunpack.c.h.b16 %v194
      %v789 = vunpack.c.l.b16 %v195
      %v790 = vunpack.c.h.b16 %v195
      %v791 = vunpack.c.l.b16 %v196
      %v792 = vunpack.c.h.b16 %v196
      %v793 = vunpack.c.l.b16 %v197
      %v794 = vunpack.c.h.b16 %v197
      %v795 = vunpack.c.l.b16 %v198
      %v796 = vunpack.c.h.b16 %v198
      %v797 = vunpack.c.l.b16 %v199
      %v798 = vunpack.c.h.b16 %v199
      %v799 = vunpack.c.l.b16 %v200
      %v800 = vunpack.c.h.b16 %v200
      %v801 = vunpack.c.l.b16 %v201
      %v802 = vunpack.c.h.b16 %v201
      %v803 = vunpack.c.l.b16 %v202
      %v804 = vunpack.c.h.b16 %v202
      %v805 = vunpack.c.l.b16 %v203
      %v806 = vunpack.c.h.b16 %v203
      %v807 = vunpack.c.l.b16 %v204
      %v808 = vunpack.c.h.b16 %v204
      %v809 = vunpack.c.l.b16 %v205
      %v810 = vunpack.c.h.b16 %v205
      %v811 = vunpack.c.l.b16 %v206
      %v812 = vunpack.c.h.b16 %v206
      %v813 = vunpack.c.l.b16 %v207
      %v814 = vunpack.c.h.b16 %v207
      %v815 = vunpack.c.l.b16 %v208
      %v816 = vunpack.c.h.b16 %v208
      %v817 = vunpack.c.l.b16 %v209
      %v818 = vunpack.c.h.b16 %v209
      %v819 = vunpack.c.l.b16 %v210
      %v820 = vunpack.c.h.b16 %v210
      %v821 = vunpack.c.l.b16 %v211
      %v822 = vunpack.c.h.b16 %v211
      %v823 = vunpack.c.l.b16 %v212
      %v824 = vunpack.c.h.b16 %v212
      %v825 = vunpack.c.l.b16 %v213
      %v826 = vunpack.c.h.b16 %v213
      %v827 = vunpack.c.l.b16 %v214
      %v828 = vunpack.c.h.b16 %v214
      %v829 = vunpack.c.l.b16 %v215
      %v830 = vunpack.c.h.b16 %v215
      %v831 = vunpack.c.l.b16 %v216
      %v832 = vunpack.c.h.b16 %v216
      %v833 = vunpack.c.l.b16 %v217
      %v834 = vunpack.c.h.b16 %v217
      %v835 = vunpack.c.l.b16 %v218
      %v836 = vunpack.c.h.b16 %v218
      %v837 = vunpack.c.l.b16 %v219
      %v838 = vunpack.c.h.b16 %v219
      %v839 = vunpack.c.l.b16 %v220
      %v840 = vunpack.c.h.b16 %v220
      %v841 = vunpack.c.l.b16 %v221
      %v842 = vunpack.c.h.b16 %v221
      %v843 = vunpack.c.l.b16 %v222
      %v844 = vunpack.c.h.b16 %v222
      %v845 = vunpack.c.l.b16 %v223
      %v846 = vunpack.c.h.b16 %v223
      %v847 = vunpack.c.l.b16 %v224
      %v848 = vunpack.c.h.b16 %v224
      %v849 = vunpack.c.l.b16 %v225
      %v850 = vunpack.c.h.b16 %v225
      %v851 = vunpack.c.l.b16 %v226
      %v852 = vunpack.c.h.b16 %v226
      %v853 = vunpack.c.l.b16 %v227
      %v854 = vunpack.c.h.b16 %v227
      %v855 = vunpack.c.l.b16 %v228
      %v856 = vunpack.c.h.b16 %v228
      %v857 = vunpack.c.l.b16 %v229
      %v858 = vunpack.c.h.b16 %v229
      %v859 = vunpack.c.l.b16 %v230
      %v860 = vunpack.c.h.b16 %v230
      %v861 = vunpack.c.l.b16 %v231
      %v862 = vunpack.c.h.b16 %v231
      %v863 = vunpack.c.l.b16 %v232
      %v864 = vunpack.c.h.b16 %v232
      %v865 = vunpack.c.l.b16 %v233
      %v866 = vunpack.c.h.b16 %v233
      %v867 = vunpack.c.l.b16 %v234
      %v868 = vunpack.c.h.b16 %v234
      %v869 = vunpack.c.l.b16 %v235
      %v870 = vunpack.c.h.b16 %v235
      %v871 = vunpack.c.l.b16 %v236
      %v872 = vunpack.c.h.b16 %v236
      %v873 = vunpack.c.l.b16 %v237
      %v874 = vunpack.c.h.b16 %v237
      %v875 = vunpack.c.l.b16 %v238
      %v876 = vunpack.c.h.b16 %v238
      %v877 = vunpack.c.l.b16 %v239
      %v878 = vunpack.c.h.b16 %v239
      %v879 = vunpack.c.l.b16 %v240
      %v880 = vunpack.c.h.b16 %v240
      %v881 = vunpack.c.l.b16 %v241
      %v882 = vunpack.c.h.b16 %v241
      %v883 = vunpack.c.l.b16 %v242
      %v884 = vunpack.c.h.b16 %v242
      %v885 = vunpack.c.l.b16 %v243
      %v886 = vunpack.c.h.b16 %v243
      %v887 = vunpack.c.l.b16 %v244
      %v888 = vunpack.c.h.b16 %v244
      %v889 = vunpack.c.l.b16 %v245
      %v890 = vunpack.c.h.b16 %v245
      %v891 = vunpack.c.l.b16 %v246
      %v892 = vunpack.c.h.b16 %v246
      %v893 = vunpack.c.l.b16 %v247
      %v894 = vunpack.c.h.b16 %v247
      %v895 = vunpack.c.l.b16 %v248
      %v896 = vunpack.c.h.b16 %v248
      %v897 = vunpack.c.l.b16 %v249
      %v898 = vunpack.c.h.b16 %v249
      %v899 = vunpack.c.l.b16 %v250
      %v900 = vunpack.c.h.b16 %v250
      %v901 = vunpack.c.l.b16 %v251
      %v902 = vunpack.c.h.b16 %v251
      %v903 = vunpack.c.l.b16 %v252
      %v904 = vunpack.c.h.b16 %v252
      %v905 = vunpack.c.l.b16 %v253
      %v906 = vunpack.c.h.b16 %v253
      %v907 = vunpack.c.l.b16 %v254
      %v908 = vunpack.c.h.b16 %v254
      %v909 = vunpack.c.l.b16 %v255
      %v910 = vunpack.c.h.b16 %v255
      %v911 = vunpack.c.l.b16 %v256
      %v912 = vunpack.c.h.b16 %v256
      %v913 = vunpack.c.l.b16 %v257
      %v914 = vunpack.c.h.b16 %v257
      %v915 = vunpack.c.l.b16 %v258
      %v916 = vunpack.c.h.b16 %v258
      %v917 = vunpack.c.l.b16 %v259
      %v918 = vunpack.c.h.b16 %v259
      %v919 = vunpack.c.l.b16 %v260
      %v920 = vunpack.c.h.b16 %v260
      %v921 = vunpack.c.l.b16 %v261
      %v922 = vunpack.c.h.b16 %v261
      %v923 = vunpack.c.l.b16 %v262
      %v924 = vunpack.c.h.b16 %v262
      %v925 = vunpack.c.l.b16 %v263
      %v926 = vunpack.c.h.b16 %v263
      %v927 = vunpack.c.l.b16 %v264
      %v928 = vunpack.c.h.b16 %v264
      %v929 = vunpack.c.l.b16 %v265
      %v930 = vunpack.c.h.b16 %v265
      %v931 = vunpack.c.l.b16 %v266
      %v932 = vunpack.c.h.b16 %v266
      %v933 = vunpack.c.l.b16 %v267
      %v934 = vunpack.c.h.b16 %v267
      %v935 = vunpack.c.l.b16 %v268
      %v936 = vunpack.c.h.b16 %v268
      %v937 = vunpack.c.l.b16 %v269
      %v938 = vunpack.c.h.b16 %v269
      %v939 = vunpack.c.l.b16 %v270
      %v940 = vunpack.c.h.b16 %v270
      %v941 = vunpack.c.l.b16 %v271
      %v942 = vunpack.c.h.b16 %v271
      %v943 = vunpack.c.l.b16 %v272
      %v944 = vunpack.c.h.b16 %v272
      %v945 = vunpack.c.l.b16 %v273
      %v946 = vunpack.c.h.b16 %v273
      %v947 = vunpack.c.l.b16 %v274
      %v948 = vunpack.c.h.b16 %v274
      %v949 = vunpack.c.l.b16 %v275
      %v950 = vunpack.c.h.b16 %v275
      %v951 = vunpack.c.l.b16 %v276
      %v952 = vunpack.c.h.b16 %v276
      %v953 = vunpack.c.l.b16 %v277
      %v954 = vunpack.c.h.b16 %v277
      %v955 = vunpack.c.l.b16 %v278
      %v956 = vunpack.c.h.b16 %v278
      %v957 = vunpack.c.l.b16 %v279
      %v958 = vunpack.c.h.b16 %v279
      %v959 = vunpack.c.l.b16 %v280
      %v960 = vunpack.c.h.b16 %v280
      %v961 = vunpack.c.l.b16 %v281
      %v962 = vunpack.c.h.b16 %v281
      %v963 = vunpack.c.l.b16 %v282
      %v964 = vunpack.c.h.b16 %v282
      %v965 = vunpack.c.l.b16 %v283
      %v966 = vunpack.c.h.b16 %v283
      %v967 = vunpack.c.l.b16 %v284
      %v968 = vunpack.c.h.b16 %v284
      %v969 = vunpack.c.l.b16 %v285
      %v970 = vunpack.c.h.b16 %v285
      %v971 = vunpack.c.l.b16 %v286
      %v972 = vunpack.c.h.b16 %v286
      %v973 = vunpack.c.l.b16 %v287
      %v974 = vunpack.c.h.b16 %v287
      %v975 = vunpack.c.l.b16 %v288
      %v976 = vunpack.c.h.b16 %v288
      %v977 = vunpack.c.l.b16 %v289
      %v978 = vunpack.c.h.b16 %v289
      %v979 = vunpack.c.l.b16 %v290
      %v980 = vunpack.c.h.b16 %v290
      %v981 = vunpack.c.l.b16 %v291
      %v982 = vunpack.c.h.b16 %v291
      %v983 = vunpack.c.l.b16 %v292
      %v984 = vunpack.c.h.b16 %v292
      %v985 = vunpack.c.l.b16 %v293
      %v986 = vunpack.c.h.b16 %v293
      %v987 = vunpack.c.l.b16 %v294
      %v988 = vunpack.c.h.b16 %v294
      %v989 = vunpack.c.l.b16 %v295
      %v990 = vunpack.c.h.b16 %v295
      %v991 = vunpack.c.l.b16 %v296
      %v992 = vunpack.c.h.b16 %v296
      %v993 = vunpack.c.l.b16 %v297
      %v994 = vunpack.c.h.b16 %v297
      %v995 = vunpack.c.l.b16 %v298
      %v996 = vunpack.c.h.b16 %v298
      %v997 = vunpack.c.l.b16 %v299
      %v998 = vunpack.c.h.b16 %v299
      %v999 = vunpack.c.l.b16 %v300
      %v1000 = vunpack.c.h.b16 %v300
      %v1001 = vunpack.c.l.b16 %v301
      %v1002 = vunpack.c.h.b16 %v301
      %v1003 = vunpack.c.l.b16 %v302
      %v1004 = vunpack.c.h.b16 %v302
      %v1005 = vunpack.c.l.b16 %v303
      %v1006 = vunpack.c.h.b16 %v303
      %v1007 = vunpack.c.l.b16 %v304
      %v1008 = vunpack.c.h.b16 %v304
      %v1009 = vunpack.c.l.b16 %v305
      %v1010 = vunpack.c.h.b16 %v305
      %v1011 = vunpack.c.l.b16 %v306
      %v1012 = vunpack.c.h.b16 %v306
      %v1013 = vunpack.c.l.b16 %v307
      %v1014 = vunpack.c.h.b16 %v307
      %v1015 = vunpack.c.l.b16 %v308
      %v1016 = vunpack.c.h.b16 %v308
      %v1017 = vunpack.c.l.b16 %v309
      %v1018 = vunpack.c.h.b16 %v309
      %v1019 = vunpack.c.l.b16 %v310
      %v1020 = vunpack.c.h.b16 %v310
      %v1021 = vunpack.c.l.b16 %v311
      %v1022 = vunpack.c.h.b16 %v311
      %v1023 = vunpack.c.l.b16 %v312
      %v1024 = vunpack.c.h.b16 %v312
      %v1025 = vunpack.c.l.b16 %v313
      %v1026 = vunpack.c.h.b16 %v313
      %v1027 = vunpack.c.l.b16 %v314
      %v1028 = vunpack.c.h.b16 %v314
      %v1029 = vunpack.c.l.b16 %v315
      %v1030 = vunpack.c.h.b16 %v315
      %v1031 = vunpack.c.l.b16 %v316
      %v1032 = vunpack.c.h.b16 %v316
      %v1033 = vunpack.c.l.b16 %v317
      %v1034 = vunpack.c.h.b16 %v317
      %v1035 = vunpack.c.l.b16 %v318
      %v1036 = vunpack.c.h.b16 %v318
      %v1037 = vunpack.c.l.b16 %v319
      %v1038 = vunpack.c.h.b16 %v319
      %v1039 = vunpack.c.l.b16 %v320
      %v1040 = vunpack.c.h.b16 %v320
      %v1041 = vunpack.c.l.b16 %v321
      %v1042 = vunpack.c.h.b16 %v321
      %v1043 = vunpack.c.l.b16 %v322
      %v1044 = vunpack.c.h.b16 %v322
      %v1045 = vunpack.c.l.b16 %v323
      %v1046 = vunpack.c.h.b16 %v323
      %v1047 = vunpack.c.l.b16 %v324
      %v1048 = vunpack.c.h.b16 %v324
      %v1049 = vunpack.c.l.b16 %v325
      %v1050 = vunpack.c.h.b16 %v325
      %v1051 = vunpack.c.l.b16 %v326
      %v1052 = vunpack.c.h.b16 %v326
      %v1053 = vunpack.c.l.b16 %v327
      %v1054 = vunpack.c.h.b16 %v327
      %v1055 = vunpack.c.l.b16 %v328
      %v1056 = vunpack.c.h.b16 %v328
      %v1057 = vunpack.c.l.b16 %v329
      %v1058 = vunpack.c.h.b16 %v329
      %v1059 = vunpack.c.l.b16 %v330
      %v1060 = vunpack.c.h.b16 %v330
      %v1061 = vunpack.c.l.b16 %v331
      %v1062 = vunpack.c.h.b16 %v331
      %v1063 = vunpack.c.l.b16 %v332
      %v1064 = vunpack.c.h.b16 %v332
      %v1065 = vunpack.c.l.b16 %v333
      %v1066 = vunpack.c.h.b16 %v333
      %v1067 = vunpack.c.l.b16 %v334
      %v1068 = vunpack.c.h.b16 %v334
      %v1069 = vunpack.c.l.b16 %v335
      %v1070 = vunpack.c.h.b16 %v335
      %v1071 = vunpack.c.l.b16 %v336
      %v1072 = vunpack.c.h.b16 %v336
      %v1073 = vunpack.c.l.b16 %v337
      %v1074 = vunpack.c.h.b16 %v337
      %v1075 = vunpack.c.l.b16 %v338
      %v1076 = vunpack.c.h.b16 %v338
      %v1077 = vunpack.c.l.b16 %v339
      %v1078 = vunpack.c.h.b16 %v339
      %v1079 = vunpack.c.l.b16 %v340
      %v1080 = vunpack.c.h.b16 %v340
      %v1081 = vunpack.c.l.b16 %v341
      %v1082 = vunpack.c.h.b16 %v341
      %v1083 = vunpack.c.l.b16 %v342
      %v1084 = vunpack.c.h.b16 %v342
      %v1085 = vunpack.c.l.b16 %v343
      %v1086 = vunpack.c.h.b16 %v343
      %v1087 = vunpack.c.l.b16 %v344
      %v1088 = vunpack.c.h.b16 %v344
      %v1089 = vunpack.c.l.b16 %v345
      %v1090 = vunpack.c.h.b16 %v345
      %v1091 = vunpack.c.l.b16 %v346
      %v1092 = vunpack.c.h.b16 %v346
      %v1093 = vunpack.c.l.b16 %v347
      %v1094 = vunpack.c.h.b16 %v347
      %v1095 = vunpack.c.l.b16 %v348
      %v1096 = vunpack.c.h.b16 %v348
      %v1097 = vunpack.c.l.b16 %v349
      %v1098 = vunpack.c.h.b16 %v349
      %v1099 = vunpack.c.l.b16 %v350
      %v1100 = vunpack.c.h.b16 %v350
      %v1101 = vunpack.c.l.b16 %v351
      %v1102 = vunpack.c.h.b16 %v351
      %v1103 = vunpack.c.l.b16 %v352
      %v1104 = vunpack.c.h.b16 %v352
      %v1105 = vunpack.c.l.b16 %v353
      %v1106 = vunpack.c.h.b16 %v353
      %v1107 = vunpack.c.l.b16 %v354
      %v1108 = vunpack.c.h.b16 %v354
      %v1109 = vunpack.c.l.b16 %v355
      %v1110 = vunpack.c.h.b16 %v355
      %v1111 = vunpack.c.l.b16 %v356
      %v1112 = vunpack.c.h.b16 %v356
      %v1113 = vunpack.c.l.b16 %v357
      %v1114 = vunpack.c.h.b16 %v357
      %v1115 = vunpack.c.l.b16 %v358
      %v1116 = vunpack.c.h.b16 %v358
      %v1117 = vunpack.c.l.b16 %v359
      %v1118 = vunpack.c.h.b16 %v359
      %v1119 = vunpack.c.l.b16 %v360
      %v1120 = vunpack.c.h.b16 %v360
      %v1121 = vunpack.c.l.b16 %v361
      %v1122 = vunpack.c.h.b16 %v361
      %v1123 = vunpack.c.l.b16 %v362
      %v1124 = vunpack.c.h.b16 %v362
      %v1125 = vunpack.c.l.b16 %v363
      %v1126 = vunpack.c.h.b16 %v363
      %v1127 = vunpack.c.l.b16 %v364
      %v1128 = vunpack.c.h.b16 %v364
      %v1129 = vunpack.c.l.b16 %v365
      %v1130 = vunpack.c.h.b16 %v365
      %v1131 = vunpack.c.l.b16 %v366
      %v1132 = vunpack.c.h.b16 %v366
      %v1133 = vunpack.c.l.b16 %v367
      %v1134 = vunpack.c.h.b16 %v367
      %v1135 = vunpack.c.l.b16 %v368
      %v1136 = vunpack.c.h.b16 %v368
      %v1137 = vunpack.c.l.b16 %v369
      %v1138 = vunpack.c.h.b16 %v369
      %v1139 = vunpack.c.l.b16 %v370
      %v1140 = vunpack.c.h.b16 %v370
      %v1141 = vunpack.c.l.b16 %v371
      %v1142 = vunpack.c.h.b16 %v371
      %v1143 = vunpack.c.l.b16 %v372
      %v1144 = vunpack.c.h.b16 %v372
      %v1145 = vunpack.c.l.b16 %v373
      %v1146 = vunpack.c.h.b16 %v373
      %v1147 = vunpack.c.l.b16 %v374
      %v1148 = vunpack.c.h.b16 %v374
      %v1149 = vunpack.c.l.b16 %v375
      %v1150 = vunpack.c.h.b16 %v375
      %v1151 = vunpack.c.l.b16 %v376
      %v1152 = vunpack.c.h.b16 %v376
      %v1153 = vunpack.c.l.b16 %v377
      %v1154 = vunpack.c.h.b16 %v377
      %v1155 = vunpack.c.l.b16 %v378
      %v1156 = vunpack.c.h.b16 %v378
      %v1157 = vunpack.c.l.b16 %v379
      %v1158 = vunpack.c.h.b16 %v379
      %v1159 = vunpack.c.l.b16 %v380
      %v1160 = vunpack.c.h.b16 %v380
      %v1161 = vunpack.c.l.b16 %v381
      %v1162 = vunpack.c.h.b16 %v381
      %v1163 = vunpack.c.l.b16 %v382
      %v1164 = vunpack.c.h.b16 %v382
      %v1165 = vunpack.c.l.b16 %v383
      %v1166 = vunpack.c.h.b16 %v383
      %v1167 = vunpack.c.l.b16 %v384
      %v1168 = vunpack.c.h.b16 %v384
      %v1169 = vunpack.c.l.b16 %v385
      %v1170 = vunpack.c.h.b16 %v385
      %v1171 = vunpack.c.l.b16 %v386
      %v1172 = vunpack.c.h.b16 %v386
      %v1173 = vunpack.c.l.b16 %v387
      %v1174 = vunpack.c.h.b16 %v387
      %v1175 = vunpack.c.l.b16 %v388
      %v1176 = vunpack.c.h.b16 %v388
      %v1177 = vunpack.c.l.b16 %v389
      %v1178 = vunpack.c.h.b16 %v389
      %v1179 = vunpack.c.l.b16 %v390
      %v1180 = vunpack.c.h.b16 %v390
      %v1181 = vunpack.c.l.b16 %v391
      %v1182 = vunpack.c.h.b16 %v391
      %v1183 = vunpack.c.l.b16 %v392
      %v1184 = vunpack.c.h.b16 %v392
      %v1185 = vunpack.c.l.b16 %v393
      %v1186 = vunpack.c.h.b16 %v393
      %v1187 = vunpack.c.l.b16 %v394
      %v1188 = vunpack.c.h.b16 %v394
      %v1189 = vunpack.c.l.b16 %v395
      %v1190 = vunpack.c.h.b16 %v395
      %v1191 = vunpack.c.l.b16 %v396
      %v1192 = vunpack.c.h.b16 %v396
      %v1193 = vunpack.c.l.b16 %v397
      %v1194 = vunpack.c.h.b16 %v397
      %v1195 = vunpack.c.l.b16 %v398
      %v1196 = vunpack.c.h.b16 %v398
      %v1197 = vunpack.c.l.b16 %v399
      %v1198 = vunpack.c.h.b16 %v399
      %v1199 = vunpack.c.l.b16 %v400
      %v1200 = vunpack.c.h.b16 %v400
      %v1201 = vunpack.c.l.b16 %v401
      %v1202 = vunpack.c.h.b16 %v401
      %v1203 = vunpack.c.l.b16 %v402
      %v1204 = vunpack.c.h.b16 %v402
      %v1205 = vunpack.c.l.b16 %v403
      %v1206 = vunpack.c.h.b16 %v403
      %v1207 = vunpack.c.l.b16 %v404
      %v1208 = vunpack.c.h.b16 %v404
      %v1209 = vunpack.c.l.b16 %v405
      %v1210 = vunpack.c.h.b16 %v405
      %v1211 = vunpack.c.l.b16 %v406
      %v1212 = vunpack.c.h.b16 %v406
      %v1213 = vunpack.c.l.b16 %v407
      %v1214 = vunpack.c.h.b16 %v407
      %v1215 = vunpack.c.l.b16 %v408
      %v1216 = vunpack.c.h.b16 %v408
      %v1217 = vunpack.c.l.b16 %v409
      %v1218 = vunpack.c.h.b16 %v409
      %v1219 = vunpack.c.l.b16 %v410
      %v1220 = vunpack.c.h.b16 %v410
      %v1221 = vunpack.c.l.b16 %v411
      %v1222 = vunpack.c.h.b16 %v411
      %v1223 = vunpack.c.l.b16 %v412
      %v1224 = vunpack.c.h.b16 %v412
      %v1225 = vunpack.c.l.b16 %v413
      %v1226 = vunpack.c.h.b16 %v413
      %v1227 = vunpack.c.l.b16 %v414
      %v1228 = vunpack.c.h.b16 %v414
      %v1229 = vunpack.c.l.b16 %v415
      %v1230 = vunpack.c.h.b16 %v415
      %v1231 = vunpack.c.l.b16 %v416
      %v1232 = vunpack.c.h.b16 %v416
      %v1233 = vunpack.c.l.b16 %v417
      %v1234 = vunpack.c.h.b16 %v417
      %v1235 = vunpack.c.l.b16 %v418
      %v1236 = vunpack.c.h.b16 %v418
      %v1237 = vunpack.c.l.b16 %v419
      %v1238 = vunpack.c.h.b16 %v419
      %v1239 = vunpack.c.l.b16 %v420
      %v1240 = vunpack.c.h.b16 %v420
      %v1241 = vunpack.c.l.b16 %v421
      %v1242 = vunpack.c.h.b16 %v421
      %v1243 = vunpack.c.l.b16 %v422
      %v1244 = vunpack.c.h.b16 %v422
      %v1245 = vunpack.c.l.b16 %v423
      %v1246 = vunpack.c.h.b16 %v423
      %v1247 = vunpack.c.l.b16 %v424
      %v1248 = vunpack.c.h.b16 %v424
      %v1249 = vunpack.c.l.b16 %v425
      %v1250 = vunpack.c.h.b16 %v425
      %v1251 = vunpack.c.l.b16 %v426
      %v1252 = vunpack.c.h.b16 %v426
      %v1253 = vunpack.c.l.b16 %v427
      %v1254 = vunpack.c.h.b16 %v427
      %v1255 = vunpack.c.l.b16 %v428
      %v1256 = vunpack.c.h.b16 %v428
      %v1257 = vunpack.c.l.b16 %v429
      %v1258 = vunpack.c.h.b16 %v429
      %v1259 = vunpack.c.l.b16 %v430
      %v1260 = vunpack.c.h.b16 %v430
      %v1261 = vunpack.c.l.b16 %v431
      %v1262 = vunpack.c.h.b16 %v431
      %v1263 = vunpack.c.l.b16 %v432
      %v1264 = vunpack.c.h.b16 %v432
      %v1265 = vunpack.c.l.b16 %v433
      %v1266 = vunpack.c.h.b16 %v433
      %v1267 = vunpack.c.l.b16 %v434
      %v1268 = vunpack.c.h.b16 %v434
      %v1269 = vunpack.c.l.b16 %v435
      %v1270 = vunpack.c.h.b16 %v435
      %v1271 = vunpack.c.l.b16 %v436
      %v1272 = vunpack.c.h.b16 %v436
      %v1273 = vunpack.c.l.b16 %v437
      %v1274 = vunpack.c.h.b16 %v437
      %v1275 = vunpack.c.l.b16 %v438
      %v1276 = vunpack.c.h.b16 %v438
      %v1277 = vunpack.c.l.b16 %v439
      %v1278 = vunpack.c.h.b16 %v439
      %v1279 = vunpack.c.l.b16 %v440
      %v1280 = vunpack.c.h.b16 %v440
      %v1281 = vunpack.c.l.b16 %v441
      %v1282 = vunpack.c.h.b16 %v441
      %v1283 = vunpack.c.l.b16 %v442
      %v1284 = vunpack.c.h.b16 %v442
      %v1285 = vunpack.c.l.b16 %v443
      %v1286 = vunpack.c.h.b16 %v443
      %v1287 = vunpack.c.l.b16 %v444
      %v1288 = vunpack.c.h.b16 %v444
      %v1289 = vunpack.c.l.b16 %v445
      %v1290 = vunpack.c.h.b16 %v445
      %v1291 = vunpack.c.l.b16 %v446
      %v1292 = vunpack.c.h.b16 %v446
      %v1293 = vunpack.c.l.b16 %v447
      %v1294 = vunpack.c.h.b16 %v447
      %v1295 = vunpack.c.l.b16 %v448
      %v1296 = vunpack.c.h.b16 %v448
      %v1297 = vpack.c.b16 %v789, %v785
      %v1298 = vpack.c.b16 %v790, %v786
      %v1299 = vpack.c.b16 %v791, %v787
      %v1300 = vpack.c.b16 %v792, %v788
      %v1301 = vpack.c.b16 %v797, %v793
      %v1302 = vpack.c.b16 %v798, %v794
      %v1303 = vpack.c.b16 %v799, %v795
      %v1304 = vpack.c.b16 %v800, %v796
      %v1305 = vpack.c.b16 %v805, %v801
      %v1306 = vpack.c.b16 %v806, %v802
      %v1307 = vpack.c.b16 %v807, %v803
      %v1308 = vpack.c.b16 %v808, %v804
      %v1309 = vpack.c.b16 %v813, %v809
      %v1310 = vpack.c.b16 %v814, %v810
      %v1311 = vpack.c.b16 %v815, %v811
      %v1312 = vpack.c.b16 %v816, %v812
      %v1313 = vpack.c.b16 %v821, %v817
      %v1314 = vpack.c.b16 %v822, %v818
      %v1315 = vpack.c.b16 %v823, %v819
      %v1316 = vpack.c.b16 %v824, %v820
      %v1317 = vpack.c.b16 %v829, %v825
      %v1318 = vpack.c.b16 %v830, %v826
      %v1319 = vpack.c.b16 %v831, %v827
      %v1320 = vpack.c.b16 %v832, %v828
      %v1321 = vpack.c.b16 %v837, %v833
      %v1322 = vpack.c.b16 %v838, %v834
      %v1323 = vpack.c.b16 %v839, %v835
      %v1324 = vpack.c.b16 %v840, %v836
      %v1325 = vpack.c.b16 %v845, %v841
      %v1326 = vpack.c.b16 %v846, %v842
      %v1327 = vpack.c.b16 %v847, %v843
      %v1328 = vpack.c.b16 %v848, %v844
      %v1329 = vpack.c.b16 %v853, %v849
      %v1330 = vpack.c.b16 %v854, %v850
      %v1331 = vpack.c.b16 %v855, %v851
      %v1332 = vpack.c.b16 %v856, %v852
      %v1333 = vpack.c.b16 %v861, %v857
      %v1334 = vpack.c.b16 %v862, %v858
      %v1335 = vpack.c.b16 %v863, %v859
      %v1336 = vpack.c.b16 %v864, %v860
      %v1337 = vpack.c.b16 %v869, %v865
      %v1338 = vpack.c.b16 %v870, %v866
      %v1339 = vpack.c.b16 %v871, %v867
      %v1340 = vpack.c.b16 %v872, %v868
      %v1341 = vpack.c.b16 %v877, %v873
      %v1342 = vpack.c.b16 %v878, %v874
      %v1343 = vpack.c.b16 %v879, %v875
      %v1344 = vpack.c.b16 %v880, %v876
      %v1345 = vpack.c.b16 %v885, %v881
      %v1346 = vpack.c.b16 %v886, %v882
      %v1347 = vpack.c.b16 %v887, %v883
      %v1348 = vpack.c.b16 %v888, %v884
      %v1349 = vpack.c.b16 %v893, %v889
      %v1350 = vpack.c.b16 %v894, %v890
      %v1351 = vpack.c.b16 %v895, %v891
      %v1352 = vpack.c.b16 %v896, %v892
      %v1353 = vpack.c.b16 %v901, %v897
      %v1354 = vpack.c.b16 %v902, %v898
      %v1355 = vpack.c.b16 %v903, %v899
      %v1356 = vpack.c.b16 %v904, %v900
      %v1357 = vpack.c.b16 %v909, %v905
      %v1358 = vpack.c.b16 %v910, %v906
      %v1359 = vpack.c.b16 %v911, %v907
      %v1360 = vpack.c.b16 %v912, %v908
      %v1361 = vpack.c.b16 %v917, %v913
      %v1362 = vpack.c.b16 %v918, %v914
      %v1363 = vpack.c.b16 %v919, %v915
      %v1364 = vpack.c.b16 %v920, %v916
      %v1365 = vpack.c.b16 %v925, %v921
      %v1366 = vpack.c.b16 %v926, %v922
      %v1367 = vpack.c.b16 %v927, %v923
      %v1368 = vpack.c.b16 %v928, %v924
      %v1369 = vpack.c.b16 %v933, %v929
      %v1370 = vpack.c.b16 %v934, %v930
      %v1371 = vpack.c.b16 %v935, %v931
      %v1372 = vpack.c.b16 %v936, %v932
      %v1373 = vpack.c.b16 %v941, %v937
      %v1374 = vpack.c.b16 %v942, %v938
      %v1375 = vpack.c.b16 %v943, %v939
      %v1376 = vpack.c.b16 %v944, %v940
      %v1377 = vpack.c.b16 %v949, %v945
      %v1378 = vpack.c.b16 %v950, %v946
      %v1379 = vpack.c.b16 %v951, %v947
      %v1380 = vpack.c.b16 %v952, %v948
      %v1381 = vpack.c.b16 %v957, %v953
      %v1382 = vpack.c.b16 %v958, %v954
      %v1383 = vpack.c.b16 %v959, %v955
      %v1384 = vpack.c.b16 %v960, %v956
      %v1385 = vpack.c.b16 %v965, %v961
      %v1386 = vpack.c.b16 %v966, %v962
      %v1387 = vpack.c.b16 %v967, %v963
      %v1388 = vpack.c.b16 %v968, %v964
      %v1389 = vpack.c.b16 %v973, %v969
      %v1390 = vpack.c.b16 %v974, %v970
      %v1391 = vpack.c.b16 %v975, %v971
      %v1392 = vpack.c.b16 %v976, %v972
      %v1393 = vpack.c.b16 %v981, %v977
      %v1394 = vpack.c.b16 %v982, %v978
      %v1395 = vpack.c.b16 %v983, %v979
      %v1396 = vpack.c.b16 %v984, %v980
      %v1397 = vpack.c.b16 %v989, %v985
      %v1398 = vpack.c.b16 %v990, %v986
      %v1399 = vpack.c.b16 %v991, %v987
      %v1400 = vpack.c.b16 %v992, %v988
      %v1401 = vpack.c.b16 %v997, %v993
      %v1402 = vpack.c.b16 %v998, %v994
      %v1403 = vpack.c.b16 %v999, %v995
      %v1404 = vpack.c.b16 %v1000, %v996
      %v1405 = vpack.c.b16 %v1005, %v1001
      %v1406 = vpack.c.b16 %v1006, %v1002
      %v1407 = vpack.c.b16 %v1007, %v1003
      %v1408 = vpack.c.b16 %v1008, %v1004
      %v1409 = vpack.c.b16 %v1013, %v1009
      %v1410 = vpack.c.b16 %v1014, %v1010
      %v1411 = vpack.c.b16 %v1015, %v1011
      %v1412 = vpack.c.b16 %v1016, %v1012
      %v1413 = vpack.c.b16 %v1021, %v1017
      %v1414 = vpack.c.b16 %v1022, %v1018
      %v1415 = vpack.c.b16 %v1023, %v1019
      %v1416 = vpack.c.b16 %v1024, %v1020
      %v1417 = vpack.c.b16 %v1029, %v1025
      %v1418 = vpack.c.b16 %v1030, %v1026
      %v1419 = vpack.c.b16 %v1031, %v1027
      %v1420 = vpack.c.b16 %v1032, %v1028
      %v1421 = vpack.c.b16 %v1037, %v1033
      %v1422 = vpack.c.b16 %v1038, %v1034
      %v1423 = vpack.c.b16 %v1039, %v1035
      %v1424 = vpack.c.b16 %v1040, %v1036
      %v1425 = vpack.c.b16 %v1045, %v1041
      %v1426 = vpack.c.b16 %v1046, %v1042
      %v1427 = vpack.c.b16 %v1047, %v1043
      %v1428 = vpack.c.b16 %v1048, %v1044
      %v1429 = vpack.c.b16 %v1053, %v1049
      %v1430 = vpack.c.b16 %v1054, %v1050
      %v1431 = vpack.c.b16 %v1055, %v1051
      %v1432 = vpack.c.b16 %v1056, %v1052
      %v1433 = vpack.c.b16 %v1061, %v1057
      %v1434 = vpack.c.b16 %v1062, %v1058
      %v1435 = vpack.c.b16 %v1063, %v1059
      %v1436 = vpack.c.b16 %v1064, %v1060
      %v1437 = vpack.c.b16 %v1069, %v1065
      %v1438 = vpack.c.b16 %v1070, %v1066
      %v1439 = vpack.c.b16 %v1071, %v1067
      %v1440 = vpack.c.b16 %v1072, %v1068
      %v1441 = vpack.c.b16 %v1077, %v1073
      %v1442 = vpack.c.b16 %v1078, %v1074
      %v1443 = vpack.c.b16 %v1079, %v1075
      %v1444 = vpack.c.b16 %v1080, %v1076
      %v1445 = vpack.c.b16 %v1085, %v1081
      %v1446 = vpack.c.b16 %v1086, %v1082
      %v1447 = vpack.c.b16 %v1087, %v1083
      %v1448 = vpack.c.b16 %v1088, %v1084
      %v1449 = vpack.c.b16 %v1093, %v1089
      %v1450 = vpack.c.b16 %v1094, %v1090
      %v1451 = vpack.c.b16 %v1095, %v1091
      %v1452 = vpack.c.b16 %v1096, %v1092
      %v1453 = vpack.c.b16 %v1101, %v1097
      %v1454 = vpack.c.b16 %v1102, %v1098
      %v1455 = vpack.c.b16 %v1103, %v1099
      %v1456 = vpack.c.b16 %v1104, %v1100
      %v1457 = vpack.c.b16 %v1109, %v1105
      %v1458 = vpack.c.b16 %v1110, %v1106
      %v1459 = vpack.c.b16 %v1111, %v1107
      %v1460 = vpack.c.b16 %v1112, %v1108
      %v1461 = vpack.c.b16 %v1117, %v1113
      %v1462 = vpack.c.b16 %v1118, %v1114
      %v1463 = vpack.c.b16 %v1119, %v1115
      %v1464 = vpack.c.b16 %v1120, %v1116
      %v1465 = vpack.c.b16 %v1125, %v1121
      %v1466 = vpack.c.b16 %v1126, %v1122
      %v1467 = vpack.c.b16 %v1127, %v1123
      %v1468 = vpack.c.b16 %v1128, %v1124
      %v1469 = vpack.c.b16 %v1133, %v1129
      %v1470 = vpack.c.b16 %v1134, %v1130
      %v1471 = vpack.c.b16 %v1135, %v1131
      %v1472 = vpack.c.b16 %v1136, %v1132
      %v1473 = vpack.c.b16 %v1141, %v1137
      %v1474 = vpack.c.b16 %v1142, %v1138
      %v1475 = vpack.c.b16 %v1143, %v1139
      %v1476 = vpack.c.b16 %v1144, %v1140
      %v1477 = vpack.c.b16 %v1149, %v1145
      %v1478 = vpack.c.b16 %v1150, %v1146
      %v1479 = vpack.c.b16 %v1151, %v1147
      %v1480 = vpack.c.b16 %v1152, %v1148
      %v1481 = vpack.c.b16 %v1157, %v1153
      %v1482 = vpack.c.b16 %v1158, %v1154
      %v1483 = vpack.c.b16 %v1159, %v1155
      %v1484 = vpack.c.b16 %v1160, %v1156
      %v1485 = vpack.c.b16 %v1165, %v1161
      %v1486 = vpack.c.b16 %v1166, %v1162
      %v1487 = vpack.c.b16 %v1167, %v1163
      %v1488 = vpack.c.b16 %v1168, %v1164
      %v1489 = vpack.c.b16 %v1173, %v1169
      %v1490 = vpack.c.b16 %v1174, %v1170
      %v1491 = vpack.c.b16 %v1175, %v1171
      %v1492 = vpack.c.b16 %v1176, %v1172
      %v1493 = vpack.c.b16 %v1181, %v1177
      %v1494 = vpack.c.b16 %v1182, %v1178
      %v1495 = vpack.c.b16 %v1183, %v1179
      %v1496 = vpack.c.b16 %v1184, %v1180
      %v1497 = vpack.c.b16 %v1189, %v1185
      %v1498 = vpack.c.b16 %v1190, %v1186
      %v1499 = vpack.c.b16 %v1191, %v1187
      %v1500 = vpack.c.b16 %v1192, %v1188
      %v1501 = vpack.c.b16 %v1197, %v1193
      %v1502 = vpack.c.b16 %v1198, %v1194
      %v1503 = vpack.c.b16 %v1199, %v1195
      %v1504 = vpack.c.b16 %v1200, %v1196
      %v1505 = vpack.c.b16 %v1205, %v1201
      %v1506 = vpack.c.b16 %v1206, %v1202
      %v1507 = vpack.c.b16 %v1207, %v1203
      %v1508 = vpack.c.b16 %v1208, %v1204
      %v1509 = vpack.c.b16 %v1213, %v1209
      %v1510 = vpack.c.b16 %v1214, %v1210
      %v1511 = vpack.c.b16 %v1215, %v1211
      %v1512 = vpack.c.b16 %v1216, %v1212
      %v1513 = vpack.c.b16 %v1221, %v1217
      %v1514 = vpack.c.b16 %v1222, %v1218
      %v1515 = vpack.c.b16 %v1223, %v1219
      %v1516 = vpack.c.b16 %v1224, %v1220
      %v1517 = vpack.c.b16 %v1229, %v1225
      %v1518 = vpack.c.b16 %v1230, %v1226
      %v1519 = vpack.c.b16 %v1231, %v1227
      %v1520 = vpack.c.b16 %v1232, %v1228
      %v1521 = vpack.c.b16 %v1237, %v1233
      %v1522 = vpack.c.b16 %v1238, %v1234
      %v1523 = vpack.c.b16 %v1239, %v1235
      %v1524 = vpack.c.b16 %v1240, %v1236
      %v1525 = vpack.c.b16 %v1245, %v1241
      %v1526 = vpack.c.b16 %v1246, %v1242
      %v1527 = vpack.c.b16 %v1247, %v1243
      %v1528 = vpack.c.b16 %v1248, %v1244
      %v1529 = vpack.c.b16 %v1253, %v1249
      %v1530 = vpack.c.b16 %v1254, %v1250
      %v1531 = vpack.c.b16 %v1255, %v1251
      %v1532 = vpack.c.b16 %v1256, %v1252
      %v1533 = vpack.c.b16 %v1261, %v1257
      %v1534 = vpack.c.b16 %v1262, %v1258
      %v1535 = vpack.c.b16 %v1263, %v1259
      %v1536 = vpack.c.b16 %v1264, %v1260
      %v1537 = vpack.c.b16 %v1269, %v1265
      %v1538 = vpack.c.b16 %v1270, %v1266
      %v1539 = vpack.c.b16 %v1271, %v1267
      %v1540 = vpack.c.b16 %v1272, %v1268
      %v1541 = vpack.c.b16 %v1277, %v1273
      %v1542 = vpack.c.b16 %v1278, %v1274
      %v1543 = vpack.c.b16 %v1279, %v1275
      %v1544 = vpack.c.b16 %v1280, %v1276
      %v1545 = vpack.c.b16 %v1285, %v1281
      %v1546 = vpack.c.b16 %v1286, %v1282
      %v1547 = vpack.c.b16 %v1287, %v1283
      %v1548 = vpack.c.b16 %v1288, %v1284
      %v1549 = vpack.c.b16 %v1293, %v1289
      %v1550 = vpack.c.b16 %v1294, %v1290
      %v1551 = vpack.c.b16 %v1295, %v1291
      %v1552 = vpack.c.b16 %v1296, %v1292
      %1809 = vmatpush.bf16.msra.mxu0 %v1325
      %1810 = vmatpush.bf16.msra.mxu0 %v1321
      %1811 = vmatpush.bf16.msra.mxu0 %v1317
      %1812 = vmatpush.bf16.msra.mxu0 %v1313
      %1813 = vmatpush.bf16.msra.mxu0 %v1309
      %1814 = vmatpush.bf16.msra.mxu0 %v1305
      %1815 = vmatpush.bf16.msra.mxu0 %v1301
      %1816 = vmatpush.bf16.msra.mxu0 %v1297
      %1817 = vmatmul.bf16.gmra.mxu0 %v497
      %v1818 = vpop.f32.mrf.mxu0
      %v1819 = vadd.f32 0.0, %v1818
      %v1820 = vpop.f32.mrf.mxu0
      %v1821 = vadd.f32 0.0, %v1820
      %1822 = vmatmul.bf16.gmra.mxu0 %v505
      %v1823 = vpop.f32.mrf.mxu0
      %v1824 = vadd.f32 0.0, %v1823
      %v1825 = vpop.f32.mrf.mxu0
      %v1826 = vadd.f32 0.0, %v1825
      %1827 = vdwg.mxu0
      %1828 = vmatpush.bf16.msra.mxu0 %v1357
      %1829 = vmatpush.bf16.msra.mxu0 %v1353
      %1830 = vmatpush.bf16.msra.mxu0 %v1349
      %1831 = vmatpush.bf16.msra.mxu0 %v1345
      %1832 = vmatpush.bf16.msra.mxu0 %v1341
      %1833 = vmatpush.bf16.msra.mxu0 %v1337
      %1834 = vmatpush.bf16.msra.mxu0 %v1333
      %1835 = vmatpush.bf16.msra.mxu0 %v1329
      %1836 = vmatmul.bf16.gmra.mxu0 %v498
      %v1837 = vpop.f32.mrf.mxu0
      %v1838 = vadd.f32 %v1819, %v1837
      %v1839 = vpop.f32.mrf.mxu0
      %v1840 = vadd.f32 %v1821, %v1839
      %1841 = vmatmul.bf16.gmra.mxu0 %v506
      %v1842 = vpop.f32.mrf.mxu0
      %v1843 = vadd.f32 %v1824, %v1842
      %v1844 = vpop.f32.mrf.mxu0
      %v1845 = vadd.f32 %v1826, %v1844
      %1846 = vdwg.mxu0
      %1847 = vmatpush.bf16.msra.mxu0 %v1389
      %1848 = vmatpush.bf16.msra.mxu0 %v1385
      %1849 = vmatpush.bf16.msra.mxu0 %v1381
      %1850 = vmatpush.bf16.msra.mxu0 %v1377
      %1851 = vmatpush.bf16.msra.mxu0 %v1373
      %1852 = vmatpush.bf16.msra.mxu0 %v1369
      %1853 = vmatpush.bf16.msra.mxu0 %v1365
      %1854 = vmatpush.bf16.msra.mxu0 %v1361
      %1855 = vmatmul.bf16.gmra.mxu0 %v499
      %v1856 = vpop.f32.mrf.mxu0
      %v1857 = vadd.f32 %v1838, %v1856
      %v1858 = vpop.f32.mrf.mxu0
      %v1859 = vadd.f32 %v1840, %v1858
      %1860 = vmatmul.bf16.gmra.mxu0 %v507
      %v1861 = vpop.f32.mrf.mxu0
      %v1862 = vadd.f32 %v1843, %v1861
      %v1863 = vpop.f32.mrf.mxu0
      %v1864 = vadd.f32 %v1845, %v1863
      %1865 = vdwg.mxu0
      %1866 = vmatpush.bf16.msra.mxu0 %v1421
      %1867 = vmatpush.bf16.msra.mxu0 %v1417
      %1868 = vmatpush.bf16.msra.mxu0 %v1413
      %1869 = vmatpush.bf16.msra.mxu0 %v1409
      %1870 = vmatpush.bf16.msra.mxu0 %v1405
      %1871 = vmatpush.bf16.msra.mxu0 %v1401
      %1872 = vmatpush.bf16.msra.mxu0 %v1397
      %1873 = vmatpush.bf16.msra.mxu0 %v1393
      %1874 = vmatmul.bf16.gmra.mxu0 %v500
      %v1875 = vpop.f32.mrf.mxu0
      %v1876 = vadd.f32 %v1857, %v1875
      %v1877 = vpop.f32.mrf.mxu0
      %v1878 = vadd.f32 %v1859, %v1877
      %1879 = vmatmul.bf16.gmra.mxu0 %v508
      %v1880 = vpop.f32.mrf.mxu0
      %v1881 = vadd.f32 %v1862, %v1880
      %v1882 = vpop.f32.mrf.mxu0
      %v1883 = vadd.f32 %v1864, %v1882
      %1884 = vdwg.mxu0
      %1885 = vmatpush.bf16.msra.mxu0 %v1453
      %1886 = vmatpush.bf16.msra.mxu0 %v1449
      %1887 = vmatpush.bf16.msra.mxu0 %v1445
      %1888 = vmatpush.bf16.msra.mxu0 %v1441
      %1889 = vmatpush.bf16.msra.mxu0 %v1437
      %1890 = vmatpush.bf16.msra.mxu0 %v1433
      %1891 = vmatpush.bf16.msra.mxu0 %v1429
      %1892 = vmatpush.bf16.msra.mxu0 %v1425
      %1893 = vmatmul.bf16.gmra.mxu0 %v501
      %v1894 = vpop.f32.mrf.mxu0
      %v1895 = vadd.f32 %v1876, %v1894
      %v1896 = vpop.f32.mrf.mxu0
      %v1897 = vadd.f32 %v1878, %v1896
      %1898 = vmatmul.bf16.gmra.mxu0 %v509
      %v1899 = vpop.f32.mrf.mxu0
      %v1900 = vadd.f32 %v1881, %v1899
      %v1901 = vpop.f32.mrf.mxu0
      %v1902 = vadd.f32 %v1883, %v1901
      %1903 = vdwg.mxu0
      %1904 = vmatpush.bf16.msra.mxu0 %v1485
      %1905 = vmatpush.bf16.msra.mxu0 %v1481
      %1906 = vmatpush.bf16.msra.mxu0 %v1477
      %1907 = vmatpush.bf16.msra.mxu0 %v1473
      %1908 = vmatpush.bf16.msra.mxu0 %v1469
      %1909 = vmatpush.bf16.msra.mxu0 %v1465
      %1910 = vmatpush.bf16.msra.mxu0 %v1461
      %1911 = vmatpush.bf16.msra.mxu0 %v1457
      %1912 = vmatmul.bf16.gmra.mxu0 %v502
      %v1913 = vpop.f32.mrf.mxu0
      %v1914 = vadd.f32 %v1895, %v1913
      %v1915 = vpop.f32.mrf.mxu0
      %v1916 = vadd.f32 %v1897, %v1915
      %1917 = vmatmul.bf16.gmra.mxu0 %v510
      %v1918 = vpop.f32.mrf.mxu0
      %v1919 = vadd.f32 %v1900, %v1918
      %v1920 = vpop.f32.mrf.mxu0
      %v1921 = vadd.f32 %v1902, %v1920
      %1922 = vdwg.mxu0
      %1923 = vmatpush.bf16.msra.mxu0 %v1517
      %1924 = vmatpush.bf16.msra.mxu0 %v1513
      %1925 = vmatpush.bf16.msra.mxu0 %v1509
      %1926 = vmatpush.bf16.msra.mxu0 %v1505
      %1927 = vmatpush.bf16.msra.mxu0 %v1501
      %1928 = vmatpush.bf16.msra.mxu0 %v1497
      %1929 = vmatpush.bf16.msra.mxu0 %v1493
      %1930 = vmatpush.bf16.msra.mxu0 %v1489
      %1931 = vmatmul.bf16.gmra.mxu0 %v503
      %v1932 = vpop.f32.mrf.mxu0
      %v1933 = vadd.f32 %v1914, %v1932
      %v1934 = vpop.f32.mrf.mxu0
      %v1935 = vadd.f32 %v1916, %v1934
      %1936 = vmatmul.bf16.gmra.mxu0 %v511
      %v1937 = vpop.f32.mrf.mxu0
      %v1938 = vadd.f32 %v1919, %v1937
      %v1939 = vpop.f32.mrf.mxu0
      %v1940 = vadd.f32 %v1921, %v1939
      %1941 = vdwg.mxu0
      %1942 = vmatpush.bf16.msra.mxu0 %v1549
      %1943 = vmatpush.bf16.msra.mxu0 %v1545
      %1944 = vmatpush.bf16.msra.mxu0 %v1541
      %1945 = vmatpush.bf16.msra.mxu0 %v1537
      %1946 = vmatpush.bf16.msra.mxu0 %v1533
      %1947 = vmatpush.bf16.msra.mxu0 %v1529
      %1948 = vmatpush.bf16.msra.mxu0 %v1525
      %1949 = vmatpush.bf16.msra.mxu0 %v1521
      %1950 = vmatmul.bf16.gmra.mxu0 %v504
      %v1951 = vpop.f32.mrf.mxu0
      %v1952 = vadd.f32 %v1933, %v1951
      %v1953 = vpop.f32.mrf.mxu0
      %v1954 = vadd.f32 %v1935, %v1953
      %1955 = vmatmul.bf16.gmra.mxu0 %v512
      %v1956 = vpop.f32.mrf.mxu0
      %v1957 = vadd.f32 %v1938, %v1956
      %v1958 = vpop.f32.mrf.mxu0
      %v1959 = vadd.f32 %v1940, %v1958
      %1960 = vdwg.mxu0
      %1961 = vmatpush.bf16.msra.mxu0 %v1326
      %1962 = vmatpush.bf16.msra.mxu0 %v1322
      %1963 = vmatpush.bf16.msra.mxu0 %v1318
      %1964 = vmatpush.bf16.msra.mxu0 %v1314
      %1965 = vmatpush.bf16.msra.mxu0 %v1310
      %1966 = vmatpush.bf16.msra.mxu0 %v1306
      %1967 = vmatpush.bf16.msra.mxu0 %v1302
      %1968 = vmatpush.bf16.msra.mxu0 %v1298
      %1969 = vmatmul.bf16.gmra.mxu0 %v497
      %v1970 = vpop.f32.mrf.mxu0
      %v1971 = vadd.f32 0.0, %v1970
      %v1972 = vpop.f32.mrf.mxu0
      %v1973 = vadd.f32 0.0, %v1972
      %1974 = vmatmul.bf16.gmra.mxu0 %v505
      %v1975 = vpop.f32.mrf.mxu0
      %v1976 = vadd.f32 0.0, %v1975
      %v1977 = vpop.f32.mrf.mxu0
      %v1978 = vadd.f32 0.0, %v1977
      %1979 = vdwg.mxu0
      %1980 = vmatpush.bf16.msra.mxu0 %v1358
      %1981 = vmatpush.bf16.msra.mxu0 %v1354
      %1982 = vmatpush.bf16.msra.mxu0 %v1350
      %1983 = vmatpush.bf16.msra.mxu0 %v1346
      %1984 = vmatpush.bf16.msra.mxu0 %v1342
      %1985 = vmatpush.bf16.msra.mxu0 %v1338
      %1986 = vmatpush.bf16.msra.mxu0 %v1334
      %1987 = vmatpush.bf16.msra.mxu0 %v1330
      %1988 = vmatmul.bf16.gmra.mxu0 %v498
      %v1989 = vpop.f32.mrf.mxu0
      %v1990 = vadd.f32 %v1971, %v1989
      %v1991 = vpop.f32.mrf.mxu0
      %v1992 = vadd.f32 %v1973, %v1991
      %1993 = vmatmul.bf16.gmra.mxu0 %v506
      %v1994 = vpop.f32.mrf.mxu0
      %v1995 = vadd.f32 %v1976, %v1994
      %v1996 = vpop.f32.mrf.mxu0
      %v1997 = vadd.f32 %v1978, %v1996
      %1998 = vdwg.mxu0
      %1999 = vmatpush.bf16.msra.mxu0 %v1390
      %2000 = vmatpush.bf16.msra.mxu0 %v1386
      %2001 = vmatpush.bf16.msra.mxu0 %v1382
      %2002 = vmatpush.bf16.msra.mxu0 %v1378
      %2003 = vmatpush.bf16.msra.mxu0 %v1374
      %2004 = vmatpush.bf16.msra.mxu0 %v1370
      %2005 = vmatpush.bf16.msra.mxu0 %v1366
      %2006 = vmatpush.bf16.msra.mxu0 %v1362
      %2007 = vmatmul.bf16.gmra.mxu0 %v499
      %v2008 = vpop.f32.mrf.mxu0
      %v2009 = vadd.f32 %v1990, %v2008
      %v2010 = vpop.f32.mrf.mxu0
      %v2011 = vadd.f32 %v1992, %v2010
      %2012 = vmatmul.bf16.gmra.mxu0 %v507
      %v2013 = vpop.f32.mrf.mxu0
      %v2014 = vadd.f32 %v1995, %v2013
      %v2015 = vpop.f32.mrf.mxu0
      %v2016 = vadd.f32 %v1997, %v2015
      %2017 = vdwg.mxu0
      %2018 = vmatpush.bf16.msra.mxu0 %v1422
      %2019 = vmatpush.bf16.msra.mxu0 %v1418
      %2020 = vmatpush.bf16.msra.mxu0 %v1414
      %2021 = vmatpush.bf16.msra.mxu0 %v1410
      %2022 = vmatpush.bf16.msra.mxu0 %v1406
      %2023 = vmatpush.bf16.msra.mxu0 %v1402
      %2024 = vmatpush.bf16.msra.mxu0 %v1398
      %2025 = vmatpush.bf16.msra.mxu0 %v1394
      %2026 = vmatmul.bf16.gmra.mxu0 %v500
      %v2027 = vpop.f32.mrf.mxu0
      %v2028 = vadd.f32 %v2009, %v2027
      %v2029 = vpop.f32.mrf.mxu0
      %v2030 = vadd.f32 %v2011, %v2029
      %2031 = vmatmul.bf16.gmra.mxu0 %v508
      %v2032 = vpop.f32.mrf.mxu0
      %v2033 = vadd.f32 %v2014, %v2032
      %v2034 = vpop.f32.mrf.mxu0
      %v2035 = vadd.f32 %v2016, %v2034
      %2036 = vdwg.mxu0
      %2037 = vmatpush.bf16.msra.mxu0 %v1454
      %2038 = vmatpush.bf16.msra.mxu0 %v1450
      %2039 = vmatpush.bf16.msra.mxu0 %v1446
      %2040 = vmatpush.bf16.msra.mxu0 %v1442
      %2041 = vmatpush.bf16.msra.mxu0 %v1438
      %2042 = vmatpush.bf16.msra.mxu0 %v1434
      %2043 = vmatpush.bf16.msra.mxu0 %v1430
      %2044 = vmatpush.bf16.msra.mxu0 %v1426
      %2045 = vmatmul.bf16.gmra.mxu0 %v501
      %v2046 = vpop.f32.mrf.mxu0
      %v2047 = vadd.f32 %v2028, %v2046
      %v2048 = vpop.f32.mrf.mxu0
      %v2049 = vadd.f32 %v2030, %v2048
      %2050 = vmatmul.bf16.gmra.mxu0 %v509
      %v2051 = vpop.f32.mrf.mxu0
      %v2052 = vadd.f32 %v2033, %v2051
      %v2053 = vpop.f32.mrf.mxu0
      %v2054 = vadd.f32 %v2035, %v2053
      %2055 = vdwg.mxu0
      %2056 = vmatpush.bf16.msra.mxu0 %v1486
      %2057 = vmatpush.bf16.msra.mxu0 %v1482
      %2058 = vmatpush.bf16.msra.mxu0 %v1478
      %2059 = vmatpush.bf16.msra.mxu0 %v1474
      %2060 = vmatpush.bf16.msra.mxu0 %v1470
      %2061 = vmatpush.bf16.msra.mxu0 %v1466
      %2062 = vmatpush.bf16.msra.mxu0 %v1462
      %2063 = vmatpush.bf16.msra.mxu0 %v1458
      %2064 = vmatmul.bf16.gmra.mxu0 %v502
      %v2065 = vpop.f32.mrf.mxu0
      %v2066 = vadd.f32 %v2047, %v2065
      %v2067 = vpop.f32.mrf.mxu0
      %v2068 = vadd.f32 %v2049, %v2067
      %2069 = vmatmul.bf16.gmra.mxu0 %v510
      %v2070 = vpop.f32.mrf.mxu0
      %v2071 = vadd.f32 %v2052, %v2070
      %v2072 = vpop.f32.mrf.mxu0
      %v2073 = vadd.f32 %v2054, %v2072
      %2074 = vdwg.mxu0
      %2075 = vmatpush.bf16.msra.mxu0 %v1518
      %2076 = vmatpush.bf16.msra.mxu0 %v1514
      %2077 = vmatpush.bf16.msra.mxu0 %v1510
      %2078 = vmatpush.bf16.msra.mxu0 %v1506
      %2079 = vmatpush.bf16.msra.mxu0 %v1502
      %2080 = vmatpush.bf16.msra.mxu0 %v1498
      %2081 = vmatpush.bf16.msra.mxu0 %v1494
      %2082 = vmatpush.bf16.msra.mxu0 %v1490
      %2083 = vmatmul.bf16.gmra.mxu0 %v503
      %v2084 = vpop.f32.mrf.mxu0
      %v2085 = vadd.f32 %v2066, %v2084
      %v2086 = vpop.f32.mrf.mxu0
      %v2087 = vadd.f32 %v2068, %v2086
      %2088 = vmatmul.bf16.gmra.mxu0 %v511
      %v2089 = vpop.f32.mrf.mxu0
      %v2090 = vadd.f32 %v2071, %v2089
      %v2091 = vpop.f32.mrf.mxu0
      %v2092 = vadd.f32 %v2073, %v2091
      %2093 = vdwg.mxu0
      %2094 = vmatpush.bf16.msra.mxu0 %v1550
      %2095 = vmatpush.bf16.msra.mxu0 %v1546
      %2096 = vmatpush.bf16.msra.mxu0 %v1542
      %2097 = vmatpush.bf16.msra.mxu0 %v1538
      %2098 = vmatpush.bf16.msra.mxu0 %v1534
      %2099 = vmatpush.bf16.msra.mxu0 %v1530
      %2100 = vmatpush.bf16.msra.mxu0 %v1526
      %2101 = vmatpush.bf16.msra.mxu0 %v1522
      %2102 = vmatmul.bf16.gmra.mxu0 %v504
      %v2103 = vpop.f32.mrf.mxu0
      %v2104 = vadd.f32 %v2085, %v2103
      %v2105 = vpop.f32.mrf.mxu0
      %v2106 = vadd.f32 %v2087, %v2105
      %2107 = vmatmul.bf16.gmra.mxu0 %v512
      %v2108 = vpop.f32.mrf.mxu0
      %v2109 = vadd.f32 %v2090, %v2108
      %v2110 = vpop.f32.mrf.mxu0
      %v2111 = vadd.f32 %v2092, %v2110
      %2112 = vdwg.mxu0
      %2113 = vmatpush.bf16.msra.mxu0 %v1327
      %2114 = vmatpush.bf16.msra.mxu0 %v1323
      %2115 = vmatpush.bf16.msra.mxu0 %v1319
      %2116 = vmatpush.bf16.msra.mxu0 %v1315
      %2117 = vmatpush.bf16.msra.mxu0 %v1311
      %2118 = vmatpush.bf16.msra.mxu0 %v1307
      %2119 = vmatpush.bf16.msra.mxu0 %v1303
      %2120 = vmatpush.bf16.msra.mxu0 %v1299
      %2121 = vmatmul.bf16.gmra.mxu0 %v497
      %v2122 = vpop.f32.mrf.mxu0
      %v2123 = vadd.f32 0.0, %v2122
      %v2124 = vpop.f32.mrf.mxu0
      %v2125 = vadd.f32 0.0, %v2124
      %2126 = vmatmul.bf16.gmra.mxu0 %v505
      %v2127 = vpop.f32.mrf.mxu0
      %v2128 = vadd.f32 0.0, %v2127
      %v2129 = vpop.f32.mrf.mxu0
      %v2130 = vadd.f32 0.0, %v2129
      %2131 = vdwg.mxu0
      %2132 = vmatpush.bf16.msra.mxu0 %v1359
      %2133 = vmatpush.bf16.msra.mxu0 %v1355
      %2134 = vmatpush.bf16.msra.mxu0 %v1351
      %2135 = vmatpush.bf16.msra.mxu0 %v1347
      %2136 = vmatpush.bf16.msra.mxu0 %v1343
      %2137 = vmatpush.bf16.msra.mxu0 %v1339
      %2138 = vmatpush.bf16.msra.mxu0 %v1335
      %2139 = vmatpush.bf16.msra.mxu0 %v1331
      %2140 = vmatmul.bf16.gmra.mxu0 %v498
      %v2141 = vpop.f32.mrf.mxu0
      %v2142 = vadd.f32 %v2123, %v2141
      %v2143 = vpop.f32.mrf.mxu0
      %v2144 = vadd.f32 %v2125, %v2143
      %2145 = vmatmul.bf16.gmra.mxu0 %v506
      %v2146 = vpop.f32.mrf.mxu0
      %v2147 = vadd.f32 %v2128, %v2146
      %v2148 = vpop.f32.mrf.mxu0
      %v2149 = vadd.f32 %v2130, %v2148
      %2150 = vdwg.mxu0
      %2151 = vmatpush.bf16.msra.mxu0 %v1391
      %2152 = vmatpush.bf16.msra.mxu0 %v1387
      %2153 = vmatpush.bf16.msra.mxu0 %v1383
      %2154 = vmatpush.bf16.msra.mxu0 %v1379
      %2155 = vmatpush.bf16.msra.mxu0 %v1375
      %2156 = vmatpush.bf16.msra.mxu0 %v1371
      %2157 = vmatpush.bf16.msra.mxu0 %v1367
      %2158 = vmatpush.bf16.msra.mxu0 %v1363
      %2159 = vmatmul.bf16.gmra.mxu0 %v499
      %v2160 = vpop.f32.mrf.mxu0
      %v2161 = vadd.f32 %v2142, %v2160
      %v2162 = vpop.f32.mrf.mxu0
      %v2163 = vadd.f32 %v2144, %v2162
      %2164 = vmatmul.bf16.gmra.mxu0 %v507
      %v2165 = vpop.f32.mrf.mxu0
      %v2166 = vadd.f32 %v2147, %v2165
      %v2167 = vpop.f32.mrf.mxu0
      %v2168 = vadd.f32 %v2149, %v2167
      %2169 = vdwg.mxu0
      %2170 = vmatpush.bf16.msra.mxu0 %v1423
      %2171 = vmatpush.bf16.msra.mxu0 %v1419
      %2172 = vmatpush.bf16.msra.mxu0 %v1415
      %2173 = vmatpush.bf16.msra.mxu0 %v1411
      %2174 = vmatpush.bf16.msra.mxu0 %v1407
      %2175 = vmatpush.bf16.msra.mxu0 %v1403
      %2176 = vmatpush.bf16.msra.mxu0 %v1399
      %2177 = vmatpush.bf16.msra.mxu0 %v1395
      %2178 = vmatmul.bf16.gmra.mxu0 %v500
      %v2179 = vpop.f32.mrf.mxu0
      %v2180 = vadd.f32 %v2161, %v2179
      %v2181 = vpop.f32.mrf.mxu0
      %v2182 = vadd.f32 %v2163, %v2181
      %2183 = vmatmul.bf16.gmra.mxu0 %v508
      %v2184 = vpop.f32.mrf.mxu0
      %v2185 = vadd.f32 %v2166, %v2184
      %v2186 = vpop.f32.mrf.mxu0
      %v2187 = vadd.f32 %v2168, %v2186
      %2188 = vdwg.mxu0
      %2189 = vmatpush.bf16.msra.mxu0 %v1455
      %2190 = vmatpush.bf16.msra.mxu0 %v1451
      %2191 = vmatpush.bf16.msra.mxu0 %v1447
      %2192 = vmatpush.bf16.msra.mxu0 %v1443
      %2193 = vmatpush.bf16.msra.mxu0 %v1439
      %2194 = vmatpush.bf16.msra.mxu0 %v1435
      %2195 = vmatpush.bf16.msra.mxu0 %v1431
      %2196 = vmatpush.bf16.msra.mxu0 %v1427
      %2197 = vmatmul.bf16.gmra.mxu0 %v501
      %v2198 = vpop.f32.mrf.mxu0
      %v2199 = vadd.f32 %v2180, %v2198
      %v2200 = vpop.f32.mrf.mxu0
      %v2201 = vadd.f32 %v2182, %v2200
      %2202 = vmatmul.bf16.gmra.mxu0 %v509
      %v2203 = vpop.f32.mrf.mxu0
      %v2204 = vadd.f32 %v2185, %v2203
      %v2205 = vpop.f32.mrf.mxu0
      %v2206 = vadd.f32 %v2187, %v2205
      %2207 = vdwg.mxu0
      %2208 = vmatpush.bf16.msra.mxu0 %v1487
      %2209 = vmatpush.bf16.msra.mxu0 %v1483
      %2210 = vmatpush.bf16.msra.mxu0 %v1479
      %2211 = vmatpush.bf16.msra.mxu0 %v1475
      %2212 = vmatpush.bf16.msra.mxu0 %v1471
      %2213 = vmatpush.bf16.msra.mxu0 %v1467
      %2214 = vmatpush.bf16.msra.mxu0 %v1463
      %2215 = vmatpush.bf16.msra.mxu0 %v1459
      %2216 = vmatmul.bf16.gmra.mxu0 %v502
      %v2217 = vpop.f32.mrf.mxu0
      %v2218 = vadd.f32 %v2199, %v2217
      %v2219 = vpop.f32.mrf.mxu0
      %v2220 = vadd.f32 %v2201, %v2219
      %2221 = vmatmul.bf16.gmra.mxu0 %v510
      %v2222 = vpop.f32.mrf.mxu0
      %v2223 = vadd.f32 %v2204, %v2222
      %v2224 = vpop.f32.mrf.mxu0
      %v2225 = vadd.f32 %v2206, %v2224
      %2226 = vdwg.mxu0
      %2227 = vmatpush.bf16.msra.mxu0 %v1519
      %2228 = vmatpush.bf16.msra.mxu0 %v1515
      %2229 = vmatpush.bf16.msra.mxu0 %v1511
      %2230 = vmatpush.bf16.msra.mxu0 %v1507
      %2231 = vmatpush.bf16.msra.mxu0 %v1503
      %2232 = vmatpush.bf16.msra.mxu0 %v1499
      %2233 = vmatpush.bf16.msra.mxu0 %v1495
      %2234 = vmatpush.bf16.msra.mxu0 %v1491
      %2235 = vmatmul.bf16.gmra.mxu0 %v503
      %v2236 = vpop.f32.mrf.mxu0
      %v2237 = vadd.f32 %v2218, %v2236
      %v2238 = vpop.f32.mrf.mxu0
      %v2239 = vadd.f32 %v2220, %v2238
      %2240 = vmatmul.bf16.gmra.mxu0 %v511
      %v2241 = vpop.f32.mrf.mxu0
      %v2242 = vadd.f32 %v2223, %v2241
      %v2243 = vpop.f32.mrf.mxu0
      %v2244 = vadd.f32 %v2225, %v2243
      %2245 = vdwg.mxu0
      %2246 = vmatpush.bf16.msra.mxu0 %v1551
      %2247 = vmatpush.bf16.msra.mxu0 %v1547
      %2248 = vmatpush.bf16.msra.mxu0 %v1543
      %2249 = vmatpush.bf16.msra.mxu0 %v1539
      %2250 = vmatpush.bf16.msra.mxu0 %v1535
      %2251 = vmatpush.bf16.msra.mxu0 %v1531
      %2252 = vmatpush.bf16.msra.mxu0 %v1527
      %2253 = vmatpush.bf16.msra.mxu0 %v1523
      %2254 = vmatmul.bf16.gmra.mxu0 %v504
      %v2255 = vpop.f32.mrf.mxu0
      %v2256 = vadd.f32 %v2237, %v2255
      %v2257 = vpop.f32.mrf.mxu0
      %v2258 = vadd.f32 %v2239, %v2257
      %2259 = vmatmul.bf16.gmra.mxu0 %v512
      %v2260 = vpop.f32.mrf.mxu0
      %v2261 = vadd.f32 %v2242, %v2260
      %v2262 = vpop.f32.mrf.mxu0
      %v2263 = vadd.f32 %v2244, %v2262
      %2264 = vdwg.mxu0
      %2265 = vmatpush.bf16.msra.mxu0 %v1328
      %2266 = vmatpush.bf16.msra.mxu0 %v1324
      %2267 = vmatpush.bf16.msra.mxu0 %v1320
      %2268 = vmatpush.bf16.msra.mxu0 %v1316
      %2269 = vmatpush.bf16.msra.mxu0 %v1312
      %2270 = vmatpush.bf16.msra.mxu0 %v1308
      %2271 = vmatpush.bf16.msra.mxu0 %v1304
      %2272 = vmatpush.bf16.msra.mxu0 %v1300
      %2273 = vmatmul.bf16.gmra.mxu0 %v497
      %v2274 = vpop.f32.mrf.mxu0
      %v2275 = vadd.f32 0.0, %v2274
      %v2276 = vpop.f32.mrf.mxu0
      %v2277 = vadd.f32 0.0, %v2276
      %2278 = vmatmul.bf16.gmra.mxu0 %v505
      %v2279 = vpop.f32.mrf.mxu0
      %v2280 = vadd.f32 0.0, %v2279
      %v2281 = vpop.f32.mrf.mxu0
      %v2282 = vadd.f32 0.0, %v2281
      %2283 = vdwg.mxu0
      %2284 = vmatpush.bf16.msra.mxu0 %v1360
      %2285 = vmatpush.bf16.msra.mxu0 %v1356
      %2286 = vmatpush.bf16.msra.mxu0 %v1352
      %2287 = vmatpush.bf16.msra.mxu0 %v1348
      %2288 = vmatpush.bf16.msra.mxu0 %v1344
      %2289 = vmatpush.bf16.msra.mxu0 %v1340
      %2290 = vmatpush.bf16.msra.mxu0 %v1336
      %2291 = vmatpush.bf16.msra.mxu0 %v1332
      %2292 = vmatmul.bf16.gmra.mxu0 %v498
      %v2293 = vpop.f32.mrf.mxu0
      %v2294 = vadd.f32 %v2275, %v2293
      %v2295 = vpop.f32.mrf.mxu0
      %v2296 = vadd.f32 %v2277, %v2295
      %2297 = vmatmul.bf16.gmra.mxu0 %v506
      %v2298 = vpop.f32.mrf.mxu0
      %v2299 = vadd.f32 %v2280, %v2298
      %v2300 = vpop.f32.mrf.mxu0
      %v2301 = vadd.f32 %v2282, %v2300
      %2302 = vdwg.mxu0
      %2303 = vmatpush.bf16.msra.mxu0 %v1392
      %2304 = vmatpush.bf16.msra.mxu0 %v1388
      %2305 = vmatpush.bf16.msra.mxu0 %v1384
      %2306 = vmatpush.bf16.msra.mxu0 %v1380
      %2307 = vmatpush.bf16.msra.mxu0 %v1376
      %2308 = vmatpush.bf16.msra.mxu0 %v1372
      %2309 = vmatpush.bf16.msra.mxu0 %v1368
      %2310 = vmatpush.bf16.msra.mxu0 %v1364
      %2311 = vmatmul.bf16.gmra.mxu0 %v499
      %v2312 = vpop.f32.mrf.mxu0
      %v2313 = vadd.f32 %v2294, %v2312
      %v2314 = vpop.f32.mrf.mxu0
      %v2315 = vadd.f32 %v2296, %v2314
      %2316 = vmatmul.bf16.gmra.mxu0 %v507
      %v2317 = vpop.f32.mrf.mxu0
      %v2318 = vadd.f32 %v2299, %v2317
      %v2319 = vpop.f32.mrf.mxu0
      %v2320 = vadd.f32 %v2301, %v2319
      %2321 = vdwg.mxu0
      %2322 = vmatpush.bf16.msra.mxu0 %v1424
      %2323 = vmatpush.bf16.msra.mxu0 %v1420
      %2324 = vmatpush.bf16.msra.mxu0 %v1416
      %2325 = vmatpush.bf16.msra.mxu0 %v1412
      %2326 = vmatpush.bf16.msra.mxu0 %v1408
      %2327 = vmatpush.bf16.msra.mxu0 %v1404
      %2328 = vmatpush.bf16.msra.mxu0 %v1400
      %2329 = vmatpush.bf16.msra.mxu0 %v1396
      %2330 = vmatmul.bf16.gmra.mxu0 %v500
      %v2331 = vpop.f32.mrf.mxu0
      %v2332 = vadd.f32 %v2313, %v2331
      %v2333 = vpop.f32.mrf.mxu0
      %v2334 = vadd.f32 %v2315, %v2333
      %2335 = vmatmul.bf16.gmra.mxu0 %v508
      %v2336 = vpop.f32.mrf.mxu0
      %v2337 = vadd.f32 %v2318, %v2336
      %v2338 = vpop.f32.mrf.mxu0
      %v2339 = vadd.f32 %v2320, %v2338
      %2340 = vdwg.mxu0
      %2341 = vmatpush.bf16.msra.mxu0 %v1456
      %2342 = vmatpush.bf16.msra.mxu0 %v1452
      %2343 = vmatpush.bf16.msra.mxu0 %v1448
      %2344 = vmatpush.bf16.msra.mxu0 %v1444
      %2345 = vmatpush.bf16.msra.mxu0 %v1440
      %2346 = vmatpush.bf16.msra.mxu0 %v1436
      %2347 = vmatpush.bf16.msra.mxu0 %v1432
      %2348 = vmatpush.bf16.msra.mxu0 %v1428
      %2349 = vmatmul.bf16.gmra.mxu0 %v501
      %v2350 = vpop.f32.mrf.mxu0
      %v2351 = vadd.f32 %v2332, %v2350
      %v2352 = vpop.f32.mrf.mxu0
      %v2353 = vadd.f32 %v2334, %v2352
      %2354 = vmatmul.bf16.gmra.mxu0 %v509
      %v2355 = vpop.f32.mrf.mxu0
      %v2356 = vadd.f32 %v2337, %v2355
      %v2357 = vpop.f32.mrf.mxu0
      %v2358 = vadd.f32 %v2339, %v2357
      %2359 = vdwg.mxu0
      %2360 = vmatpush.bf16.msra.mxu0 %v1488
      %2361 = vmatpush.bf16.msra.mxu0 %v1484
      %2362 = vmatpush.bf16.msra.mxu0 %v1480
      %2363 = vmatpush.bf16.msra.mxu0 %v1476
      %2364 = vmatpush.bf16.msra.mxu0 %v1472
      %2365 = vmatpush.bf16.msra.mxu0 %v1468
      %2366 = vmatpush.bf16.msra.mxu0 %v1464
      %2367 = vmatpush.bf16.msra.mxu0 %v1460
      %2368 = vmatmul.bf16.gmra.mxu0 %v502
      %v2369 = vpop.f32.mrf.mxu0
      %v2370 = vadd.f32 %v2351, %v2369
      %v2371 = vpop.f32.mrf.mxu0
      %v2372 = vadd.f32 %v2353, %v2371
      %2373 = vmatmul.bf16.gmra.mxu0 %v510
      %v2374 = vpop.f32.mrf.mxu0
      %v2375 = vadd.f32 %v2356, %v2374
      %v2376 = vpop.f32.mrf.mxu0
      %v2377 = vadd.f32 %v2358, %v2376
      %2378 = vdwg.mxu0
      %2379 = vmatpush.bf16.msra.mxu0 %v1520
      %2380 = vmatpush.bf16.msra.mxu0 %v1516
      %2381 = vmatpush.bf16.msra.mxu0 %v1512
      %2382 = vmatpush.bf16.msra.mxu0 %v1508
      %2383 = vmatpush.bf16.msra.mxu0 %v1504
      %2384 = vmatpush.bf16.msra.mxu0 %v1500
      %2385 = vmatpush.bf16.msra.mxu0 %v1496
      %2386 = vmatpush.bf16.msra.mxu0 %v1492
      %2387 = vmatmul.bf16.gmra.mxu0 %v503
      %v2388 = vpop.f32.mrf.mxu0
      %v2389 = vadd.f32 %v2370, %v2388
      %v2390 = vpop.f32.mrf.mxu0
      %v2391 = vadd.f32 %v2372, %v2390
      %2392 = vmatmul.bf16.gmra.mxu0 %v511
      %v2393 = vpop.f32.mrf.mxu0
      %v2394 = vadd.f32 %v2375, %v2393
      %v2395 = vpop.f32.mrf.mxu0
      %v2396 = vadd.f32 %v2377, %v2395
      %2397 = vdwg.mxu0
      %2398 = vmatpush.bf16.msra.mxu0 %v1552
      %2399 = vmatpush.bf16.msra.mxu0 %v1548
      %2400 = vmatpush.bf16.msra.mxu0 %v1544
      %2401 = vmatpush.bf16.msra.mxu0 %v1540
      %2402 = vmatpush.bf16.msra.mxu0 %v1536
      %2403 = vmatpush.bf16.msra.mxu0 %v1532
      %2404 = vmatpush.bf16.msra.mxu0 %v1528
      %2405 = vmatpush.bf16.msra.mxu0 %v1524
      %2406 = vmatmul.bf16.gmra.mxu0 %v504
      %v2407 = vpop.f32.mrf.mxu0
      %v2408 = vadd.f32 %v2389, %v2407
      %v2409 = vpop.f32.mrf.mxu0
      %v2410 = vadd.f32 %v2391, %v2409
      %2411 = vmatmul.bf16.gmra.mxu0 %v512
      %v2412 = vpop.f32.mrf.mxu0
      %v2413 = vadd.f32 %v2394, %v2412
      %v2414 = vpop.f32.mrf.mxu0
      %v2415 = vadd.f32 %v2396, %v2414
      %2416 = vdwg.mxu0
      %v2417 = vmax.f32 %v1952, %v2104
      %v2418 = vmax.f32 %v1954, %v2106
      %v2419 = vmax.f32 %v1957, %v2109
      %v2420 = vmax.f32 %v1959, %v2111
      %v2421 = vmax.f32 %v2256, %v2408
      %v2422 = vmax.f32 %v2258, %v2410
      %v2423 = vmax.f32 %v2261, %v2413
      %v2424 = vmax.f32 %v2263, %v2415
      %v2425 = vmax.f32 %v2417, %v2421
      %v2426 = vmax.f32 %v2418, %v2422
      %v2427 = vmax.f32 %v2419, %v2423
      %v2428 = vmax.f32 %v2420, %v2424
      %v2429 = vld [vmem:[%s2] sm:$0x1]
      %v2431 = vperm.slane %v2429, 0
      %v2433 = vadd.f32 %v2425, %v2431
      %v2434 = vadd.f32 %v2426, %v2431
      %v2435 = vadd.f32 %v2427, %v2431
      %v2436 = vadd.f32 %v2428, %v2431
      %v2437 = vmax.f32 %v2433, 0.0
      %v2438 = vmax.f32 %v2434, 0.0
      %v2439 = vmax.f32 %v2435, 0.0
      %v2440 = vmax.f32 %v2436, 0.0
      %v2441 = vpack.c.bf16 %v2437, %v2437
      %v2442 = vpack.c.bf16 %v2438, %v2438
      %v2443 = vpack.c.bf16 %v2439, %v2439
      %v2444 = vpack.c.bf16 %v2440, %v2440
      %2445 = vst [vmem:[%s175] sm:$0xf] %v2441
      %2446 = vst [vmem:[%s175 + $0x4] sm:$0xf] %v2442
      %2447 = vst [vmem:[%s175 + $0x8] sm:$0xf] %v2443
      %2448 = vst [vmem:[%s175 + $0xc] sm:$0xf] %v2444
      %s2449 = smul.u32 4, %s14
      %p2450 = scmp.lt.s32.totalorder %s2449, 7
      %s2451 = scalar_select %p2450, %s2449, 7
      %s2452 = smul.addr %s2451, 4
      %s2453 = scalar_lea.vmem %s3, %s2452
      // Predicated region
      $region33: #{pikv_moe_forward.4} parent=31 // pred_check
        %p2454 = pneg %p100
      $region34: #{pikv_moe_forward.4} parent=31 // pred_check_branch
        %2456 = sbr.rel (%p2454) target = $region36
      $region35: #{pikv_moe_forward.4} parent=31 // pred_region
        %s2457 = smul.u32 4, %s14
      $region36: #{pikv_moe_forward.4} parent=31 // pred_fallthru
        _
    $region32: #{pikv_moe_forward.4} parent=5 // pred_fallthru
      _
    %p2458 = scmp.le.s32.totalorder 2, %s9
    // Predicated region
    $region37: #{pikv_moe_forward.4} parent=5 // pred_check
      %p2459 = pneg %p2458
    $region38: #{pikv_moe_forward.4} parent=5 // pred_check_branch
      %2461 = sbr.rel (%p2459) target = $region40
    $region39: #{pikv_moe_forward.4} parent=5 // pred_region
      %s2462 = ssub.s32 %s9, 2
      // Predicated region
      $region41: #{pikv_moe_forward.4} parent=39 // pred_check
        %p2463 = pneg %p106
      $region42: #{pikv_moe_forward.4} parent=39 // pred_check_branch
        %2465 = sbr.rel (%p2463) target = $region44
      $region43: #{pikv_moe_forward.4} parent=39 // pred_region
        %s2466 = smul.u32 4, %s15
        %p2467 = scmp.lt.s32.totalorder %s2466, 7
        %s2468 = scalar_select %p2467, %s2466, 7
        %s2469 = smul.addr %s2468, 4
        %s2470 = scalar_lea.vmem %s3, %s2469
      $region44: #{pikv_moe_forward.4} parent=39 // pred_fallthru
        _
    $region40: #{pikv_moe_forward.4} parent=5 // pred_fallthru
      _
  $region6: #{pikv_moe_forward.4} parent=0 // loop_footer
    %s13 = sadd.s32 1, %s9
  $region7: #{pikv_moe_forward.4} parent=0 // loop_footer_branch
    %8 = sbr.rel target = $region3
  $region8: #{pikv_moe_forward.4} parent=0 // loop_exit
    _

// kernel: pikv_moe_forward.5
$region0: #{pikv_moe_forward.5}
  #allocation0 [shape = 'u32[]', space=smem, size = 0x4, offset = 0x4, fixed_abs, tag = 'smem constant byte address 0x4 - core index']
  #allocation1 [shape = 'u32[72,128]{1,0:T(1,128)}', space=vmem, size = 0x9000, scoped, tag = 'internal scratch']
  %s0 = inlined_call_operand.vmem [shape: bf16[16,3136], index: 0, kind: input, shape index: {}]
  %s1 = inlined_call_operand.vmem [shape: bf16[3136,256], index: 1, kind: input, shape index: {}]
  %s2 = inlined_call_operand.vmem [shape: f32[1,256], index: 2, kind: input, shape index: {}]
  %s3 = inlined_call_operand.vmem [shape: bf16[256,1152], index: 3, kind: input, shape index: {}]
  %s4 = inlined_call_operand.vmem [shape: f32[1,1152], index: 4, kind: input, shape index: {}]
  %s5 = inlined_call_operand.vmem [shape: bf16[256,10], index: 5, kind: input, shape index: {}]
  %s6 = inlined_call_operand.vmem [shape: f32[1,10], index: 6, kind: input, shape index: {}]
  %s7 = inlined_call_operand.vmem [shape: f32[16,10], index: 7, kind: output, shape index: {}]
  %s8 = sld [smem:[#allocation0]]
  $region38: #{pikv_moe_forward.5} parent=0
    _
  %s10 = ssub.s32 1, %s8
  %s11 = scalar_select 0, %s10, %s8
  // Predicated region
  $region2: #{pikv_moe_forward.5} parent=0 // pred_check
    _
  $region3: #{pikv_moe_forward.5} parent=0 // pred_check_branch
    %13 = sbr.rel (0) target = $region5
  $region4: #{pikv_moe_forward.5} parent=0 // pred_region
    _
  $region5: #{pikv_moe_forward.5} parent=0 // pred_fallthru
    _
  // Predicated region
  $region6: #{pikv_moe_forward.5} parent=0 // pred_check
    _
  $region7: #{pikv_moe_forward.5} parent=0 // pred_check_branch
    %15 = sbr.rel (0) target = $region9
  $region8: #{pikv_moe_forward.5} parent=0 // pred_region
    _
  $region9: #{pikv_moe_forward.5} parent=0 // pred_fallthru
    _
  // Predicated region
  $region10: #{pikv_moe_forward.5} parent=0 // pred_check
    _
  $region11: #{pikv_moe_forward.5} parent=0 // pred_check_branch
    %17 = sbr.rel (0) target = $region13
  $region12: #{pikv_moe_forward.5} parent=0 // pred_region
    _
  $region13: #{pikv_moe_forward.5} parent=0 // pred_fallthru
    _
  // Predicated region
  $region14: #{pikv_moe_forward.5} parent=0 // pred_check
    _
  $region15: #{pikv_moe_forward.5} parent=0 // pred_check_branch
    %19 = sbr.rel (0) target = $region17
  $region16: #{pikv_moe_forward.5} parent=0 // pred_region
    _
  $region17: #{pikv_moe_forward.5} parent=0 // pred_fallthru
    _
  // Predicated region
  $region18: #{pikv_moe_forward.5} parent=0 // pred_check
    _
  $region19: #{pikv_moe_forward.5} parent=0 // pred_check_branch
    %21 = sbr.rel (0) target = $region21
  $region20: #{pikv_moe_forward.5} parent=0 // pred_region
    _
  $region21: #{pikv_moe_forward.5} parent=0 // pred_fallthru
    _
  // Predicated region
  $region22: #{pikv_moe_forward.5} parent=0 // pred_check
    _
  $region23: #{pikv_moe_forward.5} parent=0 // pred_check_branch
    %23 = sbr.rel (0) target = $region25
  $region24: #{pikv_moe_forward.5} parent=0 // pred_region
    _
  $region25: #{pikv_moe_forward.5} parent=0 // pred_fallthru
    _
  // Predicated region
  $region26: #{pikv_moe_forward.5} parent=0 // pred_check
    _
  $region27: #{pikv_moe_forward.5} parent=0 // pred_check_branch
    %25 = sbr.rel (0) target = $region29
  $region28: #{pikv_moe_forward.5} parent=0 // pred_region
    _
  $region29: #{pikv_moe_forward.5} parent=0 // pred_fallthru
    _
  %v27 = vld [vmem:[%s0] sm:$0xff]
  %v28 = vld [vmem:[%s0 + $0x8] sm:$0xff]
  %v29 = vld [vmem:[%s0 + $0x10] sm:$0xff]
  %v30 = vld [vmem:[%s0 + $0x18] sm:$0xff]
  %v31 = vld [vmem:[%s0 + $0x20] sm:$0xff]
  %v32 = vld [vmem:[%s0 + $0x28] sm:$0xff]
  %v33 = vld [vmem:[%s0 + $0x30] sm:$0xff]
  %v34 = vld [vmem:[%s0 + $0x38] sm:$0xff]
  %v35 = vld [vmem:[%s0 + $0x40] sm:$0xff]
  %v36 = vld [vmem:[%s0 + $0x48] sm:$0xff]
  %v37 = vld [vmem:[%s0 + $0x50] sm:$0xff]
  %v38 = vld [vmem:[%s0 + $0x58] sm:$0xff]
  %v39 = vld [vmem:[%s0 + $0x60] sm:$0xf]
  %v40 = vld [vmem:[%s0 + $0x64] sm:$0xff]
  %v41 = vld [vmem:[%s0 + $0x6c] sm:$0xff]
  %v42 = vld [vmem:[%s0 + $0x74] sm:$0xff]
  %v43 = vld [vmem:[%s0 + $0x7c] sm:$0xff]
  %v44 = vld [vmem:[%s0 + $0x84] sm:$0xff]
  %v45 = vld [vmem:[%s0 + $0x8c] sm:$0xff]
  %v46 = vld [vmem:[%s0 + $0x94] sm:$0xff]
  %v47 = vld [vmem:[%s0 + $0x9c] sm:$0xff]
  %v48 = vld [vmem:[%s0 + $0xa4] sm:$0xff]
  %v49 = vld [vmem:[%s0 + $0xac] sm:$0xff]
  %v50 = vld [vmem:[%s0 + $0xb4] sm:$0xff]
  %v51 = vld [vmem:[%s0 + $0xbc] sm:$0xff]
  %v52 = vld [vmem:[%s0 + $0xc4] sm:$0xf]
  %v53 = vld [vmem:[%s1] sm:$0xff]
  %v54 = vld [vmem:[%s1 + $0x8] sm:$0xff]
  %v55 = vld [vmem:[%s1 + $0x10] sm:$0xff]
  %v56 = vld [vmem:[%s1 + $0x18] sm:$0xff]
  %v57 = vld [vmem:[%s1 + $0x20] sm:$0xff]
  %v58 = vld [vmem:[%s1 + $0x28] sm:$0xff]
  %v59 = vld [vmem:[%s1 + $0x30] sm:$0xff]
  %v60 = vld [vmem:[%s1 + $0x38] sm:$0xff]
  %v61 = vld [vmem:[%s1 + $0x40] sm:$0xff]
  %v62 = vld [vmem:[%s1 + $0x48] sm:$0xff]
  %v63 = vld [vmem:[%s1 + $0x50] sm:$0xff]
  %v64 = vld [vmem:[%s1 + $0x58] sm:$0xff]
  %v65 = vld [vmem:[%s1 + $0x60] sm:$0xff]
  %v66 = vld [vmem:[%s1 + $0x68] sm:$0xff]
  %v67 = vld [vmem:[%s1 + $0x70] sm:$0xff]
  %v68 = vld [vmem:[%s1 + $0x78] sm:$0xff]
  %v69 = vld [vmem:[%s1 + $0x80] sm:$0xff]
  %v70 = vld [vmem:[%s1 + $0x88] sm:$0xff]
  %v71 = vld [vmem:[%s1 + $0x90] sm:$0xff]
  %v72 = vld [vmem:[%s1 + $0x98] sm:$0xff]
  %v73 = vld [vmem:[%s1 + $0xa0] sm:$0xff]
  %v74 = vld [vmem:[%s1 + $0xa8] sm:$0xff]
  %v75 = vld [vmem:[%s1 + $0xb0] sm:$0xff]
  %v76 = vld [vmem:[%s1 + $0xb8] sm:$0xff]
  %v77 = vld [vmem:[%s1 + $0xc0] sm:$0xff]
  %v78 = vld [vmem:[%s1 + $0xc8] sm:$0xff]
  %v79 = vld [vmem:[%s1 + $0xd0] sm:$0xff]
  %v80 = vld [vmem:[%s1 + $0xd8] sm:$0xff]
  %v81 = vld [vmem:[%s1 + $0xe0] sm:$0xff]
  %v82 = vld [vmem:[%s1 + $0xe8] sm:$0xff]
  %v83 = vld [vmem:[%s1 + $0xf0] sm:$0xff]
  %v84 = vld [vmem:[%s1 + $0xf8] sm:$0xff]
  %v85 = vld [vmem:[%s1 + $0x100] sm:$0xff]
  %v86 = vld [vmem:[%s1 + $0x108] sm:$0xff]
  %v87 = vld [vmem:[%s1 + $0x110] sm:$0xff]
  %v88 = vld [vmem:[%s1 + $0x118] sm:$0xff]
  %v89 = vld [vmem:[%s1 + $0x120] sm:$0xff]
  %v90 = vld [vmem:[%s1 + $0x128] sm:$0xff]
  %v91 = vld [vmem:[%s1 + $0x130] sm:$0xff]
  %v92 = vld [vmem:[%s1 + $0x138] sm:$0xff]
  %v93 = vld [vmem:[%s1 + $0x140] sm:$0xff]
  %v94 = vld [vmem:[%s1 + $0x148] sm:$0xff]
  %v95 = vld [vmem:[%s1 + $0x150] sm:$0xff]
  %v96 = vld [vmem:[%s1 + $0x158] sm:$0xff]
  %v97 = vld [vmem:[%s1 + $0x160] sm:$0xff]
  %v98 = vld [vmem:[%s1 + $0x168] sm:$0xff]
  %v99 = vld [vmem:[%s1 + $0x170] sm:$0xff]
  %v100 = vld [vmem:[%s1 + $0x178] sm:$0xff]
  %v101 = vld [vmem:[%s1 + $0x180] sm:$0xff]
  %v102 = vld [vmem:[%s1 + $0x188] sm:$0xff]
  %v103 = vld [vmem:[%s1 + $0x190] sm:$0xff]
  %v104 = vld [vmem:[%s1 + $0x198] sm:$0xff]
  %v105 = vld [vmem:[%s1 + $0x1a0] sm:$0xff]
  %v106 = vld [vmem:[%s1 + $0x1a8] sm:$0xff]
  %v107 = vld [vmem:[%s1 + $0x1b0] sm:$0xff]
  %v108 = vld [vmem:[%s1 + $0x1b8] sm:$0xff]
  %v109 = vld [vmem:[%s1 + $0x1c0] sm:$0xff]
  %v110 = vld [vmem:[%s1 + $0x1c8] sm:$0xff]
  %v111 = vld [vmem:[%s1 + $0x1d0] sm:$0xff]
  %v112 = vld [vmem:[%s1 + $0x1d8] sm:$0xff]
  %v113 = vld [vmem:[%s1 + $0x1e0] sm:$0xff]
  %v114 = vld [vmem:[%s1 + $0x1e8] sm:$0xff]
  %v115 = vld [vmem:[%s1 + $0x1f0] sm:$0xff]
  %v116 = vld [vmem:[%s1 + $0x1f8] sm:$0xff]
  %v117 = vld [vmem:[%s1 + $0x200] sm:$0xff]
  %v118 = vld [vmem:[%s1 + $0x208] sm:$0xff]
  %v119 = vld [vmem:[%s1 + $0x210] sm:$0xff]
  %v120 = vld [vmem:[%s1 + $0x218] sm:$0xff]
  %v121 = vld [vmem:[%s1 + $0x220] sm:$0xff]
  %v122 = vld [vmem:[%s1 + $0x228] sm:$0xff]
  %v123 = vld [vmem:[%s1 + $0x230] sm:$0xff]
  %v124 = vld [vmem:[%s1 + $0x238] sm:$0xff]
  %v125 = vld [vmem:[%s1 + $0x240] sm:$0xff]
  %v126 = vld [vmem:[%s1 + $0x248] sm:$0xff]
  %v127 = vld [vmem:[%s1 + $0x250] sm:$0xff]
  %v128 = vld [vmem:[%s1 + $0x258] sm:$0xff]
  %v129 = vld [vmem:[%s1 + $0x260] sm:$0xff]
  %v130 = vld [vmem:[%s1 + $0x268] sm:$0xff]
  %v131 = vld [vmem:[%s1 + $0x270] sm:$0xff]
  %v132 = vld [vmem:[%s1 + $0x278] sm:$0xff]
  %v133 = vld [vmem:[%s1 + $0x280] sm:$0xff]
  %v134 = vld [vmem:[%s1 + $0x288] sm:$0xff]
  %v135 = vld [vmem:[%s1 + $0x290] sm:$0xff]
  %v136 = vld [vmem:[%s1 + $0x298] sm:$0xff]
  %v137 = vld [vmem:[%s1 + $0x2a0] sm:$0xff]
  %v138 = vld [vmem:[%s1 + $0x2a8] sm:$0xff]
  %v139 = vld [vmem:[%s1 + $0x2b0] sm:$0xff]
  %v140 = vld [vmem:[%s1 + $0x2b8] sm:$0xff]
  %v141 = vld [vmem:[%s1 + $0x2c0] sm:$0xff]
  %v142 = vld [vmem:[%s1 + $0x2c8] sm:$0xff]
  %v143 = vld [vmem:[%s1 + $0x2d0] sm:$0xff]
  %v144 = vld [vmem:[%s1 + $0x2d8] sm:$0xff]
  %v145 = vld [vmem:[%s1 + $0x2e0] sm:$0xff]
  %v146 = vld [vmem:[%s1 + $0x2e8] sm:$0xff]
  %v147 = vld [vmem:[%s1 + $0x2f0] sm:$0xff]
  %v148 = vld [vmem:[%s1 + $0x2f8] sm:$0xff]
  %v149 = vld [vmem:[%s1 + $0x300] sm:$0xff]
  %v150 = vld [vmem:[%s1 + $0x308] sm:$0xff]
  %v151 = vld [vmem:[%s1 + $0x310] sm:$0xff]
  %v152 = vld [vmem:[%s1 + $0x318] sm:$0xff]
  %v153 = vld [vmem:[%s1 + $0x320] sm:$0xff]
  %v154 = vld [vmem:[%s1 + $0x328] sm:$0xff]
  %v155 = vld [vmem:[%s1 + $0x330] sm:$0xff]
  %v156 = vld [vmem:[%s1 + $0x338] sm:$0xff]
  %v157 = vld [vmem:[%s1 + $0x340] sm:$0xff]
  %v158 = vld [vmem:[%s1 + $0x348] sm:$0xff]
  %v159 = vld [vmem:[%s1 + $0x350] sm:$0xff]
  %v160 = vld [vmem:[%s1 + $0x358] sm:$0xff]
  %v161 = vld [vmem:[%s1 + $0x360] sm:$0xff]
  %v162 = vld [vmem:[%s1 + $0x368] sm:$0xff]
  %v163 = vld [vmem:[%s1 + $0x370] sm:$0xff]
  %v164 = vld [vmem:[%s1 + $0x378] sm:$0xff]
  %v165 = vld [vmem:[%s1 + $0x380] sm:$0xff]
  %v166 = vld [vmem:[%s1 + $0x388] sm:$0xff]
  %v167 = vld [vmem:[%s1 + $0x390] sm:$0xff]
  %v168 = vld [vmem:[%s1 + $0x398] sm:$0xff]
  %v169 = vld [vmem:[%s1 + $0x3a0] sm:$0xff]
  %v170 = vld [vmem:[%s1 + $0x3a8] sm:$0xff]
  %v171 = vld [vmem:[%s1 + $0x3b0] sm:$0xff]
  %v172 = vld [vmem:[%s1 + $0x3b8] sm:$0xff]
  %v173 = vld [vmem:[%s1 + $0x3c0] sm:$0xff]
  %v174 = vld [vmem:[%s1 + $0x3c8] sm:$0xff]
  %v175 = vld [vmem:[%s1 + $0x3d0] sm:$0xff]
  %v176 = vld [vmem:[%s1 + $0x3d8] sm:$0xff]
  %v177 = vld [vmem:[%s1 + $0x3e0] sm:$0xff]
  %v178 = vld [vmem:[%s1 + $0x3e8] sm:$0xff]
  %v179 = vld [vmem:[%s1 + $0x3f0] sm:$0xff]
  %v180 = vld [vmem:[%s1 + $0x3f8] sm:$0xff]
  %v181 = vld [vmem:[%s1 + $0x400] sm:$0xff]
  %v182 = vld [vmem:[%s1 + $0x408] sm:$0xff]
  %v183 = vld [vmem:[%s1 + $0x410] sm:$0xff]
  %v184 = vld [vmem:[%s1 + $0x418] sm:$0xff]
  %v185 = vld [vmem:[%s1 + $0x420] sm:$0xff]
  %v186 = vld [vmem:[%s1 + $0x428] sm:$0xff]
  %v187 = vld [vmem:[%s1 + $0x430] sm:$0xff]
  %v188 = vld [vmem:[%s1 + $0x438] sm:$0xff]
  %v189 = vld [vmem:[%s1 + $0x440] sm:$0xff]
  %v190 = vld [vmem:[%s1 + $0x448] sm:$0xff]
  %v191 = vld [vmem:[%s1 + $0x450] sm:$0xff]
  %v192 = vld [vmem:[%s1 + $0x458] sm:$0xff]
  %v193 = vld [vmem:[%s1 + $0x460] sm:$0xff]
  %v194 = vld [vmem:[%s1 + $0x468] sm:$0xff]
  %v195 = vld [vmem:[%s1 + $0x470] sm:$0xff]
  %v196 = vld [vmem:[%s1 + $0x478] sm:$0xff]
  %v197 = vld [vmem:[%s1 + $0x480] sm:$0xff]
  %v198 = vld [vmem:[%s1 + $0x488] sm:$0xff]
  %v199 = vld [vmem:[%s1 + $0x490] sm:$0xff]
  %v200 = vld [vmem:[%s1 + $0x498] sm:$0xff]
  %v201 = vld [vmem:[%s1 + $0x4a0] sm:$0xff]
  %v202 = vld [vmem:[%s1 + $0x4a8] sm:$0xff]
  %v203 = vld [vmem:[%s1 + $0x4b0] sm:$0xff]
  %v204 = vld [vmem:[%s1 + $0x4b8] sm:$0xff]
  %v205 = vld [vmem:[%s1 + $0x4c0] sm:$0xff]
  %v206 = vld [vmem:[%s1 + $0x4c8] sm:$0xff]
  %v207 = vld [vmem:[%s1 + $0x4d0] sm:$0xff]
  %v208 = vld [vmem:[%s1 + $0x4d8] sm:$0xff]
  %v209 = vld [vmem:[%s1 + $0x4e0] sm:$0xff]
  %v210 = vld [vmem:[%s1 + $0x4e8] sm:$0xff]
  %v211 = vld [vmem:[%s1 + $0x4f0] sm:$0xff]
  %v212 = vld [vmem:[%s1 + $0x4f8] sm:$0xff]
  %v213 = vld [vmem:[%s1 + $0x500] sm:$0xff]
  %v214 = vld [vmem:[%s1 + $0x508] sm:$0xff]
  %v215 = vld [vmem:[%s1 + $0x510] sm:$0xff]
  %v216 = vld [vmem:[%s1 + $0x518] sm:$0xff]
  %v217 = vld [vmem:[%s1 + $0x520] sm:$0xff]
  %v218 = vld [vmem:[%s1 + $0x528] sm:$0xff]
  %v219 = vld [vmem:[%s1 + $0x530] sm:$0xff]
  %v220 = vld [vmem:[%s1 + $0x538] sm:$0xff]
  %v221 = vld [vmem:[%s1 + $0x540] sm:$0xff]
  %v222 = vld [vmem:[%s1 + $0x548] sm:$0xff]
  %v223 = vld [vmem:[%s1 + $0x550] sm:$0xff]
  %v224 = vld [vmem:[%s1 + $0x558] sm:$0xff]
  %v225 = vld [vmem:[%s1 + $0x560] sm:$0xff]
  %v226 = vld [vmem:[%s1 + $0x568] sm:$0xff]
  %v227 = vld [vmem:[%s1 + $0x570] sm:$0xff]
  %v228 = vld [vmem:[%s1 + $0x578] sm:$0xff]
  %v229 = vld [vmem:[%s1 + $0x580] sm:$0xff]
  %v230 = vld [vmem:[%s1 + $0x588] sm:$0xff]
  %v231 = vld [vmem:[%s1 + $0x590] sm:$0xff]
  %v232 = vld [vmem:[%s1 + $0x598] sm:$0xff]
  %v233 = vld [vmem:[%s1 + $0x5a0] sm:$0xff]
  %v234 = vld [vmem:[%s1 + $0x5a8] sm:$0xff]
  %v235 = vld [vmem:[%s1 + $0x5b0] sm:$0xff]
  %v236 = vld [vmem:[%s1 + $0x5b8] sm:$0xff]
  %v237 = vld [vmem:[%s1 + $0x5c0] sm:$0xff]
  %v238 = vld [vmem:[%s1 + $0x5c8] sm:$0xff]
  %v239 = vld [vmem:[%s1 + $0x5d0] sm:$0xff]
  %v240 = vld [vmem:[%s1 + $0x5d8] sm:$0xff]
  %v241 = vld [vmem:[%s1 + $0x5e0] sm:$0xff]
  %v242 = vld [vmem:[%s1 + $0x5e8] sm:$0xff]
  %v243 = vld [vmem:[%s1 + $0x5f0] sm:$0xff]
  %v244 = vld [vmem:[%s1 + $0x5f8] sm:$0xff]
  %v245 = vld [vmem:[%s1 + $0x600] sm:$0xff]
  %v246 = vld [vmem:[%s1 + $0x608] sm:$0xff]
  %v247 = vld [vmem:[%s1 + $0x610] sm:$0xff]
  %v248 = vld [vmem:[%s1 + $0x618] sm:$0xff]
  %v249 = vld [vmem:[%s1 + $0x620] sm:$0xff]
  %v250 = vld [vmem:[%s1 + $0x628] sm:$0xff]
  %v251 = vld [vmem:[%s1 + $0x630] sm:$0xff]
  %v252 = vld [vmem:[%s1 + $0x638] sm:$0xff]
  %v253 = vld [vmem:[%s1 + $0x640] sm:$0xff]
  %v254 = vld [vmem:[%s1 + $0x648] sm:$0xff]
  %v255 = vld [vmem:[%s1 + $0x650] sm:$0xff]
  %v256 = vld [vmem:[%s1 + $0x658] sm:$0xff]
  %v257 = vld [vmem:[%s1 + $0x660] sm:$0xff]
  %v258 = vld [vmem:[%s1 + $0x668] sm:$0xff]
  %v259 = vld [vmem:[%s1 + $0x670] sm:$0xff]
  %v260 = vld [vmem:[%s1 + $0x678] sm:$0xff]
  %v261 = vld [vmem:[%s1 + $0x680] sm:$0xff]
  %v262 = vld [vmem:[%s1 + $0x688] sm:$0xff]
  %v263 = vld [vmem:[%s1 + $0x690] sm:$0xff]
  %v264 = vld [vmem:[%s1 + $0x698] sm:$0xff]
  %v265 = vld [vmem:[%s1 + $0x6a0] sm:$0xff]
  %v266 = vld [vmem:[%s1 + $0x6a8] sm:$0xff]
  %v267 = vld [vmem:[%s1 + $0x6b0] sm:$0xff]
  %v268 = vld [vmem:[%s1 + $0x6b8] sm:$0xff]
  %v269 = vld [vmem:[%s1 + $0x6c0] sm:$0xff]
  %v270 = vld [vmem:[%s1 + $0x6c8] sm:$0xff]
  %v271 = vld [vmem:[%s1 + $0x6d0] sm:$0xff]
  %v272 = vld [vmem:[%s1 + $0x6d8] sm:$0xff]
  %v273 = vld [vmem:[%s1 + $0x6e0] sm:$0xff]
  %v274 = vld [vmem:[%s1 + $0x6e8] sm:$0xff]
  %v275 = vld [vmem:[%s1 + $0x6f0] sm:$0xff]
  %v276 = vld [vmem:[%s1 + $0x6f8] sm:$0xff]
  %v277 = vld [vmem:[%s1 + $0x700] sm:$0xff]
  %v278 = vld [vmem:[%s1 + $0x708] sm:$0xff]
  %v279 = vld [vmem:[%s1 + $0x710] sm:$0xff]
  %v280 = vld [vmem:[%s1 + $0x718] sm:$0xff]
  %v281 = vld [vmem:[%s1 + $0x720] sm:$0xff]
  %v282 = vld [vmem:[%s1 + $0x728] sm:$0xff]
  %v283 = vld [vmem:[%s1 + $0x730] sm:$0xff]
  %v284 = vld [vmem:[%s1 + $0x738] sm:$0xff]
  %v285 = vld [vmem:[%s1 + $0x740] sm:$0xff]
  %v286 = vld [vmem:[%s1 + $0x748] sm:$0xff]
  %v287 = vld [vmem:[%s1 + $0x750] sm:$0xff]
  %v288 = vld [vmem:[%s1 + $0x758] sm:$0xff]
  %v289 = vld [vmem:[%s1 + $0x760] sm:$0xff]
  %v290 = vld [vmem:[%s1 + $0x768] sm:$0xff]
  %v291 = vld [vmem:[%s1 + $0x770] sm:$0xff]
  %v292 = vld [vmem:[%s1 + $0x778] sm:$0xff]
  %v293 = vld [vmem:[%s1 + $0x780] sm:$0xff]
  %v294 = vld [vmem:[%s1 + $0x788] sm:$0xff]
  %v295 = vld [vmem:[%s1 + $0x790] sm:$0xff]
  %v296 = vld [vmem:[%s1 + $0x798] sm:$0xff]
  %v297 = vld [vmem:[%s1 + $0x7a0] sm:$0xff]
  %v298 = vld [vmem:[%s1 + $0x7a8] sm:$0xff]
  %v299 = vld [vmem:[%s1 + $0x7b0] sm:$0xff]
  %v300 = vld [vmem:[%s1 + $0x7b8] sm:$0xff]
  %v301 = vld [vmem:[%s1 + $0x7c0] sm:$0xff]
  %v302 = vld [vmem:[%s1 + $0x7c8] sm:$0xff]
  %v303 = vld [vmem:[%s1 + $0x7d0] sm:$0xff]
  %v304 = vld [vmem:[%s1 + $0x7d8] sm:$0xff]
  %v305 = vld [vmem:[%s1 + $0x7e0] sm:$0xff]
  %v306 = vld [vmem:[%s1 + $0x7e8] sm:$0xff]
  %v307 = vld [vmem:[%s1 + $0x7f0] sm:$0xff]
  %v308 = vld [vmem:[%s1 + $0x7f8] sm:$0xff]
  %v309 = vld [vmem:[%s1 + $0x800] sm:$0xff]
  %v310 = vld [vmem:[%s1 + $0x808] sm:$0xff]
  %v311 = vld [vmem:[%s1 + $0x810] sm:$0xff]
  %v312 = vld [vmem:[%s1 + $0x818] sm:$0xff]
  %v313 = vld [vmem:[%s1 + $0x820] sm:$0xff]
  %v314 = vld [vmem:[%s1 + $0x828] sm:$0xff]
  %v315 = vld [vmem:[%s1 + $0x830] sm:$0xff]
  %v316 = vld [vmem:[%s1 + $0x838] sm:$0xff]
  %v317 = vld [vmem:[%s1 + $0x840] sm:$0xff]
  %v318 = vld [vmem:[%s1 + $0x848] sm:$0xff]
  %v319 = vld [vmem:[%s1 + $0x850] sm:$0xff]
  %v320 = vld [vmem:[%s1 + $0x858] sm:$0xff]
  %v321 = vld [vmem:[%s1 + $0x860] sm:$0xff]
  %v322 = vld [vmem:[%s1 + $0x868] sm:$0xff]
  %v323 = vld [vmem:[%s1 + $0x870] sm:$0xff]
  %v324 = vld [vmem:[%s1 + $0x878] sm:$0xff]
  %v325 = vld [vmem:[%s1 + $0x880] sm:$0xff]
  %v326 = vld [vmem:[%s1 + $0x888] sm:$0xff]
  %v327 = vld [vmem:[%s1 + $0x890] sm:$0xff]
  %v328 = vld [vmem:[%s1 + $0x898] sm:$0xff]
  %v329 = vld [vmem:[%s1 + $0x8a0] sm:$0xff]
  %v330 = vld [vmem:[%s1 + $0x8a8] sm:$0xff]
  %v331 = vld [vmem:[%s1 + $0x8b0] sm:$0xff]
  %v332 = vld [vmem:[%s1 + $0x8b8] sm:$0xff]
  %v333 = vld [vmem:[%s1 + $0x8c0] sm:$0xff]
  %v334 = vld [vmem:[%s1 + $0x8c8] sm:$0xff]
  %v335 = vld [vmem:[%s1 + $0x8d0] sm:$0xff]
  %v336 = vld [vmem:[%s1 + $0x8d8] sm:$0xff]
  %v337 = vld [vmem:[%s1 + $0x8e0] sm:$0xff]
  %v338 = vld [vmem:[%s1 + $0x8e8] sm:$0xff]
  %v339 = vld [vmem:[%s1 + $0x8f0] sm:$0xff]
  %v340 = vld [vmem:[%s1 + $0x8f8] sm:$0xff]
  %v341 = vld [vmem:[%s1 + $0x900] sm:$0xff]
  %v342 = vld [vmem:[%s1 + $0x908] sm:$0xff]
  %v343 = vld [vmem:[%s1 + $0x910] sm:$0xff]
  %v344 = vld [vmem:[%s1 + $0x918] sm:$0xff]
  %v345 = vld [vmem:[%s1 + $0x920] sm:$0xff]
  %v346 = vld [vmem:[%s1 + $0x928] sm:$0xff]
  %v347 = vld [vmem:[%s1 + $0x930] sm:$0xff]
  %v348 = vld [vmem:[%s1 + $0x938] sm:$0xff]
  %v349 = vld [vmem:[%s1 + $0x940] sm:$0xff]
  %v350 = vld [vmem:[%s1 + $0x948] sm:$0xff]
  %v351 = vld [vmem:[%s1 + $0x950] sm:$0xff]
  %v352 = vld [vmem:[%s1 + $0x958] sm:$0xff]
  %v353 = vld [vmem:[%s1 + $0x960] sm:$0xff]
  %v354 = vld [vmem:[%s1 + $0x968] sm:$0xff]
  %v355 = vld [vmem:[%s1 + $0x970] sm:$0xff]
  %v356 = vld [vmem:[%s1 + $0x978] sm:$0xff]
  %v357 = vld [vmem:[%s1 + $0x980] sm:$0xff]
  %v358 = vld [vmem:[%s1 + $0x988] sm:$0xff]
  %v359 = vld [vmem:[%s1 + $0x990] sm:$0xff]
  %v360 = vld [vmem:[%s1 + $0x998] sm:$0xff]
  %v361 = vld [vmem:[%s1 + $0x9a0] sm:$0xff]
  %v362 = vld [vmem:[%s1 + $0x9a8] sm:$0xff]
  %v363 = vld [vmem:[%s1 + $0x9b0] sm:$0xff]
  %v364 = vld [vmem:[%s1 + $0x9b8] sm:$0xff]
  %v365 = vld [vmem:[%s1 + $0x9c0] sm:$0xff]
  %v366 = vld [vmem:[%s1 + $0x9c8] sm:$0xff]
  %v367 = vld [vmem:[%s1 + $0x9d0] sm:$0xff]
  %v368 = vld [vmem:[%s1 + $0x9d8] sm:$0xff]
  %v369 = vld [vmem:[%s1 + $0x9e0] sm:$0xff]
  %v370 = vld [vmem:[%s1 + $0x9e8] sm:$0xff]
  %v371 = vld [vmem:[%s1 + $0x9f0] sm:$0xff]
  %v372 = vld [vmem:[%s1 + $0x9f8] sm:$0xff]
  %v373 = vld [vmem:[%s1 + $0xa00] sm:$0xff]
  %v374 = vld [vmem:[%s1 + $0xa08] sm:$0xff]
  %v375 = vld [vmem:[%s1 + $0xa10] sm:$0xff]
  %v376 = vld [vmem:[%s1 + $0xa18] sm:$0xff]
  %v377 = vld [vmem:[%s1 + $0xa20] sm:$0xff]
  %v378 = vld [vmem:[%s1 + $0xa28] sm:$0xff]
  %v379 = vld [vmem:[%s1 + $0xa30] sm:$0xff]
  %v380 = vld [vmem:[%s1 + $0xa38] sm:$0xff]
  %v381 = vld [vmem:[%s1 + $0xa40] sm:$0xff]
  %v382 = vld [vmem:[%s1 + $0xa48] sm:$0xff]
  %v383 = vld [vmem:[%s1 + $0xa50] sm:$0xff]
  %v384 = vld [vmem:[%s1 + $0xa58] sm:$0xff]
  %v385 = vld [vmem:[%s1 + $0xa60] sm:$0xff]
  %v386 = vld [vmem:[%s1 + $0xa68] sm:$0xff]
  %v387 = vld [vmem:[%s1 + $0xa70] sm:$0xff]
  %v388 = vld [vmem:[%s1 + $0xa78] sm:$0xff]
  %v389 = vld [vmem:[%s1 + $0xa80] sm:$0xff]
  %v390 = vld [vmem:[%s1 + $0xa88] sm:$0xff]
  %v391 = vld [vmem:[%s1 + $0xa90] sm:$0xff]
  %v392 = vld [vmem:[%s1 + $0xa98] sm:$0xff]
  %v393 = vld [vmem:[%s1 + $0xaa0] sm:$0xff]
  %v394 = vld [vmem:[%s1 + $0xaa8] sm:$0xff]
  %v395 = vld [vmem:[%s1 + $0xab0] sm:$0xff]
  %v396 = vld [vmem:[%s1 + $0xab8] sm:$0xff]
  %v397 = vld [vmem:[%s1 + $0xac0] sm:$0xff]
  %v398 = vld [vmem:[%s1 + $0xac8] sm:$0xff]
  %v399 = vld [vmem:[%s1 + $0xad0] sm:$0xff]
  %v400 = vld [vmem:[%s1 + $0xad8] sm:$0xff]
  %v401 = vld [vmem:[%s1 + $0xae0] sm:$0xff]
  %v402 = vld [vmem:[%s1 + $0xae8] sm:$0xff]
  %v403 = vld [vmem:[%s1 + $0xaf0] sm:$0xff]
  %v404 = vld [vmem:[%s1 + $0xaf8] sm:$0xff]
  %v405 = vld [vmem:[%s1 + $0xb00] sm:$0xff]
  %v406 = vld [vmem:[%s1 + $0xb08] sm:$0xff]
  %v407 = vld [vmem:[%s1 + $0xb10] sm:$0xff]
  %v408 = vld [vmem:[%s1 + $0xb18] sm:$0xff]
  %v409 = vld [vmem:[%s1 + $0xb20] sm:$0xff]
  %v410 = vld [vmem:[%s1 + $0xb28] sm:$0xff]
  %v411 = vld [vmem:[%s1 + $0xb30] sm:$0xff]
  %v412 = vld [vmem:[%s1 + $0xb38] sm:$0xff]
  %v413 = vld [vmem:[%s1 + $0xb40] sm:$0xff]
  %v414 = vld [vmem:[%s1 + $0xb48] sm:$0xff]
  %v415 = vld [vmem:[%s1 + $0xb50] sm:$0xff]
  %v416 = vld [vmem:[%s1 + $0xb58] sm:$0xff]
  %v417 = vld [vmem:[%s1 + $0xb60] sm:$0xff]
  %v418 = vld [vmem:[%s1 + $0xb68] sm:$0xff]
  %v419 = vld [vmem:[%s1 + $0xb70] sm:$0xff]
  %v420 = vld [vmem:[%s1 + $0xb78] sm:$0xff]
  %v421 = vld [vmem:[%s1 + $0xb80] sm:$0xff]
  %v422 = vld [vmem:[%s1 + $0xb88] sm:$0xff]
  %v423 = vld [vmem:[%s1 + $0xb90] sm:$0xff]
  %v424 = vld [vmem:[%s1 + $0xb98] sm:$0xff]
  %v425 = vld [vmem:[%s1 + $0xba0] sm:$0xff]
  %v426 = vld [vmem:[%s1 + $0xba8] sm:$0xff]
  %v427 = vld [vmem:[%s1 + $0xbb0] sm:$0xff]
  %v428 = vld [vmem:[%s1 + $0xbb8] sm:$0xff]
  %v429 = vld [vmem:[%s1 + $0xbc0] sm:$0xff]
  %v430 = vld [vmem:[%s1 + $0xbc8] sm:$0xff]
  %v431 = vld [vmem:[%s1 + $0xbd0] sm:$0xff]
  %v432 = vld [vmem:[%s1 + $0xbd8] sm:$0xff]
  %v433 = vld [vmem:[%s1 + $0xbe0] sm:$0xff]
  %v434 = vld [vmem:[%s1 + $0xbe8] sm:$0xff]
  %v435 = vld [vmem:[%s1 + $0xbf0] sm:$0xff]
  %v436 = vld [vmem:[%s1 + $0xbf8] sm:$0xff]
  %v437 = vld [vmem:[%s1 + $0xc00] sm:$0xff]
  %v438 = vld [vmem:[%s1 + $0xc08] sm:$0xff]
  %v439 = vld [vmem:[%s1 + $0xc10] sm:$0xff]
  %v440 = vld [vmem:[%s1 + $0xc18] sm:$0xff]
  %v441 = vld [vmem:[%s1 + $0xc20] sm:$0xff]
  %v442 = vld [vmem:[%s1 + $0xc28] sm:$0xff]
  %v443 = vld [vmem:[%s1 + $0xc30] sm:$0xff]
  %v444 = vld [vmem:[%s1 + $0xc38] sm:$0xff]
  %v445 = vld [vmem:[%s2] sm:$0x3]
  %v447 = vperm.slane %v445, 0
  %v448 = vperm.slane %v445, 1
  %v477 = vunpack.c.l.b16 %v27
  %v478 = vunpack.c.h.b16 %v27
  %v479 = vunpack.c.l.b16 %v28
  %v480 = vunpack.c.h.b16 %v28
  %v481 = vunpack.c.l.b16 %v29
  %v482 = vunpack.c.h.b16 %v29
  %v483 = vunpack.c.l.b16 %v30
  %v484 = vunpack.c.h.b16 %v30
  %v485 = vunpack.c.l.b16 %v31
  %v486 = vunpack.c.h.b16 %v31
  %v487 = vunpack.c.l.b16 %v32
  %v488 = vunpack.c.h.b16 %v32
  %v489 = vunpack.c.l.b16 %v33
  %v490 = vunpack.c.h.b16 %v33
  %v491 = vunpack.c.l.b16 %v34
  %v492 = vunpack.c.h.b16 %v34
  %v493 = vunpack.c.l.b16 %v35
  %v494 = vunpack.c.h.b16 %v35
  %v495 = vunpack.c.l.b16 %v36
  %v496 = vunpack.c.h.b16 %v36
  %v497 = vunpack.c.l.b16 %v37
  %v498 = vunpack.c.h.b16 %v37
  %v499 = vunpack.c.l.b16 %v38
  %v500 = vunpack.c.h.b16 %v38
  %v501 = vunpack.c.l.b16 %v39
  %v502 = vunpack.c.l.b16 %v40
  %v503 = vunpack.c.h.b16 %v40
  %v504 = vunpack.c.l.b16 %v41
  %v505 = vunpack.c.h.b16 %v41
  %v506 = vunpack.c.l.b16 %v42
  %v507 = vunpack.c.h.b16 %v42
  %v508 = vunpack.c.l.b16 %v43
  %v509 = vunpack.c.h.b16 %v43
  %v510 = vunpack.c.l.b16 %v44
  %v511 = vunpack.c.h.b16 %v44
  %v512 = vunpack.c.l.b16 %v45
  %v513 = vunpack.c.h.b16 %v45
  %v514 = vunpack.c.l.b16 %v46
  %v515 = vunpack.c.h.b16 %v46
  %v516 = vunpack.c.l.b16 %v47
  %v517 = vunpack.c.h.b16 %v47
  %v518 = vunpack.c.l.b16 %v48
  %v519 = vunpack.c.h.b16 %v48
  %v520 = vunpack.c.l.b16 %v49
  %v521 = vunpack.c.h.b16 %v49
  %v522 = vunpack.c.l.b16 %v50
  %v523 = vunpack.c.h.b16 %v50
  %v524 = vunpack.c.l.b16 %v51
  %v525 = vunpack.c.h.b16 %v51
  %v526 = vunpack.c.l.b16 %v52
  %v527 = vpack.c.b16 %v502, %v477
  %v528 = vpack.c.b16 %v503, %v478
  %v529 = vpack.c.b16 %v504, %v479
  %v530 = vpack.c.b16 %v505, %v480
  %v531 = vpack.c.b16 %v506, %v481
  %v532 = vpack.c.b16 %v507, %v482
  %v533 = vpack.c.b16 %v508, %v483
  %v534 = vpack.c.b16 %v509, %v484
  %v535 = vpack.c.b16 %v510, %v485
  %v536 = vpack.c.b16 %v511, %v486
  %v537 = vpack.c.b16 %v512, %v487
  %v538 = vpack.c.b16 %v513, %v488
  %v539 = vpack.c.b16 %v514, %v489
  %v540 = vpack.c.b16 %v515, %v490
  %v541 = vpack.c.b16 %v516, %v491
  %v542 = vpack.c.b16 %v517, %v492
  %v543 = vpack.c.b16 %v518, %v493
  %v544 = vpack.c.b16 %v519, %v494
  %v545 = vpack.c.b16 %v520, %v495
  %v546 = vpack.c.b16 %v521, %v496
  %v547 = vpack.c.b16 %v522, %v497
  %v548 = vpack.c.b16 %v523, %v498
  %v549 = vpack.c.b16 %v524, %v499
  %v550 = vpack.c.b16 %v525, %v500
  %v551 = vpack.c.b16 %v526, %v501
  %v968 = vunpack.c.l.b16 %v53
  %v969 = vunpack.c.h.b16 %v53
  %v970 = vunpack.c.l.b16 %v54
  %v971 = vunpack.c.h.b16 %v54
  %v972 = vunpack.c.l.b16 %v55
  %v973 = vunpack.c.h.b16 %v55
  %v974 = vunpack.c.l.b16 %v56
  %v975 = vunpack.c.h.b16 %v56
  %v976 = vunpack.c.l.b16 %v57
  %v977 = vunpack.c.h.b16 %v57
  %v978 = vunpack.c.l.b16 %v58
  %v979 = vunpack.c.h.b16 %v58
  %v980 = vunpack.c.l.b16 %v59
  %v981 = vunpack.c.h.b16 %v59
  %v982 = vunpack.c.l.b16 %v60
  %v983 = vunpack.c.h.b16 %v60
  %v984 = vunpack.c.l.b16 %v61
  %v985 = vunpack.c.h.b16 %v61
  %v986 = vunpack.c.l.b16 %v62
  %v987 = vunpack.c.h.b16 %v62
  %v988 = vunpack.c.l.b16 %v63
  %v989 = vunpack.c.h.b16 %v63
  %v990 = vunpack.c.l.b16 %v64
  %v991 = vunpack.c.h.b16 %v64
  %v992 = vunpack.c.l.b16 %v65
  %v993 = vunpack.c.h.b16 %v65
  %v994 = vunpack.c.l.b16 %v66
  %v995 = vunpack.c.h.b16 %v66
  %v996 = vunpack.c.l.b16 %v67
  %v997 = vunpack.c.h.b16 %v67
  %v998 = vunpack.c.l.b16 %v68
  %v999 = vunpack.c.h.b16 %v68
  %v1000 = vunpack.c.l.b16 %v69
  %v1001 = vunpack.c.h.b16 %v69
  %v1002 = vunpack.c.l.b16 %v70
  %v1003 = vunpack.c.h.b16 %v70
  %v1004 = vunpack.c.l.b16 %v71
  %v1005 = vunpack.c.h.b16 %v71
  %v1006 = vunpack.c.l.b16 %v72
  %v1007 = vunpack.c.h.b16 %v72
  %v1008 = vunpack.c.l.b16 %v73
  %v1009 = vunpack.c.h.b16 %v73
  %v1010 = vunpack.c.l.b16 %v74
  %v1011 = vunpack.c.h.b16 %v74
  %v1012 = vunpack.c.l.b16 %v75
  %v1013 = vunpack.c.h.b16 %v75
  %v1014 = vunpack.c.l.b16 %v76
  %v1015 = vunpack.c.h.b16 %v76
  %v1016 = vunpack.c.l.b16 %v77
  %v1017 = vunpack.c.h.b16 %v77
  %v1018 = vunpack.c.l.b16 %v78
  %v1019 = vunpack.c.h.b16 %v78
  %v1020 = vunpack.c.l.b16 %v79
  %v1021 = vunpack.c.h.b16 %v79
  %v1022 = vunpack.c.l.b16 %v80
  %v1023 = vunpack.c.h.b16 %v80
  %v1024 = vunpack.c.l.b16 %v81
  %v1025 = vunpack.c.h.b16 %v81
  %v1026 = vunpack.c.l.b16 %v82
  %v1027 = vunpack.c.h.b16 %v82
  %v1028 = vunpack.c.l.b16 %v83
  %v1029 = vunpack.c.h.b16 %v83
  %v1030 = vunpack.c.l.b16 %v84
  %v1031 = vunpack.c.h.b16 %v84
  %v1032 = vunpack.c.l.b16 %v85
  %v1033 = vunpack.c.h.b16 %v85
  %v1034 = vunpack.c.l.b16 %v86
  %v1035 = vunpack.c.h.b16 %v86
  %v1036 = vunpack.c.l.b16 %v87
  %v1037 = vunpack.c.h.b16 %v87
  %v1038 = vunpack.c.l.b16 %v88
  %v1039 = vunpack.c.h.b16 %v88
  %v1040 = vunpack.c.l.b16 %v89
  %v1041 = vunpack.c.h.b16 %v89
  %v1042 = vunpack.c.l.b16 %v90
  %v1043 = vunpack.c.h.b16 %v90
  %v1044 = vunpack.c.l.b16 %v91
  %v1045 = vunpack.c.h.b16 %v91
  %v1046 = vunpack.c.l.b16 %v92
  %v1047 = vunpack.c.h.b16 %v92
  %v1048 = vunpack.c.l.b16 %v93
  %v1049 = vunpack.c.h.b16 %v93
  %v1050 = vunpack.c.l.b16 %v94
  %v1051 = vunpack.c.h.b16 %v94
  %v1052 = vunpack.c.l.b16 %v95
  %v1053 = vunpack.c.h.b16 %v95
  %v1054 = vunpack.c.l.b16 %v96
  %v1055 = vunpack.c.h.b16 %v96
  %v1056 = vunpack.c.l.b16 %v97
  %v1057 = vunpack.c.h.b16 %v97
  %v1058 = vunpack.c.l.b16 %v98
  %v1059 = vunpack.c.h.b16 %v98
  %v1060 = vunpack.c.l.b16 %v99
  %v1061 = vunpack.c.h.b16 %v99
  %v1062 = vunpack.c.l.b16 %v100
  %v1063 = vunpack.c.h.b16 %v100
  %v1064 = vunpack.c.l.b16 %v101
  %v1065 = vunpack.c.h.b16 %v101
  %v1066 = vunpack.c.l.b16 %v102
  %v1067 = vunpack.c.h.b16 %v102
  %v1068 = vunpack.c.l.b16 %v103
  %v1069 = vunpack.c.h.b16 %v103
  %v1070 = vunpack.c.l.b16 %v104
  %v1071 = vunpack.c.h.b16 %v104
  %v1072 = vunpack.c.l.b16 %v105
  %v1073 = vunpack.c.h.b16 %v105
  %v1074 = vunpack.c.l.b16 %v106
  %v1075 = vunpack.c.h.b16 %v106
  %v1076 = vunpack.c.l.b16 %v107
  %v1077 = vunpack.c.h.b16 %v107
  %v1078 = vunpack.c.l.b16 %v108
  %v1079 = vunpack.c.h.b16 %v108
  %v1080 = vunpack.c.l.b16 %v109
  %v1081 = vunpack.c.h.b16 %v109
  %v1082 = vunpack.c.l.b16 %v110
  %v1083 = vunpack.c.h.b16 %v110
  %v1084 = vunpack.c.l.b16 %v111
  %v1085 = vunpack.c.h.b16 %v111
  %v1086 = vunpack.c.l.b16 %v112
  %v1087 = vunpack.c.h.b16 %v112
  %v1088 = vunpack.c.l.b16 %v113
  %v1089 = vunpack.c.h.b16 %v113
  %v1090 = vunpack.c.l.b16 %v114
  %v1091 = vunpack.c.h.b16 %v114
  %v1092 = vunpack.c.l.b16 %v115
  %v1093 = vunpack.c.h.b16 %v115
  %v1094 = vunpack.c.l.b16 %v116
  %v1095 = vunpack.c.h.b16 %v116
  %v1096 = vunpack.c.l.b16 %v117
  %v1097 = vunpack.c.h.b16 %v117
  %v1098 = vunpack.c.l.b16 %v118
  %v1099 = vunpack.c.h.b16 %v118
  %v1100 = vunpack.c.l.b16 %v119
  %v1101 = vunpack.c.h.b16 %v119
  %v1102 = vunpack.c.l.b16 %v120
  %v1103 = vunpack.c.h.b16 %v120
  %v1104 = vunpack.c.l.b16 %v121
  %v1105 = vunpack.c.h.b16 %v121
  %v1106 = vunpack.c.l.b16 %v122
  %v1107 = vunpack.c.h.b16 %v122
  %v1108 = vunpack.c.l.b16 %v123
  %v1109 = vunpack.c.h.b16 %v123
  %v1110 = vunpack.c.l.b16 %v124
  %v1111 = vunpack.c.h.b16 %v124
  %v1112 = vunpack.c.l.b16 %v125
  %v1113 = vunpack.c.h.b16 %v125
  %v1114 = vunpack.c.l.b16 %v126
  %v1115 = vunpack.c.h.b16 %v126
  %v1116 = vunpack.c.l.b16 %v127
  %v1117 = vunpack.c.h.b16 %v127
  %v1118 = vunpack.c.l.b16 %v128
  %v1119 = vunpack.c.h.b16 %v128
  %v1120 = vunpack.c.l.b16 %v129
  %v1121 = vunpack.c.h.b16 %v129
  %v1122 = vunpack.c.l.b16 %v130
  %v1123 = vunpack.c.h.b16 %v130
  %v1124 = vunpack.c.l.b16 %v131
  %v1125 = vunpack.c.h.b16 %v131
  %v1126 = vunpack.c.l.b16 %v132
  %v1127 = vunpack.c.h.b16 %v132
  %v1128 = vunpack.c.l.b16 %v133
  %v1129 = vunpack.c.h.b16 %v133
  %v1130 = vunpack.c.l.b16 %v134
  %v1131 = vunpack.c.h.b16 %v134
  %v1132 = vunpack.c.l.b16 %v135
  %v1133 = vunpack.c.h.b16 %v135
  %v1134 = vunpack.c.l.b16 %v136
  %v1135 = vunpack.c.h.b16 %v136
  %v1136 = vunpack.c.l.b16 %v137
  %v1137 = vunpack.c.h.b16 %v137
  %v1138 = vunpack.c.l.b16 %v138
  %v1139 = vunpack.c.h.b16 %v138
  %v1140 = vunpack.c.l.b16 %v139
  %v1141 = vunpack.c.h.b16 %v139
  %v1142 = vunpack.c.l.b16 %v140
  %v1143 = vunpack.c.h.b16 %v140
  %v1144 = vunpack.c.l.b16 %v141
  %v1145 = vunpack.c.h.b16 %v141
  %v1146 = vunpack.c.l.b16 %v142
  %v1147 = vunpack.c.h.b16 %v142
  %v1148 = vunpack.c.l.b16 %v143
  %v1149 = vunpack.c.h.b16 %v143
  %v1150 = vunpack.c.l.b16 %v144
  %v1151 = vunpack.c.h.b16 %v144
  %v1152 = vunpack.c.l.b16 %v145
  %v1153 = vunpack.c.h.b16 %v145
  %v1154 = vunpack.c.l.b16 %v146
  %v1155 = vunpack.c.h.b16 %v146
  %v1156 = vunpack.c.l.b16 %v147
  %v1157 = vunpack.c.h.b16 %v147
  %v1158 = vunpack.c.l.b16 %v148
  %v1159 = vunpack.c.h.b16 %v148
  %v1160 = vunpack.c.l.b16 %v149
  %v1161 = vunpack.c.h.b16 %v149
  %v1162 = vunpack.c.l.b16 %v150
  %v1163 = vunpack.c.h.b16 %v150
  %v1164 = vunpack.c.l.b16 %v151
  %v1165 = vunpack.c.h.b16 %v151
  %v1166 = vunpack.c.l.b16 %v152
  %v1167 = vunpack.c.h.b16 %v152
  %v1168 = vunpack.c.l.b16 %v153
  %v1169 = vunpack.c.h.b16 %v153
  %v1170 = vunpack.c.l.b16 %v154
  %v1171 = vunpack.c.h.b16 %v154
  %v1172 = vunpack.c.l.b16 %v155
  %v1173 = vunpack.c.h.b16 %v155
  %v1174 = vunpack.c.l.b16 %v156
  %v1175 = vunpack.c.h.b16 %v156
  %v1176 = vunpack.c.l.b16 %v157
  %v1177 = vunpack.c.h.b16 %v157
  %v1178 = vunpack.c.l.b16 %v158
  %v1179 = vunpack.c.h.b16 %v158
  %v1180 = vunpack.c.l.b16 %v159
  %v1181 = vunpack.c.h.b16 %v159
  %v1182 = vunpack.c.l.b16 %v160
  %v1183 = vunpack.c.h.b16 %v160
  %v1184 = vunpack.c.l.b16 %v161
  %v1185 = vunpack.c.h.b16 %v161
  %v1186 = vunpack.c.l.b16 %v162
  %v1187 = vunpack.c.h.b16 %v162
  %v1188 = vunpack.c.l.b16 %v163
  %v1189 = vunpack.c.h.b16 %v163
  %v1190 = vunpack.c.l.b16 %v164
  %v1191 = vunpack.c.h.b16 %v164
  %v1192 = vunpack.c.l.b16 %v165
  %v1193 = vunpack.c.h.b16 %v165
  %v1194 = vunpack.c.l.b16 %v166
  %v1195 = vunpack.c.h.b16 %v166
  %v1196 = vunpack.c.l.b16 %v167
  %v1197 = vunpack.c.h.b16 %v167
  %v1198 = vunpack.c.l.b16 %v168
  %v1199 = vunpack.c.h.b16 %v168
  %v1200 = vunpack.c.l.b16 %v169
  %v1201 = vunpack.c.h.b16 %v169
  %v1202 = vunpack.c.l.b16 %v170
  %v1203 = vunpack.c.h.b16 %v170
  %v1204 = vunpack.c.l.b16 %v171
  %v1205 = vunpack.c.h.b16 %v171
  %v1206 = vunpack.c.l.b16 %v172
  %v1207 = vunpack.c.h.b16 %v172
  %v1208 = vunpack.c.l.b16 %v173
  %v1209 = vunpack.c.h.b16 %v173
  %v1210 = vunpack.c.l.b16 %v174
  %v1211 = vunpack.c.h.b16 %v174
  %v1212 = vunpack.c.l.b16 %v175
  %v1213 = vunpack.c.h.b16 %v175
  %v1214 = vunpack.c.l.b16 %v176
  %v1215 = vunpack.c.h.b16 %v176
  %v1216 = vunpack.c.l.b16 %v177
  %v1217 = vunpack.c.h.b16 %v177
  %v1218 = vunpack.c.l.b16 %v178
  %v1219 = vunpack.c.h.b16 %v178
  %v1220 = vunpack.c.l.b16 %v179
  %v1221 = vunpack.c.h.b16 %v179
  %v1222 = vunpack.c.l.b16 %v180
  %v1223 = vunpack.c.h.b16 %v180
  %v1224 = vunpack.c.l.b16 %v181
  %v1225 = vunpack.c.h.b16 %v181
  %v1226 = vunpack.c.l.b16 %v182
  %v1227 = vunpack.c.h.b16 %v182
  %v1228 = vunpack.c.l.b16 %v183
  %v1229 = vunpack.c.h.b16 %v183
  %v1230 = vunpack.c.l.b16 %v184
  %v1231 = vunpack.c.h.b16 %v184
  %v1232 = vunpack.c.l.b16 %v185
  %v1233 = vunpack.c.h.b16 %v185
  %v1234 = vunpack.c.l.b16 %v186
  %v1235 = vunpack.c.h.b16 %v186
  %v1236 = vunpack.c.l.b16 %v187
  %v1237 = vunpack.c.h.b16 %v187
  %v1238 = vunpack.c.l.b16 %v188
  %v1239 = vunpack.c.h.b16 %v188
  %v1240 = vunpack.c.l.b16 %v189
  %v1241 = vunpack.c.h.b16 %v189
  %v1242 = vunpack.c.l.b16 %v190
  %v1243 = vunpack.c.h.b16 %v190
  %v1244 = vunpack.c.l.b16 %v191
  %v1245 = vunpack.c.h.b16 %v191
  %v1246 = vunpack.c.l.b16 %v192
  %v1247 = vunpack.c.h.b16 %v192
  %v1248 = vunpack.c.l.b16 %v193
  %v1249 = vunpack.c.h.b16 %v193
  %v1250 = vunpack.c.l.b16 %v194
  %v1251 = vunpack.c.h.b16 %v194
  %v1252 = vunpack.c.l.b16 %v195
  %v1253 = vunpack.c.h.b16 %v195
  %v1254 = vunpack.c.l.b16 %v196
  %v1255 = vunpack.c.h.b16 %v196
  %v1256 = vunpack.c.l.b16 %v197
  %v1257 = vunpack.c.h.b16 %v197
  %v1258 = vunpack.c.l.b16 %v198
  %v1259 = vunpack.c.h.b16 %v198
  %v1260 = vunpack.c.l.b16 %v199
  %v1261 = vunpack.c.h.b16 %v199
  %v1262 = vunpack.c.l.b16 %v200
  %v1263 = vunpack.c.h.b16 %v200
  %v1264 = vunpack.c.l.b16 %v201
  %v1265 = vunpack.c.h.b16 %v201
  %v1266 = vunpack.c.l.b16 %v202
  %v1267 = vunpack.c.h.b16 %v202
  %v1268 = vunpack.c.l.b16 %v203
  %v1269 = vunpack.c.h.b16 %v203
  %v1270 = vunpack.c.l.b16 %v204
  %v1271 = vunpack.c.h.b16 %v204
  %v1272 = vunpack.c.l.b16 %v205
  %v1273 = vunpack.c.h.b16 %v205
  %v1274 = vunpack.c.l.b16 %v206
  %v1275 = vunpack.c.h.b16 %v206
  %v1276 = vunpack.c.l.b16 %v207
  %v1277 = vunpack.c.h.b16 %v207
  %v1278 = vunpack.c.l.b16 %v208
  %v1279 = vunpack.c.h.b16 %v208
  %v1280 = vunpack.c.l.b16 %v209
  %v1281 = vunpack.c.h.b16 %v209
  %v1282 = vunpack.c.l.b16 %v210
  %v1283 = vunpack.c.h.b16 %v210
  %v1284 = vunpack.c.l.b16 %v211
  %v1285 = vunpack.c.h.b16 %v211
  %v1286 = vunpack.c.l.b16 %v212
  %v1287 = vunpack.c.h.b16 %v212
  %v1288 = vunpack.c.l.b16 %v213
  %v1289 = vunpack.c.h.b16 %v213
  %v1290 = vunpack.c.l.b16 %v214
  %v1291 = vunpack.c.h.b16 %v214
  %v1292 = vunpack.c.l.b16 %v215
  %v1293 = vunpack.c.h.b16 %v215
  %v1294 = vunpack.c.l.b16 %v216
  %v1295 = vunpack.c.h.b16 %v216
  %v1296 = vunpack.c.l.b16 %v217
  %v1297 = vunpack.c.h.b16 %v217
  %v1298 = vunpack.c.l.b16 %v218
  %v1299 = vunpack.c.h.b16 %v218
  %v1300 = vunpack.c.l.b16 %v219
  %v1301 = vunpack.c.h.b16 %v219
  %v1302 = vunpack.c.l.b16 %v220
  %v1303 = vunpack.c.h.b16 %v220
  %v1304 = vunpack.c.l.b16 %v221
  %v1305 = vunpack.c.h.b16 %v221
  %v1306 = vunpack.c.l.b16 %v222
  %v1307 = vunpack.c.h.b16 %v222
  %v1308 = vunpack.c.l.b16 %v223
  %v1309 = vunpack.c.h.b16 %v223
  %v1310 = vunpack.c.l.b16 %v224
  %v1311 = vunpack.c.h.b16 %v224
  %v1312 = vunpack.c.l.b16 %v225
  %v1313 = vunpack.c.h.b16 %v225
  %v1314 = vunpack.c.l.b16 %v226
  %v1315 = vunpack.c.h.b16 %v226
  %v1316 = vunpack.c.l.b16 %v227
  %v1317 = vunpack.c.h.b16 %v227
  %v1318 = vunpack.c.l.b16 %v228
  %v1319 = vunpack.c.h.b16 %v228
  %v1320 = vunpack.c.l.b16 %v229
  %v1321 = vunpack.c.h.b16 %v229
  %v1322 = vunpack.c.l.b16 %v230
  %v1323 = vunpack.c.h.b16 %v230
  %v1324 = vunpack.c.l.b16 %v231
  %v1325 = vunpack.c.h.b16 %v231
  %v1326 = vunpack.c.l.b16 %v232
  %v1327 = vunpack.c.h.b16 %v232
  %v1328 = vunpack.c.l.b16 %v233
  %v1329 = vunpack.c.h.b16 %v233
  %v1330 = vunpack.c.l.b16 %v234
  %v1331 = vunpack.c.h.b16 %v234
  %v1332 = vunpack.c.l.b16 %v235
  %v1333 = vunpack.c.h.b16 %v235
  %v1334 = vunpack.c.l.b16 %v236
  %v1335 = vunpack.c.h.b16 %v236
  %v1336 = vunpack.c.l.b16 %v237
  %v1337 = vunpack.c.h.b16 %v237
  %v1338 = vunpack.c.l.b16 %v238
  %v1339 = vunpack.c.h.b16 %v238
  %v1340 = vunpack.c.l.b16 %v239
  %v1341 = vunpack.c.h.b16 %v239
  %v1342 = vunpack.c.l.b16 %v240
  %v1343 = vunpack.c.h.b16 %v240
  %v1344 = vunpack.c.l.b16 %v241
  %v1345 = vunpack.c.h.b16 %v241
  %v1346 = vunpack.c.l.b16 %v242
  %v1347 = vunpack.c.h.b16 %v242
  %v1348 = vunpack.c.l.b16 %v243
  %v1349 = vunpack.c.h.b16 %v243
  %v1350 = vunpack.c.l.b16 %v244
  %v1351 = vunpack.c.h.b16 %v244
  %v1352 = vunpack.c.l.b16 %v245
  %v1353 = vunpack.c.h.b16 %v245
  %v1354 = vunpack.c.l.b16 %v246
  %v1355 = vunpack.c.h.b16 %v246
  %v1356 = vunpack.c.l.b16 %v247
  %v1357 = vunpack.c.h.b16 %v247
  %v1358 = vunpack.c.l.b16 %v248
  %v1359 = vunpack.c.h.b16 %v248
  %v1360 = vunpack.c.l.b16 %v249
  %v1361 = vunpack.c.h.b16 %v249
  %v1362 = vunpack.c.l.b16 %v250
  %v1363 = vunpack.c.h.b16 %v250
  %v1364 = vunpack.c.l.b16 %v251
  %v1365 = vunpack.c.h.b16 %v251
  %v1366 = vunpack.c.l.b16 %v252
  %v1367 = vunpack.c.h.b16 %v252
  %v1368 = vunpack.c.l.b16 %v253
  %v1369 = vunpack.c.h.b16 %v253
  %v1370 = vunpack.c.l.b16 %v254
  %v1371 = vunpack.c.h.b16 %v254
  %v1372 = vunpack.c.l.b16 %v255
  %v1373 = vunpack.c.h.b16 %v255
  %v1374 = vunpack.c.l.b16 %v256
  %v1375 = vunpack.c.h.b16 %v256
  %v1376 = vunpack.c.l.b16 %v257
  %v1377 = vunpack.c.h.b16 %v257
  %v1378 = vunpack.c.l.b16 %v258
  %v1379 = vunpack.c.h.b16 %v258
  %v1380 = vunpack.c.l.b16 %v259
  %v1381 = vunpack.c.h.b16 %v259
  %v1382 = vunpack.c.l.b16 %v260
  %v1383 = vunpack.c.h.b16 %v260
  %v1384 = vunpack.c.l.b16 %v261
  %v1385 = vunpack.c.h.b16 %v261
  %v1386 = vunpack.c.l.b16 %v262
  %v1387 = vunpack.c.h.b16 %v262
  %v1388 = vunpack.c.l.b16 %v263
  %v1389 = vunpack.c.h.b16 %v263
  %v1390 = vunpack.c.l.b16 %v264
  %v1391 = vunpack.c.h.b16 %v264
  %v1392 = vunpack.c.l.b16 %v265
  %v1393 = vunpack.c.h.b16 %v265
  %v1394 = vunpack.c.l.b16 %v266
  %v1395 = vunpack.c.h.b16 %v266
  %v1396 = vunpack.c.l.b16 %v267
  %v1397 = vunpack.c.h.b16 %v267
  %v1398 = vunpack.c.l.b16 %v268
  %v1399 = vunpack.c.h.b16 %v268
  %v1400 = vunpack.c.l.b16 %v269
  %v1401 = vunpack.c.h.b16 %v269
  %v1402 = vunpack.c.l.b16 %v270
  %v1403 = vunpack.c.h.b16 %v270
  %v1404 = vunpack.c.l.b16 %v271
  %v1405 = vunpack.c.h.b16 %v271
  %v1406 = vunpack.c.l.b16 %v272
  %v1407 = vunpack.c.h.b16 %v272
  %v1408 = vunpack.c.l.b16 %v273
  %v1409 = vunpack.c.h.b16 %v273
  %v1410 = vunpack.c.l.b16 %v274
  %v1411 = vunpack.c.h.b16 %v274
  %v1412 = vunpack.c.l.b16 %v275
  %v1413 = vunpack.c.h.b16 %v275
  %v1414 = vunpack.c.l.b16 %v276
  %v1415 = vunpack.c.h.b16 %v276
  %v1416 = vunpack.c.l.b16 %v277
  %v1417 = vunpack.c.h.b16 %v277
  %v1418 = vunpack.c.l.b16 %v278
  %v1419 = vunpack.c.h.b16 %v278
  %v1420 = vunpack.c.l.b16 %v279
  %v1421 = vunpack.c.h.b16 %v279
  %v1422 = vunpack.c.l.b16 %v280
  %v1423 = vunpack.c.h.b16 %v280
  %v1424 = vunpack.c.l.b16 %v281
  %v1425 = vunpack.c.h.b16 %v281
  %v1426 = vunpack.c.l.b16 %v282
  %v1427 = vunpack.c.h.b16 %v282
  %v1428 = vunpack.c.l.b16 %v283
  %v1429 = vunpack.c.h.b16 %v283
  %v1430 = vunpack.c.l.b16 %v284
  %v1431 = vunpack.c.h.b16 %v284
  %v1432 = vunpack.c.l.b16 %v285
  %v1433 = vunpack.c.h.b16 %v285
  %v1434 = vunpack.c.l.b16 %v286
  %v1435 = vunpack.c.h.b16 %v286
  %v1436 = vunpack.c.l.b16 %v287
  %v1437 = vunpack.c.h.b16 %v287
  %v1438 = vunpack.c.l.b16 %v288
  %v1439 = vunpack.c.h.b16 %v288
  %v1440 = vunpack.c.l.b16 %v289
  %v1441 = vunpack.c.h.b16 %v289
  %v1442 = vunpack.c.l.b16 %v290
  %v1443 = vunpack.c.h.b16 %v290
  %v1444 = vunpack.c.l.b16 %v291
  %v1445 = vunpack.c.h.b16 %v291
  %v1446 = vunpack.c.l.b16 %v292
  %v1447 = vunpack.c.h.b16 %v292
  %v1448 = vunpack.c.l.b16 %v293
  %v1449 = vunpack.c.h.b16 %v293
  %v1450 = vunpack.c.l.b16 %v294
  %v1451 = vunpack.c.h.b16 %v294
  %v1452 = vunpack.c.l.b16 %v295
  %v1453 = vunpack.c.h.b16 %v295
  %v1454 = vunpack.c.l.b16 %v296
  %v1455 = vunpack.c.h.b16 %v296
  %v1456 = vunpack.c.l.b16 %v297
  %v1457 = vunpack.c.h.b16 %v297
  %v1458 = vunpack.c.l.b16 %v298
  %v1459 = vunpack.c.h.b16 %v298
  %v1460 = vunpack.c.l.b16 %v299
  %v1461 = vunpack.c.h.b16 %v299
  %v1462 = vunpack.c.l.b16 %v300
  %v1463 = vunpack.c.h.b16 %v300
  %v1464 = vunpack.c.l.b16 %v301
  %v1465 = vunpack.c.h.b16 %v301
  %v1466 = vunpack.c.l.b16 %v302
  %v1467 = vunpack.c.h.b16 %v302
  %v1468 = vunpack.c.l.b16 %v303
  %v1469 = vunpack.c.h.b16 %v303
  %v1470 = vunpack.c.l.b16 %v304
  %v1471 = vunpack.c.h.b16 %v304
  %v1472 = vunpack.c.l.b16 %v305
  %v1473 = vunpack.c.h.b16 %v305
  %v1474 = vunpack.c.l.b16 %v306
  %v1475 = vunpack.c.h.b16 %v306
  %v1476 = vunpack.c.l.b16 %v307
  %v1477 = vunpack.c.h.b16 %v307
  %v1478 = vunpack.c.l.b16 %v308
  %v1479 = vunpack.c.h.b16 %v308
  %v1480 = vunpack.c.l.b16 %v309
  %v1481 = vunpack.c.h.b16 %v309
  %v1482 = vunpack.c.l.b16 %v310
  %v1483 = vunpack.c.h.b16 %v310
  %v1484 = vunpack.c.l.b16 %v311
  %v1485 = vunpack.c.h.b16 %v311
  %v1486 = vunpack.c.l.b16 %v312
  %v1487 = vunpack.c.h.b16 %v312
  %v1488 = vunpack.c.l.b16 %v313
  %v1489 = vunpack.c.h.b16 %v313
  %v1490 = vunpack.c.l.b16 %v314
  %v1491 = vunpack.c.h.b16 %v314
  %v1492 = vunpack.c.l.b16 %v315
  %v1493 = vunpack.c.h.b16 %v315
  %v1494 = vunpack.c.l.b16 %v316
  %v1495 = vunpack.c.h.b16 %v316
  %v1496 = vunpack.c.l.b16 %v317
  %v1497 = vunpack.c.h.b16 %v317
  %v1498 = vunpack.c.l.b16 %v318
  %v1499 = vunpack.c.h.b16 %v318
  %v1500 = vunpack.c.l.b16 %v319
  %v1501 = vunpack.c.h.b16 %v319
  %v1502 = vunpack.c.l.b16 %v320
  %v1503 = vunpack.c.h.b16 %v320
  %v1504 = vunpack.c.l.b16 %v321
  %v1505 = vunpack.c.h.b16 %v321
  %v1506 = vunpack.c.l.b16 %v322
  %v1507 = vunpack.c.h.b16 %v322
  %v1508 = vunpack.c.l.b16 %v323
  %v1509 = vunpack.c.h.b16 %v323
  %v1510 = vunpack.c.l.b16 %v324
  %v1511 = vunpack.c.h.b16 %v324
  %v1512 = vunpack.c.l.b16 %v325
  %v1513 = vunpack.c.h.b16 %v325
  %v1514 = vunpack.c.l.b16 %v326
  %v1515 = vunpack.c.h.b16 %v326
  %v1516 = vunpack.c.l.b16 %v327
  %v1517 = vunpack.c.h.b16 %v327
  %v1518 = vunpack.c.l.b16 %v328
  %v1519 = vunpack.c.h.b16 %v328
  %v1520 = vunpack.c.l.b16 %v329
  %v1521 = vunpack.c.h.b16 %v329
  %v1522 = vunpack.c.l.b16 %v330
  %v1523 = vunpack.c.h.b16 %v330
  %v1524 = vunpack.c.l.b16 %v331
  %v1525 = vunpack.c.h.b16 %v331
  %v1526 = vunpack.c.l.b16 %v332
  %v1527 = vunpack.c.h.b16 %v332
  %v1528 = vunpack.c.l.b16 %v333
  %v1529 = vunpack.c.h.b16 %v333
  %v1530 = vunpack.c.l.b16 %v334
  %v1531 = vunpack.c.h.b16 %v334
  %v1532 = vunpack.c.l.b16 %v335
  %v1533 = vunpack.c.h.b16 %v335
  %v1534 = vunpack.c.l.b16 %v336
  %v1535 = vunpack.c.h.b16 %v336
  %v1536 = vunpack.c.l.b16 %v337
  %v1537 = vunpack.c.h.b16 %v337
  %v1538 = vunpack.c.l.b16 %v338
  %v1539 = vunpack.c.h.b16 %v338
  %v1540 = vunpack.c.l.b16 %v339
  %v1541 = vunpack.c.h.b16 %v339
  %v1542 = vunpack.c.l.b16 %v340
  %v1543 = vunpack.c.h.b16 %v340
  %v1544 = vunpack.c.l.b16 %v341
  %v1545 = vunpack.c.h.b16 %v341
  %v1546 = vunpack.c.l.b16 %v342
  %v1547 = vunpack.c.h.b16 %v342
  %v1548 = vunpack.c.l.b16 %v343
  %v1549 = vunpack.c.h.b16 %v343
  %v1550 = vunpack.c.l.b16 %v344
  %v1551 = vunpack.c.h.b16 %v344
  %v1552 = vunpack.c.l.b16 %v345
  %v1553 = vunpack.c.h.b16 %v345
  %v1554 = vunpack.c.l.b16 %v346
  %v1555 = vunpack.c.h.b16 %v346
  %v1556 = vunpack.c.l.b16 %v347
  %v1557 = vunpack.c.h.b16 %v347
  %v1558 = vunpack.c.l.b16 %v348
  %v1559 = vunpack.c.h.b16 %v348
  %v1560 = vunpack.c.l.b16 %v349
  %v1561 = vunpack.c.h.b16 %v349
  %v1562 = vunpack.c.l.b16 %v350
  %v1563 = vunpack.c.h.b16 %v350
  %v1564 = vunpack.c.l.b16 %v351
  %v1565 = vunpack.c.h.b16 %v351
  %v1566 = vunpack.c.l.b16 %v352
  %v1567 = vunpack.c.h.b16 %v352
  %v1568 = vunpack.c.l.b16 %v353
  %v1569 = vunpack.c.h.b16 %v353
  %v1570 = vunpack.c.l.b16 %v354
  %v1571 = vunpack.c.h.b16 %v354
  %v1572 = vunpack.c.l.b16 %v355
  %v1573 = vunpack.c.h.b16 %v355
  %v1574 = vunpack.c.l.b16 %v356
  %v1575 = vunpack.c.h.b16 %v356
  %v1576 = vunpack.c.l.b16 %v357
  %v1577 = vunpack.c.h.b16 %v357
  %v1578 = vunpack.c.l.b16 %v358
  %v1579 = vunpack.c.h.b16 %v358
  %v1580 = vunpack.c.l.b16 %v359
  %v1581 = vunpack.c.h.b16 %v359
  %v1582 = vunpack.c.l.b16 %v360
  %v1583 = vunpack.c.h.b16 %v360
  %v1584 = vunpack.c.l.b16 %v361
  %v1585 = vunpack.c.h.b16 %v361
  %v1586 = vunpack.c.l.b16 %v362
  %v1587 = vunpack.c.h.b16 %v362
  %v1588 = vunpack.c.l.b16 %v363
  %v1589 = vunpack.c.h.b16 %v363
  %v1590 = vunpack.c.l.b16 %v364
  %v1591 = vunpack.c.h.b16 %v364
  %v1592 = vunpack.c.l.b16 %v365
  %v1593 = vunpack.c.h.b16 %v365
  %v1594 = vunpack.c.l.b16 %v366
  %v1595 = vunpack.c.h.b16 %v366
  %v1596 = vunpack.c.l.b16 %v367
  %v1597 = vunpack.c.h.b16 %v367
  %v1598 = vunpack.c.l.b16 %v368
  %v1599 = vunpack.c.h.b16 %v368
  %v1600 = vunpack.c.l.b16 %v369
  %v1601 = vunpack.c.h.b16 %v369
  %v1602 = vunpack.c.l.b16 %v370
  %v1603 = vunpack.c.h.b16 %v370
  %v1604 = vunpack.c.l.b16 %v371
  %v1605 = vunpack.c.h.b16 %v371
  %v1606 = vunpack.c.l.b16 %v372
  %v1607 = vunpack.c.h.b16 %v372
  %v1608 = vunpack.c.l.b16 %v373
  %v1609 = vunpack.c.h.b16 %v373
  %v1610 = vunpack.c.l.b16 %v374
  %v1611 = vunpack.c.h.b16 %v374
  %v1612 = vunpack.c.l.b16 %v375
  %v1613 = vunpack.c.h.b16 %v375
  %v1614 = vunpack.c.l.b16 %v376
  %v1615 = vunpack.c.h.b16 %v376
  %v1616 = vunpack.c.l.b16 %v377
  %v1617 = vunpack.c.h.b16 %v377
  %v1618 = vunpack.c.l.b16 %v378
  %v1619 = vunpack.c.h.b16 %v378
  %v1620 = vunpack.c.l.b16 %v379
  %v1621 = vunpack.c.h.b16 %v379
  %v1622 = vunpack.c.l.b16 %v380
  %v1623 = vunpack.c.h.b16 %v380
  %v1624 = vunpack.c.l.b16 %v381
  %v1625 = vunpack.c.h.b16 %v381
  %v1626 = vunpack.c.l.b16 %v382
  %v1627 = vunpack.c.h.b16 %v382
  %v1628 = vunpack.c.l.b16 %v383
  %v1629 = vunpack.c.h.b16 %v383
  %v1630 = vunpack.c.l.b16 %v384
  %v1631 = vunpack.c.h.b16 %v384
  %v1632 = vunpack.c.l.b16 %v385
  %v1633 = vunpack.c.h.b16 %v385
  %v1634 = vunpack.c.l.b16 %v386
  %v1635 = vunpack.c.h.b16 %v386
  %v1636 = vunpack.c.l.b16 %v387
  %v1637 = vunpack.c.h.b16 %v387
  %v1638 = vunpack.c.l.b16 %v388
  %v1639 = vunpack.c.h.b16 %v388
  %v1640 = vunpack.c.l.b16 %v389
  %v1641 = vunpack.c.h.b16 %v389
  %v1642 = vunpack.c.l.b16 %v390
  %v1643 = vunpack.c.h.b16 %v390
  %v1644 = vunpack.c.l.b16 %v391
  %v1645 = vunpack.c.h.b16 %v391
  %v1646 = vunpack.c.l.b16 %v392
  %v1647 = vunpack.c.h.b16 %v392
  %v1648 = vunpack.c.l.b16 %v393
  %v1649 = vunpack.c.h.b16 %v393
  %v1650 = vunpack.c.l.b16 %v394
  %v1651 = vunpack.c.h.b16 %v394
  %v1652 = vunpack.c.l.b16 %v395
  %v1653 = vunpack.c.h.b16 %v395
  %v1654 = vunpack.c.l.b16 %v396
  %v1655 = vunpack.c.h.b16 %v396
  %v1656 = vunpack.c.l.b16 %v397
  %v1657 = vunpack.c.h.b16 %v397
  %v1658 = vunpack.c.l.b16 %v398
  %v1659 = vunpack.c.h.b16 %v398
  %v1660 = vunpack.c.l.b16 %v399
  %v1661 = vunpack.c.h.b16 %v399
  %v1662 = vunpack.c.l.b16 %v400
  %v1663 = vunpack.c.h.b16 %v400
  %v1664 = vunpack.c.l.b16 %v401
  %v1665 = vunpack.c.h.b16 %v401
  %v1666 = vunpack.c.l.b16 %v402
  %v1667 = vunpack.c.h.b16 %v402
  %v1668 = vunpack.c.l.b16 %v403
  %v1669 = vunpack.c.h.b16 %v403
  %v1670 = vunpack.c.l.b16 %v404
  %v1671 = vunpack.c.h.b16 %v404
  %v1672 = vunpack.c.l.b16 %v405
  %v1673 = vunpack.c.h.b16 %v405
  %v1674 = vunpack.c.l.b16 %v406
  %v1675 = vunpack.c.h.b16 %v406
  %v1676 = vunpack.c.l.b16 %v407
  %v1677 = vunpack.c.h.b16 %v407
  %v1678 = vunpack.c.l.b16 %v408
  %v1679 = vunpack.c.h.b16 %v408
  %v1680 = vunpack.c.l.b16 %v409
  %v1681 = vunpack.c.h.b16 %v409
  %v1682 = vunpack.c.l.b16 %v410
  %v1683 = vunpack.c.h.b16 %v410
  %v1684 = vunpack.c.l.b16 %v411
  %v1685 = vunpack.c.h.b16 %v411
  %v1686 = vunpack.c.l.b16 %v412
  %v1687 = vunpack.c.h.b16 %v412
  %v1688 = vunpack.c.l.b16 %v413
  %v1689 = vunpack.c.h.b16 %v413
  %v1690 = vunpack.c.l.b16 %v414
  %v1691 = vunpack.c.h.b16 %v414
  %v1692 = vunpack.c.l.b16 %v415
  %v1693 = vunpack.c.h.b16 %v415
  %v1694 = vunpack.c.l.b16 %v416
  %v1695 = vunpack.c.h.b16 %v416
  %v1696 = vunpack.c.l.b16 %v417
  %v1697 = vunpack.c.h.b16 %v417
  %v1698 = vunpack.c.l.b16 %v418
  %v1699 = vunpack.c.h.b16 %v418
  %v1700 = vunpack.c.l.b16 %v419
  %v1701 = vunpack.c.h.b16 %v419
  %v1702 = vunpack.c.l.b16 %v420
  %v1703 = vunpack.c.h.b16 %v420
  %v1704 = vunpack.c.l.b16 %v421
  %v1705 = vunpack.c.h.b16 %v421
  %v1706 = vunpack.c.l.b16 %v422
  %v1707 = vunpack.c.h.b16 %v422
  %v1708 = vunpack.c.l.b16 %v423
  %v1709 = vunpack.c.h.b16 %v423
  %v1710 = vunpack.c.l.b16 %v424
  %v1711 = vunpack.c.h.b16 %v424
  %v1712 = vunpack.c.l.b16 %v425
  %v1713 = vunpack.c.h.b16 %v425
  %v1714 = vunpack.c.l.b16 %v426
  %v1715 = vunpack.c.h.b16 %v426
  %v1716 = vunpack.c.l.b16 %v427
  %v1717 = vunpack.c.h.b16 %v427
  %v1718 = vunpack.c.l.b16 %v428
  %v1719 = vunpack.c.h.b16 %v428
  %v1720 = vunpack.c.l.b16 %v429
  %v1721 = vunpack.c.h.b16 %v429
  %v1722 = vunpack.c.l.b16 %v430
  %v1723 = vunpack.c.h.b16 %v430
  %v1724 = vunpack.c.l.b16 %v431
  %v1725 = vunpack.c.h.b16 %v431
  %v1726 = vunpack.c.l.b16 %v432
  %v1727 = vunpack.c.h.b16 %v432
  %v1728 = vunpack.c.l.b16 %v433
  %v1729 = vunpack.c.h.b16 %v433
  %v1730 = vunpack.c.l.b16 %v434
  %v1731 = vunpack.c.h.b16 %v434
  %v1732 = vunpack.c.l.b16 %v435
  %v1733 = vunpack.c.h.b16 %v435
  %v1734 = vunpack.c.l.b16 %v436
  %v1735 = vunpack.c.h.b16 %v436
  %v1736 = vunpack.c.l.b16 %v437
  %v1737 = vunpack.c.h.b16 %v437
  %v1738 = vunpack.c.l.b16 %v438
  %v1739 = vunpack.c.h.b16 %v438
  %v1740 = vunpack.c.l.b16 %v439
  %v1741 = vunpack.c.h.b16 %v439
  %v1742 = vunpack.c.l.b16 %v440
  %v1743 = vunpack.c.h.b16 %v440
  %v1744 = vunpack.c.l.b16 %v441
  %v1745 = vunpack.c.h.b16 %v441
  %v1746 = vunpack.c.l.b16 %v442
  %v1747 = vunpack.c.h.b16 %v442
  %v1748 = vunpack.c.l.b16 %v443
  %v1749 = vunpack.c.h.b16 %v443
  %v1750 = vunpack.c.l.b16 %v444
  %v1751 = vunpack.c.h.b16 %v444
  %v1752 = vpack.c.b16 %v970, %v968
  %v1753 = vpack.c.b16 %v971, %v969
  %v1754 = vpack.c.b16 %v974, %v972
  %v1755 = vpack.c.b16 %v975, %v973
  %v1756 = vpack.c.b16 %v978, %v976
  %v1757 = vpack.c.b16 %v979, %v977
  %v1758 = vpack.c.b16 %v982, %v980
  %v1759 = vpack.c.b16 %v983, %v981
  %v1760 = vpack.c.b16 %v986, %v984
  %v1761 = vpack.c.b16 %v987, %v985
  %v1762 = vpack.c.b16 %v990, %v988
  %v1763 = vpack.c.b16 %v991, %v989
  %v1764 = vpack.c.b16 %v994, %v992
  %v1765 = vpack.c.b16 %v995, %v993
  %v1766 = vpack.c.b16 %v998, %v996
  %v1767 = vpack.c.b16 %v999, %v997
  %v1768 = vpack.c.b16 %v1002, %v1000
  %v1769 = vpack.c.b16 %v1003, %v1001
  %v1770 = vpack.c.b16 %v1006, %v1004
  %v1771 = vpack.c.b16 %v1007, %v1005
  %v1772 = vpack.c.b16 %v1010, %v1008
  %v1773 = vpack.c.b16 %v1011, %v1009
  %v1774 = vpack.c.b16 %v1014, %v1012
  %v1775 = vpack.c.b16 %v1015, %v1013
  %v1776 = vpack.c.b16 %v1018, %v1016
  %v1777 = vpack.c.b16 %v1019, %v1017
  %v1778 = vpack.c.b16 %v1022, %v1020
  %v1779 = vpack.c.b16 %v1023, %v1021
  %v1780 = vpack.c.b16 %v1026, %v1024
  %v1781 = vpack.c.b16 %v1027, %v1025
  %v1782 = vpack.c.b16 %v1030, %v1028
  %v1783 = vpack.c.b16 %v1031, %v1029
  %v1784 = vpack.c.b16 %v1034, %v1032
  %v1785 = vpack.c.b16 %v1035, %v1033
  %v1786 = vpack.c.b16 %v1038, %v1036
  %v1787 = vpack.c.b16 %v1039, %v1037
  %v1788 = vpack.c.b16 %v1042, %v1040
  %v1789 = vpack.c.b16 %v1043, %v1041
  %v1790 = vpack.c.b16 %v1046, %v1044
  %v1791 = vpack.c.b16 %v1047, %v1045
  %v1792 = vpack.c.b16 %v1050, %v1048
  %v1793 = vpack.c.b16 %v1051, %v1049
  %v1794 = vpack.c.b16 %v1054, %v1052
  %v1795 = vpack.c.b16 %v1055, %v1053
  %v1796 = vpack.c.b16 %v1058, %v1056
  %v1797 = vpack.c.b16 %v1059, %v1057
  %v1798 = vpack.c.b16 %v1062, %v1060
  %v1799 = vpack.c.b16 %v1063, %v1061
  %v1800 = vpack.c.b16 %v1066, %v1064
  %v1801 = vpack.c.b16 %v1067, %v1065
  %v1802 = vpack.c.b16 %v1070, %v1068
  %v1803 = vpack.c.b16 %v1071, %v1069
  %v1804 = vpack.c.b16 %v1074, %v1072
  %v1805 = vpack.c.b16 %v1075, %v1073
  %v1806 = vpack.c.b16 %v1078, %v1076
  %v1807 = vpack.c.b16 %v1079, %v1077
  %v1808 = vpack.c.b16 %v1082, %v1080
  %v1809 = vpack.c.b16 %v1083, %v1081
  %v1810 = vpack.c.b16 %v1086, %v1084
  %v1811 = vpack.c.b16 %v1087, %v1085
  %v1812 = vpack.c.b16 %v1090, %v1088
  %v1813 = vpack.c.b16 %v1091, %v1089
  %v1814 = vpack.c.b16 %v1094, %v1092
  %v1815 = vpack.c.b16 %v1095, %v1093
  %v1816 = vpack.c.b16 %v1098, %v1096
  %v1817 = vpack.c.b16 %v1099, %v1097
  %v1818 = vpack.c.b16 %v1102, %v1100
  %v1819 = vpack.c.b16 %v1103, %v1101
  %v1820 = vpack.c.b16 %v1106, %v1104
  %v1821 = vpack.c.b16 %v1107, %v1105
  %v1822 = vpack.c.b16 %v1110, %v1108
  %v1823 = vpack.c.b16 %v1111, %v1109
  %v1824 = vpack.c.b16 %v1114, %v1112
  %v1825 = vpack.c.b16 %v1115, %v1113
  %v1826 = vpack.c.b16 %v1118, %v1116
  %v1827 = vpack.c.b16 %v1119, %v1117
  %v1828 = vpack.c.b16 %v1122, %v1120
  %v1829 = vpack.c.b16 %v1123, %v1121
  %v1830 = vpack.c.b16 %v1126, %v1124
  %v1831 = vpack.c.b16 %v1127, %v1125
  %v1832 = vpack.c.b16 %v1130, %v1128
  %v1833 = vpack.c.b16 %v1131, %v1129
  %v1834 = vpack.c.b16 %v1134, %v1132
  %v1835 = vpack.c.b16 %v1135, %v1133
  %v1836 = vpack.c.b16 %v1138, %v1136
  %v1837 = vpack.c.b16 %v1139, %v1137
  %v1838 = vpack.c.b16 %v1142, %v1140
  %v1839 = vpack.c.b16 %v1143, %v1141
  %v1840 = vpack.c.b16 %v1146, %v1144
  %v1841 = vpack.c.b16 %v1147, %v1145
  %v1842 = vpack.c.b16 %v1150, %v1148
  %v1843 = vpack.c.b16 %v1151, %v1149
  %v1844 = vpack.c.b16 %v1154, %v1152
  %v1845 = vpack.c.b16 %v1155, %v1153
  %v1846 = vpack.c.b16 %v1158, %v1156
  %v1847 = vpack.c.b16 %v1159, %v1157
  %v1848 = vpack.c.b16 %v1162, %v1160
  %v1849 = vpack.c.b16 %v1163, %v1161
  %v1850 = vpack.c.b16 %v1166, %v1164
  %v1851 = vpack.c.b16 %v1167, %v1165
  %v1852 = vpack.c.b16 %v1170, %v1168
  %v1853 = vpack.c.b16 %v1171, %v1169
  %v1854 = vpack.c.b16 %v1174, %v1172
  %v1855 = vpack.c.b16 %v1175, %v1173
  %v1856 = vpack.c.b16 %v1178, %v1176
  %v1857 = vpack.c.b16 %v1179, %v1177
  %v1858 = vpack.c.b16 %v1182, %v1180
  %v1859 = vpack.c.b16 %v1183, %v1181
  %v1860 = vpack.c.b16 %v1186, %v1184
  %v1861 = vpack.c.b16 %v1187, %v1185
  %v1862 = vpack.c.b16 %v1190, %v1188
  %v1863 = vpack.c.b16 %v1191, %v1189
  %v1864 = vpack.c.b16 %v1194, %v1192
  %v1865 = vpack.c.b16 %v1195, %v1193
  %v1866 = vpack.c.b16 %v1198, %v1196
  %v1867 = vpack.c.b16 %v1199, %v1197
  %v1868 = vpack.c.b16 %v1202, %v1200
  %v1869 = vpack.c.b16 %v1203, %v1201
  %v1870 = vpack.c.b16 %v1206, %v1204
  %v1871 = vpack.c.b16 %v1207, %v1205
  %v1872 = vpack.c.b16 %v1210, %v1208
  %v1873 = vpack.c.b16 %v1211, %v1209
  %v1874 = vpack.c.b16 %v1214, %v1212
  %v1875 = vpack.c.b16 %v1215, %v1213
  %v1876 = vpack.c.b16 %v1218, %v1216
  %v1877 = vpack.c.b16 %v1219, %v1217
  %v1878 = vpack.c.b16 %v1222, %v1220
  %v1879 = vpack.c.b16 %v1223, %v1221
  %v1880 = vpack.c.b16 %v1226, %v1224
  %v1881 = vpack.c.b16 %v1227, %v1225
  %v1882 = vpack.c.b16 %v1230, %v1228
  %v1883 = vpack.c.b16 %v1231, %v1229
  %v1884 = vpack.c.b16 %v1234, %v1232
  %v1885 = vpack.c.b16 %v1235, %v1233
  %v1886 = vpack.c.b16 %v1238, %v1236
  %v1887 = vpack.c.b16 %v1239, %v1237
  %v1888 = vpack.c.b16 %v1242, %v1240
  %v1889 = vpack.c.b16 %v1243, %v1241
  %v1890 = vpack.c.b16 %v1246, %v1244
  %v1891 = vpack.c.b16 %v1247, %v1245
  %v1892 = vpack.c.b16 %v1250, %v1248
  %v1893 = vpack.c.b16 %v1251, %v1249
  %v1894 = vpack.c.b16 %v1254, %v1252
  %v1895 = vpack.c.b16 %v1255, %v1253
  %v1896 = vpack.c.b16 %v1258, %v1256
  %v1897 = vpack.c.b16 %v1259, %v1257
  %v1898 = vpack.c.b16 %v1262, %v1260
  %v1899 = vpack.c.b16 %v1263, %v1261
  %v1900 = vpack.c.b16 %v1266, %v1264
  %v1901 = vpack.c.b16 %v1267, %v1265
  %v1902 = vpack.c.b16 %v1270, %v1268
  %v1903 = vpack.c.b16 %v1271, %v1269
  %v1904 = vpack.c.b16 %v1274, %v1272
  %v1905 = vpack.c.b16 %v1275, %v1273
  %v1906 = vpack.c.b16 %v1278, %v1276
  %v1907 = vpack.c.b16 %v1279, %v1277
  %v1908 = vpack.c.b16 %v1282, %v1280
  %v1909 = vpack.c.b16 %v1283, %v1281
  %v1910 = vpack.c.b16 %v1286, %v1284
  %v1911 = vpack.c.b16 %v1287, %v1285
  %v1912 = vpack.c.b16 %v1290, %v1288
  %v1913 = vpack.c.b16 %v1291, %v1289
  %v1914 = vpack.c.b16 %v1294, %v1292
  %v1915 = vpack.c.b16 %v1295, %v1293
  %v1916 = vpack.c.b16 %v1298, %v1296
  %v1917 = vpack.c.b16 %v1299, %v1297
  %v1918 = vpack.c.b16 %v1302, %v1300
  %v1919 = vpack.c.b16 %v1303, %v1301
  %v1920 = vpack.c.b16 %v1306, %v1304
  %v1921 = vpack.c.b16 %v1307, %v1305
  %v1922 = vpack.c.b16 %v1310, %v1308
  %v1923 = vpack.c.b16 %v1311, %v1309
  %v1924 = vpack.c.b16 %v1314, %v1312
  %v1925 = vpack.c.b16 %v1315, %v1313
  %v1926 = vpack.c.b16 %v1318, %v1316
  %v1927 = vpack.c.b16 %v1319, %v1317
  %v1928 = vpack.c.b16 %v1322, %v1320
  %v1929 = vpack.c.b16 %v1323, %v1321
  %v1930 = vpack.c.b16 %v1326, %v1324
  %v1931 = vpack.c.b16 %v1327, %v1325
  %v1932 = vpack.c.b16 %v1330, %v1328
  %v1933 = vpack.c.b16 %v1331, %v1329
  %v1934 = vpack.c.b16 %v1334, %v1332
  %v1935 = vpack.c.b16 %v1335, %v1333
  %v1936 = vpack.c.b16 %v1338, %v1336
  %v1937 = vpack.c.b16 %v1339, %v1337
  %v1938 = vpack.c.b16 %v1342, %v1340
  %v1939 = vpack.c.b16 %v1343, %v1341
  %v1940 = vpack.c.b16 %v1346, %v1344
  %v1941 = vpack.c.b16 %v1347, %v1345
  %v1942 = vpack.c.b16 %v1350, %v1348
  %v1943 = vpack.c.b16 %v1351, %v1349
  %v1944 = vpack.c.b16 %v1354, %v1352
  %v1945 = vpack.c.b16 %v1355, %v1353
  %v1946 = vpack.c.b16 %v1358, %v1356
  %v1947 = vpack.c.b16 %v1359, %v1357
  %v1948 = vpack.c.b16 %v1362, %v1360
  %v1949 = vpack.c.b16 %v1363, %v1361
  %v1950 = vpack.c.b16 %v1366, %v1364
  %v1951 = vpack.c.b16 %v1367, %v1365
  %v1952 = vpack.c.b16 %v1370, %v1368
  %v1953 = vpack.c.b16 %v1371, %v1369
  %v1954 = vpack.c.b16 %v1374, %v1372
  %v1955 = vpack.c.b16 %v1375, %v1373
  %v1956 = vpack.c.b16 %v1378, %v1376
  %v1957 = vpack.c.b16 %v1379, %v1377
  %v1958 = vpack.c.b16 %v1382, %v1380
  %v1959 = vpack.c.b16 %v1383, %v1381
  %v1960 = vpack.c.b16 %v1386, %v1384
  %v1961 = vpack.c.b16 %v1387, %v1385
  %v1962 = vpack.c.b16 %v1390, %v1388
  %v1963 = vpack.c.b16 %v1391, %v1389
  %v1964 = vpack.c.b16 %v1394, %v1392
  %v1965 = vpack.c.b16 %v1395, %v1393
  %v1966 = vpack.c.b16 %v1398, %v1396
  %v1967 = vpack.c.b16 %v1399, %v1397
  %v1968 = vpack.c.b16 %v1402, %v1400
  %v1969 = vpack.c.b16 %v1403, %v1401
  %v1970 = vpack.c.b16 %v1406, %v1404
  %v1971 = vpack.c.b16 %v1407, %v1405
  %v1972 = vpack.c.b16 %v1410, %v1408
  %v1973 = vpack.c.b16 %v1411, %v1409
  %v1974 = vpack.c.b16 %v1414, %v1412
  %v1975 = vpack.c.b16 %v1415, %v1413
  %v1976 = vpack.c.b16 %v1418, %v1416
  %v1977 = vpack.c.b16 %v1419, %v1417
  %v1978 = vpack.c.b16 %v1422, %v1420
  %v1979 = vpack.c.b16 %v1423, %v1421
  %v1980 = vpack.c.b16 %v1426, %v1424
  %v1981 = vpack.c.b16 %v1427, %v1425
  %v1982 = vpack.c.b16 %v1430, %v1428
  %v1983 = vpack.c.b16 %v1431, %v1429
  %v1984 = vpack.c.b16 %v1434, %v1432
  %v1985 = vpack.c.b16 %v1435, %v1433
  %v1986 = vpack.c.b16 %v1438, %v1436
  %v1987 = vpack.c.b16 %v1439, %v1437
  %v1988 = vpack.c.b16 %v1442, %v1440
  %v1989 = vpack.c.b16 %v1443, %v1441
  %v1990 = vpack.c.b16 %v1446, %v1444
  %v1991 = vpack.c.b16 %v1447, %v1445
  %v1992 = vpack.c.b16 %v1450, %v1448
  %v1993 = vpack.c.b16 %v1451, %v1449
  %v1994 = vpack.c.b16 %v1454, %v1452
  %v1995 = vpack.c.b16 %v1455, %v1453
  %v1996 = vpack.c.b16 %v1458, %v1456
  %v1997 = vpack.c.b16 %v1459, %v1457
  %v1998 = vpack.c.b16 %v1462, %v1460
  %v1999 = vpack.c.b16 %v1463, %v1461
  %v2000 = vpack.c.b16 %v1466, %v1464
  %v2001 = vpack.c.b16 %v1467, %v1465
  %v2002 = vpack.c.b16 %v1470, %v1468
  %v2003 = vpack.c.b16 %v1471, %v1469
  %v2004 = vpack.c.b16 %v1474, %v1472
  %v2005 = vpack.c.b16 %v1475, %v1473
  %v2006 = vpack.c.b16 %v1478, %v1476
  %v2007 = vpack.c.b16 %v1479, %v1477
  %v2008 = vpack.c.b16 %v1482, %v1480
  %v2009 = vpack.c.b16 %v1483, %v1481
  %v2010 = vpack.c.b16 %v1486, %v1484
  %v2011 = vpack.c.b16 %v1487, %v1485
  %v2012 = vpack.c.b16 %v1490, %v1488
  %v2013 = vpack.c.b16 %v1491, %v1489
  %v2014 = vpack.c.b16 %v1494, %v1492
  %v2015 = vpack.c.b16 %v1495, %v1493
  %v2016 = vpack.c.b16 %v1498, %v1496
  %v2017 = vpack.c.b16 %v1499, %v1497
  %v2018 = vpack.c.b16 %v1502, %v1500
  %v2019 = vpack.c.b16 %v1503, %v1501
  %v2020 = vpack.c.b16 %v1506, %v1504
  %v2021 = vpack.c.b16 %v1507, %v1505
  %v2022 = vpack.c.b16 %v1510, %v1508
  %v2023 = vpack.c.b16 %v1511, %v1509
  %v2024 = vpack.c.b16 %v1514, %v1512
  %v2025 = vpack.c.b16 %v1515, %v1513
  %v2026 = vpack.c.b16 %v1518, %v1516
  %v2027 = vpack.c.b16 %v1519, %v1517
  %v2028 = vpack.c.b16 %v1522, %v1520
  %v2029 = vpack.c.b16 %v1523, %v1521
  %v2030 = vpack.c.b16 %v1526, %v1524
  %v2031 = vpack.c.b16 %v1527, %v1525
  %v2032 = vpack.c.b16 %v1530, %v1528
  %v2033 = vpack.c.b16 %v1531, %v1529
  %v2034 = vpack.c.b16 %v1534, %v1532
  %v2035 = vpack.c.b16 %v1535, %v1533
  %v2036 = vpack.c.b16 %v1538, %v1536
  %v2037 = vpack.c.b16 %v1539, %v1537
  %v2038 = vpack.c.b16 %v1542, %v1540
  %v2039 = vpack.c.b16 %v1543, %v1541
  %v2040 = vpack.c.b16 %v1546, %v1544
  %v2041 = vpack.c.b16 %v1547, %v1545
  %v2042 = vpack.c.b16 %v1550, %v1548
  %v2043 = vpack.c.b16 %v1551, %v1549
  %v2044 = vpack.c.b16 %v1554, %v1552
  %v2045 = vpack.c.b16 %v1555, %v1553
  %v2046 = vpack.c.b16 %v1558, %v1556
  %v2047 = vpack.c.b16 %v1559, %v1557
  %v2048 = vpack.c.b16 %v1562, %v1560
  %v2049 = vpack.c.b16 %v1563, %v1561
  %v2050 = vpack.c.b16 %v1566, %v1564
  %v2051 = vpack.c.b16 %v1567, %v1565
  %v2052 = vpack.c.b16 %v1570, %v1568
  %v2053 = vpack.c.b16 %v1571, %v1569
  %v2054 = vpack.c.b16 %v1574, %v1572
  %v2055 = vpack.c.b16 %v1575, %v1573
  %v2056 = vpack.c.b16 %v1578, %v1576
  %v2057 = vpack.c.b16 %v1579, %v1577
  %v2058 = vpack.c.b16 %v1582, %v1580
  %v2059 = vpack.c.b16 %v1583, %v1581
  %v2060 = vpack.c.b16 %v1586, %v1584
  %v2061 = vpack.c.b16 %v1587, %v1585
  %v2062 = vpack.c.b16 %v1590, %v1588
  %v2063 = vpack.c.b16 %v1591, %v1589
  %v2064 = vpack.c.b16 %v1594, %v1592
  %v2065 = vpack.c.b16 %v1595, %v1593
  %v2066 = vpack.c.b16 %v1598, %v1596
  %v2067 = vpack.c.b16 %v1599, %v1597
  %v2068 = vpack.c.b16 %v1602, %v1600
  %v2069 = vpack.c.b16 %v1603, %v1601
  %v2070 = vpack.c.b16 %v1606, %v1604
  %v2071 = vpack.c.b16 %v1607, %v1605
  %v2072 = vpack.c.b16 %v1610, %v1608
  %v2073 = vpack.c.b16 %v1611, %v1609
  %v2074 = vpack.c.b16 %v1614, %v1612
  %v2075 = vpack.c.b16 %v1615, %v1613
  %v2076 = vpack.c.b16 %v1618, %v1616
  %v2077 = vpack.c.b16 %v1619, %v1617
  %v2078 = vpack.c.b16 %v1622, %v1620
  %v2079 = vpack.c.b16 %v1623, %v1621
  %v2080 = vpack.c.b16 %v1626, %v1624
  %v2081 = vpack.c.b16 %v1627, %v1625
  %v2082 = vpack.c.b16 %v1630, %v1628
  %v2083 = vpack.c.b16 %v1631, %v1629
  %v2084 = vpack.c.b16 %v1634, %v1632
  %v2085 = vpack.c.b16 %v1635, %v1633
  %v2086 = vpack.c.b16 %v1638, %v1636
  %v2087 = vpack.c.b16 %v1639, %v1637
  %v2088 = vpack.c.b16 %v1642, %v1640
  %v2089 = vpack.c.b16 %v1643, %v1641
  %v2090 = vpack.c.b16 %v1646, %v1644
  %v2091 = vpack.c.b16 %v1647, %v1645
  %v2092 = vpack.c.b16 %v1650, %v1648
  %v2093 = vpack.c.b16 %v1651, %v1649
  %v2094 = vpack.c.b16 %v1654, %v1652
  %v2095 = vpack.c.b16 %v1655, %v1653
  %v2096 = vpack.c.b16 %v1658, %v1656
  %v2097 = vpack.c.b16 %v1659, %v1657
  %v2098 = vpack.c.b16 %v1662, %v1660
  %v2099 = vpack.c.b16 %v1663, %v1661
  %v2100 = vpack.c.b16 %v1666, %v1664
  %v2101 = vpack.c.b16 %v1667, %v1665
  %v2102 = vpack.c.b16 %v1670, %v1668
  %v2103 = vpack.c.b16 %v1671, %v1669
  %v2104 = vpack.c.b16 %v1674, %v1672
  %v2105 = vpack.c.b16 %v1675, %v1673
  %v2106 = vpack.c.b16 %v1678, %v1676
  %v2107 = vpack.c.b16 %v1679, %v1677
  %v2108 = vpack.c.b16 %v1682, %v1680
  %v2109 = vpack.c.b16 %v1683, %v1681
  %v2110 = vpack.c.b16 %v1686, %v1684
  %v2111 = vpack.c.b16 %v1687, %v1685
  %v2112 = vpack.c.b16 %v1690, %v1688
  %v2113 = vpack.c.b16 %v1691, %v1689
  %v2114 = vpack.c.b16 %v1694, %v1692
  %v2115 = vpack.c.b16 %v1695, %v1693
  %v2116 = vpack.c.b16 %v1698, %v1696
  %v2117 = vpack.c.b16 %v1699, %v1697
  %v2118 = vpack.c.b16 %v1702, %v1700
  %v2119 = vpack.c.b16 %v1703, %v1701
  %v2120 = vpack.c.b16 %v1706, %v1704
  %v2121 = vpack.c.b16 %v1707, %v1705
  %v2122 = vpack.c.b16 %v1710, %v1708
  %v2123 = vpack.c.b16 %v1711, %v1709
  %v2124 = vpack.c.b16 %v1714, %v1712
  %v2125 = vpack.c.b16 %v1715, %v1713
  %v2126 = vpack.c.b16 %v1718, %v1716
  %v2127 = vpack.c.b16 %v1719, %v1717
  %v2128 = vpack.c.b16 %v1722, %v1720
  %v2129 = vpack.c.b16 %v1723, %v1721
  %v2130 = vpack.c.b16 %v1726, %v1724
  %v2131 = vpack.c.b16 %v1727, %v1725
  %v2132 = vpack.c.b16 %v1730, %v1728
  %v2133 = vpack.c.b16 %v1731, %v1729
  %v2134 = vpack.c.b16 %v1734, %v1732
  %v2135 = vpack.c.b16 %v1735, %v1733
  %v2136 = vpack.c.b16 %v1738, %v1736
  %v2137 = vpack.c.b16 %v1739, %v1737
  %v2138 = vpack.c.b16 %v1742, %v1740
  %v2139 = vpack.c.b16 %v1743, %v1741
  %v2140 = vpack.c.b16 %v1746, %v1744
  %v2141 = vpack.c.b16 %v1747, %v1745
  %v2142 = vpack.c.b16 %v1750, %v1748
  %v2143 = vpack.c.b16 %v1751, %v1749
  %vm2536 = vcmask 523264
  %v2538 = vsel %vm2536, %v551, 0
  %2540 = vmatpush.bf16.msra.mxu0 %v1766
  %2541 = vmatpush.bf16.msra.mxu0 %v1764
  %2542 = vmatpush.bf16.msra.mxu0 %v1762
  %2543 = vmatpush.bf16.msra.mxu0 %v1760
  %2544 = vmatpush.bf16.msra.mxu0 %v1758
  %2545 = vmatpush.bf16.msra.mxu0 %v1756
  %2546 = vmatpush.bf16.msra.mxu0 %v1754
  %2547 = vmatpush.bf16.msra.mxu0 %v1752
  %2548 = vmatmul.bf16.gmra.mxu0 %v527
  %v2549 = vpop.f32.mrf.mxu0
  %v2550 = vadd.f32 %v447, %v2549
  %v2551 = vpop.f32.mrf.mxu0
  %v2552 = vadd.f32 %v447, %v2551
  %2553 = vdwg.mxu0
  %2554 = vmatpush.bf16.msra.mxu0 %v1782
  %2555 = vmatpush.bf16.msra.mxu0 %v1780
  %2556 = vmatpush.bf16.msra.mxu0 %v1778
  %2557 = vmatpush.bf16.msra.mxu0 %v1776
  %2558 = vmatpush.bf16.msra.mxu0 %v1774
  %2559 = vmatpush.bf16.msra.mxu0 %v1772
  %2560 = vmatpush.bf16.msra.mxu0 %v1770
  %2561 = vmatpush.bf16.msra.mxu0 %v1768
  %2562 = vmatmul.bf16.gmra.mxu0 %v528
  %v2563 = vpop.f32.mrf.mxu0
  %v2564 = vadd.f32 %v2550, %v2563
  %v2565 = vpop.f32.mrf.mxu0
  %v2566 = vadd.f32 %v2552, %v2565
  %2567 = vdwg.mxu0
  %2568 = vmatpush.bf16.msra.mxu0 %v1798
  %2569 = vmatpush.bf16.msra.mxu0 %v1796
  %2570 = vmatpush.bf16.msra.mxu0 %v1794
  %2571 = vmatpush.bf16.msra.mxu0 %v1792
  %2572 = vmatpush.bf16.msra.mxu0 %v1790
  %2573 = vmatpush.bf16.msra.mxu0 %v1788
  %2574 = vmatpush.bf16.msra.mxu0 %v1786
  %2575 = vmatpush.bf16.msra.mxu0 %v1784
  %2576 = vmatmul.bf16.gmra.mxu0 %v529
  %v2577 = vpop.f32.mrf.mxu0
  %v2578 = vadd.f32 %v2564, %v2577
  %v2579 = vpop.f32.mrf.mxu0
  %v2580 = vadd.f32 %v2566, %v2579
  %2581 = vdwg.mxu0
  %2582 = vmatpush.bf16.msra.mxu0 %v1814
  %2583 = vmatpush.bf16.msra.mxu0 %v1812
  %2584 = vmatpush.bf16.msra.mxu0 %v1810
  %2585 = vmatpush.bf16.msra.mxu0 %v1808
  %2586 = vmatpush.bf16.msra.mxu0 %v1806
  %2587 = vmatpush.bf16.msra.mxu0 %v1804
  %2588 = vmatpush.bf16.msra.mxu0 %v1802
  %2589 = vmatpush.bf16.msra.mxu0 %v1800
  %2590 = vmatmul.bf16.gmra.mxu0 %v530
  %v2591 = vpop.f32.mrf.mxu0
  %v2592 = vadd.f32 %v2578, %v2591
  %v2593 = vpop.f32.mrf.mxu0
  %v2594 = vadd.f32 %v2580, %v2593
  %2595 = vdwg.mxu0
  %2596 = vmatpush.bf16.msra.mxu0 %v1830
  %2597 = vmatpush.bf16.msra.mxu0 %v1828
  %2598 = vmatpush.bf16.msra.mxu0 %v1826
  %2599 = vmatpush.bf16.msra.mxu0 %v1824
  %2600 = vmatpush.bf16.msra.mxu0 %v1822
  %2601 = vmatpush.bf16.msra.mxu0 %v1820
  %2602 = vmatpush.bf16.msra.mxu0 %v1818
  %2603 = vmatpush.bf16.msra.mxu0 %v1816
  %2604 = vmatmul.bf16.gmra.mxu0 %v531
  %v2605 = vpop.f32.mrf.mxu0
  %v2606 = vadd.f32 %v2592, %v2605
  %v2607 = vpop.f32.mrf.mxu0
  %v2608 = vadd.f32 %v2594, %v2607
  %2609 = vdwg.mxu0
  %2610 = vmatpush.bf16.msra.mxu0 %v1846
  %2611 = vmatpush.bf16.msra.mxu0 %v1844
  %2612 = vmatpush.bf16.msra.mxu0 %v1842
  %2613 = vmatpush.bf16.msra.mxu0 %v1840
  %2614 = vmatpush.bf16.msra.mxu0 %v1838
  %2615 = vmatpush.bf16.msra.mxu0 %v1836
  %2616 = vmatpush.bf16.msra.mxu0 %v1834
  %2617 = vmatpush.bf16.msra.mxu0 %v1832
  %2618 = vmatmul.bf16.gmra.mxu0 %v532
  %v2619 = vpop.f32.mrf.mxu0
  %v2620 = vadd.f32 %v2606, %v2619
  %v2621 = vpop.f32.mrf.mxu0
  %v2622 = vadd.f32 %v2608, %v2621
  %2623 = vdwg.mxu0
  %2624 = vmatpush.bf16.msra.mxu0 %v1862
  %2625 = vmatpush.bf16.msra.mxu0 %v1860
  %2626 = vmatpush.bf16.msra.mxu0 %v1858
  %2627 = vmatpush.bf16.msra.mxu0 %v1856
  %2628 = vmatpush.bf16.msra.mxu0 %v1854
  %2629 = vmatpush.bf16.msra.mxu0 %v1852
  %2630 = vmatpush.bf16.msra.mxu0 %v1850
  %2631 = vmatpush.bf16.msra.mxu0 %v1848
  %2632 = vmatmul.bf16.gmra.mxu0 %v533
  %v2633 = vpop.f32.mrf.mxu0
  %v2634 = vadd.f32 %v2620, %v2633
  %v2635 = vpop.f32.mrf.mxu0
  %v2636 = vadd.f32 %v2622, %v2635
  %2637 = vdwg.mxu0
  %2638 = vmatpush.bf16.msra.mxu0 %v1878
  %2639 = vmatpush.bf16.msra.mxu0 %v1876
  %2640 = vmatpush.bf16.msra.mxu0 %v1874
  %2641 = vmatpush.bf16.msra.mxu0 %v1872
  %2642 = vmatpush.bf16.msra.mxu0 %v1870
  %2643 = vmatpush.bf16.msra.mxu0 %v1868
  %2644 = vmatpush.bf16.msra.mxu0 %v1866
  %2645 = vmatpush.bf16.msra.mxu0 %v1864
  %2646 = vmatmul.bf16.gmra.mxu0 %v534
  %v2647 = vpop.f32.mrf.mxu0
  %v2648 = vadd.f32 %v2634, %v2647
  %v2649 = vpop.f32.mrf.mxu0
  %v2650 = vadd.f32 %v2636, %v2649
  %2651 = vdwg.mxu0
  %2652 = vmatpush.bf16.msra.mxu0 %v1894
  %2653 = vmatpush.bf16.msra.mxu0 %v1892
  %2654 = vmatpush.bf16.msra.mxu0 %v1890
  %2655 = vmatpush.bf16.msra.mxu0 %v1888
  %2656 = vmatpush.bf16.msra.mxu0 %v1886
  %2657 = vmatpush.bf16.msra.mxu0 %v1884
  %2658 = vmatpush.bf16.msra.mxu0 %v1882
  %2659 = vmatpush.bf16.msra.mxu0 %v1880
  %2660 = vmatmul.bf16.gmra.mxu0 %v535
  %v2661 = vpop.f32.mrf.mxu0
  %v2662 = vadd.f32 %v2648, %v2661
  %v2663 = vpop.f32.mrf.mxu0
  %v2664 = vadd.f32 %v2650, %v2663
  %2665 = vdwg.mxu0
  %2666 = vmatpush.bf16.msra.mxu0 %v1910
  %2667 = vmatpush.bf16.msra.mxu0 %v1908
  %2668 = vmatpush.bf16.msra.mxu0 %v1906
  %2669 = vmatpush.bf16.msra.mxu0 %v1904
  %2670 = vmatpush.bf16.msra.mxu0 %v1902
  %2671 = vmatpush.bf16.msra.mxu0 %v1900
  %2672 = vmatpush.bf16.msra.mxu0 %v1898
  %2673 = vmatpush.bf16.msra.mxu0 %v1896
  %2674 = vmatmul.bf16.gmra.mxu0 %v536
  %v2675 = vpop.f32.mrf.mxu0
  %v2676 = vadd.f32 %v2662, %v2675
  %v2677 = vpop.f32.mrf.mxu0
  %v2678 = vadd.f32 %v2664, %v2677
  %2679 = vdwg.mxu0
  %2680 = vmatpush.bf16.msra.mxu0 %v1926
  %2681 = vmatpush.bf16.msra.mxu0 %v1924
  %2682 = vmatpush.bf16.msra.mxu0 %v1922
  %2683 = vmatpush.bf16.msra.mxu0 %v1920
  %2684 = vmatpush.bf16.msra.mxu0 %v1918
  %2685 = vmatpush.bf16.msra.mxu0 %v1916
  %2686 = vmatpush.bf16.msra.mxu0 %v1914
  %2687 = vmatpush.bf16.msra.mxu0 %v1912
  %2688 = vmatmul.bf16.gmra.mxu0 %v537
  %v2689 = vpop.f32.mrf.mxu0
  %v2690 = vadd.f32 %v2676, %v2689
  %v2691 = vpop.f32.mrf.mxu0
  %v2692 = vadd.f32 %v2678, %v2691
  %2693 = vdwg.mxu0
  %2694 = vmatpush.bf16.msra.mxu0 %v1942
  %2695 = vmatpush.bf16.msra.mxu0 %v1940
  %2696 = vmatpush.bf16.msra.mxu0 %v1938
  %2697 = vmatpush.bf16.msra.mxu0 %v1936
  %2698 = vmatpush.bf16.msra.mxu0 %v1934
  %2699 = vmatpush.bf16.msra.mxu0 %v1932
  %2700 = vmatpush.bf16.msra.mxu0 %v1930
  %2701 = vmatpush.bf16.msra.mxu0 %v1928
  %2702 = vmatmul.bf16.gmra.mxu0 %v538
  %v2703 = vpop.f32.mrf.mxu0
  %v2704 = vadd.f32 %v2690, %v2703
  %v2705 = vpop.f32.mrf.mxu0
  %v2706 = vadd.f32 %v2692, %v2705
  %2707 = vdwg.mxu0
  %2708 = vmatpush.bf16.msra.mxu0 %v1958
  %2709 = vmatpush.bf16.msra.mxu0 %v1956
  %2710 = vmatpush.bf16.msra.mxu0 %v1954
  %2711 = vmatpush.bf16.msra.mxu0 %v1952
  %2712 = vmatpush.bf16.msra.mxu0 %v1950
  %2713 = vmatpush.bf16.msra.mxu0 %v1948
  %2714 = vmatpush.bf16.msra.mxu0 %v1946
  %2715 = vmatpush.bf16.msra.mxu0 %v1944
  %2716 = vmatmul.bf16.gmra.mxu0 %v539
  %v2717 = vpop.f32.mrf.mxu0
  %v2718 = vadd.f32 %v2704, %v2717
  %v2719 = vpop.f32.mrf.mxu0
  %v2720 = vadd.f32 %v2706, %v2719
  %2721 = vdwg.mxu0
  %2722 = vmatpush.bf16.msra.mxu0 %v1974
  %2723 = vmatpush.bf16.msra.mxu0 %v1972
  %2724 = vmatpush.bf16.msra.mxu0 %v1970
  %2725 = vmatpush.bf16.msra.mxu0 %v1968
  %2726 = vmatpush.bf16.msra.mxu0 %v1966
  %2727 = vmatpush.bf16.msra.mxu0 %v1964
  %2728 = vmatpush.bf16.msra.mxu0 %v1962
  %2729 = vmatpush.bf16.msra.mxu0 %v1960
  %2730 = vmatmul.bf16.gmra.mxu0 %v540
  %v2731 = vpop.f32.mrf.mxu0
  %v2732 = vadd.f32 %v2718, %v2731
  %v2733 = vpop.f32.mrf.mxu0
  %v2734 = vadd.f32 %v2720, %v2733
  %2735 = vdwg.mxu0
  %2736 = vmatpush.bf16.msra.mxu0 %v1990
  %2737 = vmatpush.bf16.msra.mxu0 %v1988
  %2738 = vmatpush.bf16.msra.mxu0 %v1986
  %2739 = vmatpush.bf16.msra.mxu0 %v1984
  %2740 = vmatpush.bf16.msra.mxu0 %v1982
  %2741 = vmatpush.bf16.msra.mxu0 %v1980
  %2742 = vmatpush.bf16.msra.mxu0 %v1978
  %2743 = vmatpush.bf16.msra.mxu0 %v1976
  %2744 = vmatmul.bf16.gmra.mxu0 %v541
  %v2745 = vpop.f32.mrf.mxu0
  %v2746 = vadd.f32 %v2732, %v2745
  %v2747 = vpop.f32.mrf.mxu0
  %v2748 = vadd.f32 %v2734, %v2747
  %2749 = vdwg.mxu0
  %2750 = vmatpush.bf16.msra.mxu0 %v2006
  %2751 = vmatpush.bf16.msra.mxu0 %v2004
  %2752 = vmatpush.bf16.msra.mxu0 %v2002
  %2753 = vmatpush.bf16.msra.mxu0 %v2000
  %2754 = vmatpush.bf16.msra.mxu0 %v1998
  %2755 = vmatpush.bf16.msra.mxu0 %v1996
  %2756 = vmatpush.bf16.msra.mxu0 %v1994
  %2757 = vmatpush.bf16.msra.mxu0 %v1992
  %2758 = vmatmul.bf16.gmra.mxu0 %v542
  %v2759 = vpop.f32.mrf.mxu0
  %v2760 = vadd.f32 %v2746, %v2759
  %v2761 = vpop.f32.mrf.mxu0
  %v2762 = vadd.f32 %v2748, %v2761
  %2763 = vdwg.mxu0
  %2764 = vmatpush.bf16.msra.mxu0 %v2022
  %2765 = vmatpush.bf16.msra.mxu0 %v2020
  %2766 = vmatpush.bf16.msra.mxu0 %v2018
  %2767 = vmatpush.bf16.msra.mxu0 %v2016
  %2768 = vmatpush.bf16.msra.mxu0 %v2014
  %2769 = vmatpush.bf16.msra.mxu0 %v2012
  %2770 = vmatpush.bf16.msra.mxu0 %v2010
  %2771 = vmatpush.bf16.msra.mxu0 %v2008
  %2772 = vmatmul.bf16.gmra.mxu0 %v543
  %v2773 = vpop.f32.mrf.mxu0
  %v2774 = vadd.f32 %v2760, %v2773
  %v2775 = vpop.f32.mrf.mxu0
  %v2776 = vadd.f32 %v2762, %v2775
  %2777 = vdwg.mxu0
  %2778 = vmatpush.bf16.msra.mxu0 %v2038
  %2779 = vmatpush.bf16.msra.mxu0 %v2036
  %2780 = vmatpush.bf16.msra.mxu0 %v2034
  %2781 = vmatpush.bf16.msra.mxu0 %v2032
  %2782 = vmatpush.bf16.msra.mxu0 %v2030
  %2783 = vmatpush.bf16.msra.mxu0 %v2028
  %2784 = vmatpush.bf16.msra.mxu0 %v2026
  %2785 = vmatpush.bf16.msra.mxu0 %v2024
  %2786 = vmatmul.bf16.gmra.mxu0 %v544
  %v2787 = vpop.f32.mrf.mxu0
  %v2788 = vadd.f32 %v2774, %v2787
  %v2789 = vpop.f32.mrf.mxu0
  %v2790 = vadd.f32 %v2776, %v2789
  %2791 = vdwg.mxu0
  %2792 = vmatpush.bf16.msra.mxu0 %v2054
  %2793 = vmatpush.bf16.msra.mxu0 %v2052
  %2794 = vmatpush.bf16.msra.mxu0 %v2050
  %2795 = vmatpush.bf16.msra.mxu0 %v2048
  %2796 = vmatpush.bf16.msra.mxu0 %v2046
  %2797 = vmatpush.bf16.msra.mxu0 %v2044
  %2798 = vmatpush.bf16.msra.mxu0 %v2042
  %2799 = vmatpush.bf16.msra.mxu0 %v2040
  %2800 = vmatmul.bf16.gmra.mxu0 %v545
  %v2801 = vpop.f32.mrf.mxu0
  %v2802 = vadd.f32 %v2788, %v2801
  %v2803 = vpop.f32.mrf.mxu0
  %v2804 = vadd.f32 %v2790, %v2803
  %2805 = vdwg.mxu0
  %2806 = vmatpush.bf16.msra.mxu0 %v2070
  %2807 = vmatpush.bf16.msra.mxu0 %v2068
  %2808 = vmatpush.bf16.msra.mxu0 %v2066
  %2809 = vmatpush.bf16.msra.mxu0 %v2064
  %2810 = vmatpush.bf16.msra.mxu0 %v2062
  %2811 = vmatpush.bf16.msra.mxu0 %v2060
  %2812 = vmatpush.bf16.msra.mxu0 %v2058
  %2813 = vmatpush.bf16.msra.mxu0 %v2056
  %2814 = vmatmul.bf16.gmra.mxu0 %v546
  %v2815 = vpop.f32.mrf.mxu0
  %v2816 = vadd.f32 %v2802, %v2815
  %v2817 = vpop.f32.mrf.mxu0
  %v2818 = vadd.f32 %v2804, %v2817
  %2819 = vdwg.mxu0
  %2820 = vmatpush.bf16.msra.mxu0 %v2086
  %2821 = vmatpush.bf16.msra.mxu0 %v2084
  %2822 = vmatpush.bf16.msra.mxu0 %v2082
  %2823 = vmatpush.bf16.msra.mxu0 %v2080
  %2824 = vmatpush.bf16.msra.mxu0 %v2078
  %2825 = vmatpush.bf16.msra.mxu0 %v2076
  %2826 = vmatpush.bf16.msra.mxu0 %v2074
  %2827 = vmatpush.bf16.msra.mxu0 %v2072
  %2828 = vmatmul.bf16.gmra.mxu0 %v547
  %v2829 = vpop.f32.mrf.mxu0
  %v2830 = vadd.f32 %v2816, %v2829
  %v2831 = vpop.f32.mrf.mxu0
  %v2832 = vadd.f32 %v2818, %v2831
  %2833 = vdwg.mxu0
  %2834 = vmatpush.bf16.msra.mxu0 %v2102
  %2835 = vmatpush.bf16.msra.mxu0 %v2100
  %2836 = vmatpush.bf16.msra.mxu0 %v2098
  %2837 = vmatpush.bf16.msra.mxu0 %v2096
  %2838 = vmatpush.bf16.msra.mxu0 %v2094
  %2839 = vmatpush.bf16.msra.mxu0 %v2092
  %2840 = vmatpush.bf16.msra.mxu0 %v2090
  %2841 = vmatpush.bf16.msra.mxu0 %v2088
  %2842 = vmatmul.bf16.gmra.mxu0 %v548
  %v2843 = vpop.f32.mrf.mxu0
  %v2844 = vadd.f32 %v2830, %v2843
  %v2845 = vpop.f32.mrf.mxu0
  %v2846 = vadd.f32 %v2832, %v2845
  %2847 = vdwg.mxu0
  %2848 = vmatpush.bf16.msra.mxu0 %v2118
  %2849 = vmatpush.bf16.msra.mxu0 %v2116
  %2850 = vmatpush.bf16.msra.mxu0 %v2114
  %2851 = vmatpush.bf16.msra.mxu0 %v2112
  %2852 = vmatpush.bf16.msra.mxu0 %v2110
  %2853 = vmatpush.bf16.msra.mxu0 %v2108
  %2854 = vmatpush.bf16.msra.mxu0 %v2106
  %2855 = vmatpush.bf16.msra.mxu0 %v2104
  %2856 = vmatmul.bf16.gmra.mxu0 %v549
  %v2857 = vpop.f32.mrf.mxu0
  %v2858 = vadd.f32 %v2844, %v2857
  %v2859 = vpop.f32.mrf.mxu0
  %v2860 = vadd.f32 %v2846, %v2859
  %2861 = vdwg.mxu0
  %2862 = vmatpush.bf16.msra.mxu0 %v2134
  %2863 = vmatpush.bf16.msra.mxu0 %v2132
  %2864 = vmatpush.bf16.msra.mxu0 %v2130
  %2865 = vmatpush.bf16.msra.mxu0 %v2128
  %2866 = vmatpush.bf16.msra.mxu0 %v2126
  %2867 = vmatpush.bf16.msra.mxu0 %v2124
  %2868 = vmatpush.bf16.msra.mxu0 %v2122
  %2869 = vmatpush.bf16.msra.mxu0 %v2120
  %2870 = vmatmul.bf16.gmra.mxu0 %v550
  %v2871 = vpop.f32.mrf.mxu0
  %v2872 = vadd.f32 %v2858, %v2871
  %v2873 = vpop.f32.mrf.mxu0
  %v2874 = vadd.f32 %v2860, %v2873
  %2875 = vdwg.mxu0
  %2876 = vmatpush.bf16.msra.mxu0 0
  %2877 = vmatpush.bf16.msra.mxu0 0
  %2878 = vmatpush.bf16.msra.mxu0 0
  %2879 = vmatpush.bf16.msra.mxu0 0
  %2880 = vmatpush.bf16.msra.mxu0 %v2142
  %2881 = vmatpush.bf16.msra.mxu0 %v2140
  %2882 = vmatpush.bf16.msra.mxu0 %v2138
  %2883 = vmatpush.bf16.msra.mxu0 %v2136
  %2884 = vmatmul.bf16.gmra.mxu0 %v2538
  %v2885 = vpop.f32.mrf.mxu0
  %v2886 = vadd.f32 %v2872, %v2885
  %v2887 = vpop.f32.mrf.mxu0
  %v2888 = vadd.f32 %v2874, %v2887
  %2889 = vdwg.mxu0
  %2890 = vmatpush.bf16.msra.mxu0 %v1767
  %2891 = vmatpush.bf16.msra.mxu0 %v1765
  %2892 = vmatpush.bf16.msra.mxu0 %v1763
  %2893 = vmatpush.bf16.msra.mxu0 %v1761
  %2894 = vmatpush.bf16.msra.mxu0 %v1759
  %2895 = vmatpush.bf16.msra.mxu0 %v1757
  %2896 = vmatpush.bf16.msra.mxu0 %v1755
  %2897 = vmatpush.bf16.msra.mxu0 %v1753
  %2898 = vmatmul.bf16.gmra.mxu0 %v527
  %v2899 = vpop.f32.mrf.mxu0
  %v2900 = vadd.f32 %v448, %v2899
  %v2901 = vpop.f32.mrf.mxu0
  %v2902 = vadd.f32 %v448, %v2901
  %2903 = vdwg.mxu0
  %2904 = vmatpush.bf16.msra.mxu0 %v1783
  %2905 = vmatpush.bf16.msra.mxu0 %v1781
  %2906 = vmatpush.bf16.msra.mxu0 %v1779
  %2907 = vmatpush.bf16.msra.mxu0 %v1777
  %2908 = vmatpush.bf16.msra.mxu0 %v1775
  %2909 = vmatpush.bf16.msra.mxu0 %v1773
  %2910 = vmatpush.bf16.msra.mxu0 %v1771
  %2911 = vmatpush.bf16.msra.mxu0 %v1769
  %2912 = vmatmul.bf16.gmra.mxu0 %v528
  %v2913 = vpop.f32.mrf.mxu0
  %v2914 = vadd.f32 %v2900, %v2913
  %v2915 = vpop.f32.mrf.mxu0
  %v2916 = vadd.f32 %v2902, %v2915
  %2917 = vdwg.mxu0
  %2918 = vmatpush.bf16.msra.mxu0 %v1799
  %2919 = vmatpush.bf16.msra.mxu0 %v1797
  %2920 = vmatpush.bf16.msra.mxu0 %v1795
  %2921 = vmatpush.bf16.msra.mxu0 %v1793
  %2922 = vmatpush.bf16.msra.mxu0 %v1791
  %2923 = vmatpush.bf16.msra.mxu0 %v1789
  %2924 = vmatpush.bf16.msra.mxu0 %v1787
  %2925 = vmatpush.bf16.msra.mxu0 %v1785
  %2926 = vmatmul.bf16.gmra.mxu0 %v529
  %v2927 = vpop.f32.mrf.mxu0
  %v2928 = vadd.f32 %v2914, %v2927
  %v2929 = vpop.f32.mrf.mxu0
  %v2930 = vadd.f32 %v2916, %v2929
  %2931 = vdwg.mxu0
  %2932 = vmatpush.bf16.msra.mxu0 %v1815
  %2933 = vmatpush.bf16.msra.mxu0 %v1813
  %2934 = vmatpush.bf16.msra.mxu0 %v1811
  %2935 = vmatpush.bf16.msra.mxu0 %v1809
  %2936 = vmatpush.bf16.msra.mxu0 %v1807
  %2937 = vmatpush.bf16.msra.mxu0 %v1805
  %2938 = vmatpush.bf16.msra.mxu0 %v1803
  %2939 = vmatpush.bf16.msra.mxu0 %v1801
  %2940 = vmatmul.bf16.gmra.mxu0 %v530
  %v2941 = vpop.f32.mrf.mxu0
  %v2942 = vadd.f32 %v2928, %v2941
  %v2943 = vpop.f32.mrf.mxu0
  %v2944 = vadd.f32 %v2930, %v2943
  %2945 = vdwg.mxu0
  %2946 = vmatpush.bf16.msra.mxu0 %v1831
  %2947 = vmatpush.bf16.msra.mxu0 %v1829
  %2948 = vmatpush.bf16.msra.mxu0 %v1827
  %2949 = vmatpush.bf16.msra.mxu0 %v1825
  %2950 = vmatpush.bf16.msra.mxu0 %v1823
  %2951 = vmatpush.bf16.msra.mxu0 %v1821
  %2952 = vmatpush.bf16.msra.mxu0 %v1819
  %2953 = vmatpush.bf16.msra.mxu0 %v1817
  %2954 = vmatmul.bf16.gmra.mxu0 %v531
  %v2955 = vpop.f32.mrf.mxu0
  %v2956 = vadd.f32 %v2942, %v2955
  %v2957 = vpop.f32.mrf.mxu0
  %v2958 = vadd.f32 %v2944, %v2957
  %2959 = vdwg.mxu0
  %2960 = vmatpush.bf16.msra.mxu0 %v1847
  %2961 = vmatpush.bf16.msra.mxu0 %v1845
  %2962 = vmatpush.bf16.msra.mxu0 %v1843
  %2963 = vmatpush.bf16.msra.mxu0 %v1841
  %2964 = vmatpush.bf16.msra.mxu0 %v1839
  %2965 = vmatpush.bf16.msra.mxu0 %v1837
  %2966 = vmatpush.bf16.msra.mxu0 %v1835
  %2967 = vmatpush.bf16.msra.mxu0 %v1833
  %2968 = vmatmul.bf16.gmra.mxu0 %v532
  %v2969 = vpop.f32.mrf.mxu0
  %v2970 = vadd.f32 %v2956, %v2969
  %v2971 = vpop.f32.mrf.mxu0
  %v2972 = vadd.f32 %v2958, %v2971
  %2973 = vdwg.mxu0
  %2974 = vmatpush.bf16.msra.mxu0 %v1863
  %2975 = vmatpush.bf16.msra.mxu0 %v1861
  %2976 = vmatpush.bf16.msra.mxu0 %v1859
  %2977 = vmatpush.bf16.msra.mxu0 %v1857
  %2978 = vmatpush.bf16.msra.mxu0 %v1855
  %2979 = vmatpush.bf16.msra.mxu0 %v1853
  %2980 = vmatpush.bf16.msra.mxu0 %v1851
  %2981 = vmatpush.bf16.msra.mxu0 %v1849
  %2982 = vmatmul.bf16.gmra.mxu0 %v533
  %v2983 = vpop.f32.mrf.mxu0
  %v2984 = vadd.f32 %v2970, %v2983
  %v2985 = vpop.f32.mrf.mxu0
  %v2986 = vadd.f32 %v2972, %v2985
  %2987 = vdwg.mxu0
  %2988 = vmatpush.bf16.msra.mxu0 %v1879
  %2989 = vmatpush.bf16.msra.mxu0 %v1877
  %2990 = vmatpush.bf16.msra.mxu0 %v1875
  %2991 = vmatpush.bf16.msra.mxu0 %v1873
  %2992 = vmatpush.bf16.msra.mxu0 %v1871
  %2993 = vmatpush.bf16.msra.mxu0 %v1869
  %2994 = vmatpush.bf16.msra.mxu0 %v1867
  %2995 = vmatpush.bf16.msra.mxu0 %v1865
  %2996 = vmatmul.bf16.gmra.mxu0 %v534
  %v2997 = vpop.f32.mrf.mxu0
  %v2998 = vadd.f32 %v2984, %v2997
  %v2999 = vpop.f32.mrf.mxu0
  %v3000 = vadd.f32 %v2986, %v2999
  %3001 = vdwg.mxu0
  %3002 = vmatpush.bf16.msra.mxu0 %v1895
  %3003 = vmatpush.bf16.msra.mxu0 %v1893
  %3004 = vmatpush.bf16.msra.mxu0 %v1891
  %3005 = vmatpush.bf16.msra.mxu0 %v1889
  %3006 = vmatpush.bf16.msra.mxu0 %v1887
  %3007 = vmatpush.bf16.msra.mxu0 %v1885
  %3008 = vmatpush.bf16.msra.mxu0 %v1883
  %3009 = vmatpush.bf16.msra.mxu0 %v1881
  %3010 = vmatmul.bf16.gmra.mxu0 %v535
  %v3011 = vpop.f32.mrf.mxu0
  %v3012 = vadd.f32 %v2998, %v3011
  %v3013 = vpop.f32.mrf.mxu0
  %v3014 = vadd.f32 %v3000, %v3013
  %3015 = vdwg.mxu0
  %3016 = vmatpush.bf16.msra.mxu0 %v1911
  %3017 = vmatpush.bf16.msra.mxu0 %v1909
  %3018 = vmatpush.bf16.msra.mxu0 %v1907
  %3019 = vmatpush.bf16.msra.mxu0 %v1905
  %3020 = vmatpush.bf16.msra.mxu0 %v1903
  %3021 = vmatpush.bf16.msra.mxu0 %v1901
  %3022 = vmatpush.bf16.msra.mxu0 %v1899
  %3023 = vmatpush.bf16.msra.mxu0 %v1897
  %3024 = vmatmul.bf16.gmra.mxu0 %v536
  %v3025 = vpop.f32.mrf.mxu0
  %v3026 = vadd.f32 %v3012, %v3025
  %v3027 = vpop.f32.mrf.mxu0
  %v3028 = vadd.f32 %v3014, %v3027
  %3029 = vdwg.mxu0
  %3030 = vmatpush.bf16.msra.mxu0 %v1927
  %3031 = vmatpush.bf16.msra.mxu0 %v1925
  %3032 = vmatpush.bf16.msra.mxu0 %v1923
  %3033 = vmatpush.bf16.msra.mxu0 %v1921
  %3034 = vmatpush.bf16.msra.mxu0 %v1919
  %3035 = vmatpush.bf16.msra.mxu0 %v1917
  %3036 = vmatpush.bf16.msra.mxu0 %v1915
  %3037 = vmatpush.bf16.msra.mxu0 %v1913
  %3038 = vmatmul.bf16.gmra.mxu0 %v537
  %v3039 = vpop.f32.mrf.mxu0
  %v3040 = vadd.f32 %v3026, %v3039
  %v3041 = vpop.f32.mrf.mxu0
  %v3042 = vadd.f32 %v3028, %v3041
  %3043 = vdwg.mxu0
  %3044 = vmatpush.bf16.msra.mxu0 %v1943
  %3045 = vmatpush.bf16.msra.mxu0 %v1941
  %3046 = vmatpush.bf16.msra.mxu0 %v1939
  %3047 = vmatpush.bf16.msra.mxu0 %v1937
  %3048 = vmatpush.bf16.msra.mxu0 %v1935
  %3049 = vmatpush.bf16.msra.mxu0 %v1933
  %3050 = vmatpush.bf16.msra.mxu0 %v1931
  %3051 = vmatpush.bf16.msra.mxu0 %v1929
  %3052 = vmatmul.bf16.gmra.mxu0 %v538
  %v3053 = vpop.f32.mrf.mxu0
  %v3054 = vadd.f32 %v3040, %v3053
  %v3055 = vpop.f32.mrf.mxu0
  %v3056 = vadd.f32 %v3042, %v3055
  %3057 = vdwg.mxu0
  %3058 = vmatpush.bf16.msra.mxu0 %v1959
  %3059 = vmatpush.bf16.msra.mxu0 %v1957
  %3060 = vmatpush.bf16.msra.mxu0 %v1955
  %3061 = vmatpush.bf16.msra.mxu0 %v1953
  %3062 = vmatpush.bf16.msra.mxu0 %v1951
  %3063 = vmatpush.bf16.msra.mxu0 %v1949
  %3064 = vmatpush.bf16.msra.mxu0 %v1947
  %3065 = vmatpush.bf16.msra.mxu0 %v1945
  %3066 = vmatmul.bf16.gmra.mxu0 %v539
  %v3067 = vpop.f32.mrf.mxu0
  %v3068 = vadd.f32 %v3054, %v3067
  %v3069 = vpop.f32.mrf.mxu0
  %v3070 = vadd.f32 %v3056, %v3069
  %3071 = vdwg.mxu0
  %3072 = vmatpush.bf16.msra.mxu0 %v1975
  %3073 = vmatpush.bf16.msra.mxu0 %v1973
  %3074 = vmatpush.bf16.msra.mxu0 %v1971
  %3075 = vmatpush.bf16.msra.mxu0 %v1969
  %3076 = vmatpush.bf16.msra.mxu0 %v1967
  %3077 = vmatpush.bf16.msra.mxu0 %v1965
  %3078 = vmatpush.bf16.msra.mxu0 %v1963
  %3079 = vmatpush.bf16.msra.mxu0 %v1961
  %3080 = vmatmul.bf16.gmra.mxu0 %v540
  %v3081 = vpop.f32.mrf.mxu0
  %v3082 = vadd.f32 %v3068, %v3081
  %v3083 = vpop.f32.mrf.mxu0
  %v3084 = vadd.f32 %v3070, %v3083
  %3085 = vdwg.mxu0
  %3086 = vmatpush.bf16.msra.mxu0 %v1991
  %3087 = vmatpush.bf16.msra.mxu0 %v1989
  %3088 = vmatpush.bf16.msra.mxu0 %v1987
  %3089 = vmatpush.bf16.msra.mxu0 %v1985
  %3090 = vmatpush.bf16.msra.mxu0 %v1983
  %3091 = vmatpush.bf16.msra.mxu0 %v1981
  %3092 = vmatpush.bf16.msra.mxu0 %v1979
  %3093 = vmatpush.bf16.msra.mxu0 %v1977
  %3094 = vmatmul.bf16.gmra.mxu0 %v541
  %v3095 = vpop.f32.mrf.mxu0
  %v3096 = vadd.f32 %v3082, %v3095
  %v3097 = vpop.f32.mrf.mxu0
  %v3098 = vadd.f32 %v3084, %v3097
  %3099 = vdwg.mxu0
  %3100 = vmatpush.bf16.msra.mxu0 %v2007
  %3101 = vmatpush.bf16.msra.mxu0 %v2005
  %3102 = vmatpush.bf16.msra.mxu0 %v2003
  %3103 = vmatpush.bf16.msra.mxu0 %v2001
  %3104 = vmatpush.bf16.msra.mxu0 %v1999
  %3105 = vmatpush.bf16.msra.mxu0 %v1997
  %3106 = vmatpush.bf16.msra.mxu0 %v1995
  %3107 = vmatpush.bf16.msra.mxu0 %v1993
  %3108 = vmatmul.bf16.gmra.mxu0 %v542
  %v3109 = vpop.f32.mrf.mxu0
  %v3110 = vadd.f32 %v3096, %v3109
  %v3111 = vpop.f32.mrf.mxu0
  %v3112 = vadd.f32 %v3098, %v3111
  %3113 = vdwg.mxu0
  %3114 = vmatpush.bf16.msra.mxu0 %v2023
  %3115 = vmatpush.bf16.msra.mxu0 %v2021
  %3116 = vmatpush.bf16.msra.mxu0 %v2019
  %3117 = vmatpush.bf16.msra.mxu0 %v2017
  %3118 = vmatpush.bf16.msra.mxu0 %v2015
  %3119 = vmatpush.bf16.msra.mxu0 %v2013
  %3120 = vmatpush.bf16.msra.mxu0 %v2011
  %3121 = vmatpush.bf16.msra.mxu0 %v2009
  %3122 = vmatmul.bf16.gmra.mxu0 %v543
  %v3123 = vpop.f32.mrf.mxu0
  %v3124 = vadd.f32 %v3110, %v3123
  %v3125 = vpop.f32.mrf.mxu0
  %v3126 = vadd.f32 %v3112, %v3125
  %3127 = vdwg.mxu0
  %3128 = vmatpush.bf16.msra.mxu0 %v2039
  %3129 = vmatpush.bf16.msra.mxu0 %v2037
  %3130 = vmatpush.bf16.msra.mxu0 %v2035
  %3131 = vmatpush.bf16.msra.mxu0 %v2033
  %3132 = vmatpush.bf16.msra.mxu0 %v2031
  %3133 = vmatpush.bf16.msra.mxu0 %v2029
  %3134 = vmatpush.bf16.msra.mxu0 %v2027
  %3135 = vmatpush.bf16.msra.mxu0 %v2025
  %3136 = vmatmul.bf16.gmra.mxu0 %v544
  %v3137 = vpop.f32.mrf.mxu0
  %v3138 = vadd.f32 %v3124, %v3137
  %v3139 = vpop.f32.mrf.mxu0
  %v3140 = vadd.f32 %v3126, %v3139
  %3141 = vdwg.mxu0
  %3142 = vmatpush.bf16.msra.mxu0 %v2055
  %3143 = vmatpush.bf16.msra.mxu0 %v2053
  %3144 = vmatpush.bf16.msra.mxu0 %v2051
  %3145 = vmatpush.bf16.msra.mxu0 %v2049
  %3146 = vmatpush.bf16.msra.mxu0 %v2047
  %3147 = vmatpush.bf16.msra.mxu0 %v2045
  %3148 = vmatpush.bf16.msra.mxu0 %v2043
  %3149 = vmatpush.bf16.msra.mxu0 %v2041
  %3150 = vmatmul.bf16.gmra.mxu0 %v545
  %v3151 = vpop.f32.mrf.mxu0
  %v3152 = vadd.f32 %v3138, %v3151
  %v3153 = vpop.f32.mrf.mxu0
  %v3154 = vadd.f32 %v3140, %v3153
  %3155 = vdwg.mxu0
  %3156 = vmatpush.bf16.msra.mxu0 %v2071
  %3157 = vmatpush.bf16.msra.mxu0 %v2069
  %3158 = vmatpush.bf16.msra.mxu0 %v2067
  %3159 = vmatpush.bf16.msra.mxu0 %v2065
  %3160 = vmatpush.bf16.msra.mxu0 %v2063
  %3161 = vmatpush.bf16.msra.mxu0 %v2061
  %3162 = vmatpush.bf16.msra.mxu0 %v2059
  %3163 = vmatpush.bf16.msra.mxu0 %v2057
  %3164 = vmatmul.bf16.gmra.mxu0 %v546
  %v3165 = vpop.f32.mrf.mxu0
  %v3166 = vadd.f32 %v3152, %v3165
  %v3167 = vpop.f32.mrf.mxu0
  %v3168 = vadd.f32 %v3154, %v3167
  %3169 = vdwg.mxu0
  %3170 = vmatpush.bf16.msra.mxu0 %v2087
  %3171 = vmatpush.bf16.msra.mxu0 %v2085
  %3172 = vmatpush.bf16.msra.mxu0 %v2083
  %3173 = vmatpush.bf16.msra.mxu0 %v2081
  %3174 = vmatpush.bf16.msra.mxu0 %v2079
  %3175 = vmatpush.bf16.msra.mxu0 %v2077
  %3176 = vmatpush.bf16.msra.mxu0 %v2075
  %3177 = vmatpush.bf16.msra.mxu0 %v2073
  %3178 = vmatmul.bf16.gmra.mxu0 %v547
  %v3179 = vpop.f32.mrf.mxu0
  %v3180 = vadd.f32 %v3166, %v3179
  %v3181 = vpop.f32.mrf.mxu0
  %v3182 = vadd.f32 %v3168, %v3181
  %3183 = vdwg.mxu0
  %3184 = vmatpush.bf16.msra.mxu0 %v2103
  %3185 = vmatpush.bf16.msra.mxu0 %v2101
  %3186 = vmatpush.bf16.msra.mxu0 %v2099
  %3187 = vmatpush.bf16.msra.mxu0 %v2097
  %3188 = vmatpush.bf16.msra.mxu0 %v2095
  %3189 = vmatpush.bf16.msra.mxu0 %v2093
  %3190 = vmatpush.bf16.msra.mxu0 %v2091
  %3191 = vmatpush.bf16.msra.mxu0 %v2089
  %3192 = vmatmul.bf16.gmra.mxu0 %v548
  %v3193 = vpop.f32.mrf.mxu0
  %v3194 = vadd.f32 %v3180, %v3193
  %v3195 = vpop.f32.mrf.mxu0
  %v3196 = vadd.f32 %v3182, %v3195
  %3197 = vdwg.mxu0
  %3198 = vmatpush.bf16.msra.mxu0 %v2119
  %3199 = vmatpush.bf16.msra.mxu0 %v2117
  %3200 = vmatpush.bf16.msra.mxu0 %v2115
  %3201 = vmatpush.bf16.msra.mxu0 %v2113
  %3202 = vmatpush.bf16.msra.mxu0 %v2111
  %3203 = vmatpush.bf16.msra.mxu0 %v2109
  %3204 = vmatpush.bf16.msra.mxu0 %v2107
  %3205 = vmatpush.bf16.msra.mxu0 %v2105
  %3206 = vmatmul.bf16.gmra.mxu0 %v549
  %v3207 = vpop.f32.mrf.mxu0
  %v3208 = vadd.f32 %v3194, %v3207
  %v3209 = vpop.f32.mrf.mxu0
  %v3210 = vadd.f32 %v3196, %v3209
  %3211 = vdwg.mxu0
  %3212 = vmatpush.bf16.msra.mxu0 %v2135
  %3213 = vmatpush.bf16.msra.mxu0 %v2133
  %3214 = vmatpush.bf16.msra.mxu0 %v2131
  %3215 = vmatpush.bf16.msra.mxu0 %v2129
  %3216 = vmatpush.bf16.msra.mxu0 %v2127
  %3217 = vmatpush.bf16.msra.mxu0 %v2125
  %3218 = vmatpush.bf16.msra.mxu0 %v2123
  %3219 = vmatpush.bf16.msra.mxu0 %v2121
  %3220 = vmatmul.bf16.gmra.mxu0 %v550
  %v3221 = vpop.f32.mrf.mxu0
  %v3222 = vadd.f32 %v3208, %v3221
  %v3223 = vpop.f32.mrf.mxu0
  %v3224 = vadd.f32 %v3210, %v3223
  %3225 = vdwg.mxu0
  %3226 = vmatpush.bf16.msra.mxu0 0
  %3227 = vmatpush.bf16.msra.mxu0 0
  %3228 = vmatpush.bf16.msra.mxu0 0
  %3229 = vmatpush.bf16.msra.mxu0 0
  %3230 = vmatpush.bf16.msra.mxu0 %v2143
  %3231 = vmatpush.bf16.msra.mxu0 %v2141
  %3232 = vmatpush.bf16.msra.mxu0 %v2139
  %3233 = vmatpush.bf16.msra.mxu0 %v2137
  %3234 = vmatmul.bf16.gmra.mxu0 %v2538
  %v3235 = vpop.f32.mrf.mxu0
  %v3236 = vadd.f32 %v3222, %v3235
  %v3237 = vpop.f32.mrf.mxu0
  %v3238 = vadd.f32 %v3224, %v3237
  %3239 = vdwg.mxu0
  %v3240 = vmax.f32 %v2886, 0.0
  %v3241 = vmax.f32 %v3236, 0.0
  %v3242 = vmax.f32 %v2888, 0.0
  %v3243 = vmax.f32 %v3238, 0.0
  %v3244 = vpack.c.bf16 %v3242, %v3240
  %v3245 = vpack.c.bf16 %v3243, %v3241
  %v3246 = vld [vmem:[%s3] sm:$0xff]
  %v3247 = vld [vmem:[%s3 + $0x8] sm:$0xff]
  %v3248 = vld [vmem:[%s3 + $0x10] sm:$0xff]
  %v3249 = vld [vmem:[%s3 + $0x18] sm:$0xff]
  %v3250 = vld [vmem:[%s3 + $0x20] sm:$0xf]
  %v3251 = vld [vmem:[%s3 + $0x24] sm:$0xff]
  %v3252 = vld [vmem:[%s3 + $0x2c] sm:$0xff]
  %v3253 = vld [vmem:[%s3 + $0x34] sm:$0xff]
  %v3254 = vld [vmem:[%s3 + $0x3c] sm:$0xff]
  %v3255 = vld [vmem:[%s3 + $0x44] sm:$0xf]
  %v3256 = vld [vmem:[%s3 + $0x48] sm:$0xff]
  %v3257 = vld [vmem:[%s3 + $0x50] sm:$0xff]
  %v3258 = vld [vmem:[%s3 + $0x58] sm:$0xff]
  %v3259 = vld [vmem:[%s3 + $0x60] sm:$0xff]
  %v3260 = vld [vmem:[%s3 + $0x68] sm:$0xf]
  %v3261 = vld [vmem:[%s3 + $0x6c] sm:$0xff]
  %v3262 = vld [vmem:[%s3 + $0x74] sm:$0xff]
  %v3263 = vld [vmem:[%s3 + $0x7c] sm:$0xff]
  %v3264 = vld [vmem:[%s3 + $0x84] sm:$0xff]
  %v3265 = vld [vmem:[%s3 + $0x8c] sm:$0xf]
  %v3266 = vld [vmem:[%s3 + $0x90] sm:$0xff]
  %v3267 = vld [vmem:[%s3 + $0x98] sm:$0xff]
  %v3268 = vld [vmem:[%s3 + $0xa0] sm:$0xff]
  %v3269 = vld [vmem:[%s3 + $0xa8] sm:$0xff]
  %v3270 = vld [vmem:[%s3 + $0xb0] sm:$0xf]
  %v3271 = vld [vmem:[%s3 + $0xb4] sm:$0xff]
  %v3272 = vld [vmem:[%s3 + $0xbc] sm:$0xff]
  %v3273 = vld [vmem:[%s3 + $0xc4] sm:$0xff]
  %v3274 = vld [vmem:[%s3 + $0xcc] sm:$0xff]
  %v3275 = vld [vmem:[%s3 + $0xd4] sm:$0xf]
  %v3276 = vld [vmem:[%s3 + $0xd8] sm:$0xff]
  %v3277 = vld [vmem:[%s3 + $0xe0] sm:$0xff]
  %v3278 = vld [vmem:[%s3 + $0xe8] sm:$0xff]
  %v3279 = vld [vmem:[%s3 + $0xf0] sm:$0xff]
  %v3280 = vld [vmem:[%s3 + $0xf8] sm:$0xf]
  %v3281 = vld [vmem:[%s3 + $0xfc] sm:$0xff]
  %v3282 = vld [vmem:[%s3 + $0x104] sm:$0xff]
  %v3283 = vld [vmem:[%s3 + $0x10c] sm:$0xff]
  %v3284 = vld [vmem:[%s3 + $0x114] sm:$0xff]
  %v3285 = vld [vmem:[%s3 + $0x11c] sm:$0xf]
  %v3286 = vld [vmem:[%s3 + $0x120] sm:$0xff]
  %v3287 = vld [vmem:[%s3 + $0x128] sm:$0xff]
  %v3288 = vld [vmem:[%s3 + $0x130] sm:$0xff]
  %v3289 = vld [vmem:[%s3 + $0x138] sm:$0xff]
  %v3290 = vld [vmem:[%s3 + $0x140] sm:$0xf]
  %v3291 = vld [vmem:[%s3 + $0x144] sm:$0xff]
  %v3292 = vld [vmem:[%s3 + $0x14c] sm:$0xff]
  %v3293 = vld [vmem:[%s3 + $0x154] sm:$0xff]
  %v3294 = vld [vmem:[%s3 + $0x15c] sm:$0xff]
  %v3295 = vld [vmem:[%s3 + $0x164] sm:$0xf]
  %v3296 = vld [vmem:[%s3 + $0x168] sm:$0xff]
  %v3297 = vld [vmem:[%s3 + $0x170] sm:$0xff]
  %v3298 = vld [vmem:[%s3 + $0x178] sm:$0xff]
  %v3299 = vld [vmem:[%s3 + $0x180] sm:$0xff]
  %v3300 = vld [vmem:[%s3 + $0x188] sm:$0xf]
  %v3301 = vld [vmem:[%s3 + $0x18c] sm:$0xff]
  %v3302 = vld [vmem:[%s3 + $0x194] sm:$0xff]
  %v3303 = vld [vmem:[%s3 + $0x19c] sm:$0xff]
  %v3304 = vld [vmem:[%s3 + $0x1a4] sm:$0xff]
  %v3305 = vld [vmem:[%s3 + $0x1ac] sm:$0xf]
  %v3306 = vld [vmem:[%s3 + $0x1b0] sm:$0xff]
  %v3307 = vld [vmem:[%s3 + $0x1b8] sm:$0xff]
  %v3308 = vld [vmem:[%s3 + $0x1c0] sm:$0xff]
  %v3309 = vld [vmem:[%s3 + $0x1c8] sm:$0xff]
  %v3310 = vld [vmem:[%s3 + $0x1d0] sm:$0xf]
  %v3311 = vld [vmem:[%s3 + $0x1d4] sm:$0xff]
  %v3312 = vld [vmem:[%s3 + $0x1dc] sm:$0xff]
  %v3313 = vld [vmem:[%s3 + $0x1e4] sm:$0xff]
  %v3314 = vld [vmem:[%s3 + $0x1ec] sm:$0xff]
  %v3315 = vld [vmem:[%s3 + $0x1f4] sm:$0xf]
  %v3316 = vld [vmem:[%s3 + $0x1f8] sm:$0xff]
  %v3317 = vld [vmem:[%s3 + $0x200] sm:$0xff]
  %v3318 = vld [vmem:[%s3 + $0x208] sm:$0xff]
  %v3319 = vld [vmem:[%s3 + $0x210] sm:$0xff]
  %v3320 = vld [vmem:[%s3 + $0x218] sm:$0xf]
  %v3321 = vld [vmem:[%s3 + $0x21c] sm:$0xff]
  %v3322 = vld [vmem:[%s3 + $0x224] sm:$0xff]
  %v3323 = vld [vmem:[%s3 + $0x22c] sm:$0xff]
  %v3324 = vld [vmem:[%s3 + $0x234] sm:$0xff]
  %v3325 = vld [vmem:[%s3 + $0x23c] sm:$0xf]
  %v3326 = vld [vmem:[%s3 + $0x240] sm:$0xff]
  %v3327 = vld [vmem:[%s3 + $0x248] sm:$0xff]
  %v3328 = vld [vmem:[%s3 + $0x250] sm:$0xff]
  %v3329 = vld [vmem:[%s3 + $0x258] sm:$0xff]
  %v3330 = vld [vmem:[%s3 + $0x260] sm:$0xf]
  %v3331 = vld [vmem:[%s3 + $0x264] sm:$0xff]
  %v3332 = vld [vmem:[%s3 + $0x26c] sm:$0xff]
  %v3333 = vld [vmem:[%s3 + $0x274] sm:$0xff]
  %v3334 = vld [vmem:[%s3 + $0x27c] sm:$0xff]
  %v3335 = vld [vmem:[%s3 + $0x284] sm:$0xf]
  %v3336 = vld [vmem:[%s3 + $0x288] sm:$0xff]
  %v3337 = vld [vmem:[%s3 + $0x290] sm:$0xff]
  %v3338 = vld [vmem:[%s3 + $0x298] sm:$0xff]
  %v3339 = vld [vmem:[%s3 + $0x2a0] sm:$0xff]
  %v3340 = vld [vmem:[%s3 + $0x2a8] sm:$0xf]
  %v3341 = vld [vmem:[%s3 + $0x2ac] sm:$0xff]
  %v3342 = vld [vmem:[%s3 + $0x2b4] sm:$0xff]
  %v3343 = vld [vmem:[%s3 + $0x2bc] sm:$0xff]
  %v3344 = vld [vmem:[%s3 + $0x2c4] sm:$0xff]
  %v3345 = vld [vmem:[%s3 + $0x2cc] sm:$0xf]
  %v3346 = vld [vmem:[%s3 + $0x2d0] sm:$0xff]
  %v3347 = vld [vmem:[%s3 + $0x2d8] sm:$0xff]
  %v3348 = vld [vmem:[%s3 + $0x2e0] sm:$0xff]
  %v3349 = vld [vmem:[%s3 + $0x2e8] sm:$0xff]
  %v3350 = vld [vmem:[%s3 + $0x2f0] sm:$0xf]
  %v3351 = vld [vmem:[%s3 + $0x2f4] sm:$0xff]
  %v3352 = vld [vmem:[%s3 + $0x2fc] sm:$0xff]
  %v3353 = vld [vmem:[%s3 + $0x304] sm:$0xff]
  %v3354 = vld [vmem:[%s3 + $0x30c] sm:$0xff]
  %v3355 = vld [vmem:[%s3 + $0x314] sm:$0xf]
  %v3356 = vld [vmem:[%s3 + $0x318] sm:$0xff]
  %v3357 = vld [vmem:[%s3 + $0x320] sm:$0xff]
  %v3358 = vld [vmem:[%s3 + $0x328] sm:$0xff]
  %v3359 = vld [vmem:[%s3 + $0x330] sm:$0xff]
  %v3360 = vld [vmem:[%s3 + $0x338] sm:$0xf]
  %v3361 = vld [vmem:[%s3 + $0x33c] sm:$0xff]
  %v3362 = vld [vmem:[%s3 + $0x344] sm:$0xff]
  %v3363 = vld [vmem:[%s3 + $0x34c] sm:$0xff]
  %v3364 = vld [vmem:[%s3 + $0x354] sm:$0xff]
  %v3365 = vld [vmem:[%s3 + $0x35c] sm:$0xf]
  %v3366 = vld [vmem:[%s3 + $0x360] sm:$0xff]
  %v3367 = vld [vmem:[%s3 + $0x368] sm:$0xff]
  %v3368 = vld [vmem:[%s3 + $0x370] sm:$0xff]
  %v3369 = vld [vmem:[%s3 + $0x378] sm:$0xff]
  %v3370 = vld [vmem:[%s3 + $0x380] sm:$0xf]
  %v3371 = vld [vmem:[%s3 + $0x384] sm:$0xff]
  %v3372 = vld [vmem:[%s3 + $0x38c] sm:$0xff]
  %v3373 = vld [vmem:[%s3 + $0x394] sm:$0xff]
  %v3374 = vld [vmem:[%s3 + $0x39c] sm:$0xff]
  %v3375 = vld [vmem:[%s3 + $0x3a4] sm:$0xf]
  %v3376 = vld [vmem:[%s3 + $0x3a8] sm:$0xff]
  %v3377 = vld [vmem:[%s3 + $0x3b0] sm:$0xff]
  %v3378 = vld [vmem:[%s3 + $0x3b8] sm:$0xff]
  %v3379 = vld [vmem:[%s3 + $0x3c0] sm:$0xff]
  %v3380 = vld [vmem:[%s3 + $0x3c8] sm:$0xf]
  %v3381 = vld [vmem:[%s3 + $0x3cc] sm:$0xff]
  %v3382 = vld [vmem:[%s3 + $0x3d4] sm:$0xff]
  %v3383 = vld [vmem:[%s3 + $0x3dc] sm:$0xff]
  %v3384 = vld [vmem:[%s3 + $0x3e4] sm:$0xff]
  %v3385 = vld [vmem:[%s3 + $0x3ec] sm:$0xf]
  %v3386 = vld [vmem:[%s3 + $0x3f0] sm:$0xff]
  %v3387 = vld [vmem:[%s3 + $0x3f8] sm:$0xff]
  %v3388 = vld [vmem:[%s3 + $0x400] sm:$0xff]
  %v3389 = vld [vmem:[%s3 + $0x408] sm:$0xff]
  %v3390 = vld [vmem:[%s3 + $0x410] sm:$0xf]
  %v3391 = vld [vmem:[%s3 + $0x414] sm:$0xff]
  %v3392 = vld [vmem:[%s3 + $0x41c] sm:$0xff]
  %v3393 = vld [vmem:[%s3 + $0x424] sm:$0xff]
  %v3394 = vld [vmem:[%s3 + $0x42c] sm:$0xff]
  %v3395 = vld [vmem:[%s3 + $0x434] sm:$0xf]
  %v3396 = vld [vmem:[%s3 + $0x438] sm:$0xff]
  %v3397 = vld [vmem:[%s3 + $0x440] sm:$0xff]
  %v3398 = vld [vmem:[%s3 + $0x448] sm:$0xff]
  %v3399 = vld [vmem:[%s3 + $0x450] sm:$0xff]
  %v3400 = vld [vmem:[%s3 + $0x458] sm:$0xf]
  %v3401 = vld [vmem:[%s3 + $0x45c] sm:$0xff]
  %v3402 = vld [vmem:[%s3 + $0x464] sm:$0xff]
  %v3403 = vld [vmem:[%s3 + $0x46c] sm:$0xff]
  %v3404 = vld [vmem:[%s3 + $0x474] sm:$0xff]
  %v3405 = vld [vmem:[%s3 + $0x47c] sm:$0xf]
  %v3406 = vld [vmem:[%s4] sm:$0xff]
  %v3407 = vld [vmem:[%s4 + $0x8] sm:$0x1]
  %v3410 = vperm.slane %v3406, 0
  %v3411 = vperm.slane %v3406, 1
  %v3412 = vperm.slane %v3406, 2
  %v3413 = vperm.slane %v3406, 3
  %v3414 = vperm.slane %v3406, 4
  %v3415 = vperm.slane %v3406, 5
  %v3416 = vperm.slane %v3406, 6
  %v3417 = vperm.slane %v3406, 7
  %v3418 = vperm.slane %v3407, 0
  %v3588 = vunpack.c.l.b16 %v3246
  %v3589 = vunpack.c.h.b16 %v3246
  %v3590 = vunpack.c.l.b16 %v3247
  %v3591 = vunpack.c.h.b16 %v3247
  %v3592 = vunpack.c.l.b16 %v3248
  %v3593 = vunpack.c.h.b16 %v3248
  %v3594 = vunpack.c.l.b16 %v3249
  %v3595 = vunpack.c.h.b16 %v3249
  %v3596 = vunpack.c.l.b16 %v3250
  %v3597 = vunpack.c.l.b16 %v3251
  %v3598 = vunpack.c.h.b16 %v3251
  %v3599 = vunpack.c.l.b16 %v3252
  %v3600 = vunpack.c.h.b16 %v3252
  %v3601 = vunpack.c.l.b16 %v3253
  %v3602 = vunpack.c.h.b16 %v3253
  %v3603 = vunpack.c.l.b16 %v3254
  %v3604 = vunpack.c.h.b16 %v3254
  %v3605 = vunpack.c.l.b16 %v3255
  %v3606 = vunpack.c.l.b16 %v3256
  %v3607 = vunpack.c.h.b16 %v3256
  %v3608 = vunpack.c.l.b16 %v3257
  %v3609 = vunpack.c.h.b16 %v3257
  %v3610 = vunpack.c.l.b16 %v3258
  %v3611 = vunpack.c.h.b16 %v3258
  %v3612 = vunpack.c.l.b16 %v3259
  %v3613 = vunpack.c.h.b16 %v3259
  %v3614 = vunpack.c.l.b16 %v3260
  %v3615 = vunpack.c.l.b16 %v3261
  %v3616 = vunpack.c.h.b16 %v3261
  %v3617 = vunpack.c.l.b16 %v3262
  %v3618 = vunpack.c.h.b16 %v3262
  %v3619 = vunpack.c.l.b16 %v3263
  %v3620 = vunpack.c.h.b16 %v3263
  %v3621 = vunpack.c.l.b16 %v3264
  %v3622 = vunpack.c.h.b16 %v3264
  %v3623 = vunpack.c.l.b16 %v3265
  %v3624 = vunpack.c.l.b16 %v3266
  %v3625 = vunpack.c.h.b16 %v3266
  %v3626 = vunpack.c.l.b16 %v3267
  %v3627 = vunpack.c.h.b16 %v3267
  %v3628 = vunpack.c.l.b16 %v3268
  %v3629 = vunpack.c.h.b16 %v3268
  %v3630 = vunpack.c.l.b16 %v3269
  %v3631 = vunpack.c.h.b16 %v3269
  %v3632 = vunpack.c.l.b16 %v3270
  %v3633 = vunpack.c.l.b16 %v3271
  %v3634 = vunpack.c.h.b16 %v3271
  %v3635 = vunpack.c.l.b16 %v3272
  %v3636 = vunpack.c.h.b16 %v3272
  %v3637 = vunpack.c.l.b16 %v3273
  %v3638 = vunpack.c.h.b16 %v3273
  %v3639 = vunpack.c.l.b16 %v3274
  %v3640 = vunpack.c.h.b16 %v3274
  %v3641 = vunpack.c.l.b16 %v3275
  %v3642 = vunpack.c.l.b16 %v3276
  %v3643 = vunpack.c.h.b16 %v3276
  %v3644 = vunpack.c.l.b16 %v3277
  %v3645 = vunpack.c.h.b16 %v3277
  %v3646 = vunpack.c.l.b16 %v3278
  %v3647 = vunpack.c.h.b16 %v3278
  %v3648 = vunpack.c.l.b16 %v3279
  %v3649 = vunpack.c.h.b16 %v3279
  %v3650 = vunpack.c.l.b16 %v3280
  %v3651 = vunpack.c.l.b16 %v3281
  %v3652 = vunpack.c.h.b16 %v3281
  %v3653 = vunpack.c.l.b16 %v3282
  %v3654 = vunpack.c.h.b16 %v3282
  %v3655 = vunpack.c.l.b16 %v3283
  %v3656 = vunpack.c.h.b16 %v3283
  %v3657 = vunpack.c.l.b16 %v3284
  %v3658 = vunpack.c.h.b16 %v3284
  %v3659 = vunpack.c.l.b16 %v3285
  %v3660 = vunpack.c.l.b16 %v3286
  %v3661 = vunpack.c.h.b16 %v3286
  %v3662 = vunpack.c.l.b16 %v3287
  %v3663 = vunpack.c.h.b16 %v3287
  %v3664 = vunpack.c.l.b16 %v3288
  %v3665 = vunpack.c.h.b16 %v3288
  %v3666 = vunpack.c.l.b16 %v3289
  %v3667 = vunpack.c.h.b16 %v3289
  %v3668 = vunpack.c.l.b16 %v3290
  %v3669 = vunpack.c.l.b16 %v3291
  %v3670 = vunpack.c.h.b16 %v3291
  %v3671 = vunpack.c.l.b16 %v3292
  %v3672 = vunpack.c.h.b16 %v3292
  %v3673 = vunpack.c.l.b16 %v3293
  %v3674 = vunpack.c.h.b16 %v3293
  %v3675 = vunpack.c.l.b16 %v3294
  %v3676 = vunpack.c.h.b16 %v3294
  %v3677 = vunpack.c.l.b16 %v3295
  %v3678 = vunpack.c.l.b16 %v3296
  %v3679 = vunpack.c.h.b16 %v3296
  %v3680 = vunpack.c.l.b16 %v3297
  %v3681 = vunpack.c.h.b16 %v3297
  %v3682 = vunpack.c.l.b16 %v3298
  %v3683 = vunpack.c.h.b16 %v3298
  %v3684 = vunpack.c.l.b16 %v3299
  %v3685 = vunpack.c.h.b16 %v3299
  %v3686 = vunpack.c.l.b16 %v3300
  %v3687 = vunpack.c.l.b16 %v3301
  %v3688 = vunpack.c.h.b16 %v3301
  %v3689 = vunpack.c.l.b16 %v3302
  %v3690 = vunpack.c.h.b16 %v3302
  %v3691 = vunpack.c.l.b16 %v3303
  %v3692 = vunpack.c.h.b16 %v3303
  %v3693 = vunpack.c.l.b16 %v3304
  %v3694 = vunpack.c.h.b16 %v3304
  %v3695 = vunpack.c.l.b16 %v3305
  %v3696 = vunpack.c.l.b16 %v3306
  %v3697 = vunpack.c.h.b16 %v3306
  %v3698 = vunpack.c.l.b16 %v3307
  %v3699 = vunpack.c.h.b16 %v3307
  %v3700 = vunpack.c.l.b16 %v3308
  %v3701 = vunpack.c.h.b16 %v3308
  %v3702 = vunpack.c.l.b16 %v3309
  %v3703 = vunpack.c.h.b16 %v3309
  %v3704 = vunpack.c.l.b16 %v3310
  %v3705 = vunpack.c.l.b16 %v3311
  %v3706 = vunpack.c.h.b16 %v3311
  %v3707 = vunpack.c.l.b16 %v3312
  %v3708 = vunpack.c.h.b16 %v3312
  %v3709 = vunpack.c.l.b16 %v3313
  %v3710 = vunpack.c.h.b16 %v3313
  %v3711 = vunpack.c.l.b16 %v3314
  %v3712 = vunpack.c.h.b16 %v3314
  %v3713 = vunpack.c.l.b16 %v3315
  %v3714 = vunpack.c.l.b16 %v3316
  %v3715 = vunpack.c.h.b16 %v3316
  %v3716 = vunpack.c.l.b16 %v3317
  %v3717 = vunpack.c.h.b16 %v3317
  %v3718 = vunpack.c.l.b16 %v3318
  %v3719 = vunpack.c.h.b16 %v3318
  %v3720 = vunpack.c.l.b16 %v3319
  %v3721 = vunpack.c.h.b16 %v3319
  %v3722 = vunpack.c.l.b16 %v3320
  %v3723 = vunpack.c.l.b16 %v3321
  %v3724 = vunpack.c.h.b16 %v3321
  %v3725 = vunpack.c.l.b16 %v3322
  %v3726 = vunpack.c.h.b16 %v3322
  %v3727 = vunpack.c.l.b16 %v3323
  %v3728 = vunpack.c.h.b16 %v3323
  %v3729 = vunpack.c.l.b16 %v3324
  %v3730 = vunpack.c.h.b16 %v3324
  %v3731 = vunpack.c.l.b16 %v3325
  %v3732 = vunpack.c.l.b16 %v3326
  %v3733 = vunpack.c.h.b16 %v3326
  %v3734 = vunpack.c.l.b16 %v3327
  %v3735 = vunpack.c.h.b16 %v3327
  %v3736 = vunpack.c.l.b16 %v3328
  %v3737 = vunpack.c.h.b16 %v3328
  %v3738 = vunpack.c.l.b16 %v3329
  %v3739 = vunpack.c.h.b16 %v3329
  %v3740 = vunpack.c.l.b16 %v3330
  %v3741 = vunpack.c.l.b16 %v3331
  %v3742 = vunpack.c.h.b16 %v3331
  %v3743 = vunpack.c.l.b16 %v3332
  %v3744 = vunpack.c.h.b16 %v3332
  %v3745 = vunpack.c.l.b16 %v3333
  %v3746 = vunpack.c.h.b16 %v3333
  %v3747 = vunpack.c.l.b16 %v3334
  %v3748 = vunpack.c.h.b16 %v3334
  %v3749 = vunpack.c.l.b16 %v3335
  %v3750 = vunpack.c.l.b16 %v3336
  %v3751 = vunpack.c.h.b16 %v3336
  %v3752 = vunpack.c.l.b16 %v3337
  %v3753 = vunpack.c.h.b16 %v3337
  %v3754 = vunpack.c.l.b16 %v3338
  %v3755 = vunpack.c.h.b16 %v3338
  %v3756 = vunpack.c.l.b16 %v3339
  %v3757 = vunpack.c.h.b16 %v3339
  %v3758 = vunpack.c.l.b16 %v3340
  %v3759 = vunpack.c.l.b16 %v3341
  %v3760 = vunpack.c.h.b16 %v3341
  %v3761 = vunpack.c.l.b16 %v3342
  %v3762 = vunpack.c.h.b16 %v3342
  %v3763 = vunpack.c.l.b16 %v3343
  %v3764 = vunpack.c.h.b16 %v3343
  %v3765 = vunpack.c.l.b16 %v3344
  %v3766 = vunpack.c.h.b16 %v3344
  %v3767 = vunpack.c.l.b16 %v3345
  %v3768 = vunpack.c.l.b16 %v3346
  %v3769 = vunpack.c.h.b16 %v3346
  %v3770 = vunpack.c.l.b16 %v3347
  %v3771 = vunpack.c.h.b16 %v3347
  %v3772 = vunpack.c.l.b16 %v3348
  %v3773 = vunpack.c.h.b16 %v3348
  %v3774 = vunpack.c.l.b16 %v3349
  %v3775 = vunpack.c.h.b16 %v3349
  %v3776 = vunpack.c.l.b16 %v3350
  %v3777 = vunpack.c.l.b16 %v3351
  %v3778 = vunpack.c.h.b16 %v3351
  %v3779 = vunpack.c.l.b16 %v3352
  %v3780 = vunpack.c.h.b16 %v3352
  %v3781 = vunpack.c.l.b16 %v3353
  %v3782 = vunpack.c.h.b16 %v3353
  %v3783 = vunpack.c.l.b16 %v3354
  %v3784 = vunpack.c.h.b16 %v3354
  %v3785 = vunpack.c.l.b16 %v3355
  %v3786 = vunpack.c.l.b16 %v3356
  %v3787 = vunpack.c.h.b16 %v3356
  %v3788 = vunpack.c.l.b16 %v3357
  %v3789 = vunpack.c.h.b16 %v3357
  %v3790 = vunpack.c.l.b16 %v3358
  %v3791 = vunpack.c.h.b16 %v3358
  %v3792 = vunpack.c.l.b16 %v3359
  %v3793 = vunpack.c.h.b16 %v3359
  %v3794 = vunpack.c.l.b16 %v3360
  %v3795 = vunpack.c.l.b16 %v3361
  %v3796 = vunpack.c.h.b16 %v3361
  %v3797 = vunpack.c.l.b16 %v3362
  %v3798 = vunpack.c.h.b16 %v3362
  %v3799 = vunpack.c.l.b16 %v3363
  %v3800 = vunpack.c.h.b16 %v3363
  %v3801 = vunpack.c.l.b16 %v3364
  %v3802 = vunpack.c.h.b16 %v3364
  %v3803 = vunpack.c.l.b16 %v3365
  %v3804 = vunpack.c.l.b16 %v3366
  %v3805 = vunpack.c.h.b16 %v3366
  %v3806 = vunpack.c.l.b16 %v3367
  %v3807 = vunpack.c.h.b16 %v3367
  %v3808 = vunpack.c.l.b16 %v3368
  %v3809 = vunpack.c.h.b16 %v3368
  %v3810 = vunpack.c.l.b16 %v3369
  %v3811 = vunpack.c.h.b16 %v3369
  %v3812 = vunpack.c.l.b16 %v3370
  %v3813 = vunpack.c.l.b16 %v3371
  %v3814 = vunpack.c.h.b16 %v3371
  %v3815 = vunpack.c.l.b16 %v3372
  %v3816 = vunpack.c.h.b16 %v3372
  %v3817 = vunpack.c.l.b16 %v3373
  %v3818 = vunpack.c.h.b16 %v3373
  %v3819 = vunpack.c.l.b16 %v3374
  %v3820 = vunpack.c.h.b16 %v3374
  %v3821 = vunpack.c.l.b16 %v3375
  %v3822 = vunpack.c.l.b16 %v3376
  %v3823 = vunpack.c.h.b16 %v3376
  %v3824 = vunpack.c.l.b16 %v3377
  %v3825 = vunpack.c.h.b16 %v3377
  %v3826 = vunpack.c.l.b16 %v3378
  %v3827 = vunpack.c.h.b16 %v3378
  %v3828 = vunpack.c.l.b16 %v3379
  %v3829 = vunpack.c.h.b16 %v3379
  %v3830 = vunpack.c.l.b16 %v3380
  %v3831 = vunpack.c.l.b16 %v3381
  %v3832 = vunpack.c.h.b16 %v3381
  %v3833 = vunpack.c.l.b16 %v3382
  %v3834 = vunpack.c.h.b16 %v3382
  %v3835 = vunpack.c.l.b16 %v3383
  %v3836 = vunpack.c.h.b16 %v3383
  %v3837 = vunpack.c.l.b16 %v3384
  %v3838 = vunpack.c.h.b16 %v3384
  %v3839 = vunpack.c.l.b16 %v3385
  %v3840 = vunpack.c.l.b16 %v3386
  %v3841 = vunpack.c.h.b16 %v3386
  %v3842 = vunpack.c.l.b16 %v3387
  %v3843 = vunpack.c.h.b16 %v3387
  %v3844 = vunpack.c.l.b16 %v3388
  %v3845 = vunpack.c.h.b16 %v3388
  %v3846 = vunpack.c.l.b16 %v3389
  %v3847 = vunpack.c.h.b16 %v3389
  %v3848 = vunpack.c.l.b16 %v3390
  %v3849 = vunpack.c.l.b16 %v3391
  %v3850 = vunpack.c.h.b16 %v3391
  %v3851 = vunpack.c.l.b16 %v3392
  %v3852 = vunpack.c.h.b16 %v3392
  %v3853 = vunpack.c.l.b16 %v3393
  %v3854 = vunpack.c.h.b16 %v3393
  %v3855 = vunpack.c.l.b16 %v3394
  %v3856 = vunpack.c.h.b16 %v3394
  %v3857 = vunpack.c.l.b16 %v3395
  %v3858 = vunpack.c.l.b16 %v3396
  %v3859 = vunpack.c.h.b16 %v3396
  %v3860 = vunpack.c.l.b16 %v3397
  %v3861 = vunpack.c.h.b16 %v3397
  %v3862 = vunpack.c.l.b16 %v3398
  %v3863 = vunpack.c.h.b16 %v3398
  %v3864 = vunpack.c.l.b16 %v3399
  %v3865 = vunpack.c.h.b16 %v3399
  %v3866 = vunpack.c.l.b16 %v3400
  %v3867 = vunpack.c.l.b16 %v3401
  %v3868 = vunpack.c.h.b16 %v3401
  %v3869 = vunpack.c.l.b16 %v3402
  %v3870 = vunpack.c.h.b16 %v3402
  %v3871 = vunpack.c.l.b16 %v3403
  %v3872 = vunpack.c.h.b16 %v3403
  %v3873 = vunpack.c.l.b16 %v3404
  %v3874 = vunpack.c.h.b16 %v3404
  %v3875 = vunpack.c.l.b16 %v3405
  %v3876 = vpack.c.b16 %v3597, %v3588
  %v3877 = vpack.c.b16 %v3598, %v3589
  %v3878 = vpack.c.b16 %v3599, %v3590
  %v3879 = vpack.c.b16 %v3600, %v3591
  %v3880 = vpack.c.b16 %v3601, %v3592
  %v3881 = vpack.c.b16 %v3602, %v3593
  %v3882 = vpack.c.b16 %v3603, %v3594
  %v3883 = vpack.c.b16 %v3604, %v3595
  %v3884 = vpack.c.b16 %v3605, %v3596
  %v3885 = vpack.c.b16 %v3615, %v3606
  %v3886 = vpack.c.b16 %v3616, %v3607
  %v3887 = vpack.c.b16 %v3617, %v3608
  %v3888 = vpack.c.b16 %v3618, %v3609
  %v3889 = vpack.c.b16 %v3619, %v3610
  %v3890 = vpack.c.b16 %v3620, %v3611
  %v3891 = vpack.c.b16 %v3621, %v3612
  %v3892 = vpack.c.b16 %v3622, %v3613
  %v3893 = vpack.c.b16 %v3623, %v3614
  %v3894 = vpack.c.b16 %v3633, %v3624
  %v3895 = vpack.c.b16 %v3634, %v3625
  %v3896 = vpack.c.b16 %v3635, %v3626
  %v3897 = vpack.c.b16 %v3636, %v3627
  %v3898 = vpack.c.b16 %v3637, %v3628
  %v3899 = vpack.c.b16 %v3638, %v3629
  %v3900 = vpack.c.b16 %v3639, %v3630
  %v3901 = vpack.c.b16 %v3640, %v3631
  %v3902 = vpack.c.b16 %v3641, %v3632
  %v3903 = vpack.c.b16 %v3651, %v3642
  %v3904 = vpack.c.b16 %v3652, %v3643
  %v3905 = vpack.c.b16 %v3653, %v3644
  %v3906 = vpack.c.b16 %v3654, %v3645
  %v3907 = vpack.c.b16 %v3655, %v3646
  %v3908 = vpack.c.b16 %v3656, %v3647
  %v3909 = vpack.c.b16 %v3657, %v3648
  %v3910 = vpack.c.b16 %v3658, %v3649
  %v3911 = vpack.c.b16 %v3659, %v3650
  %v3912 = vpack.c.b16 %v3669, %v3660
  %v3913 = vpack.c.b16 %v3670, %v3661
  %v3914 = vpack.c.b16 %v3671, %v3662
  %v3915 = vpack.c.b16 %v3672, %v3663
  %v3916 = vpack.c.b16 %v3673, %v3664
  %v3917 = vpack.c.b16 %v3674, %v3665
  %v3918 = vpack.c.b16 %v3675, %v3666
  %v3919 = vpack.c.b16 %v3676, %v3667
  %v3920 = vpack.c.b16 %v3677, %v3668
  %v3921 = vpack.c.b16 %v3687, %v3678
  %v3922 = vpack.c.b16 %v3688, %v3679
  %v3923 = vpack.c.b16 %v3689, %v3680
  %v3924 = vpack.c.b16 %v3690, %v3681
  %v3925 = vpack.c.b16 %v3691, %v3682
  %v3926 = vpack.c.b16 %v3692, %v3683
  %v3927 = vpack.c.b16 %v3693, %v3684
  %v3928 = vpack.c.b16 %v3694, %v3685
  %v3929 = vpack.c.b16 %v3695, %v3686
  %v3930 = vpack.c.b16 %v3705, %v3696
  %v3931 = vpack.c.b16 %v3706, %v3697
  %v3932 = vpack.c.b16 %v3707, %v3698
  %v3933 = vpack.c.b16 %v3708, %v3699
  %v3934 = vpack.c.b16 %v3709, %v3700
  %v3935 = vpack.c.b16 %v3710, %v3701
  %v3936 = vpack.c.b16 %v3711, %v3702
  %v3937 = vpack.c.b16 %v3712, %v3703
  %v3938 = vpack.c.b16 %v3713, %v3704
  %v3939 = vpack.c.b16 %v3723, %v3714
  %v3940 = vpack.c.b16 %v3724, %v3715
  %v3941 = vpack.c.b16 %v3725, %v3716
  %v3942 = vpack.c.b16 %v3726, %v3717
  %v3943 = vpack.c.b16 %v3727, %v3718
  %v3944 = vpack.c.b16 %v3728, %v3719
  %v3945 = vpack.c.b16 %v3729, %v3720
  %v3946 = vpack.c.b16 %v3730, %v3721
  %v3947 = vpack.c.b16 %v3731, %v3722
  %v3948 = vpack.c.b16 %v3741, %v3732
  %v3949 = vpack.c.b16 %v3742, %v3733
  %v3950 = vpack.c.b16 %v3743, %v3734
  %v3951 = vpack.c.b16 %v3744, %v3735
  %v3952 = vpack.c.b16 %v3745, %v3736
  %v3953 = vpack.c.b16 %v3746, %v3737
  %v3954 = vpack.c.b16 %v3747, %v3738
  %v3955 = vpack.c.b16 %v3748, %v3739
  %v3956 = vpack.c.b16 %v3749, %v3740
  %v3957 = vpack.c.b16 %v3759, %v3750
  %v3958 = vpack.c.b16 %v3760, %v3751
  %v3959 = vpack.c.b16 %v3761, %v3752
  %v3960 = vpack.c.b16 %v3762, %v3753
  %v3961 = vpack.c.b16 %v3763, %v3754
  %v3962 = vpack.c.b16 %v3764, %v3755
  %v3963 = vpack.c.b16 %v3765, %v3756
  %v3964 = vpack.c.b16 %v3766, %v3757
  %v3965 = vpack.c.b16 %v3767, %v3758
  %v3966 = vpack.c.b16 %v3777, %v3768
  %v3967 = vpack.c.b16 %v3778, %v3769
  %v3968 = vpack.c.b16 %v3779, %v3770
  %v3969 = vpack.c.b16 %v3780, %v3771
  %v3970 = vpack.c.b16 %v3781, %v3772
  %v3971 = vpack.c.b16 %v3782, %v3773
  %v3972 = vpack.c.b16 %v3783, %v3774
  %v3973 = vpack.c.b16 %v3784, %v3775
  %v3974 = vpack.c.b16 %v3785, %v3776
  %v3975 = vpack.c.b16 %v3795, %v3786
  %v3976 = vpack.c.b16 %v3796, %v3787
  %v3977 = vpack.c.b16 %v3797, %v3788
  %v3978 = vpack.c.b16 %v3798, %v3789
  %v3979 = vpack.c.b16 %v3799, %v3790
  %v3980 = vpack.c.b16 %v3800, %v3791
  %v3981 = vpack.c.b16 %v3801, %v3792
  %v3982 = vpack.c.b16 %v3802, %v3793
  %v3983 = vpack.c.b16 %v3803, %v3794
  %v3984 = vpack.c.b16 %v3813, %v3804
  %v3985 = vpack.c.b16 %v3814, %v3805
  %v3986 = vpack.c.b16 %v3815, %v3806
  %v3987 = vpack.c.b16 %v3816, %v3807
  %v3988 = vpack.c.b16 %v3817, %v3808
  %v3989 = vpack.c.b16 %v3818, %v3809
  %v3990 = vpack.c.b16 %v3819, %v3810
  %v3991 = vpack.c.b16 %v3820, %v3811
  %v3992 = vpack.c.b16 %v3821, %v3812
  %v3993 = vpack.c.b16 %v3831, %v3822
  %v3994 = vpack.c.b16 %v3832, %v3823
  %v3995 = vpack.c.b16 %v3833, %v3824
  %v3996 = vpack.c.b16 %v3834, %v3825
  %v3997 = vpack.c.b16 %v3835, %v3826
  %v3998 = vpack.c.b16 %v3836, %v3827
  %v3999 = vpack.c.b16 %v3837, %v3828
  %v4000 = vpack.c.b16 %v3838, %v3829
  %v4001 = vpack.c.b16 %v3839, %v3830
  %v4002 = vpack.c.b16 %v3849, %v3840
  %v4003 = vpack.c.b16 %v3850, %v3841
  %v4004 = vpack.c.b16 %v3851, %v3842
  %v4005 = vpack.c.b16 %v3852, %v3843
  %v4006 = vpack.c.b16 %v3853, %v3844
  %v4007 = vpack.c.b16 %v3854, %v3845
  %v4008 = vpack.c.b16 %v3855, %v3846
  %v4009 = vpack.c.b16 %v3856, %v3847
  %v4010 = vpack.c.b16 %v3857, %v3848
  %v4011 = vpack.c.b16 %v3867, %v3858
  %v4012 = vpack.c.b16 %v3868, %v3859
  %v4013 = vpack.c.b16 %v3869, %v3860
  %v4014 = vpack.c.b16 %v3870, %v3861
  %v4015 = vpack.c.b16 %v3871, %v3862
  %v4016 = vpack.c.b16 %v3872, %v3863
  %v4017 = vpack.c.b16 %v3873, %v3864
  %v4018 = vpack.c.b16 %v3874, %v3865
  %v4019 = vpack.c.b16 %v3875, %v3866
  %4164 = vmatpush.bf16.msra.mxu0 %v3939
  %4165 = vmatpush.bf16.msra.mxu0 %v3930
  %4166 = vmatpush.bf16.msra.mxu0 %v3921
  %4167 = vmatpush.bf16.msra.mxu0 %v3912
  %4168 = vmatpush.bf16.msra.mxu0 %v3903
  %4169 = vmatpush.bf16.msra.mxu0 %v3894
  %4170 = vmatpush.bf16.msra.mxu0 %v3885
  %4171 = vmatpush.bf16.msra.mxu0 %v3876
  %4172 = vmatmul.bf16.gmra.mxu0 %v3244
  %v4173 = vpop.f32.mrf.mxu0
  %v4174 = vadd.f32 %v3410, %v4173
  %v4175 = vpop.f32.mrf.mxu0
  %v4176 = vadd.f32 %v3410, %v4175
  %4177 = vdwg.mxu0
  %4178 = vmatpush.bf16.msra.mxu0 %v4011
  %4179 = vmatpush.bf16.msra.mxu0 %v4002
  %4180 = vmatpush.bf16.msra.mxu0 %v3993
  %4181 = vmatpush.bf16.msra.mxu0 %v3984
  %4182 = vmatpush.bf16.msra.mxu0 %v3975
  %4183 = vmatpush.bf16.msra.mxu0 %v3966
  %4184 = vmatpush.bf16.msra.mxu0 %v3957
  %4185 = vmatpush.bf16.msra.mxu0 %v3948
  %4186 = vmatmul.bf16.gmra.mxu0 %v3245
  %v4187 = vpop.f32.mrf.mxu0
  %v4188 = vadd.f32 %v4174, %v4187
  %v4189 = vpop.f32.mrf.mxu0
  %v4190 = vadd.f32 %v4176, %v4189
  %4191 = vdwg.mxu0
  %4192 = vmatpush.bf16.msra.mxu0 %v3940
  %4193 = vmatpush.bf16.msra.mxu0 %v3931
  %4194 = vmatpush.bf16.msra.mxu0 %v3922
  %4195 = vmatpush.bf16.msra.mxu0 %v3913
  %4196 = vmatpush.bf16.msra.mxu0 %v3904
  %4197 = vmatpush.bf16.msra.mxu0 %v3895
  %4198 = vmatpush.bf16.msra.mxu0 %v3886
  %4199 = vmatpush.bf16.msra.mxu0 %v3877
  %4200 = vmatmul.bf16.gmra.mxu0 %v3244
  %v4201 = vpop.f32.mrf.mxu0
  %v4202 = vadd.f32 %v3411, %v4201
  %v4203 = vpop.f32.mrf.mxu0
  %v4204 = vadd.f32 %v3411, %v4203
  %4205 = vdwg.mxu0
  %4206 = vmatpush.bf16.msra.mxu0 %v4012
  %4207 = vmatpush.bf16.msra.mxu0 %v4003
  %4208 = vmatpush.bf16.msra.mxu0 %v3994
  %4209 = vmatpush.bf16.msra.mxu0 %v3985
  %4210 = vmatpush.bf16.msra.mxu0 %v3976
  %4211 = vmatpush.bf16.msra.mxu0 %v3967
  %4212 = vmatpush.bf16.msra.mxu0 %v3958
  %4213 = vmatpush.bf16.msra.mxu0 %v3949
  %4214 = vmatmul.bf16.gmra.mxu0 %v3245
  %v4215 = vpop.f32.mrf.mxu0
  %v4216 = vadd.f32 %v4202, %v4215
  %v4217 = vpop.f32.mrf.mxu0
  %v4218 = vadd.f32 %v4204, %v4217
  %4219 = vdwg.mxu0
  %4220 = vmatpush.bf16.msra.mxu0 %v3941
  %4221 = vmatpush.bf16.msra.mxu0 %v3932
  %4222 = vmatpush.bf16.msra.mxu0 %v3923
  %4223 = vmatpush.bf16.msra.mxu0 %v3914
  %4224 = vmatpush.bf16.msra.mxu0 %v3905
  %4225 = vmatpush.bf16.msra.mxu0 %v3896
  %4226 = vmatpush.bf16.msra.mxu0 %v3887
  %4227 = vmatpush.bf16.msra.mxu0 %v3878
  %4228 = vmatmul.bf16.gmra.mxu0 %v3244
  %v4229 = vpop.f32.mrf.mxu0
  %v4230 = vadd.f32 %v3412, %v4229
  %v4231 = vpop.f32.mrf.mxu0
  %v4232 = vadd.f32 %v3412, %v4231
  %4233 = vdwg.mxu0
  %4234 = vmatpush.bf16.msra.mxu0 %v4013
  %4235 = vmatpush.bf16.msra.mxu0 %v4004
  %4236 = vmatpush.bf16.msra.mxu0 %v3995
  %4237 = vmatpush.bf16.msra.mxu0 %v3986
  %4238 = vmatpush.bf16.msra.mxu0 %v3977
  %4239 = vmatpush.bf16.msra.mxu0 %v3968
  %4240 = vmatpush.bf16.msra.mxu0 %v3959
  %4241 = vmatpush.bf16.msra.mxu0 %v3950
  %4242 = vmatmul.bf16.gmra.mxu0 %v3245
  %v4243 = vpop.f32.mrf.mxu0
  %v4244 = vadd.f32 %v4230, %v4243
  %v4245 = vpop.f32.mrf.mxu0
  %v4246 = vadd.f32 %v4232, %v4245
  %4247 = vdwg.mxu0
  %4248 = vmatpush.bf16.msra.mxu0 %v3942
  %4249 = vmatpush.bf16.msra.mxu0 %v3933
  %4250 = vmatpush.bf16.msra.mxu0 %v3924
  %4251 = vmatpush.bf16.msra.mxu0 %v3915
  %4252 = vmatpush.bf16.msra.mxu0 %v3906
  %4253 = vmatpush.bf16.msra.mxu0 %v3897
  %4254 = vmatpush.bf16.msra.mxu0 %v3888
  %4255 = vmatpush.bf16.msra.mxu0 %v3879
  %4256 = vmatmul.bf16.gmra.mxu0 %v3244
  %v4257 = vpop.f32.mrf.mxu0
  %v4258 = vadd.f32 %v3413, %v4257
  %v4259 = vpop.f32.mrf.mxu0
  %v4260 = vadd.f32 %v3413, %v4259
  %4261 = vdwg.mxu0
  %4262 = vmatpush.bf16.msra.mxu0 %v4014
  %4263 = vmatpush.bf16.msra.mxu0 %v4005
  %4264 = vmatpush.bf16.msra.mxu0 %v3996
  %4265 = vmatpush.bf16.msra.mxu0 %v3987
  %4266 = vmatpush.bf16.msra.mxu0 %v3978
  %4267 = vmatpush.bf16.msra.mxu0 %v3969
  %4268 = vmatpush.bf16.msra.mxu0 %v3960
  %4269 = vmatpush.bf16.msra.mxu0 %v3951
  %4270 = vmatmul.bf16.gmra.mxu0 %v3245
  %v4271 = vpop.f32.mrf.mxu0
  %v4272 = vadd.f32 %v4258, %v4271
  %v4273 = vpop.f32.mrf.mxu0
  %v4274 = vadd.f32 %v4260, %v4273
  %4275 = vdwg.mxu0
  %4276 = vmatpush.bf16.msra.mxu0 %v3943
  %4277 = vmatpush.bf16.msra.mxu0 %v3934
  %4278 = vmatpush.bf16.msra.mxu0 %v3925
  %4279 = vmatpush.bf16.msra.mxu0 %v3916
  %4280 = vmatpush.bf16.msra.mxu0 %v3907
  %4281 = vmatpush.bf16.msra.mxu0 %v3898
  %4282 = vmatpush.bf16.msra.mxu0 %v3889
  %4283 = vmatpush.bf16.msra.mxu0 %v3880
  %4284 = vmatmul.bf16.gmra.mxu0 %v3244
  %v4285 = vpop.f32.mrf.mxu0
  %v4286 = vadd.f32 %v3414, %v4285
  %v4287 = vpop.f32.mrf.mxu0
  %v4288 = vadd.f32 %v3414, %v4287
  %4289 = vdwg.mxu0
  %4290 = vmatpush.bf16.msra.mxu0 %v4015
  %4291 = vmatpush.bf16.msra.mxu0 %v4006
  %4292 = vmatpush.bf16.msra.mxu0 %v3997
  %4293 = vmatpush.bf16.msra.mxu0 %v3988
  %4294 = vmatpush.bf16.msra.mxu0 %v3979
  %4295 = vmatpush.bf16.msra.mxu0 %v3970
  %4296 = vmatpush.bf16.msra.mxu0 %v3961
  %4297 = vmatpush.bf16.msra.mxu0 %v3952
  %4298 = vmatmul.bf16.gmra.mxu0 %v3245
  %v4299 = vpop.f32.mrf.mxu0
  %v4300 = vadd.f32 %v4286, %v4299
  %v4301 = vpop.f32.mrf.mxu0
  %v4302 = vadd.f32 %v4288, %v4301
  %4303 = vdwg.mxu0
  %4304 = vmatpush.bf16.msra.mxu0 %v3944
  %4305 = vmatpush.bf16.msra.mxu0 %v3935
  %4306 = vmatpush.bf16.msra.mxu0 %v3926
  %4307 = vmatpush.bf16.msra.mxu0 %v3917
  %4308 = vmatpush.bf16.msra.mxu0 %v3908
  %4309 = vmatpush.bf16.msra.mxu0 %v3899
  %4310 = vmatpush.bf16.msra.mxu0 %v3890
  %4311 = vmatpush.bf16.msra.mxu0 %v3881
  %4312 = vmatmul.bf16.gmra.mxu0 %v3244
  %v4313 = vpop.f32.mrf.mxu0
  %v4314 = vadd.f32 %v3415, %v4313
  %v4315 = vpop.f32.mrf.mxu0
  %v4316 = vadd.f32 %v3415, %v4315
  %4317 = vdwg.mxu0
  %4318 = vmatpush.bf16.msra.mxu0 %v4016
  %4319 = vmatpush.bf16.msra.mxu0 %v4007
  %4320 = vmatpush.bf16.msra.mxu0 %v3998
  %4321 = vmatpush.bf16.msra.mxu0 %v3989
  %4322 = vmatpush.bf16.msra.mxu0 %v3980
  %4323 = vmatpush.bf16.msra.mxu0 %v3971
  %4324 = vmatpush.bf16.msra.mxu0 %v3962
  %4325 = vmatpush.bf16.msra.mxu0 %v3953
  %4326 = vmatmul.bf16.gmra.mxu0 %v3245
  %v4327 = vpop.f32.mrf.mxu0
  %v4328 = vadd.f32 %v4314, %v4327
  %v4329 = vpop.f32.mrf.mxu0
  %v4330 = vadd.f32 %v4316, %v4329
  %4331 = vdwg.mxu0
  %4332 = vmatpush.bf16.msra.mxu0 %v3945
  %4333 = vmatpush.bf16.msra.mxu0 %v3936
  %4334 = vmatpush.bf16.msra.mxu0 %v3927
  %4335 = vmatpush.bf16.msra.mxu0 %v3918
  %4336 = vmatpush.bf16.msra.mxu0 %v3909
  %4337 = vmatpush.bf16.msra.mxu0 %v3900
  %4338 = vmatpush.bf16.msra.mxu0 %v3891
  %4339 = vmatpush.bf16.msra.mxu0 %v3882
  %4340 = vmatmul.bf16.gmra.mxu0 %v3244
  %v4341 = vpop.f32.mrf.mxu0
  %v4342 = vadd.f32 %v3416, %v4341
  %v4343 = vpop.f32.mrf.mxu0
  %v4344 = vadd.f32 %v3416, %v4343
  %4345 = vdwg.mxu0
  %4346 = vmatpush.bf16.msra.mxu0 %v4017
  %4347 = vmatpush.bf16.msra.mxu0 %v4008
  %4348 = vmatpush.bf16.msra.mxu0 %v3999
  %4349 = vmatpush.bf16.msra.mxu0 %v3990
  %4350 = vmatpush.bf16.msra.mxu0 %v3981
  %4351 = vmatpush.bf16.msra.mxu0 %v3972
  %4352 = vmatpush.bf16.msra.mxu0 %v3963
  %4353 = vmatpush.bf16.msra.mxu0 %v3954
  %4354 = vmatmul.bf16.gmra.mxu0 %v3245
  %v4355 = vpop.f32.mrf.mxu0
  %v4356 = vadd.f32 %v4342, %v4355
  %v4357 = vpop.f32.mrf.mxu0
  %v4358 = vadd.f32 %v4344, %v4357
  %4359 = vdwg.mxu0
  %4360 = vmatpush.bf16.msra.mxu0 %v3946
  %4361 = vmatpush.bf16.msra.mxu0 %v3937
  %4362 = vmatpush.bf16.msra.mxu0 %v3928
  %4363 = vmatpush.bf16.msra.mxu0 %v3919
  %4364 = vmatpush.bf16.msra.mxu0 %v3910
  %4365 = vmatpush.bf16.msra.mxu0 %v3901
  %4366 = vmatpush.bf16.msra.mxu0 %v3892
  %4367 = vmatpush.bf16.msra.mxu0 %v3883
  %4368 = vmatmul.bf16.gmra.mxu0 %v3244
  %v4369 = vpop.f32.mrf.mxu0
  %v4370 = vadd.f32 %v3417, %v4369
  %v4371 = vpop.f32.mrf.mxu0
  %v4372 = vadd.f32 %v3417, %v4371
  %4373 = vdwg.mxu0
  %4374 = vmatpush.bf16.msra.mxu0 %v4018
  %4375 = vmatpush.bf16.msra.mxu0 %v4009
  %4376 = vmatpush.bf16.msra.mxu0 %v4000
  %4377 = vmatpush.bf16.msra.mxu0 %v3991
  %4378 = vmatpush.bf16.msra.mxu0 %v3982
  %4379 = vmatpush.bf16.msra.mxu0 %v3973
  %4380 = vmatpush.bf16.msra.mxu0 %v3964
  %4381 = vmatpush.bf16.msra.mxu0 %v3955
  %4382 = vmatmul.bf16.gmra.mxu0 %v3245
  %v4383 = vpop.f32.mrf.mxu0
  %v4384 = vadd.f32 %v4370, %v4383
  %v4385 = vpop.f32.mrf.mxu0
  %v4386 = vadd.f32 %v4372, %v4385
  %4387 = vdwg.mxu0
  %4388 = vmatpush.bf16.msra.mxu0 %v3947
  %4389 = vmatpush.bf16.msra.mxu0 %v3938
  %4390 = vmatpush.bf16.msra.mxu0 %v3929
  %4391 = vmatpush.bf16.msra.mxu0 %v3920
  %4392 = vmatpush.bf16.msra.mxu0 %v3911
  %4393 = vmatpush.bf16.msra.mxu0 %v3902
  %4394 = vmatpush.bf16.msra.mxu0 %v3893
  %4395 = vmatpush.bf16.msra.mxu0 %v3884
  %4396 = vmatmul.bf16.gmra.mxu0 %v3244
  %v4397 = vpop.f32.mrf.mxu0
  %v4398 = vadd.f32 %v3418, %v4397
  %v4399 = vpop.f32.mrf.mxu0
  %v4400 = vadd.f32 %v3418, %v4399
  %4401 = vdwg.mxu0
  %4402 = vmatpush.bf16.msra.mxu0 %v4019
  %4403 = vmatpush.bf16.msra.mxu0 %v4010
  %4404 = vmatpush.bf16.msra.mxu0 %v4001
  %4405 = vmatpush.bf16.msra.mxu0 %v3992
  %4406 = vmatpush.bf16.msra.mxu0 %v3983
  %4407 = vmatpush.bf16.msra.mxu0 %v3974
  %4408 = vmatpush.bf16.msra.mxu0 %v3965
  %4409 = vmatpush.bf16.msra.mxu0 %v3956
  %4410 = vmatmul.bf16.gmra.mxu0 %v3245
  %v4411 = vpop.f32.mrf.mxu0
  %v4412 = vadd.f32 %v4398, %v4411
  %v4413 = vpop.f32.mrf.mxu0
  %v4414 = vadd.f32 %v4400, %v4413
  %4415 = vdwg.mxu0
  %vm4416 = vcmask 31744
  %v4417 = vsel %vm4416, %v4188, -inf
  %4418 = vmax.xlane.f32.xlu0 %v4417
  %v4419 = vpop.xlane.xlu0 %4418
  %v4420 = vsel %vm4416, %v4190, -inf
  %4421 = vmax.xlane.f32.xlu0 %v4420
  %v4422 = vpop.xlane.xlu0 %4421
  %v4423 = vsub.f32 %v4188, %v4419
  %v4424 = vsub.f32 %v4190, %v4422
  %v4425 = vmul.f32 %v4423, 1.442695
  %v4426 = vpow.pop %v4425
  %v4427 = vmul.f32 %v4424, 1.442695
  %v4428 = vpow.pop %v4427
  %v4429 = vsel %vm4416, %v4426, 0.0
  %4430 = vadd.xlane.f32.xlu0 %v4429
  %v4431 = vpop.xlane.xlu0 %4430
  %v4432 = vsel %vm4416, %v4428, 0.0
  %4433 = vadd.xlane.f32.xlu0 %v4432
  %v4434 = vpop.xlane.xlu0 %4433
  %v4435 = vrcp.pop %v4431
  %v4436 = vmul.f32 %v4431, %v4435
  %v4437 = vsub.f32 1.0, %v4436
  %v4438 = vmul.f32 %v4435, %v4437
  %v4439 = vadd.f32 %v4435, %v4438
  %vm4440 = vweird.f32 %v4431
  %vm4441 = vweird.f32 %v4435
  %vm4442 = vmor %vm4440, %vm4441
  %v4443 = vsel %vm4442, %v4435, %v4439
  %v4444 = vand.u32 2147483647, %v4431
  %vm4445 = vcmp.eq.f32.partialorder %v4444, 8.507059e+37
  %v4446 = vand.u32 %v4431, 2147483648
  %v4447 = vor.u32 1.1754944e-38, %v4446
  %v4448 = vsel %vm4445, %v4447, %v4443
  %v4449 = vmul.f32 %v4426, %v4448
  %v4450 = vrcp.pop %v4434
  %v4451 = vmul.f32 %v4434, %v4450
  %v4452 = vsub.f32 1.0, %v4451
  %v4453 = vmul.f32 %v4450, %v4452
  %v4454 = vadd.f32 %v4450, %v4453
  %vm4455 = vweird.f32 %v4434
  %vm4456 = vweird.f32 %v4450
  %vm4457 = vmor %vm4455, %vm4456
  %v4458 = vsel %vm4457, %v4450, %v4454
  %v4459 = vand.u32 2147483647, %v4434
  %vm4460 = vcmp.eq.f32.partialorder %v4459, 8.507059e+37
  %v4461 = vand.u32 %v4434, 2147483648
  %v4462 = vor.u32 1.1754944e-38, %v4461
  %v4463 = vsel %vm4460, %v4462, %v4458
  %v4464 = vmul.f32 %v4428, %v4463
  %4466 = vset.pattern.permute.xlu0 0
  %4467 = vperm.xlu0 %4466, %v4449
  %v4468 = vpop.permute.xlu0 %4467
  %4471 = vset.pattern.permute.xlu0 0
  %4472 = vperm.xlu0 %4471, %v4464
  %v4473 = vpop.permute.xlu0 %4472
  %v4475 = vmul.f32 %v4468, %v4216
  %v4476 = vmul.f32 %v4468, %v4244
  %v4477 = vmul.f32 %v4473, %v4218
  %v4478 = vmul.f32 %v4473, %v4246
  %4479 = vset.pattern.permute.xlu0 1
  %4480 = vperm.xlu0 %4479, %v4449
  %v4481 = vpop.permute.xlu0 %4480
  %4483 = vset.pattern.permute.xlu0 1
  %4484 = vperm.xlu0 %4483, %v4464
  %v4485 = vpop.permute.xlu0 %4484
  %v4487 = vmul.f32 %v4481, %v4272
  %v4488 = vmul.f32 %v4481, %v4300
  %v4489 = vmul.f32 %v4485, %v4274
  %v4490 = vmul.f32 %v4485, %v4302
  %v4491 = vadd.f32 %v4475, %v4487
  %v4492 = vadd.f32 %v4476, %v4488
  %v4493 = vadd.f32 %v4477, %v4489
  %v4494 = vadd.f32 %v4478, %v4490
  %4495 = vset.pattern.permute.xlu0 2
  %4496 = vperm.xlu0 %4495, %v4449
  %v4497 = vpop.permute.xlu0 %4496
  %4499 = vset.pattern.permute.xlu0 2
  %4500 = vperm.xlu0 %4499, %v4464
  %v4501 = vpop.permute.xlu0 %4500
  %v4503 = vmul.f32 %v4497, %v4328
  %v4504 = vmul.f32 %v4497, %v4356
  %v4505 = vmul.f32 %v4501, %v4330
  %v4506 = vmul.f32 %v4501, %v4358
  %v4507 = vadd.f32 %v4491, %v4503
  %v4508 = vadd.f32 %v4492, %v4504
  %v4509 = vadd.f32 %v4493, %v4505
  %v4510 = vadd.f32 %v4494, %v4506
  %4511 = vset.pattern.permute.xlu0 3
  %4512 = vperm.xlu0 %4511, %v4449
  %v4513 = vpop.permute.xlu0 %4512
  %4515 = vset.pattern.permute.xlu0 3
  %4516 = vperm.xlu0 %4515, %v4464
  %v4517 = vpop.permute.xlu0 %4516
  %v4519 = vmul.f32 %v4513, %v4384
  %v4520 = vmul.f32 %v4513, %v4412
  %v4521 = vmul.f32 %v4517, %v4386
  %v4522 = vmul.f32 %v4517, %v4414
  %v4523 = vadd.f32 %v4507, %v4519
  %v4524 = vadd.f32 %v4508, %v4520
  %v4525 = vadd.f32 %v4509, %v4521
  %v4526 = vadd.f32 %v4510, %v4522
  %v4527 = vpack.c.bf16 %v4525, %v4523
  %v4528 = vpack.c.bf16 %v4526, %v4524
  %v4529 = vld [vmem:[%s5] sm:$0xf]
  %v4530 = vld [vmem:[%s5 + $0x4] sm:$0xf]
  %v4531 = vld [vmem:[%s5 + $0x8] sm:$0xf]
  %v4532 = vld [vmem:[%s5 + $0xc] sm:$0xf]
  %v4533 = vld [vmem:[%s5 + $0x10] sm:$0xf]
  %v4534 = vld [vmem:[%s5 + $0x14] sm:$0xf]
  %v4535 = vld [vmem:[%s5 + $0x18] sm:$0xf]
  %v4536 = vld [vmem:[%s5 + $0x1c] sm:$0xf]
  %v4537 = vld [vmem:[%s5 + $0x20] sm:$0xf]
  %v4538 = vld [vmem:[%s5 + $0x24] sm:$0xf]
  %v4539 = vld [vmem:[%s5 + $0x28] sm:$0xf]
  %v4540 = vld [vmem:[%s5 + $0x2c] sm:$0xf]
  %v4541 = vld [vmem:[%s5 + $0x30] sm:$0xf]
  %v4542 = vld [vmem:[%s5 + $0x34] sm:$0xf]
  %v4543 = vld [vmem:[%s5 + $0x38] sm:$0xf]
  %v4544 = vld [vmem:[%s5 + $0x3c] sm:$0xf]
  %v4545 = vld [vmem:[%s5 + $0x40] sm:$0xf]
  %v4546 = vld [vmem:[%s5 + $0x44] sm:$0xf]
  %v4547 = vld [vmem:[%s5 + $0x48] sm:$0xf]
  %v4548 = vld [vmem:[%s5 + $0x4c] sm:$0xf]
  %v4549 = vld [vmem:[%s5 + $0x50] sm:$0xf]
  %v4550 = vld [vmem:[%s5 + $0x54] sm:$0xf]
  %v4551 = vld [vmem:[%s5 + $0x58] sm:$0xf]
  %v4552 = vld [vmem:[%s5 + $0x5c] sm:$0xf]
  %v4553 = vld [vmem:[%s5 + $0x60] sm:$0xf]
  %v4554 = vld [vmem:[%s5 + $0x64] sm:$0xf]
  %v4555 = vld [vmem:[%s5 + $0x68] sm:$0xf]
  %v4556 = vld [vmem:[%s5 + $0x6c] sm:$0xf]
  %v4557 = vld [vmem:[%s5 + $0x70] sm:$0xf]
  %v4558 = vld [vmem:[%s5 + $0x74] sm:$0xf]
  %v4559 = vld [vmem:[%s5 + $0x78] sm:$0xf]
  %v4560 = vld [vmem:[%s5 + $0x7c] sm:$0xf]
  %v4561 = vld [vmem:[%s6] sm:$0x1]
  %v4563 = vperm.slane %v4561, 0
  %v4597 = vunpack.c.l.b16 %v4529
  %v4598 = vunpack.c.l.b16 %v4530
  %v4599 = vunpack.c.l.b16 %v4531
  %v4600 = vunpack.c.l.b16 %v4532
  %v4601 = vunpack.c.l.b16 %v4533
  %v4602 = vunpack.c.l.b16 %v4534
  %v4603 = vunpack.c.l.b16 %v4535
  %v4604 = vunpack.c.l.b16 %v4536
  %v4605 = vunpack.c.l.b16 %v4537
  %v4606 = vunpack.c.l.b16 %v4538
  %v4607 = vunpack.c.l.b16 %v4539
  %v4608 = vunpack.c.l.b16 %v4540
  %v4609 = vunpack.c.l.b16 %v4541
  %v4610 = vunpack.c.l.b16 %v4542
  %v4611 = vunpack.c.l.b16 %v4543
  %v4612 = vunpack.c.l.b16 %v4544
  %v4613 = vunpack.c.l.b16 %v4545
  %v4614 = vunpack.c.l.b16 %v4546
  %v4615 = vunpack.c.l.b16 %v4547
  %v4616 = vunpack.c.l.b16 %v4548
  %v4617 = vunpack.c.l.b16 %v4549
  %v4618 = vunpack.c.l.b16 %v4550
  %v4619 = vunpack.c.l.b16 %v4551
  %v4620 = vunpack.c.l.b16 %v4552
  %v4621 = vunpack.c.l.b16 %v4553
  %v4622 = vunpack.c.l.b16 %v4554
  %v4623 = vunpack.c.l.b16 %v4555
  %v4624 = vunpack.c.l.b16 %v4556
  %v4625 = vunpack.c.l.b16 %v4557
  %v4626 = vunpack.c.l.b16 %v4558
  %v4627 = vunpack.c.l.b16 %v4559
  %v4628 = vunpack.c.l.b16 %v4560
  %v4629 = vpack.c.b16 %v4598, %v4597
  %v4630 = vpack.c.b16 %v4600, %v4599
  %v4631 = vpack.c.b16 %v4602, %v4601
  %v4632 = vpack.c.b16 %v4604, %v4603
  %v4633 = vpack.c.b16 %v4606, %v4605
  %v4634 = vpack.c.b16 %v4608, %v4607
  %v4635 = vpack.c.b16 %v4610, %v4609
  %v4636 = vpack.c.b16 %v4612, %v4611
  %v4637 = vpack.c.b16 %v4614, %v4613
  %v4638 = vpack.c.b16 %v4616, %v4615
  %v4639 = vpack.c.b16 %v4618, %v4617
  %v4640 = vpack.c.b16 %v4620, %v4619
  %v4641 = vpack.c.b16 %v4622, %v4621
  %v4642 = vpack.c.b16 %v4624, %v4623
  %v4643 = vpack.c.b16 %v4626, %v4625
  %v4644 = vpack.c.b16 %v4628, %v4627
  %4661 = vmatpush.bf16.msra.mxu0 %v4636
  %4662 = vmatpush.bf16.msra.mxu0 %v4635
  %4663 = vmatpush.bf16.msra.mxu0 %v4634
  %4664 = vmatpush.bf16.msra.mxu0 %v4633
  %4665 = vmatpush.bf16.msra.mxu0 %v4632
  %4666 = vmatpush.bf16.msra.mxu0 %v4631
  %4667 = vmatpush.bf16.msra.mxu0 %v4630
  %4668 = vmatpush.bf16.msra.mxu0 %v4629
  %4669 = vmatmul.bf16.gmra.mxu0 %v4527
  %v4670 = vpop.f32.mrf.mxu0
  %v4671 = vadd.f32 %v4563, %v4670
  %v4672 = vpop.f32.mrf.mxu0
  %v4673 = vadd.f32 %v4563, %v4672
  %4674 = vdwg.mxu0
  %4675 = vmatpush.bf16.msra.mxu0 %v4644
  %4676 = vmatpush.bf16.msra.mxu0 %v4643
  %4677 = vmatpush.bf16.msra.mxu0 %v4642
  %4678 = vmatpush.bf16.msra.mxu0 %v4641
  %4679 = vmatpush.bf16.msra.mxu0 %v4640
  %4680 = vmatpush.bf16.msra.mxu0 %v4639
  %4681 = vmatpush.bf16.msra.mxu0 %v4638
  %4682 = vmatpush.bf16.msra.mxu0 %v4637
  %4683 = vmatmul.bf16.gmra.mxu0 %v4528
  %v4684 = vpop.f32.mrf.mxu0
  %v4685 = vadd.f32 %v4671, %v4684
  %v4686 = vpop.f32.mrf.mxu0
  %v4687 = vadd.f32 %v4673, %v4686
  %4688 = vdwg.mxu0
  %vm4689 = vcmask 80896
  %4690 = vst.msk [vmem:[%s7] sm:$0xff] %vm4689, %v4685
  %4691 = vst.msk [vmem:[%s7 + $0x8] sm:$0xff] %vm4689, %v4687
  // Predicated region
  $region30: #{pikv_moe_forward.5} parent=0 // pred_check
    _
  $region31: #{pikv_moe_forward.5} parent=0 // pred_check_branch
    %4693 = sbr.rel (0) target = $region33
  $region32: #{pikv_moe_forward.5} parent=0 // pred_region
    _
  $region33: #{pikv_moe_forward.5} parent=0 // pred_fallthru
    _
  // Predicated region
  $region34: #{pikv_moe_forward.5} parent=0 // pred_check
    _
  $region35: #{pikv_moe_forward.5} parent=0 // pred_check_branch
    %4695 = sbr.rel (0) target = $region37
  $region36: #{pikv_moe_forward.5} parent=0 // pred_region
    _
  $region37: #{pikv_moe_forward.5} parent=0 // pred_fallthru
    _

</llo_original>
